<compile_context>
chip_gen: v5e
topology: v5e:2x2
jax: 0.10.0
libtpu: 0.0.40
codegen_flags: <defaults>
</compile_context>

<pallas_src>
import jax
import jax.numpy as jnp
from jax.experimental import pallas as pl
from jax.experimental.pallas import tpu as pltpu

VMEM_LIMIT = 32 * 1024 * 1024  # safe scoped-VMEM ceiling on v5e/v6e/v7x
OUT_LANES = 128                # lane-dense head output width


def _round_up(v, m=128):
    return ((v + m - 1) // m) * m


def _pad2(x, shape):
    return jnp.pad(x, [(0, t - s) for s, t in zip(x.shape, shape)])


# ---------------------------------------------------------------------------
# Kernel 1: first-layer support  s1 = x @ W1   (row-tiled, runs once)
# ---------------------------------------------------------------------------

def _support_kernel(x_ref, w_ref, o_ref):
    o_ref[...] = jnp.dot(
        x_ref[...], w_ref[...], preferred_element_type=jnp.float32
    ).astype(o_ref.dtype)


def support_matmul(x, w, *, tm=512):
    n, din = x.shape
    dout = w.shape[1]
    tm = min(tm, n)
    assert n % tm == 0, (n, tm)
    return pl.pallas_call(
        _support_kernel,
        out_shape=jax.ShapeDtypeStruct((n, dout), jnp.bfloat16),
        grid_spec=pltpu.PrefetchScalarGridSpec(
            num_scalar_prefetch=0,
            grid=(n // tm,),
            in_specs=[
                pl.BlockSpec((tm, din), lambda i: (i, 0)),
                pl.BlockSpec((din, dout), lambda i: (0, 0)),
            ],
            out_specs=pl.BlockSpec((tm, dout), lambda i: (i, 0)),
        ),
        compiler_params=pltpu.CompilerParams(
            dimension_semantics=("parallel",),
            vmem_limit_bytes=VMEM_LIMIT,
        ),
        cost_estimate=pl.CostEstimate(
            flops=2 * n * din * dout,
            transcendentals=0,
            bytes_accessed=2 * (n * din + din * dout + n * dout),
        ),
    )(x, w)


# ---------------------------------------------------------------------------
# Kernel 2: fused aggregate + next support
#   s_next = relu(adj @ s) @ W_next     (grid = rows x K, f32 VMEM accumulator)
# ---------------------------------------------------------------------------

def _agg_fuse_kernel(adj_ref, s_ref, wn_ref, o_ref, acc_ref):
    k = pl.program_id(1)

    @pl.when(k == 0)
    def _init():
        acc_ref[...] = jnp.zeros_like(acc_ref)

    acc_ref[...] += jnp.dot(
        adj_ref[...], s_ref[...], preferred_element_type=jnp.float32
    )

    @pl.when(k == pl.num_programs(1) - 1)
    def _fini():
        h = jnp.maximum(acc_ref[...], 0.0).astype(jnp.bfloat16)   # relu(adj@s)
        o_ref[...] = jnp.dot(                                     # fused h @ W_next
            h, wn_ref[...], preferred_element_type=jnp.float32
        ).astype(o_ref.dtype)


def gnn_aggregate_fused(adj, support, w_next, *, tm=512, tk=512):
    n = adj.shape[0]
    d_in = support.shape[1]
    d_out = w_next.shape[1]
    tm = min(tm, n)
    tk = min(tk, n)
    assert n % tm == 0 and n % tk == 0, (n, tm, tk)
    return pl.pallas_call(
        _agg_fuse_kernel,
        out_shape=jax.ShapeDtypeStruct((n, d_out), jnp.bfloat16),
        grid_spec=pltpu.PrefetchScalarGridSpec(
            num_scalar_prefetch=0,
            grid=(n // tm, n // tk),
            in_specs=[
                pl.BlockSpec((tm, tk), lambda i, k: (i, k)),
                pl.BlockSpec((tk, d_in), lambda i, k: (k, 0)),
                pl.BlockSpec((d_in, d_out), lambda i, k: (0, 0)),  # resident
            ],
            out_specs=pl.BlockSpec((tm, d_out), lambda i, k: (i, 0)),
            scratch_shapes=[pltpu.VMEM((tm, d_in), jnp.float32)],
        ),
        compiler_params=pltpu.CompilerParams(
            # On v7x the row axis can be switched to pltpu.CORE_PARALLEL if
            # the profile shows one TensorCore idle.
            dimension_semantics=("parallel", "arbitrary"),
            vmem_limit_bytes=VMEM_LIMIT,
        ),
        cost_estimate=pl.CostEstimate(
            flops=2 * n * n * d_in + 2 * n * d_in * d_out,
            transcendentals=0,
            bytes_accessed=2 * (n * n + n * d_in + d_in * d_out + n * d_out),
        ),
    )(adj, support, w_next)


# ---------------------------------------------------------------------------
# Kernel 3: last aggregate + fused head (lane-dense output)
#   h3 = relu(adj @ s3); z = relu(h3 @ Wo + bo); y = relu(sum(z*wd)+bd)
#   y is broadcast across 128 lanes for an unmasked store; col 0 sliced later.
# ---------------------------------------------------------------------------

def _agg_head_kernel(adj_ref, s_ref, wo_ref, bo_ref, wd_ref, bd_ref,
                     o_ref, acc_ref):
    k = pl.program_id(1)

    @pl.when(k == 0)
    def _init():
        acc_ref[...] = jnp.zeros_like(acc_ref)

    acc_ref[...] += jnp.dot(
        adj_ref[...], s_ref[...], preferred_element_type=jnp.float32
    )

    @pl.when(k == pl.num_programs(1) - 1)
    def _fini():
        h3 = jnp.maximum(acc_ref[...], 0.0)                       # [tm, d3] f32
        z = jnp.dot(h3.astype(jnp.bfloat16), wo_ref[...],
                    preferred_element_type=jnp.float32)           # [tm, do] f32
        z = jnp.maximum(z + bo_ref[...], 0.0)
        # Dense(out_dim, 1): VPU mul + XLU lane reduction, bias from SMEM.
        y = jnp.sum(z * wd_ref[...], axis=-1, keepdims=True) + bd_ref[0, 0]
        # Lane-dense store: broadcast the [tm, 1] column across 128 lanes.
        o_ref[...] = jnp.broadcast_to(jnp.maximum(y, 0.0), o_ref.shape)


def gnn_aggregate_head(adj, support, wo, bo, wd_row, bd, *, tm=512, tk=512):
    n = adj.shape[0]
    d3 = support.shape[1]
    do = wo.shape[1]
    tm = min(tm, n)
    tk = min(tk, n)
    assert n % tm == 0 and n % tk == 0, (n, tm, tk)
    return pl.pallas_call(
        _agg_head_kernel,
        out_shape=jax.ShapeDtypeStruct((n, OUT_LANES), jnp.float32),
        grid_spec=pltpu.PrefetchScalarGridSpec(
            num_scalar_prefetch=0,
            grid=(n // tm, n // tk),
            in_specs=[
                pl.BlockSpec((tm, tk), lambda i, k: (i, k)),
                pl.BlockSpec((tk, d3), lambda i, k: (k, 0)),
                pl.BlockSpec((d3, do), lambda i, k: (0, 0)),     # resident
                pl.BlockSpec((1, do), lambda i, k: (0, 0)),      # bo row, resident
                pl.BlockSpec((1, do), lambda i, k: (0, 0)),      # wd row, resident
                pl.BlockSpec(memory_space=pltpu.MemorySpace.SMEM),  # bd scalar
            ],
            out_specs=pl.BlockSpec((tm, OUT_LANES), lambda i, k: (i, 0)),
            scratch_shapes=[pltpu.VMEM((tm, d3), jnp.float32)],
        ),
        compiler_params=pltpu.CompilerParams(
            dimension_semantics=("parallel", "arbitrary"),
            vmem_limit_bytes=VMEM_LIMIT,
        ),
        cost_estimate=pl.CostEstimate(
            flops=2 * n * n * d3 + 2 * n * d3 * do + 2 * n * do,
            transcendentals=0,
            bytes_accessed=2 * (n * n + n * d3 + d3 * do) + 4 * n * OUT_LANES,
        ),
    )(adj, support, wo, bo, wd_row, bd)


# ---------------------------------------------------------------------------
# Parameters (mirror the PyTorch __init__ shapes)
# ---------------------------------------------------------------------------

def xavier_uniform(key, shape):
    fan_in, fan_out = shape
    bound = jnp.sqrt(6.0 / (fan_in + fan_out))
    return jax.random.uniform(key, shape, jnp.float32, -bound, bound)


def init_params(key, in_dim, out_dim, hidden_dims=(200, 300, 200)):
    ks = jax.random.split(key, 8)
    h1, h2, h3 = hidden_dims
    return {
        "w1": xavier_uniform(ks[0], (in_dim, h1)),
        "w2": xavier_uniform(ks[1], (h1, h2)),
        "w3": xavier_uniform(ks[2], (h2, h3)),
        # GNNP.out = nn.Linear(h3, out_dim), stored pre-transposed [h3, out_dim]
        "wo": xavier_uniform(ks[3], (h3, out_dim)),
        "bo": jax.random.uniform(ks[4], (1, out_dim), jnp.float32, -0.1, 0.1),
        # Dense(out_dim, 1), stored pre-transposed [out_dim, 1]
        "wd": xavier_uniform(ks[5], (out_dim, 1)),
        "bd": jax.random.uniform(ks[6], (1, 1), jnp.float32, -0.1, 0.1),
    }


# ---------------------------------------------------------------------------
# Forward pass
# ---------------------------------------------------------------------------

def ptgnn_forward(params, feat_x, adj, *, tm=512, tk=512):
    n, din = feat_x.shape
    d1, d2, d3 = (params["w1"].shape[1], params["w2"].shape[1],
                  params["w3"].shape[1])
    do = params["wo"].shape[1]
    din_p, d1_p, d2_p, d3_p, do_p = map(_round_up, (din, d1, d2, d3, do))

    # Lane-dense zero padding + bf16 MXU operands (f32 accumulation in-kernel).
    x_p = _pad2(feat_x, (n, din_p)).astype(jnp.bfloat16)
    adj_b = adj.astype(jnp.bfloat16)
    w1_p = _pad2(params["w1"], (din_p, d1_p)).astype(jnp.bfloat16)
    w2_p = _pad2(params["w2"], (d1_p, d2_p)).astype(jnp.bfloat16)
    w3_p = _pad2(params["w3"], (d2_p, d3_p)).astype(jnp.bfloat16)
    wo_p = _pad2(params["wo"], (d3_p, do_p)).astype(jnp.bfloat16)
    bo_p = _pad2(params["bo"], (1, do_p))          # f32 (VPU bias add)
    wd_p = _pad2(params["wd"].T, (1, do_p))        # f32 row vector
    bd = params["bd"]                              # (1, 1) f32 -> SMEM

    s1 = support_matmul(x_p, w1_p, tm=tm)                        # [n, d1_p]
    s2 = gnn_aggregate_fused(adj_b, s1, w2_p, tm=tm, tk=tk)      # [n, d2_p]
    s3 = gnn_aggregate_fused(adj_b, s2, w3_p, tm=tm, tk=tk)      # [n, d3_p]
    y = gnn_aggregate_head(adj_b, s3, wo_p, bo_p, wd_p, bd,
                           tm=tm, tk=tk)                         # [n, 128]
    return y[:, 0]                                               # -> [N]


# ---------------------------------------------------------------------------
# Pure-JAX references
# ---------------------------------------------------------------------------

def ptgnn_reference_f32(params, feat_x, adj):
    h = jnp.maximum(adj @ (feat_x @ params["w1"]), 0.0)
    h = jnp.maximum(adj @ (h @ params["w2"]), 0.0)
    h = jnp.maximum(adj @ (h @ params["w3"]), 0.0)
    z = jnp.maximum(h @ params["wo"] + params["bo"], 0.0)
    y = jnp.maximum(z @ params["wd"] + params["bd"], 0.0)
    return jnp.squeeze(y, axis=-1)


def ptgnn_reference_bf16(params, feat_x, adj):
    """Reference applying the same bf16-operand / f32-accumulate cast chain."""
    bf, f32 = jnp.bfloat16, jnp.float32
    adj_b = adj.astype(bf)

    s = jnp.dot(feat_x.astype(bf), params["w1"].astype(bf),
                preferred_element_type=f32).astype(bf)
    h = jnp.maximum(jnp.dot(adj_b, s, preferred_element_type=f32), 0.0).astype(bf)
    s = jnp.dot(h, params["w2"].astype(bf), preferred_element_type=f32).astype(bf)
    h = jnp.maximum(jnp.dot(adj_b, s, preferred_element_type=f32), 0.0).astype(bf)
    s = jnp.dot(h, params["w3"].astype(bf), preferred_element_type=f32).astype(bf)
    h3 = jnp.maximum(jnp.dot(adj_b, s, preferred_element_type=f32), 0.0)
    z = jnp.dot(h3.astype(bf), params["wo"].astype(bf), preferred_element_type=f32)
    z = jnp.maximum(z + params["bo"], 0.0)
    y = jnp.sum(z * params["wd"].T, axis=-1, keepdims=True) + params["bd"]
    return jnp.squeeze(jnp.maximum(y, 0.0), axis=-1)


# ---------------------------------------------------------------------------
# Main
# ---------------------------------------------------------------------------

if __name__ == "__main__":
    key = jax.random.PRNGKey(0)
    k_feat, k_adj, k_param = jax.random.split(key, 3)

    N = 512       # small test graph; tm=tk=256 below exercises the 2x2 grid
    IN_DIM = 16   # padded to 128 internally
    OUT_DIM = 32  # padded to 128 internally

    feat_x = jax.random.normal(k_feat, (N, IN_DIM), jnp.float32)

    # Dense row-normalized adjacency (stand-in for the sparse adj of torch.spmm).
    raw = jax.random.uniform(k_adj, (N, N), jnp.float32)
    adj = (raw > 0.5).astype(jnp.float32) + jnp.eye(N, dtype=jnp.float32)
    adj = adj / jnp.sum(adj, axis=1, keepdims=True)

    params = init_params(k_param, IN_DIM, OUT_DIM)

    # Production default tiles are tm=tk=512; use 256 here so the test hits
    # the multi-step K accumulation path at a small shape.
    fwd = jax.jit(lambda p, x, a: ptgnn_forward(p, x, a, tm=256, tk=256))
    out = jax.block_until_ready(fwd(params, feat_x, adj))
    ref_bf16 = jax.block_until_ready(ptgnn_reference_bf16(params, feat_x, adj))
    ref_f32 = jax.block_until_ready(ptgnn_reference_f32(params, feat_x, adj))

    assert out.shape == (N,), out.shape
    # Tight check vs a reference with identical bf16/f32 casting.
    assert jnp.allclose(out, ref_bf16, atol=2e-2, rtol=2e-2), "mismatch vs bf16 ref"
    # Loose check vs the pure-f32 reference (bf16 MXU operands).
    assert jnp.allclose(out, ref_f32, atol=5e-2, rtol=5e-2), "mismatch vs f32 ref"
    print("KERNEL_OK")
</pallas_src>

<mosaic_0001>
module attributes {stable_mosaic.version = 11 : i64} {
  func.func @_support_kernel(%arg0: i32, %arg1: memref<256x128xbf16, #tpu.memory_space<vmem>>, %arg2: memref<128x256xbf16, #tpu.memory_space<vmem>>, %arg3: memref<256x256xbf16, #tpu.memory_space<vmem>>) attributes {dimension_semantics = [#tpu.dimension_semantics<parallel>], iteration_bounds = array<i64: 2>, scalar_prefetch = 0 : i64, scratch_operands = 0 : i64, tpu.core_type = #tpu.core_type<tc>, window_params = [{transform_indices = @transform_0, window_bounds = array<i64: 256, 128>}, {pipeline_mode = #tpu.pipeline_mode<synchronous>, transform_indices = @transform_1, window_bounds = array<i64: 128, 256>}, {transform_indices = @transform_2, window_bounds = array<i64: 256, 256>}]} {
    %c0 = arith.constant 0 : index
    %c0_0 = arith.constant 0 : index
    %0 = vector.load %arg1[%c0, %c0_0] : memref<256x128xbf16, #tpu.memory_space<vmem>>, vector<256x128xbf16>
    %c0_1 = arith.constant 0 : index
    %c0_2 = arith.constant 0 : index
    %1 = vector.load %arg2[%c0_1, %c0_2] : memref<128x256xbf16, #tpu.memory_space<vmem>>, vector<128x256xbf16>
    %cst = arith.constant dense<0.000000e+00> : vector<256x256xf32>
    %2 = tpu.matmul %0, %1, %cst {dimension_numbers = #tpu.dot_dimension_numbers<[1], [0], [0], [1], [0, 0, 1, 1], [], []>} : vector<256x128xbf16>, vector<128x256xbf16>, vector<256x256xf32> -> vector<256x256xf32>
    %3 = arith.truncf %2 : vector<256x256xf32> to vector<256x256xbf16>
    %c0_3 = arith.constant 0 : index
    %c0_4 = arith.constant 0 : index
    %4 = vector.load %arg3[%c0_3, %c0_4] : memref<256x256xbf16, #tpu.memory_space<vmem>>, vector<256x256xbf16>
    tpu.vector_store %arg3[%c0_3, %c0_4], %3 {strides = array<i32>} : memref<256x256xbf16, #tpu.memory_space<vmem>>, vector<256x256xbf16>,
    return
  }
  func.func @transform_0(%arg0: i32) -> (i32, i32) {
    %c0_i32 = arith.constant 0 : i32
    %c0_i32_0 = arith.constant 0 : i32
    return %arg0, %c0_i32 : i32, i32
  }
  func.func @transform_1(%arg0: i32) -> (i32, i32) {
    %c0_i32 = arith.constant 0 : i32
    %c0_i32_0 = arith.constant 0 : i32
    %c0_i32_1 = arith.constant 0 : i32
    return %c0_i32, %c0_i32_0 : i32, i32
  }
  func.func @transform_2(%arg0: i32) -> (i32, i32) {
    %c0_i32 = arith.constant 0 : i32
    %c0_i32_0 = arith.constant 0 : i32
    return %arg0, %c0_i32 : i32, i32
  }
}

module attributes {stable_mosaic.version = 11 : i64} {
  func.func @_agg_fuse_kernel(%arg0: i32, %arg1: i32, %arg2: memref<256x256xbf16, #tpu.memory_space<vmem>>, %arg3: memref<256x256xbf16, #tpu.memory_space<vmem>>, %arg4: memref<256x384xbf16, #tpu.memory_space<vmem>>, %arg5: memref<256x384xbf16, #tpu.memory_space<vmem>>, %arg6: memref<256x256xf32, #tpu.memory_space<vmem>>) attributes {dimension_semantics = [#tpu.dimension_semantics<parallel>, #tpu.dimension_semantics<arbitrary>], iteration_bounds = array<i64: 2, 2>, scalar_prefetch = 0 : i64, scratch_operands = 1 : i64, tpu.core_type = #tpu.core_type<tc>, window_params = [{transform_indices = @transform_0, window_bounds = array<i64: 256, 256>}, {transform_indices = @transform_1, window_bounds = array<i64: 256, 256>}, {pipeline_mode = #tpu.pipeline_mode<synchronous>, transform_indices = @transform_2, window_bounds = array<i64: 256, 384>}, {transform_indices = @transform_3, window_bounds = array<i64: 256, 384>}]} {
    %c0_i32 = arith.constant 0 : i32
    %0 = arith.cmpi eq, %arg1, %c0_i32 : i32
    %1 = arith.extui %0 : i1 to i32
    %c0_i32_0 = arith.constant 0 : i32
    %2 = arith.cmpi ne, %1, %c0_i32_0 : i32
    scf.if %2 {
      %cst_9 = arith.constant 0.000000e+00 : f32
      %12 = vector.broadcast %cst_9 : f32 to vector<256x256xf32>
      %c0_10 = arith.constant 0 : index
      %c0_11 = arith.constant 0 : index
      %13 = vector.load %arg6[%c0_10, %c0_11] : memref<256x256xf32, #tpu.memory_space<vmem>>, vector<256x256xf32>
      tpu.vector_store %arg6[%c0_10, %c0_11], %12 {strides = array<i32>} : memref<256x256xf32, #tpu.memory_space<vmem>>, vector<256x256xf32>,
    } else {
    }
    %c0 = arith.constant 0 : index
    %c0_1 = arith.constant 0 : index
    %3 = vector.load %arg6[%c0, %c0_1] : memref<256x256xf32, #tpu.memory_space<vmem>>, vector<256x256xf32>
    %c0_2 = arith.constant 0 : index
    %c0_3 = arith.constant 0 : index
    %4 = vector.load %arg2[%c0_2, %c0_3] : memref<256x256xbf16, #tpu.memory_space<vmem>>, vector<256x256xbf16>
    %c0_4 = arith.constant 0 : index
    %c0_5 = arith.constant 0 : index
    %5 = vector.load %arg3[%c0_4, %c0_5] : memref<256x256xbf16, #tpu.memory_space<vmem>>, vector<256x256xbf16>
    %cst = arith.constant dense<0.000000e+00> : vector<256x256xf32>
    %6 = tpu.matmul %4, %5, %cst {dimension_numbers = #tpu.dot_dimension_numbers<[1], [0], [0], [1], [0, 0, 1, 1], [], []>} : vector<256x256xbf16>, vector<256x256xbf16>, vector<256x256xf32> -> vector<256x256xf32>
    %7 = arith.addf %3, %6 : vector<256x256xf32>
    %c0_6 = arith.constant 0 : index
    %c0_7 = arith.constant 0 : index
    %8 = vector.load %arg6[%c0_6, %c0_7] : memref<256x256xf32, #tpu.memory_space<vmem>>, vector<256x256xf32>
    tpu.vector_store %arg6[%c0_6, %c0_7], %7 {strides = array<i32>} : memref<256x256xf32, #tpu.memory_space<vmem>>, vector<256x256xf32>,
    %c1_i32 = arith.constant 1 : i32
    %9 = arith.cmpi eq, %arg1, %c1_i32 : i32
    %10 = arith.extui %9 : i1 to i32
    %c0_i32_8 = arith.constant 0 : i32
    %11 = arith.cmpi ne, %10, %c0_i32_8 : i32
    scf.if %11 {
      %c0_9 = arith.constant 0 : index
      %c0_10 = arith.constant 0 : index
      %12 = vector.load %arg6[%c0_9, %c0_10] : memref<256x256xf32, #tpu.memory_space<vmem>>, vector<256x256xf32>
      %cst_11 = arith.constant 0.000000e+00 : f32
      %13 = vector.broadcast %cst_11 : f32 to vector<256x256xf32>
      %14 = arith.maximumf %12, %13 : vector<256x256xf32>
      %15 = arith.truncf %14 : vector<256x256xf32> to vector<256x256xbf16>
      %c0_12 = arith.constant 0 : index
      %c0_13 = arith.constant 0 : index
      %16 = vector.load %arg4[%c0_12, %c0_13] : memref<256x384xbf16, #tpu.memory_space<vmem>>, vector<256x384xbf16>
      %cst_14 = arith.constant dense<0.000000e+00> : vector<256x384xf32>
      %17 = tpu.matmul %15, %16, %cst_14 {dimension_numbers = #tpu.dot_dimension_numbers<[1], [0], [0], [1], [0, 0, 1, 1], [], []>} : vector<256x256xbf16>, vector<256x384xbf16>, vector<256x384xf32> -> vector<256x384xf32>
      %18 = arith.truncf %17 : vector<256x384xf32> to vector<256x384xbf16>
      %c0_15 = arith.constant 0 : index
      %c0_16 = arith.constant 0 : index
      %19 = vector.load %arg5[%c0_15, %c0_16] : memref<256x384xbf16, #tpu.memory_space<vmem>>, vector<256x384xbf16>
      tpu.vector_store %arg5[%c0_15, %c0_16], %18 {strides = array<i32>} : memref<256x384xbf16, #tpu.memory_space<vmem>>, vector<256x384xbf16>,
    } else {
    }
    return
  }
  func.func @transform_0(%arg0: i32, %arg1: i32) -> (i32, i32) {
    %c0_i32 = arith.constant 0 : i32
    return %arg0, %arg1 : i32, i32
  }
  func.func @transform_1(%arg0: i32, %arg1: i32) -> (i32, i32) {
    %c0_i32 = arith.constant 0 : i32
    %c0_i32_0 = arith.constant 0 : i32
    return %arg1, %c0_i32 : i32, i32
  }
  func.func @transform_2(%arg0: i32, %arg1: i32) -> (i32, i32) {
    %c0_i32 = arith.constant 0 : i32
    %c0_i32_0 = arith.constant 0 : i32
    %c0_i32_1 = arith.constant 0 : i32
    return %c0_i32, %c0_i32_0 : i32, i32
  }
  func.func @transform_3(%arg0: i32, %arg1: i32) -> (i32, i32) {
    %c0_i32 = arith.constant 0 : i32
    %c0_i32_0 = arith.constant 0 : i32
    return %arg0, %c0_i32 : i32, i32
  }
}

module attributes {stable_mosaic.version = 11 : i64} {
  func.func @_agg_fuse_kernel(%arg0: i32, %arg1: i32, %arg2: memref<256x256xbf16, #tpu.memory_space<vmem>>, %arg3: memref<256x384xbf16, #tpu.memory_space<vmem>>, %arg4: memref<384x256xbf16, #tpu.memory_space<vmem>>, %arg5: memref<256x256xbf16, #tpu.memory_space<vmem>>, %arg6: memref<256x384xf32, #tpu.memory_space<vmem>>) attributes {dimension_semantics = [#tpu.dimension_semantics<parallel>, #tpu.dimension_semantics<arbitrary>], iteration_bounds = array<i64: 2, 2>, scalar_prefetch = 0 : i64, scratch_operands = 1 : i64, tpu.core_type = #tpu.core_type<tc>, window_params = [{transform_indices = @transform_0, window_bounds = array<i64: 256, 256>}, {transform_indices = @transform_1, window_bounds = array<i64: 256, 384>}, {pipeline_mode = #tpu.pipeline_mode<synchronous>, transform_indices = @transform_2, window_bounds = array<i64: 384, 256>}, {transform_indices = @transform_3, window_bounds = array<i64: 256, 256>}]} {
    %c0_i32 = arith.constant 0 : i32
    %0 = arith.cmpi eq, %arg1, %c0_i32 : i32
    %1 = arith.extui %0 : i1 to i32
    %c0_i32_0 = arith.constant 0 : i32
    %2 = arith.cmpi ne, %1, %c0_i32_0 : i32
    scf.if %2 {
      %cst_9 = arith.constant 0.000000e+00 : f32
      %12 = vector.broadcast %cst_9 : f32 to vector<256x384xf32>
      %c0_10 = arith.constant 0 : index
      %c0_11 = arith.constant 0 : index
      %13 = vector.load %arg6[%c0_10, %c0_11] : memref<256x384xf32, #tpu.memory_space<vmem>>, vector<256x384xf32>
      tpu.vector_store %arg6[%c0_10, %c0_11], %12 {strides = array<i32>} : memref<256x384xf32, #tpu.memory_space<vmem>>, vector<256x384xf32>,
    } else {
    }
    %c0 = arith.constant 0 : index
    %c0_1 = arith.constant 0 : index
    %3 = vector.load %arg6[%c0, %c0_1] : memref<256x384xf32, #tpu.memory_space<vmem>>, vector<256x384xf32>
    %c0_2 = arith.constant 0 : index
    %c0_3 = arith.constant 0 : index
    %4 = vector.load %arg2[%c0_2, %c0_3] : memref<256x256xbf16, #tpu.memory_space<vmem>>, vector<256x256xbf16>
    %c0_4 = arith.constant 0 : index
    %c0_5 = arith.constant 0 : index
    %5 = vector.load %arg3[%c0_4, %c0_5] : memref<256x384xbf16, #tpu.memory_space<vmem>>, vector<256x384xbf16>
    %cst = arith.constant dense<0.000000e+00> : vector<256x384xf32>
    %6 = tpu.matmul %4, %5, %cst {dimension_numbers = #tpu.dot_dimension_numbers<[1], [0], [0], [1], [0, 0, 1, 1], [], []>} : vector<256x256xbf16>, vector<256x384xbf16>, vector<256x384xf32> -> vector<256x384xf32>
    %7 = arith.addf %3, %6 : vector<256x384xf32>
    %c0_6 = arith.constant 0 : index
    %c0_7 = arith.constant 0 : index
    %8 = vector.load %arg6[%c0_6, %c0_7] : memref<256x384xf32, #tpu.memory_space<vmem>>, vector<256x384xf32>
    tpu.vector_store %arg6[%c0_6, %c0_7], %7 {strides = array<i32>} : memref<256x384xf32, #tpu.memory_space<vmem>>, vector<256x384xf32>,
    %c1_i32 = arith.constant 1 : i32
    %9 = arith.cmpi eq, %arg1, %c1_i32 : i32
    %10 = arith.extui %9 : i1 to i32
    %c0_i32_8 = arith.constant 0 : i32
    %11 = arith.cmpi ne, %10, %c0_i32_8 : i32
    scf.if %11 {
      %c0_9 = arith.constant 0 : index
      %c0_10 = arith.constant 0 : index
      %12 = vector.load %arg6[%c0_9, %c0_10] : memref<256x384xf32, #tpu.memory_space<vmem>>, vector<256x384xf32>
      %cst_11 = arith.constant 0.000000e+00 : f32
      %13 = vector.broadcast %cst_11 : f32 to vector<256x384xf32>
      %14 = arith.maximumf %12, %13 : vector<256x384xf32>
      %15 = arith.truncf %14 : vector<256x384xf32> to vector<256x384xbf16>
      %c0_12 = arith.constant 0 : index
      %c0_13 = arith.constant 0 : index
      %16 = vector.load %arg4[%c0_12, %c0_13] : memref<384x256xbf16, #tpu.memory_space<vmem>>, vector<384x256xbf16>
      %cst_14 = arith.constant dense<0.000000e+00> : vector<256x256xf32>
      %17 = tpu.matmul %15, %16, %cst_14 {dimension_numbers = #tpu.dot_dimension_numbers<[1], [0], [0], [1], [0, 0, 1, 1], [], []>} : vector<256x384xbf16>, vector<384x256xbf16>, vector<256x256xf32> -> vector<256x256xf32>
      %18 = arith.truncf %17 : vector<256x256xf32> to vector<256x256xbf16>
      %c0_15 = arith.constant 0 : index
      %c0_16 = arith.constant 0 : index
      %19 = vector.load %arg5[%c0_15, %c0_16] : memref<256x256xbf16, #tpu.memory_space<vmem>>, vector<256x256xbf16>
      tpu.vector_store %arg5[%c0_15, %c0_16], %18 {strides = array<i32>} : memref<256x256xbf16, #tpu.memory_space<vmem>>, vector<256x256xbf16>,
    } else {
    }
    return
  }
  func.func @transform_0(%arg0: i32, %arg1: i32) -> (i32, i32) {
    %c0_i32 = arith.constant 0 : i32
    return %arg0, %arg1 : i32, i32
  }
  func.func @transform_1(%arg0: i32, %arg1: i32) -> (i32, i32) {
    %c0_i32 = arith.constant 0 : i32
    %c0_i32_0 = arith.constant 0 : i32
    return %arg1, %c0_i32 : i32, i32
  }
  func.func @transform_2(%arg0: i32, %arg1: i32) -> (i32, i32) {
    %c0_i32 = arith.constant 0 : i32
    %c0_i32_0 = arith.constant 0 : i32
    %c0_i32_1 = arith.constant 0 : i32
    return %c0_i32, %c0_i32_0 : i32, i32
  }
  func.func @transform_3(%arg0: i32, %arg1: i32) -> (i32, i32) {
    %c0_i32 = arith.constant 0 : i32
    %c0_i32_0 = arith.constant 0 : i32
    return %arg0, %c0_i32 : i32, i32
  }
}

module attributes {stable_mosaic.version = 11 : i64} {
  func.func @_agg_head_kernel(%arg0: i32, %arg1: i32, %arg2: memref<256x256xbf16, #tpu.memory_space<vmem>>, %arg3: memref<256x256xbf16, #tpu.memory_space<vmem>>, %arg4: memref<256x128xbf16, #tpu.memory_space<vmem>>, %arg5: memref<1x128xf32, #tpu.memory_space<vmem>>, %arg6: memref<1x128xf32, #tpu.memory_space<vmem>>, %arg7: memref<1x1xf32, #tpu.memory_space<smem>>, %arg8: memref<256x128xf32, #tpu.memory_space<vmem>>, %arg9: memref<256x256xf32, #tpu.memory_space<vmem>>) attributes {dimension_semantics = [#tpu.dimension_semantics<parallel>, #tpu.dimension_semantics<arbitrary>], iteration_bounds = array<i64: 2, 2>, scalar_prefetch = 0 : i64, scratch_operands = 1 : i64, tpu.core_type = #tpu.core_type<tc>, window_params = [{transform_indices = @transform_0, window_bounds = array<i64: 256, 256>}, {transform_indices = @transform_1, window_bounds = array<i64: 256, 256>}, {pipeline_mode = #tpu.pipeline_mode<synchronous>, transform_indices = @transform_2, window_bounds = array<i64: 256, 128>}, {pipeline_mode = #tpu.pipeline_mode<synchronous>, transform_indices = @transform_3, window_bounds = array<i64: 1, 128>}, {pipeline_mode = #tpu.pipeline_mode<synchronous>, transform_indices = @transform_4, window_bounds = array<i64: 1, 128>}, {transform_indices = @transform_5, window_bounds = array<i64: 1, 1>}, {transform_indices = @transform_6, window_bounds = array<i64: 256, 128>}]} {
    %c0_i32 = arith.constant 0 : i32
    %0 = arith.cmpi eq, %arg1, %c0_i32 : i32
    %1 = arith.extui %0 : i1 to i32
    %c0_i32_0 = arith.constant 0 : i32
    %2 = arith.cmpi ne, %1, %c0_i32_0 : i32
    scf.if %2 {
      %cst_9 = arith.constant 0.000000e+00 : f32
      %12 = vector.broadcast %cst_9 : f32 to vector<256x256xf32>
      %c0_10 = arith.constant 0 : index
      %c0_11 = arith.constant 0 : index
      %13 = vector.load %arg9[%c0_10, %c0_11] : memref<256x256xf32, #tpu.memory_space<vmem>>, vector<256x256xf32>
      tpu.vector_store %arg9[%c0_10, %c0_11], %12 {strides = array<i32>} : memref<256x256xf32, #tpu.memory_space<vmem>>, vector<256x256xf32>,
    } else {
    }
    %c0 = arith.constant 0 : index
    %c0_1 = arith.constant 0 : index
    %3 = vector.load %arg9[%c0, %c0_1] : memref<256x256xf32, #tpu.memory_space<vmem>>, vector<256x256xf32>
    %c0_2 = arith.constant 0 : index
    %c0_3 = arith.constant 0 : index
    %4 = vector.load %arg2[%c0_2, %c0_3] : memref<256x256xbf16, #tpu.memory_space<vmem>>, vector<256x256xbf16>
    %c0_4 = arith.constant 0 : index
    %c0_5 = arith.constant 0 : index
    %5 = vector.load %arg3[%c0_4, %c0_5] : memref<256x256xbf16, #tpu.memory_space<vmem>>, vector<256x256xbf16>
    %cst = arith.constant dense<0.000000e+00> : vector<256x256xf32>
    %6 = tpu.matmul %4, %5, %cst {dimension_numbers = #tpu.dot_dimension_numbers<[1], [0], [0], [1], [0, 0, 1, 1], [], []>} : vector<256x256xbf16>, vector<256x256xbf16>, vector<256x256xf32> -> vector<256x256xf32>
    %7 = arith.addf %3, %6 : vector<256x256xf32>
    %c0_6 = arith.constant 0 : index
    %c0_7 = arith.constant 0 : index
    %8 = vector.load %arg9[%c0_6, %c0_7] : memref<256x256xf32, #tpu.memory_space<vmem>>, vector<256x256xf32>
    tpu.vector_store %arg9[%c0_6, %c0_7], %7 {strides = array<i32>} : memref<256x256xf32, #tpu.memory_space<vmem>>, vector<256x256xf32>,
    %c1_i32 = arith.constant 1 : i32
    %9 = arith.cmpi eq, %arg1, %c1_i32 : i32
    %10 = arith.extui %9 : i1 to i32
    %c0_i32_8 = arith.constant 0 : i32
    %11 = arith.cmpi ne, %10, %c0_i32_8 : i32
    scf.if %11 {
      %c0_9 = arith.constant 0 : index
      %c0_10 = arith.constant 0 : index
      %12 = vector.load %arg9[%c0_9, %c0_10] : memref<256x256xf32, #tpu.memory_space<vmem>>, vector<256x256xf32>
      %cst_11 = arith.constant 0.000000e+00 : f32
      %13 = vector.broadcast %cst_11 : f32 to vector<256x256xf32>
      %14 = arith.maximumf %12, %13 : vector<256x256xf32>
      %15 = arith.truncf %14 : vector<256x256xf32> to vector<256x256xbf16>
      %c0_12 = arith.constant 0 : index
      %c0_13 = arith.constant 0 : index
      %16 = vector.load %arg4[%c0_12, %c0_13] : memref<256x128xbf16, #tpu.memory_space<vmem>>, vector<256x128xbf16>
      %cst_14 = arith.constant dense<0.000000e+00> : vector<256x128xf32>
      %17 = tpu.matmul %15, %16, %cst_14 {dimension_numbers = #tpu.dot_dimension_numbers<[1], [0], [0], [1], [0, 0, 1, 1], [], []>} : vector<256x256xbf16>, vector<256x128xbf16>, vector<256x128xf32> -> vector<256x128xf32>
      %c0_15 = arith.constant 0 : index
      %c0_16 = arith.constant 0 : index
      %18 = vector.load %arg5[%c0_15, %c0_16] : memref<1x128xf32, #tpu.memory_space<vmem>>, vector<1x128xf32>
      %19 = vector.broadcast %18 : vector<1x128xf32> to vector<256x128xf32>
      %20 = arith.addf %17, %19 : vector<256x128xf32>
      %cst_17 = arith.constant 0.000000e+00 : f32
      %21 = vector.broadcast %cst_17 : f32 to vector<256x128xf32>
      %22 = arith.maximumf %20, %21 : vector<256x128xf32>
      %c0_18 = arith.constant 0 : index
      %c0_19 = arith.constant 0 : index
      %23 = vector.load %arg6[%c0_18, %c0_19] : memref<1x128xf32, #tpu.memory_space<vmem>>, vector<1x128xf32>
      %24 = vector.broadcast %23 : vector<1x128xf32> to vector<256x128xf32>
      %25 = arith.mulf %22, %24 : vector<256x128xf32>
      %cst_20 = arith.constant dense<0.000000e+00> : vector<256xf32>
      %26 = vector.multi_reduction <add>, %25, %cst_20 [1] : vector<256x128xf32> to vector<256xf32>
      %27 = vector.shape_cast %26 : vector<256xf32> to vector<256x1xf32>
      %c0_21 = arith.constant 0 : index
      %c0_22 = arith.constant 0 : index
      %28 = memref.load %arg7[%c0_21, %c0_22] : memref<1x1xf32, #tpu.memory_space<smem>>
      %29 = vector.broadcast %28 : f32 to vector<256x1xf32>
      %30 = arith.addf %27, %29 : vector<256x1xf32>
      %cst_23 = arith.constant 0.000000e+00 : f32
      %31 = vector.broadcast %cst_23 : f32 to vector<256x1xf32>
      %32 = arith.maximumf %30, %31 : vector<256x1xf32>
      %33 = vector.shape_cast %32 : vector<256x1xf32> to vector<256x1xf32>
      %34 = vector.broadcast %33 : vector<256x1xf32> to vector<256x128xf32>
      %c0_24 = arith.constant 0 : index
      %c0_25 = arith.constant 0 : index
      %35 = vector.load %arg8[%c0_24, %c0_25] : memref<256x128xf32, #tpu.memory_space<vmem>>, vector<256x128xf32>
      tpu.vector_store %arg8[%c0_24, %c0_25], %34 {strides = array<i32>} : memref<256x128xf32, #tpu.memory_space<vmem>>, vector<256x128xf32>,
    } else {
    }
    return
  }
  func.func @transform_0(%arg0: i32, %arg1: i32) -> (i32, i32) {
    %c0_i32 = arith.constant 0 : i32
    return %arg0, %arg1 : i32, i32
  }
  func.func @transform_1(%arg0: i32, %arg1: i32) -> (i32, i32) {
    %c0_i32 = arith.constant 0 : i32
    %c0_i32_0 = arith.constant 0 : i32
    return %arg1, %c0_i32 : i32, i32
  }
  func.func @transform_2(%arg0: i32, %arg1: i32) -> (i32, i32) {
    %c0_i32 = arith.constant 0 : i32
    %c0_i32_0 = arith.constant 0 : i32
    %c0_i32_1 = arith.constant 0 : i32
    return %c0_i32, %c0_i32_0 : i32, i32
  }
  func.func @transform_3(%arg0: i32, %arg1: i32) -> (i32, i32) {
    %c0_i32 = arith.constant 0 : i32
    %c0_i32_0 = arith.constant 0 : i32
    %c0_i32_1 = arith.constant 0 : i32
    return %c0_i32, %c0_i32_0 : i32, i32
  }
  func.func @transform_4(%arg0: i32, %arg1: i32) -> (i32, i32) {
    %c0_i32 = arith.constant 0 : i32
    %c0_i32_0 = arith.constant 0 : i32
    %c0_i32_1 = arith.constant 0 : i32
    return %c0_i32, %c0_i32_0 : i32, i32
  }
  func.func @transform_5(%arg0: i32, %arg1: i32) -> (i32, i32) {
    %c0_i32 = arith.constant 0 : i32
    %c0_i32_0 = arith.constant 0 : i32
    %c0_i32_1 = arith.constant 0 : i32
    return %c0_i32, %c0_i32_0 : i32, i32
  }
  func.func @transform_6(%arg0: i32, %arg1: i32) -> (i32, i32) {
    %c0_i32 = arith.constant 0 : i32
    %c0_i32_0 = arith.constant 0 : i32
    return %arg0, %c0_i32 : i32, i32
  }
}

</mosaic_0001>

<llo_original>
// kernel: _lambda_.4
$region0: #{_lambda_.4}
  #allocation0 [shape = 'u32[]', space=smem, size = 0x4, offset = 0x4, fixed_abs, tag = 'smem constant byte address 0x4 - core index']
  #allocation1 [shape = 'u32[72,128]{1,0:T(1,128)}', space=vmem, size = 0x9000, scoped, tag = 'internal scratch']
  %s0 = inlined_call_operand.vmem [shape: bf16[512,128], index: 0, kind: input, shape index: {}]
  %s1 = inlined_call_operand.vmem [shape: bf16[128,256], index: 1, kind: input, shape index: {}]
  %s2 = inlined_call_operand.vmem [shape: bf16[512,256], index: 2, kind: output, shape index: {}]
  %s3 = sld [smem:[#allocation0]]
  $region41: #{_lambda_.4} parent=0
    _
  %s5 = ssub.s32 1, %s3
  %s6 = scalar_select 0, %s5, %s3
  loop: start=0, step=1, limit=4
  $region2: #{_lambda_.4} parent=0 // loop_pre_header
    _
  $region3: #{_lambda_.4} parent=0 // loop_header
    %s8 = sphi 0, %s12
    %p9 = scmp.ge.s32.totalorder %s8, 4
    %s18 = sphi 0, %s20
    %s21 = sphi 0, %s18
    %s22 = sphi 0, %s21
    %s38 = sphi 0, %s22
    %s42 = sphi 0, %s42
    %s44 = sphi 0, %s42
    %s45 = sphi 0, %s44
    %s59 = sphi 0, %s45
    %s65 = sphi 0, %s67
    %s68 = sphi 0, %s65
    %s69 = sphi 0, %s68
    %s85 = sphi 0, %s69
  $region4: #{_lambda_.4} parent=0 // loop_header_branch
    %11 = sbr.rel (%p9) target = $region8
  $region5: #{_lambda_.4} parent=0 // loop_body
    %s13 = ssub.s32 %s8, 1
    %s14 = ssub.s32 %s8, 2
    %s15 = sadd.s32 %s8, 1
    %s16 = ssub.s32 %s8, %s15
    %p17 = scmp.eq.s32.totalorder %s16, 0
    %s19 = sadd.s32 %s18, 1
    %s20 = scalar_select %p17, %s18, %s19
    %p23 = pneg %p17
    %p24 = scmp.eq.s32.totalorder %s8, 1
    %p25 = por %p23, %p24
    %p26 = scmp.ne.s32.totalorder %s18, %s21
    %p27 = scmp.eq.s32.totalorder %s8, 0
    %p28 = por %p26, %p27
    %p29 = scmp.ne.s32.totalorder %s18, %s21
    %p30 = scmp.eq.s32.totalorder %s13, 1
    %p31 = por %p29, %p30
    %p32 = scmp.ne.s32.totalorder %s21, %s22
    %p33 = scmp.eq.s32.totalorder %s13, 0
    %p34 = por %p32, %p33
    %p35 = scmp.ne.s32.totalorder %s21, %s22
    %p36 = scmp.eq.s32.totalorder %s14, 1
    %p37 = por %p35, %p36
    %p39 = scmp.ne.s32.totalorder %s22, %s38
    %p40 = scmp.eq.s32.totalorder %s14, 0
    %p41 = por %p39, %p40
    %s43 = sadd.s32 %s42, 1
    %p46 = scmp.eq.s32.totalorder %s8, 1
    %p47 = scmp.ne.s32.totalorder %s42, %s44
    %p48 = scmp.eq.s32.totalorder %s8, 0
    %p49 = por %p47, %p48
    %p50 = scmp.ne.s32.totalorder %s42, %s44
    %p51 = scmp.eq.s32.totalorder %s13, 1
    %p52 = por %p50, %p51
    %p53 = scmp.ne.s32.totalorder %s44, %s45
    %p54 = scmp.eq.s32.totalorder %s13, 0
    %p55 = por %p53, %p54
    %p56 = scmp.ne.s32.totalorder %s44, %s45
    %p57 = scmp.eq.s32.totalorder %s14, 1
    %p58 = por %p56, %p57
    %p60 = scmp.ne.s32.totalorder %s45, %s59
    %p61 = scmp.eq.s32.totalorder %s14, 0
    %p62 = por %p60, %p61
    %s63 = ssub.s32 %s8, %s15
    %p64 = scmp.eq.s32.totalorder %s63, 0
    %s66 = sadd.s32 %s65, 1
    %s67 = scalar_select %p64, %s65, %s66
    %p70 = pneg %p64
    %p71 = scmp.eq.s32.totalorder %s8, 1
    %p72 = por %p70, %p71
    %p73 = scmp.ne.s32.totalorder %s65, %s68
    %p74 = scmp.eq.s32.totalorder %s8, 0
    %p75 = por %p73, %p74
    %p76 = scmp.ne.s32.totalorder %s65, %s68
    %p77 = scmp.eq.s32.totalorder %s13, 1
    %p78 = por %p76, %p77
    %p79 = scmp.ne.s32.totalorder %s68, %s69
    %p80 = scmp.eq.s32.totalorder %s13, 0
    %p81 = por %p79, %p80
    %p82 = scmp.ne.s32.totalorder %s68, %s69
    %p83 = scmp.eq.s32.totalorder %s14, 1
    %p84 = por %p82, %p83
    %p86 = scmp.ne.s32.totalorder %s69, %s85
    %p87 = scmp.eq.s32.totalorder %s14, 0
    %p88 = por %p86, %p87
    %p89 = scmp.le.s32.totalorder 1, %s8
    %p90 = scmp.lt.s32.totalorder %s8, 3
    %p91 = pnand %p89, %p90
    %p92 = pneg %p91
    // Predicated region
    $region9: #{_lambda_.4} parent=5 // pred_check
      _
    $region10: #{_lambda_.4} parent=5 // pred_check_branch
      %94 = sbr.rel (%p91) target = $region12
    $region11: #{_lambda_.4} parent=5 // pred_region
      %s95 = ssub.s32 %s8, 1
      // Predicated region
      $region13: #{_lambda_.4} parent=11 // pred_check
        %p96 = pneg %p55
      $region14: #{_lambda_.4} parent=11 // pred_check_branch
        %98 = sbr.rel (%p96) target = $region16
      $region15: #{_lambda_.4} parent=11 // pred_region
        _
      $region16: #{_lambda_.4} parent=11 // pred_fallthru
        _
    $region12: #{_lambda_.4} parent=5 // pred_fallthru
      _
    %p99 = scmp.lt.s32.totalorder %s8, 2
    // Predicated region
    $region17: #{_lambda_.4} parent=5 // pred_check
      %p100 = pneg %p99
    $region18: #{_lambda_.4} parent=5 // pred_check_branch
      %102 = sbr.rel (%p100) target = $region20
    $region19: #{_lambda_.4} parent=5 // pred_region
      // Predicated region
      $region21: #{_lambda_.4} parent=19 // pred_check
        %p103 = pneg %p28
      $region22: #{_lambda_.4} parent=19 // pred_check_branch
        %105 = sbr.rel (%p103) target = $region24
      $region23: #{_lambda_.4} parent=19 // pred_region
        %s106 = smul.u32 32, %s8
        %p107 = scmp.lt.s32.totalorder %s106, 63
        %s108 = scalar_select %p107, %s106, 63
        %s109 = smul.addr %s108, 4
        %s110 = scalar_lea.vmem %s0, %s109
        %s111 = smul.u32 32, %s8
      $region24: #{_lambda_.4} parent=19 // pred_fallthru
        _
    $region20: #{_lambda_.4} parent=5 // pred_fallthru
      _
    %p112 = scmp.le.s32.totalorder 1, %s8
    %p113 = scmp.lt.s32.totalorder %s8, 3
    %p114 = pnand %p112, %p113
    %p115 = pneg %p114
    // Predicated region
    $region25: #{_lambda_.4} parent=5 // pred_check
      _
    $region26: #{_lambda_.4} parent=5 // pred_check_branch
      %117 = sbr.rel (%p114) target = $region28
    $region27: #{_lambda_.4} parent=5 // pred_region
      %s118 = ssub.s32 %s8, 1
      %s119 = smul.u32 32, %s13
      %p120 = scmp.lt.s32.totalorder %s119, 63
      %s121 = scalar_select %p120, %s119, 63
      %s122 = smul.addr %s121, 4
      %s123 = scalar_lea.vmem %s0, %s122
      %p124 = pneg %p34
      %p125 = pneg %p31
      %p126 = pneg %p55
      %p127 = pneg %p52
      %p128 = pneg %p81
      %p129 = pneg %p78
      %s130 = smul.u32 32, %s13
      %p131 = scmp.lt.s32.totalorder %s130, 63
      %s132 = scalar_select %p131, %s130, 63
      %s133 = smul.addr %s132, 2
      %s134 = smul.addr %s133, 4
      %s135 = scalar_lea.vmem %s2, %s134
      %s136 = smul.u32 32, %s13
      %p137 = scmp.lt.s32.totalorder %s136, 63
      %s138 = scalar_select %p137, %s136, 63
      %s139 = smul.addr %s138, 4
      %s140 = scalar_lea.vmem %s0, %s139
      %s141 = smul.u32 32, %s13
      %s142 = smul.u32 32, %s13
      %p143 = scmp.lt.s32.totalorder %s142, 63
      %s144 = scalar_select %p143, %s142, 63
      %s145 = smul.addr %s144, 2
      %s146 = smul.addr %s145, 4
      %s147 = scalar_lea.vmem %s2, %s146
      %s148 = smul.u32 32, %s13
      %v149 = vld [vmem:[%s140] sm:$0xf]
      %v150 = vld [vmem:[%s140 + $0x4] sm:$0xf]
      %v151 = vld [vmem:[%s140 + $0x8] sm:$0xf]
      %v152 = vld [vmem:[%s140 + $0xc] sm:$0xf]
      %v153 = vld [vmem:[%s140 + $0x10] sm:$0xf]
      %v154 = vld [vmem:[%s140 + $0x14] sm:$0xf]
      %v155 = vld [vmem:[%s140 + $0x18] sm:$0xf]
      %v156 = vld [vmem:[%s140 + $0x1c] sm:$0xf]
      %v157 = vld [vmem:[%s140 + $0x20] sm:$0xf]
      %v158 = vld [vmem:[%s140 + $0x24] sm:$0xf]
      %v159 = vld [vmem:[%s140 + $0x28] sm:$0xf]
      %v160 = vld [vmem:[%s140 + $0x2c] sm:$0xf]
      %v161 = vld [vmem:[%s140 + $0x30] sm:$0xf]
      %v162 = vld [vmem:[%s140 + $0x34] sm:$0xf]
      %v163 = vld [vmem:[%s140 + $0x38] sm:$0xf]
      %v164 = vld [vmem:[%s140 + $0x3c] sm:$0xf]
      %v165 = vld [vmem:[%s140 + $0x40] sm:$0xf]
      %v166 = vld [vmem:[%s140 + $0x44] sm:$0xf]
      %v167 = vld [vmem:[%s140 + $0x48] sm:$0xf]
      %v168 = vld [vmem:[%s140 + $0x4c] sm:$0xf]
      %v169 = vld [vmem:[%s140 + $0x50] sm:$0xf]
      %v170 = vld [vmem:[%s140 + $0x54] sm:$0xf]
      %v171 = vld [vmem:[%s140 + $0x58] sm:$0xf]
      %v172 = vld [vmem:[%s140 + $0x5c] sm:$0xf]
      %v173 = vld [vmem:[%s140 + $0x60] sm:$0xf]
      %v174 = vld [vmem:[%s140 + $0x64] sm:$0xf]
      %v175 = vld [vmem:[%s140 + $0x68] sm:$0xf]
      %v176 = vld [vmem:[%s140 + $0x6c] sm:$0xf]
      %v177 = vld [vmem:[%s140 + $0x70] sm:$0xf]
      %v178 = vld [vmem:[%s140 + $0x74] sm:$0xf]
      %v179 = vld [vmem:[%s140 + $0x78] sm:$0xf]
      %v180 = vld [vmem:[%s140 + $0x7c] sm:$0xf]
      %v181 = vld [vmem:[%s1] sm:$0xff]
      %v182 = vld [vmem:[%s1 + $0x8] sm:$0xff]
      %v183 = vld [vmem:[%s1 + $0x10] sm:$0xff]
      %v184 = vld [vmem:[%s1 + $0x18] sm:$0xff]
      %v185 = vld [vmem:[%s1 + $0x20] sm:$0xff]
      %v186 = vld [vmem:[%s1 + $0x28] sm:$0xff]
      %v187 = vld [vmem:[%s1 + $0x30] sm:$0xff]
      %v188 = vld [vmem:[%s1 + $0x38] sm:$0xff]
      %v189 = vld [vmem:[%s1 + $0x40] sm:$0xff]
      %v190 = vld [vmem:[%s1 + $0x48] sm:$0xff]
      %v191 = vld [vmem:[%s1 + $0x50] sm:$0xff]
      %v192 = vld [vmem:[%s1 + $0x58] sm:$0xff]
      %v193 = vld [vmem:[%s1 + $0x60] sm:$0xff]
      %v194 = vld [vmem:[%s1 + $0x68] sm:$0xff]
      %v195 = vld [vmem:[%s1 + $0x70] sm:$0xff]
      %v196 = vld [vmem:[%s1 + $0x78] sm:$0xff]
      %v229 = vunpack.c.l.b16 %v149
      %v230 = vunpack.c.l.b16 %v150
      %v231 = vunpack.c.l.b16 %v151
      %v232 = vunpack.c.l.b16 %v152
      %v233 = vunpack.c.l.b16 %v153
      %v234 = vunpack.c.l.b16 %v154
      %v235 = vunpack.c.l.b16 %v155
      %v236 = vunpack.c.l.b16 %v156
      %v237 = vunpack.c.l.b16 %v157
      %v238 = vunpack.c.l.b16 %v158
      %v239 = vunpack.c.l.b16 %v159
      %v240 = vunpack.c.l.b16 %v160
      %v241 = vunpack.c.l.b16 %v161
      %v242 = vunpack.c.l.b16 %v162
      %v243 = vunpack.c.l.b16 %v163
      %v244 = vunpack.c.l.b16 %v164
      %v245 = vunpack.c.l.b16 %v165
      %v246 = vunpack.c.l.b16 %v166
      %v247 = vunpack.c.l.b16 %v167
      %v248 = vunpack.c.l.b16 %v168
      %v249 = vunpack.c.l.b16 %v169
      %v250 = vunpack.c.l.b16 %v170
      %v251 = vunpack.c.l.b16 %v171
      %v252 = vunpack.c.l.b16 %v172
      %v253 = vunpack.c.l.b16 %v173
      %v254 = vunpack.c.l.b16 %v174
      %v255 = vunpack.c.l.b16 %v175
      %v256 = vunpack.c.l.b16 %v176
      %v257 = vunpack.c.l.b16 %v177
      %v258 = vunpack.c.l.b16 %v178
      %v259 = vunpack.c.l.b16 %v179
      %v260 = vunpack.c.l.b16 %v180
      %v261 = vpack.c.b16 %v230, %v229
      %v262 = vpack.c.b16 %v232, %v231
      %v263 = vpack.c.b16 %v234, %v233
      %v264 = vpack.c.b16 %v236, %v235
      %v265 = vpack.c.b16 %v238, %v237
      %v266 = vpack.c.b16 %v240, %v239
      %v267 = vpack.c.b16 %v242, %v241
      %v268 = vpack.c.b16 %v244, %v243
      %v269 = vpack.c.b16 %v246, %v245
      %v270 = vpack.c.b16 %v248, %v247
      %v271 = vpack.c.b16 %v250, %v249
      %v272 = vpack.c.b16 %v252, %v251
      %v273 = vpack.c.b16 %v254, %v253
      %v274 = vpack.c.b16 %v256, %v255
      %v275 = vpack.c.b16 %v258, %v257
      %v276 = vpack.c.b16 %v260, %v259
      %v309 = vunpack.c.l.b16 %v181
      %v310 = vunpack.c.h.b16 %v181
      %v311 = vunpack.c.l.b16 %v182
      %v312 = vunpack.c.h.b16 %v182
      %v313 = vunpack.c.l.b16 %v183
      %v314 = vunpack.c.h.b16 %v183
      %v315 = vunpack.c.l.b16 %v184
      %v316 = vunpack.c.h.b16 %v184
      %v317 = vunpack.c.l.b16 %v185
      %v318 = vunpack.c.h.b16 %v185
      %v319 = vunpack.c.l.b16 %v186
      %v320 = vunpack.c.h.b16 %v186
      %v321 = vunpack.c.l.b16 %v187
      %v322 = vunpack.c.h.b16 %v187
      %v323 = vunpack.c.l.b16 %v188
      %v324 = vunpack.c.h.b16 %v188
      %v325 = vunpack.c.l.b16 %v189
      %v326 = vunpack.c.h.b16 %v189
      %v327 = vunpack.c.l.b16 %v190
      %v328 = vunpack.c.h.b16 %v190
      %v329 = vunpack.c.l.b16 %v191
      %v330 = vunpack.c.h.b16 %v191
      %v331 = vunpack.c.l.b16 %v192
      %v332 = vunpack.c.h.b16 %v192
      %v333 = vunpack.c.l.b16 %v193
      %v334 = vunpack.c.h.b16 %v193
      %v335 = vunpack.c.l.b16 %v194
      %v336 = vunpack.c.h.b16 %v194
      %v337 = vunpack.c.l.b16 %v195
      %v338 = vunpack.c.h.b16 %v195
      %v339 = vunpack.c.l.b16 %v196
      %v340 = vunpack.c.h.b16 %v196
      %v341 = vpack.c.b16 %v311, %v309
      %v342 = vpack.c.b16 %v312, %v310
      %v343 = vpack.c.b16 %v315, %v313
      %v344 = vpack.c.b16 %v316, %v314
      %v345 = vpack.c.b16 %v319, %v317
      %v346 = vpack.c.b16 %v320, %v318
      %v347 = vpack.c.b16 %v323, %v321
      %v348 = vpack.c.b16 %v324, %v322
      %v349 = vpack.c.b16 %v327, %v325
      %v350 = vpack.c.b16 %v328, %v326
      %v351 = vpack.c.b16 %v331, %v329
      %v352 = vpack.c.b16 %v332, %v330
      %v353 = vpack.c.b16 %v335, %v333
      %v354 = vpack.c.b16 %v336, %v334
      %v355 = vpack.c.b16 %v339, %v337
      %v356 = vpack.c.b16 %v340, %v338
      %373 = vmatpush.bf16.msra.mxu0 %v355
      %374 = vmatpush.bf16.msra.mxu0 %v353
      %375 = vmatpush.bf16.msra.mxu0 %v351
      %376 = vmatpush.bf16.msra.mxu0 %v349
      %377 = vmatpush.bf16.msra.mxu0 %v347
      %378 = vmatpush.bf16.msra.mxu0 %v345
      %379 = vmatpush.bf16.msra.mxu0 %v343
      %380 = vmatpush.bf16.msra.mxu0 %v341
      %381 = vmatmul.bf16.gmra.mxu0 %v261
      %v382 = vpop.f32.mrf.mxu0
      %v383 = vadd.f32 0.0, %v382
      %v384 = vpop.f32.mrf.mxu0
      %v385 = vadd.f32 0.0, %v384
      %386 = vmatmul.bf16.gmra.mxu0 %v262
      %v387 = vpop.f32.mrf.mxu0
      %v388 = vadd.f32 0.0, %v387
      %v389 = vpop.f32.mrf.mxu0
      %v390 = vadd.f32 0.0, %v389
      %391 = vmatmul.bf16.gmra.mxu0 %v263
      %v392 = vpop.f32.mrf.mxu0
      %v393 = vadd.f32 0.0, %v392
      %v394 = vpop.f32.mrf.mxu0
      %v395 = vadd.f32 0.0, %v394
      %396 = vmatmul.bf16.gmra.mxu0 %v264
      %v397 = vpop.f32.mrf.mxu0
      %v398 = vadd.f32 0.0, %v397
      %v399 = vpop.f32.mrf.mxu0
      %v400 = vadd.f32 0.0, %v399
      %401 = vmatmul.bf16.gmra.mxu0 %v265
      %v402 = vpop.f32.mrf.mxu0
      %v403 = vadd.f32 0.0, %v402
      %v404 = vpop.f32.mrf.mxu0
      %v405 = vadd.f32 0.0, %v404
      %406 = vmatmul.bf16.gmra.mxu0 %v266
      %v407 = vpop.f32.mrf.mxu0
      %v408 = vadd.f32 0.0, %v407
      %v409 = vpop.f32.mrf.mxu0
      %v410 = vadd.f32 0.0, %v409
      %411 = vmatmul.bf16.gmra.mxu0 %v267
      %v412 = vpop.f32.mrf.mxu0
      %v413 = vadd.f32 0.0, %v412
      %v414 = vpop.f32.mrf.mxu0
      %v415 = vadd.f32 0.0, %v414
      %416 = vmatmul.bf16.gmra.mxu0 %v268
      %v417 = vpop.f32.mrf.mxu0
      %v418 = vadd.f32 0.0, %v417
      %v419 = vpop.f32.mrf.mxu0
      %v420 = vadd.f32 0.0, %v419
      %421 = vmatmul.bf16.gmra.mxu0 %v269
      %v422 = vpop.f32.mrf.mxu0
      %v423 = vadd.f32 0.0, %v422
      %v424 = vpop.f32.mrf.mxu0
      %v425 = vadd.f32 0.0, %v424
      %426 = vmatmul.bf16.gmra.mxu0 %v270
      %v427 = vpop.f32.mrf.mxu0
      %v428 = vadd.f32 0.0, %v427
      %v429 = vpop.f32.mrf.mxu0
      %v430 = vadd.f32 0.0, %v429
      %431 = vmatmul.bf16.gmra.mxu0 %v271
      %v432 = vpop.f32.mrf.mxu0
      %v433 = vadd.f32 0.0, %v432
      %v434 = vpop.f32.mrf.mxu0
      %v435 = vadd.f32 0.0, %v434
      %436 = vmatmul.bf16.gmra.mxu0 %v272
      %v437 = vpop.f32.mrf.mxu0
      %v438 = vadd.f32 0.0, %v437
      %v439 = vpop.f32.mrf.mxu0
      %v440 = vadd.f32 0.0, %v439
      %441 = vmatmul.bf16.gmra.mxu0 %v273
      %v442 = vpop.f32.mrf.mxu0
      %v443 = vadd.f32 0.0, %v442
      %v444 = vpop.f32.mrf.mxu0
      %v445 = vadd.f32 0.0, %v444
      %446 = vmatmul.bf16.gmra.mxu0 %v274
      %v447 = vpop.f32.mrf.mxu0
      %v448 = vadd.f32 0.0, %v447
      %v449 = vpop.f32.mrf.mxu0
      %v450 = vadd.f32 0.0, %v449
      %451 = vmatmul.bf16.gmra.mxu0 %v275
      %v452 = vpop.f32.mrf.mxu0
      %v453 = vadd.f32 0.0, %v452
      %v454 = vpop.f32.mrf.mxu0
      %v455 = vadd.f32 0.0, %v454
      %456 = vmatmul.bf16.gmra.mxu0 %v276
      %v457 = vpop.f32.mrf.mxu0
      %v458 = vadd.f32 0.0, %v457
      %v459 = vpop.f32.mrf.mxu0
      %v460 = vadd.f32 0.0, %v459
      %461 = vdwg.mxu0
      %462 = vmatpush.bf16.msra.mxu0 %v356
      %463 = vmatpush.bf16.msra.mxu0 %v354
      %464 = vmatpush.bf16.msra.mxu0 %v352
      %465 = vmatpush.bf16.msra.mxu0 %v350
      %466 = vmatpush.bf16.msra.mxu0 %v348
      %467 = vmatpush.bf16.msra.mxu0 %v346
      %468 = vmatpush.bf16.msra.mxu0 %v344
      %469 = vmatpush.bf16.msra.mxu0 %v342
      %470 = vmatmul.bf16.gmra.mxu0 %v261
      %v471 = vpop.f32.mrf.mxu0
      %v472 = vadd.f32 0.0, %v471
      %v473 = vpop.f32.mrf.mxu0
      %v474 = vadd.f32 0.0, %v473
      %475 = vmatmul.bf16.gmra.mxu0 %v262
      %v476 = vpop.f32.mrf.mxu0
      %v477 = vadd.f32 0.0, %v476
      %v478 = vpop.f32.mrf.mxu0
      %v479 = vadd.f32 0.0, %v478
      %480 = vmatmul.bf16.gmra.mxu0 %v263
      %v481 = vpop.f32.mrf.mxu0
      %v482 = vadd.f32 0.0, %v481
      %v483 = vpop.f32.mrf.mxu0
      %v484 = vadd.f32 0.0, %v483
      %485 = vmatmul.bf16.gmra.mxu0 %v264
      %v486 = vpop.f32.mrf.mxu0
      %v487 = vadd.f32 0.0, %v486
      %v488 = vpop.f32.mrf.mxu0
      %v489 = vadd.f32 0.0, %v488
      %490 = vmatmul.bf16.gmra.mxu0 %v265
      %v491 = vpop.f32.mrf.mxu0
      %v492 = vadd.f32 0.0, %v491
      %v493 = vpop.f32.mrf.mxu0
      %v494 = vadd.f32 0.0, %v493
      %495 = vmatmul.bf16.gmra.mxu0 %v266
      %v496 = vpop.f32.mrf.mxu0
      %v497 = vadd.f32 0.0, %v496
      %v498 = vpop.f32.mrf.mxu0
      %v499 = vadd.f32 0.0, %v498
      %500 = vmatmul.bf16.gmra.mxu0 %v267
      %v501 = vpop.f32.mrf.mxu0
      %v502 = vadd.f32 0.0, %v501
      %v503 = vpop.f32.mrf.mxu0
      %v504 = vadd.f32 0.0, %v503
      %505 = vmatmul.bf16.gmra.mxu0 %v268
      %v506 = vpop.f32.mrf.mxu0
      %v507 = vadd.f32 0.0, %v506
      %v508 = vpop.f32.mrf.mxu0
      %v509 = vadd.f32 0.0, %v508
      %510 = vmatmul.bf16.gmra.mxu0 %v269
      %v511 = vpop.f32.mrf.mxu0
      %v512 = vadd.f32 0.0, %v511
      %v513 = vpop.f32.mrf.mxu0
      %v514 = vadd.f32 0.0, %v513
      %515 = vmatmul.bf16.gmra.mxu0 %v270
      %v516 = vpop.f32.mrf.mxu0
      %v517 = vadd.f32 0.0, %v516
      %v518 = vpop.f32.mrf.mxu0
      %v519 = vadd.f32 0.0, %v518
      %520 = vmatmul.bf16.gmra.mxu0 %v271
      %v521 = vpop.f32.mrf.mxu0
      %v522 = vadd.f32 0.0, %v521
      %v523 = vpop.f32.mrf.mxu0
      %v524 = vadd.f32 0.0, %v523
      %525 = vmatmul.bf16.gmra.mxu0 %v272
      %v526 = vpop.f32.mrf.mxu0
      %v527 = vadd.f32 0.0, %v526
      %v528 = vpop.f32.mrf.mxu0
      %v529 = vadd.f32 0.0, %v528
      %530 = vmatmul.bf16.gmra.mxu0 %v273
      %v531 = vpop.f32.mrf.mxu0
      %v532 = vadd.f32 0.0, %v531
      %v533 = vpop.f32.mrf.mxu0
      %v534 = vadd.f32 0.0, %v533
      %535 = vmatmul.bf16.gmra.mxu0 %v274
      %v536 = vpop.f32.mrf.mxu0
      %v537 = vadd.f32 0.0, %v536
      %v538 = vpop.f32.mrf.mxu0
      %v539 = vadd.f32 0.0, %v538
      %540 = vmatmul.bf16.gmra.mxu0 %v275
      %v541 = vpop.f32.mrf.mxu0
      %v542 = vadd.f32 0.0, %v541
      %v543 = vpop.f32.mrf.mxu0
      %v544 = vadd.f32 0.0, %v543
      %545 = vmatmul.bf16.gmra.mxu0 %v276
      %v546 = vpop.f32.mrf.mxu0
      %v547 = vadd.f32 0.0, %v546
      %v548 = vpop.f32.mrf.mxu0
      %v549 = vadd.f32 0.0, %v548
      %550 = vdwg.mxu0
      %v551 = vpack.c.bf16 %v472, %v383
      %v552 = vpack.c.bf16 %v474, %v385
      %v553 = vpack.c.bf16 %v477, %v388
      %v554 = vpack.c.bf16 %v479, %v390
      %v555 = vpack.c.bf16 %v482, %v393
      %v556 = vpack.c.bf16 %v484, %v395
      %v557 = vpack.c.bf16 %v487, %v398
      %v558 = vpack.c.bf16 %v489, %v400
      %v559 = vpack.c.bf16 %v492, %v403
      %v560 = vpack.c.bf16 %v494, %v405
      %v561 = vpack.c.bf16 %v497, %v408
      %v562 = vpack.c.bf16 %v499, %v410
      %v563 = vpack.c.bf16 %v502, %v413
      %v564 = vpack.c.bf16 %v504, %v415
      %v565 = vpack.c.bf16 %v507, %v418
      %v566 = vpack.c.bf16 %v509, %v420
      %v567 = vpack.c.bf16 %v512, %v423
      %v568 = vpack.c.bf16 %v514, %v425
      %v569 = vpack.c.bf16 %v517, %v428
      %v570 = vpack.c.bf16 %v519, %v430
      %v571 = vpack.c.bf16 %v522, %v433
      %v572 = vpack.c.bf16 %v524, %v435
      %v573 = vpack.c.bf16 %v527, %v438
      %v574 = vpack.c.bf16 %v529, %v440
      %v575 = vpack.c.bf16 %v532, %v443
      %v576 = vpack.c.bf16 %v534, %v445
      %v577 = vpack.c.bf16 %v537, %v448
      %v578 = vpack.c.bf16 %v539, %v450
      %v579 = vpack.c.bf16 %v542, %v453
      %v580 = vpack.c.bf16 %v544, %v455
      %v581 = vpack.c.bf16 %v547, %v458
      %v582 = vpack.c.bf16 %v549, %v460
      %583 = vst [vmem:[%s147] sm:$0xff] %v551
      %584 = vst [vmem:[%s147 + $0x8] sm:$0xff] %v552
      %585 = vst [vmem:[%s147 + $0x10] sm:$0xff] %v553
      %586 = vst [vmem:[%s147 + $0x18] sm:$0xff] %v554
      %587 = vst [vmem:[%s147 + $0x20] sm:$0xff] %v555
      %588 = vst [vmem:[%s147 + $0x28] sm:$0xff] %v556
      %589 = vst [vmem:[%s147 + $0x30] sm:$0xff] %v557
      %590 = vst [vmem:[%s147 + $0x38] sm:$0xff] %v558
      %591 = vst [vmem:[%s147 + $0x40] sm:$0xff] %v559
      %592 = vst [vmem:[%s147 + $0x48] sm:$0xff] %v560
      %593 = vst [vmem:[%s147 + $0x50] sm:$0xff] %v561
      %594 = vst [vmem:[%s147 + $0x58] sm:$0xff] %v562
      %595 = vst [vmem:[%s147 + $0x60] sm:$0xff] %v563
      %596 = vst [vmem:[%s147 + $0x68] sm:$0xff] %v564
      %597 = vst [vmem:[%s147 + $0x70] sm:$0xff] %v565
      %598 = vst [vmem:[%s147 + $0x78] sm:$0xff] %v566
      %599 = vst [vmem:[%s147 + $0x80] sm:$0xff] %v567
      %600 = vst [vmem:[%s147 + $0x88] sm:$0xff] %v568
      %601 = vst [vmem:[%s147 + $0x90] sm:$0xff] %v569
      %602 = vst [vmem:[%s147 + $0x98] sm:$0xff] %v570
      %603 = vst [vmem:[%s147 + $0xa0] sm:$0xff] %v571
      %604 = vst [vmem:[%s147 + $0xa8] sm:$0xff] %v572
      %605 = vst [vmem:[%s147 + $0xb0] sm:$0xff] %v573
      %606 = vst [vmem:[%s147 + $0xb8] sm:$0xff] %v574
      %607 = vst [vmem:[%s147 + $0xc0] sm:$0xff] %v575
      %608 = vst [vmem:[%s147 + $0xc8] sm:$0xff] %v576
      %609 = vst [vmem:[%s147 + $0xd0] sm:$0xff] %v577
      %610 = vst [vmem:[%s147 + $0xd8] sm:$0xff] %v578
      %611 = vst [vmem:[%s147 + $0xe0] sm:$0xff] %v579
      %612 = vst [vmem:[%s147 + $0xe8] sm:$0xff] %v580
      %613 = vst [vmem:[%s147 + $0xf0] sm:$0xff] %v581
      %614 = vst [vmem:[%s147 + $0xf8] sm:$0xff] %v582
      %s615 = smul.u32 32, %s13
      %p616 = scmp.lt.s32.totalorder %s615, 63
      %s617 = scalar_select %p616, %s615, 63
      %s618 = smul.addr %s617, 2
      %s619 = smul.addr %s618, 4
      %s620 = scalar_lea.vmem %s2, %s619
      // Predicated region
      $region29: #{_lambda_.4} parent=27 // pred_check
        %p621 = pneg %p78
      $region30: #{_lambda_.4} parent=27 // pred_check_branch
        %623 = sbr.rel (%p621) target = $region32
      $region31: #{_lambda_.4} parent=27 // pred_region
        %s624 = smul.u32 32, %s13
      $region32: #{_lambda_.4} parent=27 // pred_fallthru
        _
    $region28: #{_lambda_.4} parent=5 // pred_fallthru
      _
    %p625 = scmp.le.s32.totalorder 2, %s8
    // Predicated region
    $region33: #{_lambda_.4} parent=5 // pred_check
      %p626 = pneg %p625
    $region34: #{_lambda_.4} parent=5 // pred_check_branch
      %628 = sbr.rel (%p626) target = $region36
    $region35: #{_lambda_.4} parent=5 // pred_region
      %s629 = ssub.s32 %s8, 2
      // Predicated region
      $region37: #{_lambda_.4} parent=35 // pred_check
        %p630 = pneg %p84
      $region38: #{_lambda_.4} parent=35 // pred_check_branch
        %632 = sbr.rel (%p630) target = $region40
      $region39: #{_lambda_.4} parent=35 // pred_region
        %s633 = smul.u32 32, %s14
        %p634 = scmp.lt.s32.totalorder %s633, 63
        %s635 = scalar_select %p634, %s633, 63
        %s636 = smul.addr %s635, 2
        %s637 = smul.addr %s636, 4
        %s638 = scalar_lea.vmem %s2, %s637
      $region40: #{_lambda_.4} parent=35 // pred_fallthru
        _
    $region36: #{_lambda_.4} parent=5 // pred_fallthru
      _
  $region6: #{_lambda_.4} parent=0 // loop_footer
    %s12 = sadd.s32 1, %s8
  $region7: #{_lambda_.4} parent=0 // loop_footer_branch
    %7 = sbr.rel target = $region3
  $region8: #{_lambda_.4} parent=0 // loop_exit
    _

// kernel: _lambda_.5
$region0: #{_lambda_.5}
  #allocation0 [shape = 'u32[]', space=smem, size = 0x4, offset = 0x4, fixed_abs, tag = 'smem constant byte address 0x4 - core index']
  #allocation1 [shape = 'u32[72,128]{1,0:T(1,128)}', space=vmem, size = 0x9000, scoped, tag = 'internal scratch']
  #allocation2 [shape = 'f32[256,256]{1,0:T(8,128)}', space=vmem, size = 0x40000, scoped, tag = 'scratch operand']
  %s0 = inlined_call_operand.vmem [shape: bf16[512,512], index: 0, kind: input, shape index: {}]
  %s1 = inlined_call_operand.vmem [shape: bf16[512,256], index: 1, kind: input, shape index: {}]
  %s2 = inlined_call_operand.vmem [shape: bf16[256,384], index: 2, kind: input, shape index: {}]
  %s3 = inlined_call_operand.vmem [shape: bf16[512,384], index: 3, kind: output, shape index: {}]
  %s4 = sld [smem:[#allocation0]]
  $region91: #{_lambda_.5} parent=0
    _
  %s6 = ssub.s32 1, %s4
  %s7 = scalar_select 0, %s6, %s4
  $region1: #{_lambda_.5} parent=0
    #allocation3 [shape = 'u8[262144]{0}', space=vmem, size = 0x40000, scoped, tag = 'input window, operand 0']
    loop: start=0, step=1, limit=6
    $region2: #{_lambda_.5} parent=1 // loop_pre_header
      _
    $region3: #{_lambda_.5} parent=1 // loop_header
      %s9 = sphi 0, %s13
      %p10 = scmp.ge.s32.totalorder %s9, 6
      %s16 = sphi 0, %s28
      %s17 = sphi 0, %s24
      %s18 = sphi 0, %s16
      %s19 = sphi 0, %s17
      %s20 = sphi 0, %s18
      %s21 = sphi 0, %s19
      %s33 = sphi 0, %s35
      %s36 = sphi 0, %s33
      %s37 = sphi 0, %s36
      %s53 = sphi 0, %s37
      %s59 = sphi 0, %s61
      %s62 = sphi 0, %s59
      %s63 = sphi 0, %s62
      %s79 = sphi 0, %s63
      %s83 = sphi 0, %s83
      %s85 = sphi 0, %s83
      %s86 = sphi 0, %s85
      %s100 = sphi 0, %s86
      %s106 = sphi 0, %s108
      %s109 = sphi 0, %s106
      %s110 = sphi 0, %s109
      %s126 = sphi 0, %s110
    $region4: #{_lambda_.5} parent=1 // loop_header_branch
      %12 = sbr.rel (%p10) target = $region8
    $region5: #{_lambda_.5} parent=1 // loop_body
      %s14 = ssub.s32 %s9, 1
      %s15 = ssub.s32 %s9, 2
      %s22 = sadd.s32 1, %s17
      %p23 = scmp.ge.s32.totalorder %s22, 2
      %s24 = scalar_select %p23, 0, %s22
      %s25 = sadd.s32 1, %s16
      %s26 = scalar_select %p23, %s25, %s16
      %p27 = scmp.ge.s32.totalorder %s26, 2
      %s28 = scalar_select %p27, 0, %s26
      %s29 = ssub.s32 %s16, %s28
      %s30 = ssub.s32 %s17, %s24
      %s31 = sor.u32 %s29, %s30
      %p32 = scmp.eq.s32.totalorder %s31, 0
      %s34 = sadd.s32 %s33, 1
      %s35 = scalar_select %p32, %s33, %s34
      %p38 = pneg %p32
      %p39 = scmp.eq.s32.totalorder %s9, 3
      %p40 = por %p38, %p39
      %p41 = scmp.ne.s32.totalorder %s33, %s36
      %p42 = scmp.eq.s32.totalorder %s9, 0
      %p43 = por %p41, %p42
      %p44 = scmp.ne.s32.totalorder %s33, %s36
      %p45 = scmp.eq.s32.totalorder %s14, 3
      %p46 = por %p44, %p45
      %p47 = scmp.ne.s32.totalorder %s36, %s37
      %p48 = scmp.eq.s32.totalorder %s14, 0
      %p49 = por %p47, %p48
      %p50 = scmp.ne.s32.totalorder %s36, %s37
      %p51 = scmp.eq.s32.totalorder %s15, 3
      %p52 = por %p50, %p51
      %p54 = scmp.ne.s32.totalorder %s37, %s53
      %p55 = scmp.eq.s32.totalorder %s15, 0
      %p56 = por %p54, %p55
      %s57 = ssub.s32 %s17, %s24
      %p58 = scmp.eq.s32.totalorder %s57, 0
      %s60 = sadd.s32 %s59, 1
      %s61 = scalar_select %p58, %s59, %s60
      %p64 = pneg %p58
      %p65 = scmp.eq.s32.totalorder %s9, 3
      %p66 = por %p64, %p65
      %p67 = scmp.ne.s32.totalorder %s59, %s62
      %p68 = scmp.eq.s32.totalorder %s9, 0
      %p69 = por %p67, %p68
      %p70 = scmp.ne.s32.totalorder %s59, %s62
      %p71 = scmp.eq.s32.totalorder %s14, 3
      %p72 = por %p70, %p71
      %p73 = scmp.ne.s32.totalorder %s62, %s63
      %p74 = scmp.eq.s32.totalorder %s14, 0
      %p75 = por %p73, %p74
      %p76 = scmp.ne.s32.totalorder %s62, %s63
      %p77 = scmp.eq.s32.totalorder %s15, 3
      %p78 = por %p76, %p77
      %p80 = scmp.ne.s32.totalorder %s63, %s79
      %p81 = scmp.eq.s32.totalorder %s15, 0
      %p82 = por %p80, %p81
      %s84 = sadd.s32 %s83, 1
      %p87 = scmp.eq.s32.totalorder %s9, 3
      %p88 = scmp.ne.s32.totalorder %s83, %s85
      %p89 = scmp.eq.s32.totalorder %s9, 0
      %p90 = por %p88, %p89
      %p91 = scmp.ne.s32.totalorder %s83, %s85
      %p92 = scmp.eq.s32.totalorder %s14, 3
      %p93 = por %p91, %p92
      %p94 = scmp.ne.s32.totalorder %s85, %s86
      %p95 = scmp.eq.s32.totalorder %s14, 0
      %p96 = por %p94, %p95
      %p97 = scmp.ne.s32.totalorder %s85, %s86
      %p98 = scmp.eq.s32.totalorder %s15, 3
      %p99 = por %p97, %p98
      %p101 = scmp.ne.s32.totalorder %s86, %s100
      %p102 = scmp.eq.s32.totalorder %s15, 0
      %p103 = por %p101, %p102
      %s104 = ssub.s32 %s16, %s28
      %p105 = scmp.eq.s32.totalorder %s104, 0
      %s107 = sadd.s32 %s106, 1
      %s108 = scalar_select %p105, %s106, %s107
      %p111 = pneg %p105
      %p112 = scmp.eq.s32.totalorder %s9, 3
      %p113 = por %p111, %p112
      %p114 = scmp.ne.s32.totalorder %s106, %s109
      %p115 = scmp.eq.s32.totalorder %s9, 0
      %p116 = por %p114, %p115
      %p117 = scmp.ne.s32.totalorder %s106, %s109
      %p118 = scmp.eq.s32.totalorder %s14, 3
      %p119 = por %p117, %p118
      %p120 = scmp.ne.s32.totalorder %s109, %s110
      %p121 = scmp.eq.s32.totalorder %s14, 0
      %p122 = por %p120, %p121
      %p123 = scmp.ne.s32.totalorder %s109, %s110
      %p124 = scmp.eq.s32.totalorder %s15, 3
      %p125 = por %p123, %p124
      %p127 = scmp.ne.s32.totalorder %s110, %s126
      %p128 = scmp.eq.s32.totalorder %s15, 0
      %p129 = por %p127, %p128
      %p130 = scmp.le.s32.totalorder 1, %s9
      %p131 = scmp.lt.s32.totalorder %s9, 5
      %p132 = pnand %p130, %p131
      %p133 = pneg %p132
      // Predicated region
      $region9: #{_lambda_.5} parent=5 // pred_check
        _
      $region10: #{_lambda_.5} parent=5 // pred_check_branch
        %135 = sbr.rel (%p132) target = $region12
      $region11: #{_lambda_.5} parent=5 // pred_region
        %s136 = ssub.s32 %s9, 1
        // Predicated region
        $region13: #{_lambda_.5} parent=11 // pred_check
          %p137 = pneg %p96
        $region14: #{_lambda_.5} parent=11 // pred_check_branch
          %139 = sbr.rel (%p137) target = $region16
        $region15: #{_lambda_.5} parent=11 // pred_region
          _
        $region16: #{_lambda_.5} parent=11 // pred_fallthru
          _
      $region12: #{_lambda_.5} parent=5 // pred_fallthru
        _
      %p140 = scmp.lt.s32.totalorder %s9, 4
      // Predicated region
      $region17: #{_lambda_.5} parent=5 // pred_check
        %p141 = pneg %p140
      $region18: #{_lambda_.5} parent=5 // pred_check_branch
        %143 = sbr.rel (%p141) target = $region20
      $region19: #{_lambda_.5} parent=5 // pred_region
        // Predicated region
        $region21: #{_lambda_.5} parent=19 // pred_check
          %p144 = pneg %p43
        $region22: #{_lambda_.5} parent=19 // pred_check_branch
          %146 = sbr.rel (%p144) target = $region24
        $region23: #{_lambda_.5} parent=19 // pred_region
          %s147 = sand.u32 %s33, 1
          %s148 = sand.u32 %s33, 1
          %s149 = smul.addr %s148, 256
          %s150 = scalar_lea.vmem [#allocation3], %s149
          %s151 = smul.u32 32, %s16
          %s152 = smul.u32 2, %s17
          %s153 = smul.addr %s151, 4
          %s154 = sadd.s32 %s152, %s153
          %s155 = smul.addr %s154, 4
          %s156 = scalar_lea.vmem %s0, %s155
          // Predicated region
          $region25: #{_lambda_.5} parent=23 // pred_check
            _
          $region26: #{_lambda_.5} parent=23 // pred_check_branch
            %158 = sbr.rel (0) target = $region28
          $region27: #{_lambda_.5} parent=23 // pred_region
            // Predicated region
            $region29: #{_lambda_.5} parent=27 // pred_check
              _
            $region30: #{_lambda_.5} parent=27 // pred_check_branch
              %160 = sbr.rel (0) target = $region32
            $region31: #{_lambda_.5} parent=27 // pred_region
              // Predicated region
              $region44: #{_lambda_.5} parent=31 // pred_check
                _
              $region45: #{_lambda_.5} parent=31 // pred_check_branch
                %238 = sbr.rel (0) target = $region47
              $region46: #{_lambda_.5} parent=31 // pred_region
                loop: start=0, step=1, limit=1
                $region48: #{_lambda_.5} parent=46 // loop_pre_header
                  _
                $region49: #{_lambda_.5} parent=46 // loop_header
                  %s240 = sphi 0, %s244
                  %p241 = scmp.ge.s32.totalorder %s240, 1
                  %s245 = sphi %s156, %s156
                  %s246 = sphi %s150, %s150
                $region50: #{_lambda_.5} parent=46 // loop_header_branch
                  %243 = sbr.rel (%p241) target = $region54
                $region51: #{_lambda_.5} parent=46 // loop_body
                  %v247 = vld [vmem:[%s245] sm:$0xff]
                  %248 = vst [vmem:[%s246] sm:$0xff] %v247
                  %v249 = vld [vmem:[%s245 + $0x10] sm:$0xff]
                  %250 = vst [vmem:[%s246 + $0x8] sm:$0xff] %v249
                  %v251 = vld [vmem:[%s245 + $0x20] sm:$0xff]
                  %252 = vst [vmem:[%s246 + $0x10] sm:$0xff] %v251
                  %v253 = vld [vmem:[%s245 + $0x30] sm:$0xff]
                  %254 = vst [vmem:[%s246 + $0x18] sm:$0xff] %v253
                  %v255 = vld [vmem:[%s245 + $0x40] sm:$0xff]
                  %256 = vst [vmem:[%s246 + $0x20] sm:$0xff] %v255
                  %v257 = vld [vmem:[%s245 + $0x50] sm:$0xff]
                  %258 = vst [vmem:[%s246 + $0x28] sm:$0xff] %v257
                  %v259 = vld [vmem:[%s245 + $0x60] sm:$0xff]
                  %260 = vst [vmem:[%s246 + $0x30] sm:$0xff] %v259
                  %v261 = vld [vmem:[%s245 + $0x70] sm:$0xff]
                  %262 = vst [vmem:[%s246 + $0x38] sm:$0xff] %v261
                  %v263 = vld [vmem:[%s245 + $0x80] sm:$0xff]
                  %264 = vst [vmem:[%s246 + $0x40] sm:$0xff] %v263
                  %v265 = vld [vmem:[%s245 + $0x90] sm:$0xff]
                  %266 = vst [vmem:[%s246 + $0x48] sm:$0xff] %v265
                  %v267 = vld [vmem:[%s245 + $0xa0] sm:$0xff]
                  %268 = vst [vmem:[%s246 + $0x50] sm:$0xff] %v267
                  %v269 = vld [vmem:[%s245 + $0xb0] sm:$0xff]
                  %270 = vst [vmem:[%s246 + $0x58] sm:$0xff] %v269
                  %v271 = vld [vmem:[%s245 + $0xc0] sm:$0xff]
                  %272 = vst [vmem:[%s246 + $0x60] sm:$0xff] %v271
                  %v273 = vld [vmem:[%s245 + $0xd0] sm:$0xff]
                  %274 = vst [vmem:[%s246 + $0x68] sm:$0xff] %v273
                  %v275 = vld [vmem:[%s245 + $0xe0] sm:$0xff]
                  %276 = vst [vmem:[%s246 + $0x70] sm:$0xff] %v275
                  %v277 = vld [vmem:[%s245 + $0xf0] sm:$0xff]
                  %278 = vst [vmem:[%s246 + $0x78] sm:$0xff] %v277
                  %v279 = vld [vmem:[%s245 + $0x100] sm:$0xff]
                  %280 = vst [vmem:[%s246 + $0x80] sm:$0xff] %v279
                  %v281 = vld [vmem:[%s245 + $0x110] sm:$0xff]
                  %282 = vst [vmem:[%s246 + $0x88] sm:$0xff] %v281
                  %v283 = vld [vmem:[%s245 + $0x120] sm:$0xff]
                  %284 = vst [vmem:[%s246 + $0x90] sm:$0xff] %v283
                  %v285 = vld [vmem:[%s245 + $0x130] sm:$0xff]
                  %286 = vst [vmem:[%s246 + $0x98] sm:$0xff] %v285
                  %v287 = vld [vmem:[%s245 + $0x140] sm:$0xff]
                  %288 = vst [vmem:[%s246 + $0xa0] sm:$0xff] %v287
                  %v289 = vld [vmem:[%s245 + $0x150] sm:$0xff]
                  %290 = vst [vmem:[%s246 + $0xa8] sm:$0xff] %v289
                  %v291 = vld [vmem:[%s245 + $0x160] sm:$0xff]
                  %292 = vst [vmem:[%s246 + $0xb0] sm:$0xff] %v291
                  %v293 = vld [vmem:[%s245 + $0x170] sm:$0xff]
                  %294 = vst [vmem:[%s246 + $0xb8] sm:$0xff] %v293
                  %v295 = vld [vmem:[%s245 + $0x180] sm:$0xff]
                  %296 = vst [vmem:[%s246 + $0xc0] sm:$0xff] %v295
                  %v297 = vld [vmem:[%s245 + $0x190] sm:$0xff]
                  %298 = vst [vmem:[%s246 + $0xc8] sm:$0xff] %v297
                  %v299 = vld [vmem:[%s245 + $0x1a0] sm:$0xff]
                  %300 = vst [vmem:[%s246 + $0xd0] sm:$0xff] %v299
                  %v301 = vld [vmem:[%s245 + $0x1b0] sm:$0xff]
                  %302 = vst [vmem:[%s246 + $0xd8] sm:$0xff] %v301
                  %v303 = vld [vmem:[%s245 + $0x1c0] sm:$0xff]
                  %304 = vst [vmem:[%s246 + $0xe0] sm:$0xff] %v303
                  %v305 = vld [vmem:[%s245 + $0x1d0] sm:$0xff]
                  %306 = vst [vmem:[%s246 + $0xe8] sm:$0xff] %v305
                  %v307 = vld [vmem:[%s245 + $0x1e0] sm:$0xff]
                  %308 = vst [vmem:[%s246 + $0xf0] sm:$0xff] %v307
                  %v309 = vld [vmem:[%s245 + $0x1f0] sm:$0xff]
                  %310 = vst [vmem:[%s246 + $0xf8] sm:$0xff] %v309
                $region52: #{_lambda_.5} parent=46 // loop_footer
                  %s244 = sadd.s32 1, %s240
                $region53: #{_lambda_.5} parent=46 // loop_footer_branch
                  %239 = sbr.rel target = $region49
                $region54: #{_lambda_.5} parent=46 // loop_exit
                  _
              $region47: #{_lambda_.5} parent=31 // pred_fallthru
                _
              // Predicated region
              $region55: #{_lambda_.5} parent=31 // pred_check
                _
              $region56: #{_lambda_.5} parent=31 // pred_check_branch
                %312 = sbr.rel target = $region58
              $region57: #{_lambda_.5} parent=31 // pred_region
                _
              $region58: #{_lambda_.5} parent=31 // pred_fallthru
                _
            $region32: #{_lambda_.5} parent=27 // pred_fallthru
              _
            // Predicated region
            $region33: #{_lambda_.5} parent=27 // pred_check
              _
            $region34: #{_lambda_.5} parent=27 // pred_check_branch
              %162 = sbr.rel target = $region36
            $region35: #{_lambda_.5} parent=27 // pred_region
              %s164 = ssub.s32 256, 1
              loop: start=0, step=1, limit=1
              $region37: #{_lambda_.5} parent=35 // loop_pre_header
                _
              $region38: #{_lambda_.5} parent=35 // loop_header
                %s166 = sphi 0, %s170
                %p167 = scmp.ge.s32.totalorder %s166, 1
                %s171 = sphi %s156, %s156
                %s172 = sphi %s150, %s150
              $region39: #{_lambda_.5} parent=35 // loop_header_branch
                %169 = sbr.rel (%p167) target = $region43
              $region40: #{_lambda_.5} parent=35 // loop_body
                %v173 = vld [vmem:[%s171] sm:%s164]
                %174 = vst [vmem:[%s172] sm:%s164] %v173
                %v175 = vld [vmem:[%s171 + $0x10] sm:%s164]
                %176 = vst [vmem:[%s172 + $0x8] sm:%s164] %v175
                %v177 = vld [vmem:[%s171 + $0x20] sm:%s164]
                %178 = vst [vmem:[%s172 + $0x10] sm:%s164] %v177
                %v179 = vld [vmem:[%s171 + $0x30] sm:%s164]
                %180 = vst [vmem:[%s172 + $0x18] sm:%s164] %v179
                %v181 = vld [vmem:[%s171 + $0x40] sm:%s164]
                %182 = vst [vmem:[%s172 + $0x20] sm:%s164] %v181
                %v183 = vld [vmem:[%s171 + $0x50] sm:%s164]
                %184 = vst [vmem:[%s172 + $0x28] sm:%s164] %v183
                %v185 = vld [vmem:[%s171 + $0x60] sm:%s164]
                %186 = vst [vmem:[%s172 + $0x30] sm:%s164] %v185
                %v187 = vld [vmem:[%s171 + $0x70] sm:%s164]
                %188 = vst [vmem:[%s172 + $0x38] sm:%s164] %v187
                %v189 = vld [vmem:[%s171 + $0x80] sm:%s164]
                %190 = vst [vmem:[%s172 + $0x40] sm:%s164] %v189
                %v191 = vld [vmem:[%s171 + $0x90] sm:%s164]
                %192 = vst [vmem:[%s172 + $0x48] sm:%s164] %v191
                %v193 = vld [vmem:[%s171 + $0xa0] sm:%s164]
                %194 = vst [vmem:[%s172 + $0x50] sm:%s164] %v193
                %v195 = vld [vmem:[%s171 + $0xb0] sm:%s164]
                %196 = vst [vmem:[%s172 + $0x58] sm:%s164] %v195
                %v197 = vld [vmem:[%s171 + $0xc0] sm:%s164]
                %198 = vst [vmem:[%s172 + $0x60] sm:%s164] %v197
                %v199 = vld [vmem:[%s171 + $0xd0] sm:%s164]
                %200 = vst [vmem:[%s172 + $0x68] sm:%s164] %v199
                %v201 = vld [vmem:[%s171 + $0xe0] sm:%s164]
                %202 = vst [vmem:[%s172 + $0x70] sm:%s164] %v201
                %v203 = vld [vmem:[%s171 + $0xf0] sm:%s164]
                %204 = vst [vmem:[%s172 + $0x78] sm:%s164] %v203
                %v205 = vld [vmem:[%s171 + $0x100] sm:%s164]
                %206 = vst [vmem:[%s172 + $0x80] sm:%s164] %v205
                %v207 = vld [vmem:[%s171 + $0x110] sm:%s164]
                %208 = vst [vmem:[%s172 + $0x88] sm:%s164] %v207
                %v209 = vld [vmem:[%s171 + $0x120] sm:%s164]
                %210 = vst [vmem:[%s172 + $0x90] sm:%s164] %v209
                %v211 = vld [vmem:[%s171 + $0x130] sm:%s164]
                %212 = vst [vmem:[%s172 + $0x98] sm:%s164] %v211
                %v213 = vld [vmem:[%s171 + $0x140] sm:%s164]
                %214 = vst [vmem:[%s172 + $0xa0] sm:%s164] %v213
                %v215 = vld [vmem:[%s171 + $0x150] sm:%s164]
                %216 = vst [vmem:[%s172 + $0xa8] sm:%s164] %v215
                %v217 = vld [vmem:[%s171 + $0x160] sm:%s164]
                %218 = vst [vmem:[%s172 + $0xb0] sm:%s164] %v217
                %v219 = vld [vmem:[%s171 + $0x170] sm:%s164]
                %220 = vst [vmem:[%s172 + $0xb8] sm:%s164] %v219
                %v221 = vld [vmem:[%s171 + $0x180] sm:%s164]
                %222 = vst [vmem:[%s172 + $0xc0] sm:%s164] %v221
                %v223 = vld [vmem:[%s171 + $0x190] sm:%s164]
                %224 = vst [vmem:[%s172 + $0xc8] sm:%s164] %v223
                %v225 = vld [vmem:[%s171 + $0x1a0] sm:%s164]
                %226 = vst [vmem:[%s172 + $0xd0] sm:%s164] %v225
                %v227 = vld [vmem:[%s171 + $0x1b0] sm:%s164]
                %228 = vst [vmem:[%s172 + $0xd8] sm:%s164] %v227
                %v229 = vld [vmem:[%s171 + $0x1c0] sm:%s164]
                %230 = vst [vmem:[%s172 + $0xe0] sm:%s164] %v229
                %v231 = vld [vmem:[%s171 + $0x1d0] sm:%s164]
                %232 = vst [vmem:[%s172 + $0xe8] sm:%s164] %v231
                %v233 = vld [vmem:[%s171 + $0x1e0] sm:%s164]
                %234 = vst [vmem:[%s172 + $0xf0] sm:%s164] %v233
                %v235 = vld [vmem:[%s171 + $0x1f0] sm:%s164]
                %236 = vst [vmem:[%s172 + $0xf8] sm:%s164] %v235
              $region41: #{_lambda_.5} parent=35 // loop_footer
                %s170 = sadd.s32 1, %s166
              $region42: #{_lambda_.5} parent=35 // loop_footer_branch
                %165 = sbr.rel target = $region38
              $region43: #{_lambda_.5} parent=35 // loop_exit
                _
            $region36: #{_lambda_.5} parent=27 // pred_fallthru
              _
          $region28: #{_lambda_.5} parent=23 // pred_fallthru
            _
          %313 = vnop
        $region24: #{_lambda_.5} parent=19 // pred_fallthru
          _
        // Predicated region
        $region59: #{_lambda_.5} parent=19 // pred_check
          %p314 = pneg %p69
        $region60: #{_lambda_.5} parent=19 // pred_check_branch
          %316 = sbr.rel (%p314) target = $region62
        $region61: #{_lambda_.5} parent=19 // pred_region
          %s317 = smul.u32 32, %s17
          %p318 = scmp.lt.s32.totalorder %s317, 63
          %s319 = scalar_select %p318, %s317, 63
          %s320 = smul.addr %s319, 2
          %s321 = smul.addr %s320, 4
          %s322 = scalar_lea.vmem %s1, %s321
          %s323 = smul.u32 32, %s17
        $region62: #{_lambda_.5} parent=19 // pred_fallthru
          _
      $region20: #{_lambda_.5} parent=5 // pred_fallthru
        _
      %p324 = scmp.le.s32.totalorder 1, %s9
      %p325 = scmp.lt.s32.totalorder %s9, 5
      %p326 = pnand %p324, %p325
      %p327 = pneg %p326
      // Predicated region
      $region63: #{_lambda_.5} parent=5 // pred_check
        _
      $region64: #{_lambda_.5} parent=5 // pred_check_branch
        %329 = sbr.rel (%p326) target = $region66
      $region65: #{_lambda_.5} parent=5 // pred_region
        %s330 = ssub.s32 %s9, 1
        %s331 = sand.u32 %s36, 1
        %s332 = sand.u32 %s36, 1
        %s333 = smul.addr %s332, 256
        %s334 = scalar_lea.vmem [#allocation3], %s333
        // Predicated region
        $region67: #{_lambda_.5} parent=65 // pred_check
          %p335 = pneg %p49
        $region68: #{_lambda_.5} parent=65 // pred_check_branch
          %337 = sbr.rel (%p335) target = $region70
        $region69: #{_lambda_.5} parent=65 // pred_region
          _
        $region70: #{_lambda_.5} parent=65 // pred_fallthru
          _
        %s338 = sand.u32 %s36, 1
        %s339 = sand.u32 %s36, 1
        %s340 = smul.addr %s339, 256
        %s341 = scalar_lea.vmem [#allocation3], %s340
        %p342 = pneg %p49
        %p343 = pneg %p46
        %s344 = smul.u32 32, %s19
        %p345 = scmp.lt.s32.totalorder %s344, 63
        %s346 = scalar_select %p345, %s344, 63
        %s347 = smul.addr %s346, 2
        %s348 = smul.addr %s347, 4
        %s349 = scalar_lea.vmem %s1, %s348
        %p350 = pneg %p75
        %p351 = pneg %p72
        %p352 = pneg %p96
        %p353 = pneg %p93
        %p354 = pneg %p122
        %p355 = pneg %p119
        %s356 = smul.u32 32, %s18
        %p357 = scmp.lt.s32.totalorder %s356, 63
        %s358 = scalar_select %p357, %s356, 63
        %s359 = smul.addr %s358, 3
        %s360 = smul.addr %s359, 4
        %s361 = scalar_lea.vmem %s3, %s360
        %s362 = smul.u32 32, %s18
        %s363 = smul.u32 2, %s19
        %s364 = smul.u32 32, %s19
        %p365 = scmp.lt.s32.totalorder %s364, 63
        %s366 = scalar_select %p365, %s364, 63
        %s367 = smul.addr %s366, 2
        %s368 = smul.addr %s367, 4
        %s369 = scalar_lea.vmem %s1, %s368
        %s370 = smul.u32 32, %s19
        %s371 = smul.u32 32, %s18
        %p372 = scmp.lt.s32.totalorder %s371, 63
        %s373 = scalar_select %p372, %s371, 63
        %s374 = smul.addr %s373, 3
        %s375 = smul.addr %s374, 4
        %s376 = scalar_lea.vmem %s3, %s375
        %s377 = smul.u32 32, %s18
        %p378 = scmp.eq.s32.totalorder %s19, 0
        // Predicated region
        $region71: #{_lambda_.5} parent=65 // pred_check
          %p379 = pneg %p378
        $region72: #{_lambda_.5} parent=65 // pred_check_branch
          %381 = sbr.rel (%p379) target = $region74
        $region73: #{_lambda_.5} parent=65 // pred_region
          %382 = vst [vmem:[#allocation2] sm:$0xff] 0.0
          %383 = vst [vmem:[#allocation2 + $0x8] sm:$0xff] 0.0
          %384 = vst [vmem:[#allocation2 + $0x10] sm:$0xff] 0.0
          %385 = vst [vmem:[#allocation2 + $0x18] sm:$0xff] 0.0
          %386 = vst [vmem:[#allocation2 + $0x20] sm:$0xff] 0.0
          %387 = vst [vmem:[#allocation2 + $0x28] sm:$0xff] 0.0
          %388 = vst [vmem:[#allocation2 + $0x30] sm:$0xff] 0.0
          %389 = vst [vmem:[#allocation2 + $0x38] sm:$0xff] 0.0
          %390 = vst [vmem:[#allocation2 + $0x40] sm:$0xff] 0.0
          %391 = vst [vmem:[#allocation2 + $0x48] sm:$0xff] 0.0
          %392 = vst [vmem:[#allocation2 + $0x50] sm:$0xff] 0.0
          %393 = vst [vmem:[#allocation2 + $0x58] sm:$0xff] 0.0
          %394 = vst [vmem:[#allocation2 + $0x60] sm:$0xff] 0.0
          %395 = vst [vmem:[#allocation2 + $0x68] sm:$0xff] 0.0
          %396 = vst [vmem:[#allocation2 + $0x70] sm:$0xff] 0.0
          %397 = vst [vmem:[#allocation2 + $0x78] sm:$0xff] 0.0
          %398 = vst [vmem:[#allocation2 + $0x80] sm:$0xff] 0.0
          %399 = vst [vmem:[#allocation2 + $0x88] sm:$0xff] 0.0
          %400 = vst [vmem:[#allocation2 + $0x90] sm:$0xff] 0.0
          %401 = vst [vmem:[#allocation2 + $0x98] sm:$0xff] 0.0
          %402 = vst [vmem:[#allocation2 + $0xa0] sm:$0xff] 0.0
          %403 = vst [vmem:[#allocation2 + $0xa8] sm:$0xff] 0.0
          %404 = vst [vmem:[#allocation2 + $0xb0] sm:$0xff] 0.0
          %405 = vst [vmem:[#allocation2 + $0xb8] sm:$0xff] 0.0
          %406 = vst [vmem:[#allocation2 + $0xc0] sm:$0xff] 0.0
          %407 = vst [vmem:[#allocation2 + $0xc8] sm:$0xff] 0.0
          %408 = vst [vmem:[#allocation2 + $0xd0] sm:$0xff] 0.0
          %409 = vst [vmem:[#allocation2 + $0xd8] sm:$0xff] 0.0
          %410 = vst [vmem:[#allocation2 + $0xe0] sm:$0xff] 0.0
          %411 = vst [vmem:[#allocation2 + $0xe8] sm:$0xff] 0.0
          %412 = vst [vmem:[#allocation2 + $0xf0] sm:$0xff] 0.0
          %413 = vst [vmem:[#allocation2 + $0xf8] sm:$0xff] 0.0
          %414 = vst [vmem:[#allocation2 + $0x100] sm:$0xff] 0.0
          %415 = vst [vmem:[#allocation2 + $0x108] sm:$0xff] 0.0
          %416 = vst [vmem:[#allocation2 + $0x110] sm:$0xff] 0.0
          %417 = vst [vmem:[#allocation2 + $0x118] sm:$0xff] 0.0
          %418 = vst [vmem:[#allocation2 + $0x120] sm:$0xff] 0.0
          %419 = vst [vmem:[#allocation2 + $0x128] sm:$0xff] 0.0
          %420 = vst [vmem:[#allocation2 + $0x130] sm:$0xff] 0.0
          %421 = vst [vmem:[#allocation2 + $0x138] sm:$0xff] 0.0
          %422 = vst [vmem:[#allocation2 + $0x140] sm:$0xff] 0.0
          %423 = vst [vmem:[#allocation2 + $0x148] sm:$0xff] 0.0
          %424 = vst [vmem:[#allocation2 + $0x150] sm:$0xff] 0.0
          %425 = vst [vmem:[#allocation2 + $0x158] sm:$0xff] 0.0
          %426 = vst [vmem:[#allocation2 + $0x160] sm:$0xff] 0.0
          %427 = vst [vmem:[#allocation2 + $0x168] sm:$0xff] 0.0
          %428 = vst [vmem:[#allocation2 + $0x170] sm:$0xff] 0.0
          %429 = vst [vmem:[#allocation2 + $0x178] sm:$0xff] 0.0
          %430 = vst [vmem:[#allocation2 + $0x180] sm:$0xff] 0.0
          %431 = vst [vmem:[#allocation2 + $0x188] sm:$0xff] 0.0
          %432 = vst [vmem:[#allocation2 + $0x190] sm:$0xff] 0.0
          %433 = vst [vmem:[#allocation2 + $0x198] sm:$0xff] 0.0
          %434 = vst [vmem:[#allocation2 + $0x1a0] sm:$0xff] 0.0
          %435 = vst [vmem:[#allocation2 + $0x1a8] sm:$0xff] 0.0
          %436 = vst [vmem:[#allocation2 + $0x1b0] sm:$0xff] 0.0
          %437 = vst [vmem:[#allocation2 + $0x1b8] sm:$0xff] 0.0
          %438 = vst [vmem:[#allocation2 + $0x1c0] sm:$0xff] 0.0
          %439 = vst [vmem:[#allocation2 + $0x1c8] sm:$0xff] 0.0
          %440 = vst [vmem:[#allocation2 + $0x1d0] sm:$0xff] 0.0
          %441 = vst [vmem:[#allocation2 + $0x1d8] sm:$0xff] 0.0
          %442 = vst [vmem:[#allocation2 + $0x1e0] sm:$0xff] 0.0
          %443 = vst [vmem:[#allocation2 + $0x1e8] sm:$0xff] 0.0
          %444 = vst [vmem:[#allocation2 + $0x1f0] sm:$0xff] 0.0
          %445 = vst [vmem:[#allocation2 + $0x1f8] sm:$0xff] 0.0
        $region74: #{_lambda_.5} parent=65 // pred_fallthru
          _
        %v446 = vld [vmem:[#allocation2] sm:$0xff]
        %v447 = vld [vmem:[#allocation2 + $0x8] sm:$0xff]
        %v448 = vld [vmem:[#allocation2 + $0x10] sm:$0xff]
        %v449 = vld [vmem:[#allocation2 + $0x18] sm:$0xff]
        %v450 = vld [vmem:[#allocation2 + $0x20] sm:$0xff]
        %v451 = vld [vmem:[#allocation2 + $0x28] sm:$0xff]
        %v452 = vld [vmem:[#allocation2 + $0x30] sm:$0xff]
        %v453 = vld [vmem:[#allocation2 + $0x38] sm:$0xff]
        %v454 = vld [vmem:[#allocation2 + $0x40] sm:$0xff]
        %v455 = vld [vmem:[#allocation2 + $0x48] sm:$0xff]
        %v456 = vld [vmem:[#allocation2 + $0x50] sm:$0xff]
        %v457 = vld [vmem:[#allocation2 + $0x58] sm:$0xff]
        %v458 = vld [vmem:[#allocation2 + $0x60] sm:$0xff]
        %v459 = vld [vmem:[#allocation2 + $0x68] sm:$0xff]
        %v460 = vld [vmem:[#allocation2 + $0x70] sm:$0xff]
        %v461 = vld [vmem:[#allocation2 + $0x78] sm:$0xff]
        %v462 = vld [vmem:[#allocation2 + $0x80] sm:$0xff]
        %v463 = vld [vmem:[#allocation2 + $0x88] sm:$0xff]
        %v464 = vld [vmem:[#allocation2 + $0x90] sm:$0xff]
        %v465 = vld [vmem:[#allocation2 + $0x98] sm:$0xff]
        %v466 = vld [vmem:[#allocation2 + $0xa0] sm:$0xff]
        %v467 = vld [vmem:[#allocation2 + $0xa8] sm:$0xff]
        %v468 = vld [vmem:[#allocation2 + $0xb0] sm:$0xff]
        %v469 = vld [vmem:[#allocation2 + $0xb8] sm:$0xff]
        %v470 = vld [vmem:[#allocation2 + $0xc0] sm:$0xff]
        %v471 = vld [vmem:[#allocation2 + $0xc8] sm:$0xff]
        %v472 = vld [vmem:[#allocation2 + $0xd0] sm:$0xff]
        %v473 = vld [vmem:[#allocation2 + $0xd8] sm:$0xff]
        %v474 = vld [vmem:[#allocation2 + $0xe0] sm:$0xff]
        %v475 = vld [vmem:[#allocation2 + $0xe8] sm:$0xff]
        %v476 = vld [vmem:[#allocation2 + $0xf0] sm:$0xff]
        %v477 = vld [vmem:[#allocation2 + $0xf8] sm:$0xff]
        %v478 = vld [vmem:[#allocation2 + $0x100] sm:$0xff]
        %v479 = vld [vmem:[#allocation2 + $0x108] sm:$0xff]
        %v480 = vld [vmem:[#allocation2 + $0x110] sm:$0xff]
        %v481 = vld [vmem:[#allocation2 + $0x118] sm:$0xff]
        %v482 = vld [vmem:[#allocation2 + $0x120] sm:$0xff]
        %v483 = vld [vmem:[#allocation2 + $0x128] sm:$0xff]
        %v484 = vld [vmem:[#allocation2 + $0x130] sm:$0xff]
        %v485 = vld [vmem:[#allocation2 + $0x138] sm:$0xff]
        %v486 = vld [vmem:[#allocation2 + $0x140] sm:$0xff]
        %v487 = vld [vmem:[#allocation2 + $0x148] sm:$0xff]
        %v488 = vld [vmem:[#allocation2 + $0x150] sm:$0xff]
        %v489 = vld [vmem:[#allocation2 + $0x158] sm:$0xff]
        %v490 = vld [vmem:[#allocation2 + $0x160] sm:$0xff]
        %v491 = vld [vmem:[#allocation2 + $0x168] sm:$0xff]
        %v492 = vld [vmem:[#allocation2 + $0x170] sm:$0xff]
        %v493 = vld [vmem:[#allocation2 + $0x178] sm:$0xff]
        %v494 = vld [vmem:[#allocation2 + $0x180] sm:$0xff]
        %v495 = vld [vmem:[#allocation2 + $0x188] sm:$0xff]
        %v496 = vld [vmem:[#allocation2 + $0x190] sm:$0xff]
        %v497 = vld [vmem:[#allocation2 + $0x198] sm:$0xff]
        %v498 = vld [vmem:[#allocation2 + $0x1a0] sm:$0xff]
        %v499 = vld [vmem:[#allocation2 + $0x1a8] sm:$0xff]
        %v500 = vld [vmem:[#allocation2 + $0x1b0] sm:$0xff]
        %v501 = vld [vmem:[#allocation2 + $0x1b8] sm:$0xff]
        %v502 = vld [vmem:[#allocation2 + $0x1c0] sm:$0xff]
        %v503 = vld [vmem:[#allocation2 + $0x1c8] sm:$0xff]
        %v504 = vld [vmem:[#allocation2 + $0x1d0] sm:$0xff]
        %v505 = vld [vmem:[#allocation2 + $0x1d8] sm:$0xff]
        %v506 = vld [vmem:[#allocation2 + $0x1e0] sm:$0xff]
        %v507 = vld [vmem:[#allocation2 + $0x1e8] sm:$0xff]
        %v508 = vld [vmem:[#allocation2 + $0x1f0] sm:$0xff]
        %v509 = vld [vmem:[#allocation2 + $0x1f8] sm:$0xff]
        %v510 = vld [vmem:[%s334] sm:$0xff]
        %v511 = vld [vmem:[%s334 + $0x8] sm:$0xff]
        %v512 = vld [vmem:[%s334 + $0x10] sm:$0xff]
        %v513 = vld [vmem:[%s334 + $0x18] sm:$0xff]
        %v514 = vld [vmem:[%s334 + $0x20] sm:$0xff]
        %v515 = vld [vmem:[%s334 + $0x28] sm:$0xff]
        %v516 = vld [vmem:[%s334 + $0x30] sm:$0xff]
        %v517 = vld [vmem:[%s334 + $0x38] sm:$0xff]
        %v518 = vld [vmem:[%s334 + $0x40] sm:$0xff]
        %v519 = vld [vmem:[%s334 + $0x48] sm:$0xff]
        %v520 = vld [vmem:[%s334 + $0x50] sm:$0xff]
        %v521 = vld [vmem:[%s334 + $0x58] sm:$0xff]
        %v522 = vld [vmem:[%s334 + $0x60] sm:$0xff]
        %v523 = vld [vmem:[%s334 + $0x68] sm:$0xff]
        %v524 = vld [vmem:[%s334 + $0x70] sm:$0xff]
        %v525 = vld [vmem:[%s334 + $0x78] sm:$0xff]
        %v526 = vld [vmem:[%s334 + $0x80] sm:$0xff]
        %v527 = vld [vmem:[%s334 + $0x88] sm:$0xff]
        %v528 = vld [vmem:[%s334 + $0x90] sm:$0xff]
        %v529 = vld [vmem:[%s334 + $0x98] sm:$0xff]
        %v530 = vld [vmem:[%s334 + $0xa0] sm:$0xff]
        %v531 = vld [vmem:[%s334 + $0xa8] sm:$0xff]
        %v532 = vld [vmem:[%s334 + $0xb0] sm:$0xff]
        %v533 = vld [vmem:[%s334 + $0xb8] sm:$0xff]
        %v534 = vld [vmem:[%s334 + $0xc0] sm:$0xff]
        %v535 = vld [vmem:[%s334 + $0xc8] sm:$0xff]
        %v536 = vld [vmem:[%s334 + $0xd0] sm:$0xff]
        %v537 = vld [vmem:[%s334 + $0xd8] sm:$0xff]
        %v538 = vld [vmem:[%s334 + $0xe0] sm:$0xff]
        %v539 = vld [vmem:[%s334 + $0xe8] sm:$0xff]
        %v540 = vld [vmem:[%s334 + $0xf0] sm:$0xff]
        %v541 = vld [vmem:[%s334 + $0xf8] sm:$0xff]
        %v542 = vld [vmem:[%s369] sm:$0xff]
        %v543 = vld [vmem:[%s369 + $0x8] sm:$0xff]
        %v544 = vld [vmem:[%s369 + $0x10] sm:$0xff]
        %v545 = vld [vmem:[%s369 + $0x18] sm:$0xff]
        %v546 = vld [vmem:[%s369 + $0x20] sm:$0xff]
        %v547 = vld [vmem:[%s369 + $0x28] sm:$0xff]
        %v548 = vld [vmem:[%s369 + $0x30] sm:$0xff]
        %v549 = vld [vmem:[%s369 + $0x38] sm:$0xff]
        %v550 = vld [vmem:[%s369 + $0x40] sm:$0xff]
        %v551 = vld [vmem:[%s369 + $0x48] sm:$0xff]
        %v552 = vld [vmem:[%s369 + $0x50] sm:$0xff]
        %v553 = vld [vmem:[%s369 + $0x58] sm:$0xff]
        %v554 = vld [vmem:[%s369 + $0x60] sm:$0xff]
        %v555 = vld [vmem:[%s369 + $0x68] sm:$0xff]
        %v556 = vld [vmem:[%s369 + $0x70] sm:$0xff]
        %v557 = vld [vmem:[%s369 + $0x78] sm:$0xff]
        %v558 = vld [vmem:[%s369 + $0x80] sm:$0xff]
        %v559 = vld [vmem:[%s369 + $0x88] sm:$0xff]
        %v560 = vld [vmem:[%s369 + $0x90] sm:$0xff]
        %v561 = vld [vmem:[%s369 + $0x98] sm:$0xff]
        %v562 = vld [vmem:[%s369 + $0xa0] sm:$0xff]
        %v563 = vld [vmem:[%s369 + $0xa8] sm:$0xff]
        %v564 = vld [vmem:[%s369 + $0xb0] sm:$0xff]
        %v565 = vld [vmem:[%s369 + $0xb8] sm:$0xff]
        %v566 = vld [vmem:[%s369 + $0xc0] sm:$0xff]
        %v567 = vld [vmem:[%s369 + $0xc8] sm:$0xff]
        %v568 = vld [vmem:[%s369 + $0xd0] sm:$0xff]
        %v569 = vld [vmem:[%s369 + $0xd8] sm:$0xff]
        %v570 = vld [vmem:[%s369 + $0xe0] sm:$0xff]
        %v571 = vld [vmem:[%s369 + $0xe8] sm:$0xff]
        %v572 = vld [vmem:[%s369 + $0xf0] sm:$0xff]
        %v573 = vld [vmem:[%s369 + $0xf8] sm:$0xff]
        %v606 = vunpack.c.l.b16 %v510
        %v607 = vunpack.c.h.b16 %v510
        %v608 = vunpack.c.l.b16 %v511
        %v609 = vunpack.c.h.b16 %v511
        %v610 = vunpack.c.l.b16 %v512
        %v611 = vunpack.c.h.b16 %v512
        %v612 = vunpack.c.l.b16 %v513
        %v613 = vunpack.c.h.b16 %v513
        %v614 = vunpack.c.l.b16 %v514
        %v615 = vunpack.c.h.b16 %v514
        %v616 = vunpack.c.l.b16 %v515
        %v617 = vunpack.c.h.b16 %v515
        %v618 = vunpack.c.l.b16 %v516
        %v619 = vunpack.c.h.b16 %v516
        %v620 = vunpack.c.l.b16 %v517
        %v621 = vunpack.c.h.b16 %v517
        %v622 = vunpack.c.l.b16 %v518
        %v623 = vunpack.c.h.b16 %v518
        %v624 = vunpack.c.l.b16 %v519
        %v625 = vunpack.c.h.b16 %v519
        %v626 = vunpack.c.l.b16 %v520
        %v627 = vunpack.c.h.b16 %v520
        %v628 = vunpack.c.l.b16 %v521
        %v629 = vunpack.c.h.b16 %v521
        %v630 = vunpack.c.l.b16 %v522
        %v631 = vunpack.c.h.b16 %v522
        %v632 = vunpack.c.l.b16 %v523
        %v633 = vunpack.c.h.b16 %v523
        %v634 = vunpack.c.l.b16 %v524
        %v635 = vunpack.c.h.b16 %v524
        %v636 = vunpack.c.l.b16 %v525
        %v637 = vunpack.c.h.b16 %v525
        %v638 = vunpack.c.l.b16 %v526
        %v639 = vunpack.c.h.b16 %v526
        %v640 = vunpack.c.l.b16 %v527
        %v641 = vunpack.c.h.b16 %v527
        %v642 = vunpack.c.l.b16 %v528
        %v643 = vunpack.c.h.b16 %v528
        %v644 = vunpack.c.l.b16 %v529
        %v645 = vunpack.c.h.b16 %v529
        %v646 = vunpack.c.l.b16 %v530
        %v647 = vunpack.c.h.b16 %v530
        %v648 = vunpack.c.l.b16 %v531
        %v649 = vunpack.c.h.b16 %v531
        %v650 = vunpack.c.l.b16 %v532
        %v651 = vunpack.c.h.b16 %v532
        %v652 = vunpack.c.l.b16 %v533
        %v653 = vunpack.c.h.b16 %v533
        %v654 = vunpack.c.l.b16 %v534
        %v655 = vunpack.c.h.b16 %v534
        %v656 = vunpack.c.l.b16 %v535
        %v657 = vunpack.c.h.b16 %v535
        %v658 = vunpack.c.l.b16 %v536
        %v659 = vunpack.c.h.b16 %v536
        %v660 = vunpack.c.l.b16 %v537
        %v661 = vunpack.c.h.b16 %v537
        %v662 = vunpack.c.l.b16 %v538
        %v663 = vunpack.c.h.b16 %v538
        %v664 = vunpack.c.l.b16 %v539
        %v665 = vunpack.c.h.b16 %v539
        %v666 = vunpack.c.l.b16 %v540
        %v667 = vunpack.c.h.b16 %v540
        %v668 = vunpack.c.l.b16 %v541
        %v669 = vunpack.c.h.b16 %v541
        %v670 = vpack.c.b16 %v608, %v606
        %v671 = vpack.c.b16 %v609, %v607
        %v672 = vpack.c.b16 %v612, %v610
        %v673 = vpack.c.b16 %v613, %v611
        %v674 = vpack.c.b16 %v616, %v614
        %v675 = vpack.c.b16 %v617, %v615
        %v676 = vpack.c.b16 %v620, %v618
        %v677 = vpack.c.b16 %v621, %v619
        %v678 = vpack.c.b16 %v624, %v622
        %v679 = vpack.c.b16 %v625, %v623
        %v680 = vpack.c.b16 %v628, %v626
        %v681 = vpack.c.b16 %v629, %v627
        %v682 = vpack.c.b16 %v632, %v630
        %v683 = vpack.c.b16 %v633, %v631
        %v684 = vpack.c.b16 %v636, %v634
        %v685 = vpack.c.b16 %v637, %v635
        %v686 = vpack.c.b16 %v640, %v638
        %v687 = vpack.c.b16 %v641, %v639
        %v688 = vpack.c.b16 %v644, %v642
        %v689 = vpack.c.b16 %v645, %v643
        %v690 = vpack.c.b16 %v648, %v646
        %v691 = vpack.c.b16 %v649, %v647
        %v692 = vpack.c.b16 %v652, %v650
        %v693 = vpack.c.b16 %v653, %v651
        %v694 = vpack.c.b16 %v656, %v654
        %v695 = vpack.c.b16 %v657, %v655
        %v696 = vpack.c.b16 %v660, %v658
        %v697 = vpack.c.b16 %v661, %v659
        %v698 = vpack.c.b16 %v664, %v662
        %v699 = vpack.c.b16 %v665, %v663
        %v700 = vpack.c.b16 %v668, %v666
        %v701 = vpack.c.b16 %v669, %v667
        %v766 = vunpack.c.l.b16 %v542
        %v767 = vunpack.c.h.b16 %v542
        %v768 = vunpack.c.l.b16 %v543
        %v769 = vunpack.c.h.b16 %v543
        %v770 = vunpack.c.l.b16 %v544
        %v771 = vunpack.c.h.b16 %v544
        %v772 = vunpack.c.l.b16 %v545
        %v773 = vunpack.c.h.b16 %v545
        %v774 = vunpack.c.l.b16 %v546
        %v775 = vunpack.c.h.b16 %v546
        %v776 = vunpack.c.l.b16 %v547
        %v777 = vunpack.c.h.b16 %v547
        %v778 = vunpack.c.l.b16 %v548
        %v779 = vunpack.c.h.b16 %v548
        %v780 = vunpack.c.l.b16 %v549
        %v781 = vunpack.c.h.b16 %v549
        %v782 = vunpack.c.l.b16 %v550
        %v783 = vunpack.c.h.b16 %v550
        %v784 = vunpack.c.l.b16 %v551
        %v785 = vunpack.c.h.b16 %v551
        %v786 = vunpack.c.l.b16 %v552
        %v787 = vunpack.c.h.b16 %v552
        %v788 = vunpack.c.l.b16 %v553
        %v789 = vunpack.c.h.b16 %v553
        %v790 = vunpack.c.l.b16 %v554
        %v791 = vunpack.c.h.b16 %v554
        %v792 = vunpack.c.l.b16 %v555
        %v793 = vunpack.c.h.b16 %v555
        %v794 = vunpack.c.l.b16 %v556
        %v795 = vunpack.c.h.b16 %v556
        %v796 = vunpack.c.l.b16 %v557
        %v797 = vunpack.c.h.b16 %v557
        %v798 = vunpack.c.l.b16 %v558
        %v799 = vunpack.c.h.b16 %v558
        %v800 = vunpack.c.l.b16 %v559
        %v801 = vunpack.c.h.b16 %v559
        %v802 = vunpack.c.l.b16 %v560
        %v803 = vunpack.c.h.b16 %v560
        %v804 = vunpack.c.l.b16 %v561
        %v805 = vunpack.c.h.b16 %v561
        %v806 = vunpack.c.l.b16 %v562
        %v807 = vunpack.c.h.b16 %v562
        %v808 = vunpack.c.l.b16 %v563
        %v809 = vunpack.c.h.b16 %v563
        %v810 = vunpack.c.l.b16 %v564
        %v811 = vunpack.c.h.b16 %v564
        %v812 = vunpack.c.l.b16 %v565
        %v813 = vunpack.c.h.b16 %v565
        %v814 = vunpack.c.l.b16 %v566
        %v815 = vunpack.c.h.b16 %v566
        %v816 = vunpack.c.l.b16 %v567
        %v817 = vunpack.c.h.b16 %v567
        %v818 = vunpack.c.l.b16 %v568
        %v819 = vunpack.c.h.b16 %v568
        %v820 = vunpack.c.l.b16 %v569
        %v821 = vunpack.c.h.b16 %v569
        %v822 = vunpack.c.l.b16 %v570
        %v823 = vunpack.c.h.b16 %v570
        %v824 = vunpack.c.l.b16 %v571
        %v825 = vunpack.c.h.b16 %v571
        %v826 = vunpack.c.l.b16 %v572
        %v827 = vunpack.c.h.b16 %v572
        %v828 = vunpack.c.l.b16 %v573
        %v829 = vunpack.c.h.b16 %v573
        %v830 = vpack.c.b16 %v768, %v766
        %v831 = vpack.c.b16 %v769, %v767
        %v832 = vpack.c.b16 %v772, %v770
        %v833 = vpack.c.b16 %v773, %v771
        %v834 = vpack.c.b16 %v776, %v774
        %v835 = vpack.c.b16 %v777, %v775
        %v836 = vpack.c.b16 %v780, %v778
        %v837 = vpack.c.b16 %v781, %v779
        %v838 = vpack.c.b16 %v784, %v782
        %v839 = vpack.c.b16 %v785, %v783
        %v840 = vpack.c.b16 %v788, %v786
        %v841 = vpack.c.b16 %v789, %v787
        %v842 = vpack.c.b16 %v792, %v790
        %v843 = vpack.c.b16 %v793, %v791
        %v844 = vpack.c.b16 %v796, %v794
        %v845 = vpack.c.b16 %v797, %v795
        %v846 = vpack.c.b16 %v800, %v798
        %v847 = vpack.c.b16 %v801, %v799
        %v848 = vpack.c.b16 %v804, %v802
        %v849 = vpack.c.b16 %v805, %v803
        %v850 = vpack.c.b16 %v808, %v806
        %v851 = vpack.c.b16 %v809, %v807
        %v852 = vpack.c.b16 %v812, %v810
        %v853 = vpack.c.b16 %v813, %v811
        %v854 = vpack.c.b16 %v816, %v814
        %v855 = vpack.c.b16 %v817, %v815
        %v856 = vpack.c.b16 %v820, %v818
        %v857 = vpack.c.b16 %v821, %v819
        %v858 = vpack.c.b16 %v824, %v822
        %v859 = vpack.c.b16 %v825, %v823
        %v860 = vpack.c.b16 %v828, %v826
        %v861 = vpack.c.b16 %v829, %v827
        %894 = vmatpush.bf16.msra.mxu0 %v844
        %895 = vmatpush.bf16.msra.mxu0 %v842
        %896 = vmatpush.bf16.msra.mxu0 %v840
        %897 = vmatpush.bf16.msra.mxu0 %v838
        %898 = vmatpush.bf16.msra.mxu0 %v836
        %899 = vmatpush.bf16.msra.mxu0 %v834
        %900 = vmatpush.bf16.msra.mxu0 %v832
        %901 = vmatpush.bf16.msra.mxu0 %v830
        %902 = vmatmul.bf16.gmra.mxu0 %v670
        %v903 = vpop.f32.mrf.mxu0
        %v904 = vadd.f32 0.0, %v903
        %v905 = vpop.f32.mrf.mxu0
        %v906 = vadd.f32 0.0, %v905
        %907 = vmatmul.bf16.gmra.mxu0 %v672
        %v908 = vpop.f32.mrf.mxu0
        %v909 = vadd.f32 0.0, %v908
        %v910 = vpop.f32.mrf.mxu0
        %v911 = vadd.f32 0.0, %v910
        %912 = vmatmul.bf16.gmra.mxu0 %v674
        %v913 = vpop.f32.mrf.mxu0
        %v914 = vadd.f32 0.0, %v913
        %v915 = vpop.f32.mrf.mxu0
        %v916 = vadd.f32 0.0, %v915
        %917 = vmatmul.bf16.gmra.mxu0 %v676
        %v918 = vpop.f32.mrf.mxu0
        %v919 = vadd.f32 0.0, %v918
        %v920 = vpop.f32.mrf.mxu0
        %v921 = vadd.f32 0.0, %v920
        %922 = vmatmul.bf16.gmra.mxu0 %v678
        %v923 = vpop.f32.mrf.mxu0
        %v924 = vadd.f32 0.0, %v923
        %v925 = vpop.f32.mrf.mxu0
        %v926 = vadd.f32 0.0, %v925
        %927 = vmatmul.bf16.gmra.mxu0 %v680
        %v928 = vpop.f32.mrf.mxu0
        %v929 = vadd.f32 0.0, %v928
        %v930 = vpop.f32.mrf.mxu0
        %v931 = vadd.f32 0.0, %v930
        %932 = vmatmul.bf16.gmra.mxu0 %v682
        %v933 = vpop.f32.mrf.mxu0
        %v934 = vadd.f32 0.0, %v933
        %v935 = vpop.f32.mrf.mxu0
        %v936 = vadd.f32 0.0, %v935
        %937 = vmatmul.bf16.gmra.mxu0 %v684
        %v938 = vpop.f32.mrf.mxu0
        %v939 = vadd.f32 0.0, %v938
        %v940 = vpop.f32.mrf.mxu0
        %v941 = vadd.f32 0.0, %v940
        %942 = vmatmul.bf16.gmra.mxu0 %v686
        %v943 = vpop.f32.mrf.mxu0
        %v944 = vadd.f32 0.0, %v943
        %v945 = vpop.f32.mrf.mxu0
        %v946 = vadd.f32 0.0, %v945
        %947 = vmatmul.bf16.gmra.mxu0 %v688
        %v948 = vpop.f32.mrf.mxu0
        %v949 = vadd.f32 0.0, %v948
        %v950 = vpop.f32.mrf.mxu0
        %v951 = vadd.f32 0.0, %v950
        %952 = vmatmul.bf16.gmra.mxu0 %v690
        %v953 = vpop.f32.mrf.mxu0
        %v954 = vadd.f32 0.0, %v953
        %v955 = vpop.f32.mrf.mxu0
        %v956 = vadd.f32 0.0, %v955
        %957 = vmatmul.bf16.gmra.mxu0 %v692
        %v958 = vpop.f32.mrf.mxu0
        %v959 = vadd.f32 0.0, %v958
        %v960 = vpop.f32.mrf.mxu0
        %v961 = vadd.f32 0.0, %v960
        %962 = vmatmul.bf16.gmra.mxu0 %v694
        %v963 = vpop.f32.mrf.mxu0
        %v964 = vadd.f32 0.0, %v963
        %v965 = vpop.f32.mrf.mxu0
        %v966 = vadd.f32 0.0, %v965
        %967 = vmatmul.bf16.gmra.mxu0 %v696
        %v968 = vpop.f32.mrf.mxu0
        %v969 = vadd.f32 0.0, %v968
        %v970 = vpop.f32.mrf.mxu0
        %v971 = vadd.f32 0.0, %v970
        %972 = vmatmul.bf16.gmra.mxu0 %v698
        %v973 = vpop.f32.mrf.mxu0
        %v974 = vadd.f32 0.0, %v973
        %v975 = vpop.f32.mrf.mxu0
        %v976 = vadd.f32 0.0, %v975
        %977 = vmatmul.bf16.gmra.mxu0 %v700
        %v978 = vpop.f32.mrf.mxu0
        %v979 = vadd.f32 0.0, %v978
        %v980 = vpop.f32.mrf.mxu0
        %v981 = vadd.f32 0.0, %v980
        %982 = vdwg.mxu0
        %983 = vmatpush.bf16.msra.mxu0 %v860
        %984 = vmatpush.bf16.msra.mxu0 %v858
        %985 = vmatpush.bf16.msra.mxu0 %v856
        %986 = vmatpush.bf16.msra.mxu0 %v854
        %987 = vmatpush.bf16.msra.mxu0 %v852
        %988 = vmatpush.bf16.msra.mxu0 %v850
        %989 = vmatpush.bf16.msra.mxu0 %v848
        %990 = vmatpush.bf16.msra.mxu0 %v846
        %991 = vmatmul.bf16.gmra.mxu0 %v671
        %v992 = vpop.f32.mrf.mxu0
        %v993 = vadd.f32 %v904, %v992
        %v994 = vpop.f32.mrf.mxu0
        %v995 = vadd.f32 %v906, %v994
        %996 = vmatmul.bf16.gmra.mxu0 %v673
        %v997 = vpop.f32.mrf.mxu0
        %v998 = vadd.f32 %v909, %v997
        %v999 = vpop.f32.mrf.mxu0
        %v1000 = vadd.f32 %v911, %v999
        %1001 = vmatmul.bf16.gmra.mxu0 %v675
        %v1002 = vpop.f32.mrf.mxu0
        %v1003 = vadd.f32 %v914, %v1002
        %v1004 = vpop.f32.mrf.mxu0
        %v1005 = vadd.f32 %v916, %v1004
        %1006 = vmatmul.bf16.gmra.mxu0 %v677
        %v1007 = vpop.f32.mrf.mxu0
        %v1008 = vadd.f32 %v919, %v1007
        %v1009 = vpop.f32.mrf.mxu0
        %v1010 = vadd.f32 %v921, %v1009
        %1011 = vmatmul.bf16.gmra.mxu0 %v679
        %v1012 = vpop.f32.mrf.mxu0
        %v1013 = vadd.f32 %v924, %v1012
        %v1014 = vpop.f32.mrf.mxu0
        %v1015 = vadd.f32 %v926, %v1014
        %1016 = vmatmul.bf16.gmra.mxu0 %v681
        %v1017 = vpop.f32.mrf.mxu0
        %v1018 = vadd.f32 %v929, %v1017
        %v1019 = vpop.f32.mrf.mxu0
        %v1020 = vadd.f32 %v931, %v1019
        %1021 = vmatmul.bf16.gmra.mxu0 %v683
        %v1022 = vpop.f32.mrf.mxu0
        %v1023 = vadd.f32 %v934, %v1022
        %v1024 = vpop.f32.mrf.mxu0
        %v1025 = vadd.f32 %v936, %v1024
        %1026 = vmatmul.bf16.gmra.mxu0 %v685
        %v1027 = vpop.f32.mrf.mxu0
        %v1028 = vadd.f32 %v939, %v1027
        %v1029 = vpop.f32.mrf.mxu0
        %v1030 = vadd.f32 %v941, %v1029
        %1031 = vmatmul.bf16.gmra.mxu0 %v687
        %v1032 = vpop.f32.mrf.mxu0
        %v1033 = vadd.f32 %v944, %v1032
        %v1034 = vpop.f32.mrf.mxu0
        %v1035 = vadd.f32 %v946, %v1034
        %1036 = vmatmul.bf16.gmra.mxu0 %v689
        %v1037 = vpop.f32.mrf.mxu0
        %v1038 = vadd.f32 %v949, %v1037
        %v1039 = vpop.f32.mrf.mxu0
        %v1040 = vadd.f32 %v951, %v1039
        %1041 = vmatmul.bf16.gmra.mxu0 %v691
        %v1042 = vpop.f32.mrf.mxu0
        %v1043 = vadd.f32 %v954, %v1042
        %v1044 = vpop.f32.mrf.mxu0
        %v1045 = vadd.f32 %v956, %v1044
        %1046 = vmatmul.bf16.gmra.mxu0 %v693
        %v1047 = vpop.f32.mrf.mxu0
        %v1048 = vadd.f32 %v959, %v1047
        %v1049 = vpop.f32.mrf.mxu0
        %v1050 = vadd.f32 %v961, %v1049
        %1051 = vmatmul.bf16.gmra.mxu0 %v695
        %v1052 = vpop.f32.mrf.mxu0
        %v1053 = vadd.f32 %v964, %v1052
        %v1054 = vpop.f32.mrf.mxu0
        %v1055 = vadd.f32 %v966, %v1054
        %1056 = vmatmul.bf16.gmra.mxu0 %v697
        %v1057 = vpop.f32.mrf.mxu0
        %v1058 = vadd.f32 %v969, %v1057
        %v1059 = vpop.f32.mrf.mxu0
        %v1060 = vadd.f32 %v971, %v1059
        %1061 = vmatmul.bf16.gmra.mxu0 %v699
        %v1062 = vpop.f32.mrf.mxu0
        %v1063 = vadd.f32 %v974, %v1062
        %v1064 = vpop.f32.mrf.mxu0
        %v1065 = vadd.f32 %v976, %v1064
        %1066 = vmatmul.bf16.gmra.mxu0 %v701
        %v1067 = vpop.f32.mrf.mxu0
        %v1068 = vadd.f32 %v979, %v1067
        %v1069 = vpop.f32.mrf.mxu0
        %v1070 = vadd.f32 %v981, %v1069
        %1071 = vdwg.mxu0
        %1072 = vmatpush.bf16.msra.mxu0 %v845
        %1073 = vmatpush.bf16.msra.mxu0 %v843
        %1074 = vmatpush.bf16.msra.mxu0 %v841
        %1075 = vmatpush.bf16.msra.mxu0 %v839
        %1076 = vmatpush.bf16.msra.mxu0 %v837
        %1077 = vmatpush.bf16.msra.mxu0 %v835
        %1078 = vmatpush.bf16.msra.mxu0 %v833
        %1079 = vmatpush.bf16.msra.mxu0 %v831
        %1080 = vmatmul.bf16.gmra.mxu0 %v670
        %v1081 = vpop.f32.mrf.mxu0
        %v1082 = vadd.f32 0.0, %v1081
        %v1083 = vpop.f32.mrf.mxu0
        %v1084 = vadd.f32 0.0, %v1083
        %1085 = vmatmul.bf16.gmra.mxu0 %v672
        %v1086 = vpop.f32.mrf.mxu0
        %v1087 = vadd.f32 0.0, %v1086
        %v1088 = vpop.f32.mrf.mxu0
        %v1089 = vadd.f32 0.0, %v1088
        %1090 = vmatmul.bf16.gmra.mxu0 %v674
        %v1091 = vpop.f32.mrf.mxu0
        %v1092 = vadd.f32 0.0, %v1091
        %v1093 = vpop.f32.mrf.mxu0
        %v1094 = vadd.f32 0.0, %v1093
        %1095 = vmatmul.bf16.gmra.mxu0 %v676
        %v1096 = vpop.f32.mrf.mxu0
        %v1097 = vadd.f32 0.0, %v1096
        %v1098 = vpop.f32.mrf.mxu0
        %v1099 = vadd.f32 0.0, %v1098
        %1100 = vmatmul.bf16.gmra.mxu0 %v678
        %v1101 = vpop.f32.mrf.mxu0
        %v1102 = vadd.f32 0.0, %v1101
        %v1103 = vpop.f32.mrf.mxu0
        %v1104 = vadd.f32 0.0, %v1103
        %1105 = vmatmul.bf16.gmra.mxu0 %v680
        %v1106 = vpop.f32.mrf.mxu0
        %v1107 = vadd.f32 0.0, %v1106
        %v1108 = vpop.f32.mrf.mxu0
        %v1109 = vadd.f32 0.0, %v1108
        %1110 = vmatmul.bf16.gmra.mxu0 %v682
        %v1111 = vpop.f32.mrf.mxu0
        %v1112 = vadd.f32 0.0, %v1111
        %v1113 = vpop.f32.mrf.mxu0
        %v1114 = vadd.f32 0.0, %v1113
        %1115 = vmatmul.bf16.gmra.mxu0 %v684
        %v1116 = vpop.f32.mrf.mxu0
        %v1117 = vadd.f32 0.0, %v1116
        %v1118 = vpop.f32.mrf.mxu0
        %v1119 = vadd.f32 0.0, %v1118
        %1120 = vmatmul.bf16.gmra.mxu0 %v686
        %v1121 = vpop.f32.mrf.mxu0
        %v1122 = vadd.f32 0.0, %v1121
        %v1123 = vpop.f32.mrf.mxu0
        %v1124 = vadd.f32 0.0, %v1123
        %1125 = vmatmul.bf16.gmra.mxu0 %v688
        %v1126 = vpop.f32.mrf.mxu0
        %v1127 = vadd.f32 0.0, %v1126
        %v1128 = vpop.f32.mrf.mxu0
        %v1129 = vadd.f32 0.0, %v1128
        %1130 = vmatmul.bf16.gmra.mxu0 %v690
        %v1131 = vpop.f32.mrf.mxu0
        %v1132 = vadd.f32 0.0, %v1131
        %v1133 = vpop.f32.mrf.mxu0
        %v1134 = vadd.f32 0.0, %v1133
        %1135 = vmatmul.bf16.gmra.mxu0 %v692
        %v1136 = vpop.f32.mrf.mxu0
        %v1137 = vadd.f32 0.0, %v1136
        %v1138 = vpop.f32.mrf.mxu0
        %v1139 = vadd.f32 0.0, %v1138
        %1140 = vmatmul.bf16.gmra.mxu0 %v694
        %v1141 = vpop.f32.mrf.mxu0
        %v1142 = vadd.f32 0.0, %v1141
        %v1143 = vpop.f32.mrf.mxu0
        %v1144 = vadd.f32 0.0, %v1143
        %1145 = vmatmul.bf16.gmra.mxu0 %v696
        %v1146 = vpop.f32.mrf.mxu0
        %v1147 = vadd.f32 0.0, %v1146
        %v1148 = vpop.f32.mrf.mxu0
        %v1149 = vadd.f32 0.0, %v1148
        %1150 = vmatmul.bf16.gmra.mxu0 %v698
        %v1151 = vpop.f32.mrf.mxu0
        %v1152 = vadd.f32 0.0, %v1151
        %v1153 = vpop.f32.mrf.mxu0
        %v1154 = vadd.f32 0.0, %v1153
        %1155 = vmatmul.bf16.gmra.mxu0 %v700
        %v1156 = vpop.f32.mrf.mxu0
        %v1157 = vadd.f32 0.0, %v1156
        %v1158 = vpop.f32.mrf.mxu0
        %v1159 = vadd.f32 0.0, %v1158
        %1160 = vdwg.mxu0
        %1161 = vmatpush.bf16.msra.mxu0 %v861
        %1162 = vmatpush.bf16.msra.mxu0 %v859
        %1163 = vmatpush.bf16.msra.mxu0 %v857
        %1164 = vmatpush.bf16.msra.mxu0 %v855
        %1165 = vmatpush.bf16.msra.mxu0 %v853
        %1166 = vmatpush.bf16.msra.mxu0 %v851
        %1167 = vmatpush.bf16.msra.mxu0 %v849
        %1168 = vmatpush.bf16.msra.mxu0 %v847
        %1169 = vmatmul.bf16.gmra.mxu0 %v671
        %v1170 = vpop.f32.mrf.mxu0
        %v1171 = vadd.f32 %v1082, %v1170
        %v1172 = vpop.f32.mrf.mxu0
        %v1173 = vadd.f32 %v1084, %v1172
        %1174 = vmatmul.bf16.gmra.mxu0 %v673
        %v1175 = vpop.f32.mrf.mxu0
        %v1176 = vadd.f32 %v1087, %v1175
        %v1177 = vpop.f32.mrf.mxu0
        %v1178 = vadd.f32 %v1089, %v1177
        %1179 = vmatmul.bf16.gmra.mxu0 %v675
        %v1180 = vpop.f32.mrf.mxu0
        %v1181 = vadd.f32 %v1092, %v1180
        %v1182 = vpop.f32.mrf.mxu0
        %v1183 = vadd.f32 %v1094, %v1182
        %1184 = vmatmul.bf16.gmra.mxu0 %v677
        %v1185 = vpop.f32.mrf.mxu0
        %v1186 = vadd.f32 %v1097, %v1185
        %v1187 = vpop.f32.mrf.mxu0
        %v1188 = vadd.f32 %v1099, %v1187
        %1189 = vmatmul.bf16.gmra.mxu0 %v679
        %v1190 = vpop.f32.mrf.mxu0
        %v1191 = vadd.f32 %v1102, %v1190
        %v1192 = vpop.f32.mrf.mxu0
        %v1193 = vadd.f32 %v1104, %v1192
        %1194 = vmatmul.bf16.gmra.mxu0 %v681
        %v1195 = vpop.f32.mrf.mxu0
        %v1196 = vadd.f32 %v1107, %v1195
        %v1197 = vpop.f32.mrf.mxu0
        %v1198 = vadd.f32 %v1109, %v1197
        %1199 = vmatmul.bf16.gmra.mxu0 %v683
        %v1200 = vpop.f32.mrf.mxu0
        %v1201 = vadd.f32 %v1112, %v1200
        %v1202 = vpop.f32.mrf.mxu0
        %v1203 = vadd.f32 %v1114, %v1202
        %1204 = vmatmul.bf16.gmra.mxu0 %v685
        %v1205 = vpop.f32.mrf.mxu0
        %v1206 = vadd.f32 %v1117, %v1205
        %v1207 = vpop.f32.mrf.mxu0
        %v1208 = vadd.f32 %v1119, %v1207
        %1209 = vmatmul.bf16.gmra.mxu0 %v687
        %v1210 = vpop.f32.mrf.mxu0
        %v1211 = vadd.f32 %v1122, %v1210
        %v1212 = vpop.f32.mrf.mxu0
        %v1213 = vadd.f32 %v1124, %v1212
        %1214 = vmatmul.bf16.gmra.mxu0 %v689
        %v1215 = vpop.f32.mrf.mxu0
        %v1216 = vadd.f32 %v1127, %v1215
        %v1217 = vpop.f32.mrf.mxu0
        %v1218 = vadd.f32 %v1129, %v1217
        %1219 = vmatmul.bf16.gmra.mxu0 %v691
        %v1220 = vpop.f32.mrf.mxu0
        %v1221 = vadd.f32 %v1132, %v1220
        %v1222 = vpop.f32.mrf.mxu0
        %v1223 = vadd.f32 %v1134, %v1222
        %1224 = vmatmul.bf16.gmra.mxu0 %v693
        %v1225 = vpop.f32.mrf.mxu0
        %v1226 = vadd.f32 %v1137, %v1225
        %v1227 = vpop.f32.mrf.mxu0
        %v1228 = vadd.f32 %v1139, %v1227
        %1229 = vmatmul.bf16.gmra.mxu0 %v695
        %v1230 = vpop.f32.mrf.mxu0
        %v1231 = vadd.f32 %v1142, %v1230
        %v1232 = vpop.f32.mrf.mxu0
        %v1233 = vadd.f32 %v1144, %v1232
        %1234 = vmatmul.bf16.gmra.mxu0 %v697
        %v1235 = vpop.f32.mrf.mxu0
        %v1236 = vadd.f32 %v1147, %v1235
        %v1237 = vpop.f32.mrf.mxu0
        %v1238 = vadd.f32 %v1149, %v1237
        %1239 = vmatmul.bf16.gmra.mxu0 %v699
        %v1240 = vpop.f32.mrf.mxu0
        %v1241 = vadd.f32 %v1152, %v1240
        %v1242 = vpop.f32.mrf.mxu0
        %v1243 = vadd.f32 %v1154, %v1242
        %1244 = vmatmul.bf16.gmra.mxu0 %v701
        %v1245 = vpop.f32.mrf.mxu0
        %v1246 = vadd.f32 %v1157, %v1245
        %v1247 = vpop.f32.mrf.mxu0
        %v1248 = vadd.f32 %v1159, %v1247
        %1249 = vdwg.mxu0
        %v1250 = vadd.f32 %v446, %v993
        %v1251 = vadd.f32 %v447, %v1171
        %v1252 = vadd.f32 %v448, %v995
        %v1253 = vadd.f32 %v449, %v1173
        %v1254 = vadd.f32 %v450, %v998
        %v1255 = vadd.f32 %v451, %v1176
        %v1256 = vadd.f32 %v452, %v1000
        %v1257 = vadd.f32 %v453, %v1178
        %v1258 = vadd.f32 %v454, %v1003
        %v1259 = vadd.f32 %v455, %v1181
        %v1260 = vadd.f32 %v456, %v1005
        %v1261 = vadd.f32 %v457, %v1183
        %v1262 = vadd.f32 %v458, %v1008
        %v1263 = vadd.f32 %v459, %v1186
        %v1264 = vadd.f32 %v460, %v1010
        %v1265 = vadd.f32 %v461, %v1188
        %v1266 = vadd.f32 %v462, %v1013
        %v1267 = vadd.f32 %v463, %v1191
        %v1268 = vadd.f32 %v464, %v1015
        %v1269 = vadd.f32 %v465, %v1193
        %v1270 = vadd.f32 %v466, %v1018
        %v1271 = vadd.f32 %v467, %v1196
        %v1272 = vadd.f32 %v468, %v1020
        %v1273 = vadd.f32 %v469, %v1198
        %v1274 = vadd.f32 %v470, %v1023
        %v1275 = vadd.f32 %v471, %v1201
        %v1276 = vadd.f32 %v472, %v1025
        %v1277 = vadd.f32 %v473, %v1203
        %v1278 = vadd.f32 %v474, %v1028
        %v1279 = vadd.f32 %v475, %v1206
        %v1280 = vadd.f32 %v476, %v1030
        %v1281 = vadd.f32 %v477, %v1208
        %v1282 = vadd.f32 %v478, %v1033
        %v1283 = vadd.f32 %v479, %v1211
        %v1284 = vadd.f32 %v480, %v1035
        %v1285 = vadd.f32 %v481, %v1213
        %v1286 = vadd.f32 %v482, %v1038
        %v1287 = vadd.f32 %v483, %v1216
        %v1288 = vadd.f32 %v484, %v1040
        %v1289 = vadd.f32 %v485, %v1218
        %v1290 = vadd.f32 %v486, %v1043
        %v1291 = vadd.f32 %v487, %v1221
        %v1292 = vadd.f32 %v488, %v1045
        %v1293 = vadd.f32 %v489, %v1223
        %v1294 = vadd.f32 %v490, %v1048
        %v1295 = vadd.f32 %v491, %v1226
        %v1296 = vadd.f32 %v492, %v1050
        %v1297 = vadd.f32 %v493, %v1228
        %v1298 = vadd.f32 %v494, %v1053
        %v1299 = vadd.f32 %v495, %v1231
        %v1300 = vadd.f32 %v496, %v1055
        %v1301 = vadd.f32 %v497, %v1233
        %v1302 = vadd.f32 %v498, %v1058
        %v1303 = vadd.f32 %v499, %v1236
        %v1304 = vadd.f32 %v500, %v1060
        %v1305 = vadd.f32 %v501, %v1238
        %v1306 = vadd.f32 %v502, %v1063
        %v1307 = vadd.f32 %v503, %v1241
        %v1308 = vadd.f32 %v504, %v1065
        %v1309 = vadd.f32 %v505, %v1243
        %v1310 = vadd.f32 %v506, %v1068
        %v1311 = vadd.f32 %v507, %v1246
        %v1312 = vadd.f32 %v508, %v1070
        %v1313 = vadd.f32 %v509, %v1248
        %1314 = vst [vmem:[#allocation2] sm:$0xff] %v1250
        %1315 = vst [vmem:[#allocation2 + $0x8] sm:$0xff] %v1251
        %1316 = vst [vmem:[#allocation2 + $0x10] sm:$0xff] %v1252
        %1317 = vst [vmem:[#allocation2 + $0x18] sm:$0xff] %v1253
        %1318 = vst [vmem:[#allocation2 + $0x20] sm:$0xff] %v1254
        %1319 = vst [vmem:[#allocation2 + $0x28] sm:$0xff] %v1255
        %1320 = vst [vmem:[#allocation2 + $0x30] sm:$0xff] %v1256
        %1321 = vst [vmem:[#allocation2 + $0x38] sm:$0xff] %v1257
        %1322 = vst [vmem:[#allocation2 + $0x40] sm:$0xff] %v1258
        %1323 = vst [vmem:[#allocation2 + $0x48] sm:$0xff] %v1259
        %1324 = vst [vmem:[#allocation2 + $0x50] sm:$0xff] %v1260
        %1325 = vst [vmem:[#allocation2 + $0x58] sm:$0xff] %v1261
        %1326 = vst [vmem:[#allocation2 + $0x60] sm:$0xff] %v1262
        %1327 = vst [vmem:[#allocation2 + $0x68] sm:$0xff] %v1263
        %1328 = vst [vmem:[#allocation2 + $0x70] sm:$0xff] %v1264
        %1329 = vst [vmem:[#allocation2 + $0x78] sm:$0xff] %v1265
        %1330 = vst [vmem:[#allocation2 + $0x80] sm:$0xff] %v1266
        %1331 = vst [vmem:[#allocation2 + $0x88] sm:$0xff] %v1267
        %1332 = vst [vmem:[#allocation2 + $0x90] sm:$0xff] %v1268
        %1333 = vst [vmem:[#allocation2 + $0x98] sm:$0xff] %v1269
        %1334 = vst [vmem:[#allocation2 + $0xa0] sm:$0xff] %v1270
        %1335 = vst [vmem:[#allocation2 + $0xa8] sm:$0xff] %v1271
        %1336 = vst [vmem:[#allocation2 + $0xb0] sm:$0xff] %v1272
        %1337 = vst [vmem:[#allocation2 + $0xb8] sm:$0xff] %v1273
        %1338 = vst [vmem:[#allocation2 + $0xc0] sm:$0xff] %v1274
        %1339 = vst [vmem:[#allocation2 + $0xc8] sm:$0xff] %v1275
        %1340 = vst [vmem:[#allocation2 + $0xd0] sm:$0xff] %v1276
        %1341 = vst [vmem:[#allocation2 + $0xd8] sm:$0xff] %v1277
        %1342 = vst [vmem:[#allocation2 + $0xe0] sm:$0xff] %v1278
        %1343 = vst [vmem:[#allocation2 + $0xe8] sm:$0xff] %v1279
        %1344 = vst [vmem:[#allocation2 + $0xf0] sm:$0xff] %v1280
        %1345 = vst [vmem:[#allocation2 + $0xf8] sm:$0xff] %v1281
        %1346 = vst [vmem:[#allocation2 + $0x100] sm:$0xff] %v1282
        %1347 = vst [vmem:[#allocation2 + $0x108] sm:$0xff] %v1283
        %1348 = vst [vmem:[#allocation2 + $0x110] sm:$0xff] %v1284
        %1349 = vst [vmem:[#allocation2 + $0x118] sm:$0xff] %v1285
        %1350 = vst [vmem:[#allocation2 + $0x120] sm:$0xff] %v1286
        %1351 = vst [vmem:[#allocation2 + $0x128] sm:$0xff] %v1287
        %1352 = vst [vmem:[#allocation2 + $0x130] sm:$0xff] %v1288
        %1353 = vst [vmem:[#allocation2 + $0x138] sm:$0xff] %v1289
        %1354 = vst [vmem:[#allocation2 + $0x140] sm:$0xff] %v1290
        %1355 = vst [vmem:[#allocation2 + $0x148] sm:$0xff] %v1291
        %1356 = vst [vmem:[#allocation2 + $0x150] sm:$0xff] %v1292
        %1357 = vst [vmem:[#allocation2 + $0x158] sm:$0xff] %v1293
        %1358 = vst [vmem:[#allocation2 + $0x160] sm:$0xff] %v1294
        %1359 = vst [vmem:[#allocation2 + $0x168] sm:$0xff] %v1295
        %1360 = vst [vmem:[#allocation2 + $0x170] sm:$0xff] %v1296
        %1361 = vst [vmem:[#allocation2 + $0x178] sm:$0xff] %v1297
        %1362 = vst [vmem:[#allocation2 + $0x180] sm:$0xff] %v1298
        %1363 = vst [vmem:[#allocation2 + $0x188] sm:$0xff] %v1299
        %1364 = vst [vmem:[#allocation2 + $0x190] sm:$0xff] %v1300
        %1365 = vst [vmem:[#allocation2 + $0x198] sm:$0xff] %v1301
        %1366 = vst [vmem:[#allocation2 + $0x1a0] sm:$0xff] %v1302
        %1367 = vst [vmem:[#allocation2 + $0x1a8] sm:$0xff] %v1303
        %1368 = vst [vmem:[#allocation2 + $0x1b0] sm:$0xff] %v1304
        %1369 = vst [vmem:[#allocation2 + $0x1b8] sm:$0xff] %v1305
        %1370 = vst [vmem:[#allocation2 + $0x1c0] sm:$0xff] %v1306
        %1371 = vst [vmem:[#allocation2 + $0x1c8] sm:$0xff] %v1307
        %1372 = vst [vmem:[#allocation2 + $0x1d0] sm:$0xff] %v1308
        %1373 = vst [vmem:[#allocation2 + $0x1d8] sm:$0xff] %v1309
        %1374 = vst [vmem:[#allocation2 + $0x1e0] sm:$0xff] %v1310
        %1375 = vst [vmem:[#allocation2 + $0x1e8] sm:$0xff] %v1311
        %1376 = vst [vmem:[#allocation2 + $0x1f0] sm:$0xff] %v1312
        %1377 = vst [vmem:[#allocation2 + $0x1f8] sm:$0xff] %v1313
        %p1378 = scmp.eq.s32.totalorder %s19, 1
        // Predicated region
        $region75: #{_lambda_.5} parent=65 // pred_check
          %p1379 = pneg %p1378
        $region76: #{_lambda_.5} parent=65 // pred_check_branch
          %1381 = sbr.rel (%p1379) target = $region78
        $region77: #{_lambda_.5} parent=65 // pred_region
          %v1382 = vld [vmem:[#allocation2] sm:$0xff]
          %v1383 = vld [vmem:[#allocation2 + $0x8] sm:$0xff]
          %v1384 = vld [vmem:[#allocation2 + $0x10] sm:$0xff]
          %v1385 = vld [vmem:[#allocation2 + $0x18] sm:$0xff]
          %v1386 = vld [vmem:[#allocation2 + $0x20] sm:$0xff]
          %v1387 = vld [vmem:[#allocation2 + $0x28] sm:$0xff]
          %v1388 = vld [vmem:[#allocation2 + $0x30] sm:$0xff]
          %v1389 = vld [vmem:[#allocation2 + $0x38] sm:$0xff]
          %v1390 = vld [vmem:[#allocation2 + $0x40] sm:$0xff]
          %v1391 = vld [vmem:[#allocation2 + $0x48] sm:$0xff]
          %v1392 = vld [vmem:[#allocation2 + $0x50] sm:$0xff]
          %v1393 = vld [vmem:[#allocation2 + $0x58] sm:$0xff]
          %v1394 = vld [vmem:[#allocation2 + $0x60] sm:$0xff]
          %v1395 = vld [vmem:[#allocation2 + $0x68] sm:$0xff]
          %v1396 = vld [vmem:[#allocation2 + $0x70] sm:$0xff]
          %v1397 = vld [vmem:[#allocation2 + $0x78] sm:$0xff]
          %v1398 = vld [vmem:[#allocation2 + $0x80] sm:$0xff]
          %v1399 = vld [vmem:[#allocation2 + $0x88] sm:$0xff]
          %v1400 = vld [vmem:[#allocation2 + $0x90] sm:$0xff]
          %v1401 = vld [vmem:[#allocation2 + $0x98] sm:$0xff]
          %v1402 = vld [vmem:[#allocation2 + $0xa0] sm:$0xff]
          %v1403 = vld [vmem:[#allocation2 + $0xa8] sm:$0xff]
          %v1404 = vld [vmem:[#allocation2 + $0xb0] sm:$0xff]
          %v1405 = vld [vmem:[#allocation2 + $0xb8] sm:$0xff]
          %v1406 = vld [vmem:[#allocation2 + $0xc0] sm:$0xff]
          %v1407 = vld [vmem:[#allocation2 + $0xc8] sm:$0xff]
          %v1408 = vld [vmem:[#allocation2 + $0xd0] sm:$0xff]
          %v1409 = vld [vmem:[#allocation2 + $0xd8] sm:$0xff]
          %v1410 = vld [vmem:[#allocation2 + $0xe0] sm:$0xff]
          %v1411 = vld [vmem:[#allocation2 + $0xe8] sm:$0xff]
          %v1412 = vld [vmem:[#allocation2 + $0xf0] sm:$0xff]
          %v1413 = vld [vmem:[#allocation2 + $0xf8] sm:$0xff]
          %v1414 = vld [vmem:[#allocation2 + $0x100] sm:$0xff]
          %v1415 = vld [vmem:[#allocation2 + $0x108] sm:$0xff]
          %v1416 = vld [vmem:[#allocation2 + $0x110] sm:$0xff]
          %v1417 = vld [vmem:[#allocation2 + $0x118] sm:$0xff]
          %v1418 = vld [vmem:[#allocation2 + $0x120] sm:$0xff]
          %v1419 = vld [vmem:[#allocation2 + $0x128] sm:$0xff]
          %v1420 = vld [vmem:[#allocation2 + $0x130] sm:$0xff]
          %v1421 = vld [vmem:[#allocation2 + $0x138] sm:$0xff]
          %v1422 = vld [vmem:[#allocation2 + $0x140] sm:$0xff]
          %v1423 = vld [vmem:[#allocation2 + $0x148] sm:$0xff]
          %v1424 = vld [vmem:[#allocation2 + $0x150] sm:$0xff]
          %v1425 = vld [vmem:[#allocation2 + $0x158] sm:$0xff]
          %v1426 = vld [vmem:[#allocation2 + $0x160] sm:$0xff]
          %v1427 = vld [vmem:[#allocation2 + $0x168] sm:$0xff]
          %v1428 = vld [vmem:[#allocation2 + $0x170] sm:$0xff]
          %v1429 = vld [vmem:[#allocation2 + $0x178] sm:$0xff]
          %v1430 = vld [vmem:[#allocation2 + $0x180] sm:$0xff]
          %v1431 = vld [vmem:[#allocation2 + $0x188] sm:$0xff]
          %v1432 = vld [vmem:[#allocation2 + $0x190] sm:$0xff]
          %v1433 = vld [vmem:[#allocation2 + $0x198] sm:$0xff]
          %v1434 = vld [vmem:[#allocation2 + $0x1a0] sm:$0xff]
          %v1435 = vld [vmem:[#allocation2 + $0x1a8] sm:$0xff]
          %v1436 = vld [vmem:[#allocation2 + $0x1b0] sm:$0xff]
          %v1437 = vld [vmem:[#allocation2 + $0x1b8] sm:$0xff]
          %v1438 = vld [vmem:[#allocation2 + $0x1c0] sm:$0xff]
          %v1439 = vld [vmem:[#allocation2 + $0x1c8] sm:$0xff]
          %v1440 = vld [vmem:[#allocation2 + $0x1d0] sm:$0xff]
          %v1441 = vld [vmem:[#allocation2 + $0x1d8] sm:$0xff]
          %v1442 = vld [vmem:[#allocation2 + $0x1e0] sm:$0xff]
          %v1443 = vld [vmem:[#allocation2 + $0x1e8] sm:$0xff]
          %v1444 = vld [vmem:[#allocation2 + $0x1f0] sm:$0xff]
          %v1445 = vld [vmem:[#allocation2 + $0x1f8] sm:$0xff]
          %v1446 = vmax.f32 %v1382, 0.0
          %v1447 = vmax.f32 %v1383, 0.0
          %v1448 = vmax.f32 %v1384, 0.0
          %v1449 = vmax.f32 %v1385, 0.0
          %v1450 = vmax.f32 %v1386, 0.0
          %v1451 = vmax.f32 %v1387, 0.0
          %v1452 = vmax.f32 %v1388, 0.0
          %v1453 = vmax.f32 %v1389, 0.0
          %v1454 = vmax.f32 %v1390, 0.0
          %v1455 = vmax.f32 %v1391, 0.0
          %v1456 = vmax.f32 %v1392, 0.0
          %v1457 = vmax.f32 %v1393, 0.0
          %v1458 = vmax.f32 %v1394, 0.0
          %v1459 = vmax.f32 %v1395, 0.0
          %v1460 = vmax.f32 %v1396, 0.0
          %v1461 = vmax.f32 %v1397, 0.0
          %v1462 = vmax.f32 %v1398, 0.0
          %v1463 = vmax.f32 %v1399, 0.0
          %v1464 = vmax.f32 %v1400, 0.0
          %v1465 = vmax.f32 %v1401, 0.0
          %v1466 = vmax.f32 %v1402, 0.0
          %v1467 = vmax.f32 %v1403, 0.0
          %v1468 = vmax.f32 %v1404, 0.0
          %v1469 = vmax.f32 %v1405, 0.0
          %v1470 = vmax.f32 %v1406, 0.0
          %v1471 = vmax.f32 %v1407, 0.0
          %v1472 = vmax.f32 %v1408, 0.0
          %v1473 = vmax.f32 %v1409, 0.0
          %v1474 = vmax.f32 %v1410, 0.0
          %v1475 = vmax.f32 %v1411, 0.0
          %v1476 = vmax.f32 %v1412, 0.0
          %v1477 = vmax.f32 %v1413, 0.0
          %v1478 = vmax.f32 %v1414, 0.0
          %v1479 = vmax.f32 %v1415, 0.0
          %v1480 = vmax.f32 %v1416, 0.0
          %v1481 = vmax.f32 %v1417, 0.0
          %v1482 = vmax.f32 %v1418, 0.0
          %v1483 = vmax.f32 %v1419, 0.0
          %v1484 = vmax.f32 %v1420, 0.0
          %v1485 = vmax.f32 %v1421, 0.0
          %v1486 = vmax.f32 %v1422, 0.0
          %v1487 = vmax.f32 %v1423, 0.0
          %v1488 = vmax.f32 %v1424, 0.0
          %v1489 = vmax.f32 %v1425, 0.0
          %v1490 = vmax.f32 %v1426, 0.0
          %v1491 = vmax.f32 %v1427, 0.0
          %v1492 = vmax.f32 %v1428, 0.0
          %v1493 = vmax.f32 %v1429, 0.0
          %v1494 = vmax.f32 %v1430, 0.0
          %v1495 = vmax.f32 %v1431, 0.0
          %v1496 = vmax.f32 %v1432, 0.0
          %v1497 = vmax.f32 %v1433, 0.0
          %v1498 = vmax.f32 %v1434, 0.0
          %v1499 = vmax.f32 %v1435, 0.0
          %v1500 = vmax.f32 %v1436, 0.0
          %v1501 = vmax.f32 %v1437, 0.0
          %v1502 = vmax.f32 %v1438, 0.0
          %v1503 = vmax.f32 %v1439, 0.0
          %v1504 = vmax.f32 %v1440, 0.0
          %v1505 = vmax.f32 %v1441, 0.0
          %v1506 = vmax.f32 %v1442, 0.0
          %v1507 = vmax.f32 %v1443, 0.0
          %v1508 = vmax.f32 %v1444, 0.0
          %v1509 = vmax.f32 %v1445, 0.0
          %v1510 = vpack.c.bf16 %v1448, %v1446
          %v1511 = vpack.c.bf16 %v1449, %v1447
          %v1512 = vpack.c.bf16 %v1452, %v1450
          %v1513 = vpack.c.bf16 %v1453, %v1451
          %v1514 = vpack.c.bf16 %v1456, %v1454
          %v1515 = vpack.c.bf16 %v1457, %v1455
          %v1516 = vpack.c.bf16 %v1460, %v1458
          %v1517 = vpack.c.bf16 %v1461, %v1459
          %v1518 = vpack.c.bf16 %v1464, %v1462
          %v1519 = vpack.c.bf16 %v1465, %v1463
          %v1520 = vpack.c.bf16 %v1468, %v1466
          %v1521 = vpack.c.bf16 %v1469, %v1467
          %v1522 = vpack.c.bf16 %v1472, %v1470
          %v1523 = vpack.c.bf16 %v1473, %v1471
          %v1524 = vpack.c.bf16 %v1476, %v1474
          %v1525 = vpack.c.bf16 %v1477, %v1475
          %v1526 = vpack.c.bf16 %v1480, %v1478
          %v1527 = vpack.c.bf16 %v1481, %v1479
          %v1528 = vpack.c.bf16 %v1484, %v1482
          %v1529 = vpack.c.bf16 %v1485, %v1483
          %v1530 = vpack.c.bf16 %v1488, %v1486
          %v1531 = vpack.c.bf16 %v1489, %v1487
          %v1532 = vpack.c.bf16 %v1492, %v1490
          %v1533 = vpack.c.bf16 %v1493, %v1491
          %v1534 = vpack.c.bf16 %v1496, %v1494
          %v1535 = vpack.c.bf16 %v1497, %v1495
          %v1536 = vpack.c.bf16 %v1500, %v1498
          %v1537 = vpack.c.bf16 %v1501, %v1499
          %v1538 = vpack.c.bf16 %v1504, %v1502
          %v1539 = vpack.c.bf16 %v1505, %v1503
          %v1540 = vpack.c.bf16 %v1508, %v1506
          %v1541 = vpack.c.bf16 %v1509, %v1507
          %v1542 = vld [vmem:[%s2] sm:$0xff]
          %v1543 = vld [vmem:[%s2 + $0x8] sm:$0xf]
          %v1544 = vld [vmem:[%s2 + $0xc] sm:$0xff]
          %v1545 = vld [vmem:[%s2 + $0x14] sm:$0xf]
          %v1546 = vld [vmem:[%s2 + $0x18] sm:$0xff]
          %v1547 = vld [vmem:[%s2 + $0x20] sm:$0xf]
          %v1548 = vld [vmem:[%s2 + $0x24] sm:$0xff]
          %v1549 = vld [vmem:[%s2 + $0x2c] sm:$0xf]
          %v1550 = vld [vmem:[%s2 + $0x30] sm:$0xff]
          %v1551 = vld [vmem:[%s2 + $0x38] sm:$0xf]
          %v1552 = vld [vmem:[%s2 + $0x3c] sm:$0xff]
          %v1553 = vld [vmem:[%s2 + $0x44] sm:$0xf]
          %v1554 = vld [vmem:[%s2 + $0x48] sm:$0xff]
          %v1555 = vld [vmem:[%s2 + $0x50] sm:$0xf]
          %v1556 = vld [vmem:[%s2 + $0x54] sm:$0xff]
          %v1557 = vld [vmem:[%s2 + $0x5c] sm:$0xf]
          %v1558 = vld [vmem:[%s2 + $0x60] sm:$0xff]
          %v1559 = vld [vmem:[%s2 + $0x68] sm:$0xf]
          %v1560 = vld [vmem:[%s2 + $0x6c] sm:$0xff]
          %v1561 = vld [vmem:[%s2 + $0x74] sm:$0xf]
          %v1562 = vld [vmem:[%s2 + $0x78] sm:$0xff]
          %v1563 = vld [vmem:[%s2 + $0x80] sm:$0xf]
          %v1564 = vld [vmem:[%s2 + $0x84] sm:$0xff]
          %v1565 = vld [vmem:[%s2 + $0x8c] sm:$0xf]
          %v1566 = vld [vmem:[%s2 + $0x90] sm:$0xff]
          %v1567 = vld [vmem:[%s2 + $0x98] sm:$0xf]
          %v1568 = vld [vmem:[%s2 + $0x9c] sm:$0xff]
          %v1569 = vld [vmem:[%s2 + $0xa4] sm:$0xf]
          %v1570 = vld [vmem:[%s2 + $0xa8] sm:$0xff]
          %v1571 = vld [vmem:[%s2 + $0xb0] sm:$0xf]
          %v1572 = vld [vmem:[%s2 + $0xb4] sm:$0xff]
          %v1573 = vld [vmem:[%s2 + $0xbc] sm:$0xf]
          %v1574 = vld [vmem:[%s2 + $0xc0] sm:$0xff]
          %v1575 = vld [vmem:[%s2 + $0xc8] sm:$0xf]
          %v1576 = vld [vmem:[%s2 + $0xcc] sm:$0xff]
          %v1577 = vld [vmem:[%s2 + $0xd4] sm:$0xf]
          %v1578 = vld [vmem:[%s2 + $0xd8] sm:$0xff]
          %v1579 = vld [vmem:[%s2 + $0xe0] sm:$0xf]
          %v1580 = vld [vmem:[%s2 + $0xe4] sm:$0xff]
          %v1581 = vld [vmem:[%s2 + $0xec] sm:$0xf]
          %v1582 = vld [vmem:[%s2 + $0xf0] sm:$0xff]
          %v1583 = vld [vmem:[%s2 + $0xf8] sm:$0xf]
          %v1584 = vld [vmem:[%s2 + $0xfc] sm:$0xff]
          %v1585 = vld [vmem:[%s2 + $0x104] sm:$0xf]
          %v1586 = vld [vmem:[%s2 + $0x108] sm:$0xff]
          %v1587 = vld [vmem:[%s2 + $0x110] sm:$0xf]
          %v1588 = vld [vmem:[%s2 + $0x114] sm:$0xff]
          %v1589 = vld [vmem:[%s2 + $0x11c] sm:$0xf]
          %v1590 = vld [vmem:[%s2 + $0x120] sm:$0xff]
          %v1591 = vld [vmem:[%s2 + $0x128] sm:$0xf]
          %v1592 = vld [vmem:[%s2 + $0x12c] sm:$0xff]
          %v1593 = vld [vmem:[%s2 + $0x134] sm:$0xf]
          %v1594 = vld [vmem:[%s2 + $0x138] sm:$0xff]
          %v1595 = vld [vmem:[%s2 + $0x140] sm:$0xf]
          %v1596 = vld [vmem:[%s2 + $0x144] sm:$0xff]
          %v1597 = vld [vmem:[%s2 + $0x14c] sm:$0xf]
          %v1598 = vld [vmem:[%s2 + $0x150] sm:$0xff]
          %v1599 = vld [vmem:[%s2 + $0x158] sm:$0xf]
          %v1600 = vld [vmem:[%s2 + $0x15c] sm:$0xff]
          %v1601 = vld [vmem:[%s2 + $0x164] sm:$0xf]
          %v1602 = vld [vmem:[%s2 + $0x168] sm:$0xff]
          %v1603 = vld [vmem:[%s2 + $0x170] sm:$0xf]
          %v1604 = vld [vmem:[%s2 + $0x174] sm:$0xff]
          %v1605 = vld [vmem:[%s2 + $0x17c] sm:$0xf]
          %v1670 = vunpack.c.l.b16 %v1542
          %v1671 = vunpack.c.h.b16 %v1542
          %v1672 = vunpack.c.l.b16 %v1543
          %v1673 = vunpack.c.l.b16 %v1544
          %v1674 = vunpack.c.h.b16 %v1544
          %v1675 = vunpack.c.l.b16 %v1545
          %v1676 = vunpack.c.l.b16 %v1546
          %v1677 = vunpack.c.h.b16 %v1546
          %v1678 = vunpack.c.l.b16 %v1547
          %v1679 = vunpack.c.l.b16 %v1548
          %v1680 = vunpack.c.h.b16 %v1548
          %v1681 = vunpack.c.l.b16 %v1549
          %v1682 = vunpack.c.l.b16 %v1550
          %v1683 = vunpack.c.h.b16 %v1550
          %v1684 = vunpack.c.l.b16 %v1551
          %v1685 = vunpack.c.l.b16 %v1552
          %v1686 = vunpack.c.h.b16 %v1552
          %v1687 = vunpack.c.l.b16 %v1553
          %v1688 = vunpack.c.l.b16 %v1554
          %v1689 = vunpack.c.h.b16 %v1554
          %v1690 = vunpack.c.l.b16 %v1555
          %v1691 = vunpack.c.l.b16 %v1556
          %v1692 = vunpack.c.h.b16 %v1556
          %v1693 = vunpack.c.l.b16 %v1557
          %v1694 = vunpack.c.l.b16 %v1558
          %v1695 = vunpack.c.h.b16 %v1558
          %v1696 = vunpack.c.l.b16 %v1559
          %v1697 = vunpack.c.l.b16 %v1560
          %v1698 = vunpack.c.h.b16 %v1560
          %v1699 = vunpack.c.l.b16 %v1561
          %v1700 = vunpack.c.l.b16 %v1562
          %v1701 = vunpack.c.h.b16 %v1562
          %v1702 = vunpack.c.l.b16 %v1563
          %v1703 = vunpack.c.l.b16 %v1564
          %v1704 = vunpack.c.h.b16 %v1564
          %v1705 = vunpack.c.l.b16 %v1565
          %v1706 = vunpack.c.l.b16 %v1566
          %v1707 = vunpack.c.h.b16 %v1566
          %v1708 = vunpack.c.l.b16 %v1567
          %v1709 = vunpack.c.l.b16 %v1568
          %v1710 = vunpack.c.h.b16 %v1568
          %v1711 = vunpack.c.l.b16 %v1569
          %v1712 = vunpack.c.l.b16 %v1570
          %v1713 = vunpack.c.h.b16 %v1570
          %v1714 = vunpack.c.l.b16 %v1571
          %v1715 = vunpack.c.l.b16 %v1572
          %v1716 = vunpack.c.h.b16 %v1572
          %v1717 = vunpack.c.l.b16 %v1573
          %v1718 = vunpack.c.l.b16 %v1574
          %v1719 = vunpack.c.h.b16 %v1574
          %v1720 = vunpack.c.l.b16 %v1575
          %v1721 = vunpack.c.l.b16 %v1576
          %v1722 = vunpack.c.h.b16 %v1576
          %v1723 = vunpack.c.l.b16 %v1577
          %v1724 = vunpack.c.l.b16 %v1578
          %v1725 = vunpack.c.h.b16 %v1578
          %v1726 = vunpack.c.l.b16 %v1579
          %v1727 = vunpack.c.l.b16 %v1580
          %v1728 = vunpack.c.h.b16 %v1580
          %v1729 = vunpack.c.l.b16 %v1581
          %v1730 = vunpack.c.l.b16 %v1582
          %v1731 = vunpack.c.h.b16 %v1582
          %v1732 = vunpack.c.l.b16 %v1583
          %v1733 = vunpack.c.l.b16 %v1584
          %v1734 = vunpack.c.h.b16 %v1584
          %v1735 = vunpack.c.l.b16 %v1585
          %v1736 = vunpack.c.l.b16 %v1586
          %v1737 = vunpack.c.h.b16 %v1586
          %v1738 = vunpack.c.l.b16 %v1587
          %v1739 = vunpack.c.l.b16 %v1588
          %v1740 = vunpack.c.h.b16 %v1588
          %v1741 = vunpack.c.l.b16 %v1589
          %v1742 = vunpack.c.l.b16 %v1590
          %v1743 = vunpack.c.h.b16 %v1590
          %v1744 = vunpack.c.l.b16 %v1591
          %v1745 = vunpack.c.l.b16 %v1592
          %v1746 = vunpack.c.h.b16 %v1592
          %v1747 = vunpack.c.l.b16 %v1593
          %v1748 = vunpack.c.l.b16 %v1594
          %v1749 = vunpack.c.h.b16 %v1594
          %v1750 = vunpack.c.l.b16 %v1595
          %v1751 = vunpack.c.l.b16 %v1596
          %v1752 = vunpack.c.h.b16 %v1596
          %v1753 = vunpack.c.l.b16 %v1597
          %v1754 = vunpack.c.l.b16 %v1598
          %v1755 = vunpack.c.h.b16 %v1598
          %v1756 = vunpack.c.l.b16 %v1599
          %v1757 = vunpack.c.l.b16 %v1600
          %v1758 = vunpack.c.h.b16 %v1600
          %v1759 = vunpack.c.l.b16 %v1601
          %v1760 = vunpack.c.l.b16 %v1602
          %v1761 = vunpack.c.h.b16 %v1602
          %v1762 = vunpack.c.l.b16 %v1603
          %v1763 = vunpack.c.l.b16 %v1604
          %v1764 = vunpack.c.h.b16 %v1604
          %v1765 = vunpack.c.l.b16 %v1605
          %v1766 = vpack.c.b16 %v1673, %v1670
          %v1767 = vpack.c.b16 %v1674, %v1671
          %v1768 = vpack.c.b16 %v1675, %v1672
          %v1769 = vpack.c.b16 %v1679, %v1676
          %v1770 = vpack.c.b16 %v1680, %v1677
          %v1771 = vpack.c.b16 %v1681, %v1678
          %v1772 = vpack.c.b16 %v1685, %v1682
          %v1773 = vpack.c.b16 %v1686, %v1683
          %v1774 = vpack.c.b16 %v1687, %v1684
          %v1775 = vpack.c.b16 %v1691, %v1688
          %v1776 = vpack.c.b16 %v1692, %v1689
          %v1777 = vpack.c.b16 %v1693, %v1690
          %v1778 = vpack.c.b16 %v1697, %v1694
          %v1779 = vpack.c.b16 %v1698, %v1695
          %v1780 = vpack.c.b16 %v1699, %v1696
          %v1781 = vpack.c.b16 %v1703, %v1700
          %v1782 = vpack.c.b16 %v1704, %v1701
          %v1783 = vpack.c.b16 %v1705, %v1702
          %v1784 = vpack.c.b16 %v1709, %v1706
          %v1785 = vpack.c.b16 %v1710, %v1707
          %v1786 = vpack.c.b16 %v1711, %v1708
          %v1787 = vpack.c.b16 %v1715, %v1712
          %v1788 = vpack.c.b16 %v1716, %v1713
          %v1789 = vpack.c.b16 %v1717, %v1714
          %v1790 = vpack.c.b16 %v1721, %v1718
          %v1791 = vpack.c.b16 %v1722, %v1719
          %v1792 = vpack.c.b16 %v1723, %v1720
          %v1793 = vpack.c.b16 %v1727, %v1724
          %v1794 = vpack.c.b16 %v1728, %v1725
          %v1795 = vpack.c.b16 %v1729, %v1726
          %v1796 = vpack.c.b16 %v1733, %v1730
          %v1797 = vpack.c.b16 %v1734, %v1731
          %v1798 = vpack.c.b16 %v1735, %v1732
          %v1799 = vpack.c.b16 %v1739, %v1736
          %v1800 = vpack.c.b16 %v1740, %v1737
          %v1801 = vpack.c.b16 %v1741, %v1738
          %v1802 = vpack.c.b16 %v1745, %v1742
          %v1803 = vpack.c.b16 %v1746, %v1743
          %v1804 = vpack.c.b16 %v1747, %v1744
          %v1805 = vpack.c.b16 %v1751, %v1748
          %v1806 = vpack.c.b16 %v1752, %v1749
          %v1807 = vpack.c.b16 %v1753, %v1750
          %v1808 = vpack.c.b16 %v1757, %v1754
          %v1809 = vpack.c.b16 %v1758, %v1755
          %v1810 = vpack.c.b16 %v1759, %v1756
          %v1811 = vpack.c.b16 %v1763, %v1760
          %v1812 = vpack.c.b16 %v1764, %v1761
          %v1813 = vpack.c.b16 %v1765, %v1762
          %1862 = vmatpush.bf16.msra.mxu0 %v1787
          %1863 = vmatpush.bf16.msra.mxu0 %v1784
          %1864 = vmatpush.bf16.msra.mxu0 %v1781
          %1865 = vmatpush.bf16.msra.mxu0 %v1778
          %1866 = vmatpush.bf16.msra.mxu0 %v1775
          %1867 = vmatpush.bf16.msra.mxu0 %v1772
          %1868 = vmatpush.bf16.msra.mxu0 %v1769
          %1869 = vmatpush.bf16.msra.mxu0 %v1766
          %1870 = vmatmul.bf16.gmra.mxu0 %v1510
          %v1871 = vpop.f32.mrf.mxu0
          %v1872 = vadd.f32 0.0, %v1871
          %v1873 = vpop.f32.mrf.mxu0
          %v1874 = vadd.f32 0.0, %v1873
          %1875 = vmatmul.bf16.gmra.mxu0 %v1512
          %v1876 = vpop.f32.mrf.mxu0
          %v1877 = vadd.f32 0.0, %v1876
          %v1878 = vpop.f32.mrf.mxu0
          %v1879 = vadd.f32 0.0, %v1878
          %1880 = vmatmul.bf16.gmra.mxu0 %v1514
          %v1881 = vpop.f32.mrf.mxu0
          %v1882 = vadd.f32 0.0, %v1881
          %v1883 = vpop.f32.mrf.mxu0
          %v1884 = vadd.f32 0.0, %v1883
          %1885 = vmatmul.bf16.gmra.mxu0 %v1516
          %v1886 = vpop.f32.mrf.mxu0
          %v1887 = vadd.f32 0.0, %v1886
          %v1888 = vpop.f32.mrf.mxu0
          %v1889 = vadd.f32 0.0, %v1888
          %1890 = vmatmul.bf16.gmra.mxu0 %v1518
          %v1891 = vpop.f32.mrf.mxu0
          %v1892 = vadd.f32 0.0, %v1891
          %v1893 = vpop.f32.mrf.mxu0
          %v1894 = vadd.f32 0.0, %v1893
          %1895 = vmatmul.bf16.gmra.mxu0 %v1520
          %v1896 = vpop.f32.mrf.mxu0
          %v1897 = vadd.f32 0.0, %v1896
          %v1898 = vpop.f32.mrf.mxu0
          %v1899 = vadd.f32 0.0, %v1898
          %1900 = vmatmul.bf16.gmra.mxu0 %v1522
          %v1901 = vpop.f32.mrf.mxu0
          %v1902 = vadd.f32 0.0, %v1901
          %v1903 = vpop.f32.mrf.mxu0
          %v1904 = vadd.f32 0.0, %v1903
          %1905 = vmatmul.bf16.gmra.mxu0 %v1524
          %v1906 = vpop.f32.mrf.mxu0
          %v1907 = vadd.f32 0.0, %v1906
          %v1908 = vpop.f32.mrf.mxu0
          %v1909 = vadd.f32 0.0, %v1908
          %1910 = vmatmul.bf16.gmra.mxu0 %v1526
          %v1911 = vpop.f32.mrf.mxu0
          %v1912 = vadd.f32 0.0, %v1911
          %v1913 = vpop.f32.mrf.mxu0
          %v1914 = vadd.f32 0.0, %v1913
          %1915 = vmatmul.bf16.gmra.mxu0 %v1528
          %v1916 = vpop.f32.mrf.mxu0
          %v1917 = vadd.f32 0.0, %v1916
          %v1918 = vpop.f32.mrf.mxu0
          %v1919 = vadd.f32 0.0, %v1918
          %1920 = vmatmul.bf16.gmra.mxu0 %v1530
          %v1921 = vpop.f32.mrf.mxu0
          %v1922 = vadd.f32 0.0, %v1921
          %v1923 = vpop.f32.mrf.mxu0
          %v1924 = vadd.f32 0.0, %v1923
          %1925 = vmatmul.bf16.gmra.mxu0 %v1532
          %v1926 = vpop.f32.mrf.mxu0
          %v1927 = vadd.f32 0.0, %v1926
          %v1928 = vpop.f32.mrf.mxu0
          %v1929 = vadd.f32 0.0, %v1928
          %1930 = vmatmul.bf16.gmra.mxu0 %v1534
          %v1931 = vpop.f32.mrf.mxu0
          %v1932 = vadd.f32 0.0, %v1931
          %v1933 = vpop.f32.mrf.mxu0
          %v1934 = vadd.f32 0.0, %v1933
          %1935 = vmatmul.bf16.gmra.mxu0 %v1536
          %v1936 = vpop.f32.mrf.mxu0
          %v1937 = vadd.f32 0.0, %v1936
          %v1938 = vpop.f32.mrf.mxu0
          %v1939 = vadd.f32 0.0, %v1938
          %1940 = vmatmul.bf16.gmra.mxu0 %v1538
          %v1941 = vpop.f32.mrf.mxu0
          %v1942 = vadd.f32 0.0, %v1941
          %v1943 = vpop.f32.mrf.mxu0
          %v1944 = vadd.f32 0.0, %v1943
          %1945 = vmatmul.bf16.gmra.mxu0 %v1540
          %v1946 = vpop.f32.mrf.mxu0
          %v1947 = vadd.f32 0.0, %v1946
          %v1948 = vpop.f32.mrf.mxu0
          %v1949 = vadd.f32 0.0, %v1948
          %1950 = vdwg.mxu0
          %1951 = vmatpush.bf16.msra.mxu0 %v1811
          %1952 = vmatpush.bf16.msra.mxu0 %v1808
          %1953 = vmatpush.bf16.msra.mxu0 %v1805
          %1954 = vmatpush.bf16.msra.mxu0 %v1802
          %1955 = vmatpush.bf16.msra.mxu0 %v1799
          %1956 = vmatpush.bf16.msra.mxu0 %v1796
          %1957 = vmatpush.bf16.msra.mxu0 %v1793
          %1958 = vmatpush.bf16.msra.mxu0 %v1790
          %1959 = vmatmul.bf16.gmra.mxu0 %v1511
          %v1960 = vpop.f32.mrf.mxu0
          %v1961 = vadd.f32 %v1872, %v1960
          %v1962 = vpop.f32.mrf.mxu0
          %v1963 = vadd.f32 %v1874, %v1962
          %1964 = vmatmul.bf16.gmra.mxu0 %v1513
          %v1965 = vpop.f32.mrf.mxu0
          %v1966 = vadd.f32 %v1877, %v1965
          %v1967 = vpop.f32.mrf.mxu0
          %v1968 = vadd.f32 %v1879, %v1967
          %1969 = vmatmul.bf16.gmra.mxu0 %v1515
          %v1970 = vpop.f32.mrf.mxu0
          %v1971 = vadd.f32 %v1882, %v1970
          %v1972 = vpop.f32.mrf.mxu0
          %v1973 = vadd.f32 %v1884, %v1972
          %1974 = vmatmul.bf16.gmra.mxu0 %v1517
          %v1975 = vpop.f32.mrf.mxu0
          %v1976 = vadd.f32 %v1887, %v1975
          %v1977 = vpop.f32.mrf.mxu0
          %v1978 = vadd.f32 %v1889, %v1977
          %1979 = vmatmul.bf16.gmra.mxu0 %v1519
          %v1980 = vpop.f32.mrf.mxu0
          %v1981 = vadd.f32 %v1892, %v1980
          %v1982 = vpop.f32.mrf.mxu0
          %v1983 = vadd.f32 %v1894, %v1982
          %1984 = vmatmul.bf16.gmra.mxu0 %v1521
          %v1985 = vpop.f32.mrf.mxu0
          %v1986 = vadd.f32 %v1897, %v1985
          %v1987 = vpop.f32.mrf.mxu0
          %v1988 = vadd.f32 %v1899, %v1987
          %1989 = vmatmul.bf16.gmra.mxu0 %v1523
          %v1990 = vpop.f32.mrf.mxu0
          %v1991 = vadd.f32 %v1902, %v1990
          %v1992 = vpop.f32.mrf.mxu0
          %v1993 = vadd.f32 %v1904, %v1992
          %1994 = vmatmul.bf16.gmra.mxu0 %v1525
          %v1995 = vpop.f32.mrf.mxu0
          %v1996 = vadd.f32 %v1907, %v1995
          %v1997 = vpop.f32.mrf.mxu0
          %v1998 = vadd.f32 %v1909, %v1997
          %1999 = vmatmul.bf16.gmra.mxu0 %v1527
          %v2000 = vpop.f32.mrf.mxu0
          %v2001 = vadd.f32 %v1912, %v2000
          %v2002 = vpop.f32.mrf.mxu0
          %v2003 = vadd.f32 %v1914, %v2002
          %2004 = vmatmul.bf16.gmra.mxu0 %v1529
          %v2005 = vpop.f32.mrf.mxu0
          %v2006 = vadd.f32 %v1917, %v2005
          %v2007 = vpop.f32.mrf.mxu0
          %v2008 = vadd.f32 %v1919, %v2007
          %2009 = vmatmul.bf16.gmra.mxu0 %v1531
          %v2010 = vpop.f32.mrf.mxu0
          %v2011 = vadd.f32 %v1922, %v2010
          %v2012 = vpop.f32.mrf.mxu0
          %v2013 = vadd.f32 %v1924, %v2012
          %2014 = vmatmul.bf16.gmra.mxu0 %v1533
          %v2015 = vpop.f32.mrf.mxu0
          %v2016 = vadd.f32 %v1927, %v2015
          %v2017 = vpop.f32.mrf.mxu0
          %v2018 = vadd.f32 %v1929, %v2017
          %2019 = vmatmul.bf16.gmra.mxu0 %v1535
          %v2020 = vpop.f32.mrf.mxu0
          %v2021 = vadd.f32 %v1932, %v2020
          %v2022 = vpop.f32.mrf.mxu0
          %v2023 = vadd.f32 %v1934, %v2022
          %2024 = vmatmul.bf16.gmra.mxu0 %v1537
          %v2025 = vpop.f32.mrf.mxu0
          %v2026 = vadd.f32 %v1937, %v2025
          %v2027 = vpop.f32.mrf.mxu0
          %v2028 = vadd.f32 %v1939, %v2027
          %2029 = vmatmul.bf16.gmra.mxu0 %v1539
          %v2030 = vpop.f32.mrf.mxu0
          %v2031 = vadd.f32 %v1942, %v2030
          %v2032 = vpop.f32.mrf.mxu0
          %v2033 = vadd.f32 %v1944, %v2032
          %2034 = vmatmul.bf16.gmra.mxu0 %v1541
          %v2035 = vpop.f32.mrf.mxu0
          %v2036 = vadd.f32 %v1947, %v2035
          %v2037 = vpop.f32.mrf.mxu0
          %v2038 = vadd.f32 %v1949, %v2037
          %2039 = vdwg.mxu0
          %2040 = vmatpush.bf16.msra.mxu0 %v1788
          %2041 = vmatpush.bf16.msra.mxu0 %v1785
          %2042 = vmatpush.bf16.msra.mxu0 %v1782
          %2043 = vmatpush.bf16.msra.mxu0 %v1779
          %2044 = vmatpush.bf16.msra.mxu0 %v1776
          %2045 = vmatpush.bf16.msra.mxu0 %v1773
          %2046 = vmatpush.bf16.msra.mxu0 %v1770
          %2047 = vmatpush.bf16.msra.mxu0 %v1767
          %2048 = vmatmul.bf16.gmra.mxu0 %v1510
          %v2049 = vpop.f32.mrf.mxu0
          %v2050 = vadd.f32 0.0, %v2049
          %v2051 = vpop.f32.mrf.mxu0
          %v2052 = vadd.f32 0.0, %v2051
          %2053 = vmatmul.bf16.gmra.mxu0 %v1512
          %v2054 = vpop.f32.mrf.mxu0
          %v2055 = vadd.f32 0.0, %v2054
          %v2056 = vpop.f32.mrf.mxu0
          %v2057 = vadd.f32 0.0, %v2056
          %2058 = vmatmul.bf16.gmra.mxu0 %v1514
          %v2059 = vpop.f32.mrf.mxu0
          %v2060 = vadd.f32 0.0, %v2059
          %v2061 = vpop.f32.mrf.mxu0
          %v2062 = vadd.f32 0.0, %v2061
          %2063 = vmatmul.bf16.gmra.mxu0 %v1516
          %v2064 = vpop.f32.mrf.mxu0
          %v2065 = vadd.f32 0.0, %v2064
          %v2066 = vpop.f32.mrf.mxu0
          %v2067 = vadd.f32 0.0, %v2066
          %2068 = vmatmul.bf16.gmra.mxu0 %v1518
          %v2069 = vpop.f32.mrf.mxu0
          %v2070 = vadd.f32 0.0, %v2069
          %v2071 = vpop.f32.mrf.mxu0
          %v2072 = vadd.f32 0.0, %v2071
          %2073 = vmatmul.bf16.gmra.mxu0 %v1520
          %v2074 = vpop.f32.mrf.mxu0
          %v2075 = vadd.f32 0.0, %v2074
          %v2076 = vpop.f32.mrf.mxu0
          %v2077 = vadd.f32 0.0, %v2076
          %2078 = vmatmul.bf16.gmra.mxu0 %v1522
          %v2079 = vpop.f32.mrf.mxu0
          %v2080 = vadd.f32 0.0, %v2079
          %v2081 = vpop.f32.mrf.mxu0
          %v2082 = vadd.f32 0.0, %v2081
          %2083 = vmatmul.bf16.gmra.mxu0 %v1524
          %v2084 = vpop.f32.mrf.mxu0
          %v2085 = vadd.f32 0.0, %v2084
          %v2086 = vpop.f32.mrf.mxu0
          %v2087 = vadd.f32 0.0, %v2086
          %2088 = vmatmul.bf16.gmra.mxu0 %v1526
          %v2089 = vpop.f32.mrf.mxu0
          %v2090 = vadd.f32 0.0, %v2089
          %v2091 = vpop.f32.mrf.mxu0
          %v2092 = vadd.f32 0.0, %v2091
          %2093 = vmatmul.bf16.gmra.mxu0 %v1528
          %v2094 = vpop.f32.mrf.mxu0
          %v2095 = vadd.f32 0.0, %v2094
          %v2096 = vpop.f32.mrf.mxu0
          %v2097 = vadd.f32 0.0, %v2096
          %2098 = vmatmul.bf16.gmra.mxu0 %v1530
          %v2099 = vpop.f32.mrf.mxu0
          %v2100 = vadd.f32 0.0, %v2099
          %v2101 = vpop.f32.mrf.mxu0
          %v2102 = vadd.f32 0.0, %v2101
          %2103 = vmatmul.bf16.gmra.mxu0 %v1532
          %v2104 = vpop.f32.mrf.mxu0
          %v2105 = vadd.f32 0.0, %v2104
          %v2106 = vpop.f32.mrf.mxu0
          %v2107 = vadd.f32 0.0, %v2106
          %2108 = vmatmul.bf16.gmra.mxu0 %v1534
          %v2109 = vpop.f32.mrf.mxu0
          %v2110 = vadd.f32 0.0, %v2109
          %v2111 = vpop.f32.mrf.mxu0
          %v2112 = vadd.f32 0.0, %v2111
          %2113 = vmatmul.bf16.gmra.mxu0 %v1536
          %v2114 = vpop.f32.mrf.mxu0
          %v2115 = vadd.f32 0.0, %v2114
          %v2116 = vpop.f32.mrf.mxu0
          %v2117 = vadd.f32 0.0, %v2116
          %2118 = vmatmul.bf16.gmra.mxu0 %v1538
          %v2119 = vpop.f32.mrf.mxu0
          %v2120 = vadd.f32 0.0, %v2119
          %v2121 = vpop.f32.mrf.mxu0
          %v2122 = vadd.f32 0.0, %v2121
          %2123 = vmatmul.bf16.gmra.mxu0 %v1540
          %v2124 = vpop.f32.mrf.mxu0
          %v2125 = vadd.f32 0.0, %v2124
          %v2126 = vpop.f32.mrf.mxu0
          %v2127 = vadd.f32 0.0, %v2126
          %2128 = vdwg.mxu0
          %2129 = vmatpush.bf16.msra.mxu0 %v1812
          %2130 = vmatpush.bf16.msra.mxu0 %v1809
          %2131 = vmatpush.bf16.msra.mxu0 %v1806
          %2132 = vmatpush.bf16.msra.mxu0 %v1803
          %2133 = vmatpush.bf16.msra.mxu0 %v1800
          %2134 = vmatpush.bf16.msra.mxu0 %v1797
          %2135 = vmatpush.bf16.msra.mxu0 %v1794
          %2136 = vmatpush.bf16.msra.mxu0 %v1791
          %2137 = vmatmul.bf16.gmra.mxu0 %v1511
          %v2138 = vpop.f32.mrf.mxu0
          %v2139 = vadd.f32 %v2050, %v2138
          %v2140 = vpop.f32.mrf.mxu0
          %v2141 = vadd.f32 %v2052, %v2140
          %2142 = vmatmul.bf16.gmra.mxu0 %v1513
          %v2143 = vpop.f32.mrf.mxu0
          %v2144 = vadd.f32 %v2055, %v2143
          %v2145 = vpop.f32.mrf.mxu0
          %v2146 = vadd.f32 %v2057, %v2145
          %2147 = vmatmul.bf16.gmra.mxu0 %v1515
          %v2148 = vpop.f32.mrf.mxu0
          %v2149 = vadd.f32 %v2060, %v2148
          %v2150 = vpop.f32.mrf.mxu0
          %v2151 = vadd.f32 %v2062, %v2150
          %2152 = vmatmul.bf16.gmra.mxu0 %v1517
          %v2153 = vpop.f32.mrf.mxu0
          %v2154 = vadd.f32 %v2065, %v2153
          %v2155 = vpop.f32.mrf.mxu0
          %v2156 = vadd.f32 %v2067, %v2155
          %2157 = vmatmul.bf16.gmra.mxu0 %v1519
          %v2158 = vpop.f32.mrf.mxu0
          %v2159 = vadd.f32 %v2070, %v2158
          %v2160 = vpop.f32.mrf.mxu0
          %v2161 = vadd.f32 %v2072, %v2160
          %2162 = vmatmul.bf16.gmra.mxu0 %v1521
          %v2163 = vpop.f32.mrf.mxu0
          %v2164 = vadd.f32 %v2075, %v2163
          %v2165 = vpop.f32.mrf.mxu0
          %v2166 = vadd.f32 %v2077, %v2165
          %2167 = vmatmul.bf16.gmra.mxu0 %v1523
          %v2168 = vpop.f32.mrf.mxu0
          %v2169 = vadd.f32 %v2080, %v2168
          %v2170 = vpop.f32.mrf.mxu0
          %v2171 = vadd.f32 %v2082, %v2170
          %2172 = vmatmul.bf16.gmra.mxu0 %v1525
          %v2173 = vpop.f32.mrf.mxu0
          %v2174 = vadd.f32 %v2085, %v2173
          %v2175 = vpop.f32.mrf.mxu0
          %v2176 = vadd.f32 %v2087, %v2175
          %2177 = vmatmul.bf16.gmra.mxu0 %v1527
          %v2178 = vpop.f32.mrf.mxu0
          %v2179 = vadd.f32 %v2090, %v2178
          %v2180 = vpop.f32.mrf.mxu0
          %v2181 = vadd.f32 %v2092, %v2180
          %2182 = vmatmul.bf16.gmra.mxu0 %v1529
          %v2183 = vpop.f32.mrf.mxu0
          %v2184 = vadd.f32 %v2095, %v2183
          %v2185 = vpop.f32.mrf.mxu0
          %v2186 = vadd.f32 %v2097, %v2185
          %2187 = vmatmul.bf16.gmra.mxu0 %v1531
          %v2188 = vpop.f32.mrf.mxu0
          %v2189 = vadd.f32 %v2100, %v2188
          %v2190 = vpop.f32.mrf.mxu0
          %v2191 = vadd.f32 %v2102, %v2190
          %2192 = vmatmul.bf16.gmra.mxu0 %v1533
          %v2193 = vpop.f32.mrf.mxu0
          %v2194 = vadd.f32 %v2105, %v2193
          %v2195 = vpop.f32.mrf.mxu0
          %v2196 = vadd.f32 %v2107, %v2195
          %2197 = vmatmul.bf16.gmra.mxu0 %v1535
          %v2198 = vpop.f32.mrf.mxu0
          %v2199 = vadd.f32 %v2110, %v2198
          %v2200 = vpop.f32.mrf.mxu0
          %v2201 = vadd.f32 %v2112, %v2200
          %2202 = vmatmul.bf16.gmra.mxu0 %v1537
          %v2203 = vpop.f32.mrf.mxu0
          %v2204 = vadd.f32 %v2115, %v2203
          %v2205 = vpop.f32.mrf.mxu0
          %v2206 = vadd.f32 %v2117, %v2205
          %2207 = vmatmul.bf16.gmra.mxu0 %v1539
          %v2208 = vpop.f32.mrf.mxu0
          %v2209 = vadd.f32 %v2120, %v2208
          %v2210 = vpop.f32.mrf.mxu0
          %v2211 = vadd.f32 %v2122, %v2210
          %2212 = vmatmul.bf16.gmra.mxu0 %v1541
          %v2213 = vpop.f32.mrf.mxu0
          %v2214 = vadd.f32 %v2125, %v2213
          %v2215 = vpop.f32.mrf.mxu0
          %v2216 = vadd.f32 %v2127, %v2215
          %2217 = vdwg.mxu0
          %2218 = vmatpush.bf16.msra.mxu0 %v1789
          %2219 = vmatpush.bf16.msra.mxu0 %v1786
          %2220 = vmatpush.bf16.msra.mxu0 %v1783
          %2221 = vmatpush.bf16.msra.mxu0 %v1780
          %2222 = vmatpush.bf16.msra.mxu0 %v1777
          %2223 = vmatpush.bf16.msra.mxu0 %v1774
          %2224 = vmatpush.bf16.msra.mxu0 %v1771
          %2225 = vmatpush.bf16.msra.mxu0 %v1768
          %2226 = vmatmul.bf16.gmra.mxu0 %v1510
          %v2227 = vpop.f32.mrf.mxu0
          %v2228 = vadd.f32 0.0, %v2227
          %v2229 = vpop.f32.mrf.mxu0
          %v2230 = vadd.f32 0.0, %v2229
          %2231 = vmatmul.bf16.gmra.mxu0 %v1512
          %v2232 = vpop.f32.mrf.mxu0
          %v2233 = vadd.f32 0.0, %v2232
          %v2234 = vpop.f32.mrf.mxu0
          %v2235 = vadd.f32 0.0, %v2234
          %2236 = vmatmul.bf16.gmra.mxu0 %v1514
          %v2237 = vpop.f32.mrf.mxu0
          %v2238 = vadd.f32 0.0, %v2237
          %v2239 = vpop.f32.mrf.mxu0
          %v2240 = vadd.f32 0.0, %v2239
          %2241 = vmatmul.bf16.gmra.mxu0 %v1516
          %v2242 = vpop.f32.mrf.mxu0
          %v2243 = vadd.f32 0.0, %v2242
          %v2244 = vpop.f32.mrf.mxu0
          %v2245 = vadd.f32 0.0, %v2244
          %2246 = vmatmul.bf16.gmra.mxu0 %v1518
          %v2247 = vpop.f32.mrf.mxu0
          %v2248 = vadd.f32 0.0, %v2247
          %v2249 = vpop.f32.mrf.mxu0
          %v2250 = vadd.f32 0.0, %v2249
          %2251 = vmatmul.bf16.gmra.mxu0 %v1520
          %v2252 = vpop.f32.mrf.mxu0
          %v2253 = vadd.f32 0.0, %v2252
          %v2254 = vpop.f32.mrf.mxu0
          %v2255 = vadd.f32 0.0, %v2254
          %2256 = vmatmul.bf16.gmra.mxu0 %v1522
          %v2257 = vpop.f32.mrf.mxu0
          %v2258 = vadd.f32 0.0, %v2257
          %v2259 = vpop.f32.mrf.mxu0
          %v2260 = vadd.f32 0.0, %v2259
          %2261 = vmatmul.bf16.gmra.mxu0 %v1524
          %v2262 = vpop.f32.mrf.mxu0
          %v2263 = vadd.f32 0.0, %v2262
          %v2264 = vpop.f32.mrf.mxu0
          %v2265 = vadd.f32 0.0, %v2264
          %2266 = vmatmul.bf16.gmra.mxu0 %v1526
          %v2267 = vpop.f32.mrf.mxu0
          %v2268 = vadd.f32 0.0, %v2267
          %v2269 = vpop.f32.mrf.mxu0
          %v2270 = vadd.f32 0.0, %v2269
          %2271 = vmatmul.bf16.gmra.mxu0 %v1528
          %v2272 = vpop.f32.mrf.mxu0
          %v2273 = vadd.f32 0.0, %v2272
          %v2274 = vpop.f32.mrf.mxu0
          %v2275 = vadd.f32 0.0, %v2274
          %2276 = vmatmul.bf16.gmra.mxu0 %v1530
          %v2277 = vpop.f32.mrf.mxu0
          %v2278 = vadd.f32 0.0, %v2277
          %v2279 = vpop.f32.mrf.mxu0
          %v2280 = vadd.f32 0.0, %v2279
          %2281 = vmatmul.bf16.gmra.mxu0 %v1532
          %v2282 = vpop.f32.mrf.mxu0
          %v2283 = vadd.f32 0.0, %v2282
          %v2284 = vpop.f32.mrf.mxu0
          %v2285 = vadd.f32 0.0, %v2284
          %2286 = vmatmul.bf16.gmra.mxu0 %v1534
          %v2287 = vpop.f32.mrf.mxu0
          %v2288 = vadd.f32 0.0, %v2287
          %v2289 = vpop.f32.mrf.mxu0
          %v2290 = vadd.f32 0.0, %v2289
          %2291 = vmatmul.bf16.gmra.mxu0 %v1536
          %v2292 = vpop.f32.mrf.mxu0
          %v2293 = vadd.f32 0.0, %v2292
          %v2294 = vpop.f32.mrf.mxu0
          %v2295 = vadd.f32 0.0, %v2294
          %2296 = vmatmul.bf16.gmra.mxu0 %v1538
          %v2297 = vpop.f32.mrf.mxu0
          %v2298 = vadd.f32 0.0, %v2297
          %v2299 = vpop.f32.mrf.mxu0
          %v2300 = vadd.f32 0.0, %v2299
          %2301 = vmatmul.bf16.gmra.mxu0 %v1540
          %v2302 = vpop.f32.mrf.mxu0
          %v2303 = vadd.f32 0.0, %v2302
          %v2304 = vpop.f32.mrf.mxu0
          %v2305 = vadd.f32 0.0, %v2304
          %2306 = vdwg.mxu0
          %2307 = vmatpush.bf16.msra.mxu0 %v1813
          %2308 = vmatpush.bf16.msra.mxu0 %v1810
          %2309 = vmatpush.bf16.msra.mxu0 %v1807
          %2310 = vmatpush.bf16.msra.mxu0 %v1804
          %2311 = vmatpush.bf16.msra.mxu0 %v1801
          %2312 = vmatpush.bf16.msra.mxu0 %v1798
          %2313 = vmatpush.bf16.msra.mxu0 %v1795
          %2314 = vmatpush.bf16.msra.mxu0 %v1792
          %2315 = vmatmul.bf16.gmra.mxu0 %v1511
          %v2316 = vpop.f32.mrf.mxu0
          %v2317 = vadd.f32 %v2228, %v2316
          %v2318 = vpop.f32.mrf.mxu0
          %v2319 = vadd.f32 %v2230, %v2318
          %2320 = vmatmul.bf16.gmra.mxu0 %v1513
          %v2321 = vpop.f32.mrf.mxu0
          %v2322 = vadd.f32 %v2233, %v2321
          %v2323 = vpop.f32.mrf.mxu0
          %v2324 = vadd.f32 %v2235, %v2323
          %2325 = vmatmul.bf16.gmra.mxu0 %v1515
          %v2326 = vpop.f32.mrf.mxu0
          %v2327 = vadd.f32 %v2238, %v2326
          %v2328 = vpop.f32.mrf.mxu0
          %v2329 = vadd.f32 %v2240, %v2328
          %2330 = vmatmul.bf16.gmra.mxu0 %v1517
          %v2331 = vpop.f32.mrf.mxu0
          %v2332 = vadd.f32 %v2243, %v2331
          %v2333 = vpop.f32.mrf.mxu0
          %v2334 = vadd.f32 %v2245, %v2333
          %2335 = vmatmul.bf16.gmra.mxu0 %v1519
          %v2336 = vpop.f32.mrf.mxu0
          %v2337 = vadd.f32 %v2248, %v2336
          %v2338 = vpop.f32.mrf.mxu0
          %v2339 = vadd.f32 %v2250, %v2338
          %2340 = vmatmul.bf16.gmra.mxu0 %v1521
          %v2341 = vpop.f32.mrf.mxu0
          %v2342 = vadd.f32 %v2253, %v2341
          %v2343 = vpop.f32.mrf.mxu0
          %v2344 = vadd.f32 %v2255, %v2343
          %2345 = vmatmul.bf16.gmra.mxu0 %v1523
          %v2346 = vpop.f32.mrf.mxu0
          %v2347 = vadd.f32 %v2258, %v2346
          %v2348 = vpop.f32.mrf.mxu0
          %v2349 = vadd.f32 %v2260, %v2348
          %2350 = vmatmul.bf16.gmra.mxu0 %v1525
          %v2351 = vpop.f32.mrf.mxu0
          %v2352 = vadd.f32 %v2263, %v2351
          %v2353 = vpop.f32.mrf.mxu0
          %v2354 = vadd.f32 %v2265, %v2353
          %2355 = vmatmul.bf16.gmra.mxu0 %v1527
          %v2356 = vpop.f32.mrf.mxu0
          %v2357 = vadd.f32 %v2268, %v2356
          %v2358 = vpop.f32.mrf.mxu0
          %v2359 = vadd.f32 %v2270, %v2358
          %2360 = vmatmul.bf16.gmra.mxu0 %v1529
          %v2361 = vpop.f32.mrf.mxu0
          %v2362 = vadd.f32 %v2273, %v2361
          %v2363 = vpop.f32.mrf.mxu0
          %v2364 = vadd.f32 %v2275, %v2363
          %2365 = vmatmul.bf16.gmra.mxu0 %v1531
          %v2366 = vpop.f32.mrf.mxu0
          %v2367 = vadd.f32 %v2278, %v2366
          %v2368 = vpop.f32.mrf.mxu0
          %v2369 = vadd.f32 %v2280, %v2368
          %2370 = vmatmul.bf16.gmra.mxu0 %v1533
          %v2371 = vpop.f32.mrf.mxu0
          %v2372 = vadd.f32 %v2283, %v2371
          %v2373 = vpop.f32.mrf.mxu0
          %v2374 = vadd.f32 %v2285, %v2373
          %2375 = vmatmul.bf16.gmra.mxu0 %v1535
          %v2376 = vpop.f32.mrf.mxu0
          %v2377 = vadd.f32 %v2288, %v2376
          %v2378 = vpop.f32.mrf.mxu0
          %v2379 = vadd.f32 %v2290, %v2378
          %2380 = vmatmul.bf16.gmra.mxu0 %v1537
          %v2381 = vpop.f32.mrf.mxu0
          %v2382 = vadd.f32 %v2293, %v2381
          %v2383 = vpop.f32.mrf.mxu0
          %v2384 = vadd.f32 %v2295, %v2383
          %2385 = vmatmul.bf16.gmra.mxu0 %v1539
          %v2386 = vpop.f32.mrf.mxu0
          %v2387 = vadd.f32 %v2298, %v2386
          %v2388 = vpop.f32.mrf.mxu0
          %v2389 = vadd.f32 %v2300, %v2388
          %2390 = vmatmul.bf16.gmra.mxu0 %v1541
          %v2391 = vpop.f32.mrf.mxu0
          %v2392 = vadd.f32 %v2303, %v2391
          %v2393 = vpop.f32.mrf.mxu0
          %v2394 = vadd.f32 %v2305, %v2393
          %2395 = vdwg.mxu0
          %v2396 = vpack.c.bf16 %v2139, %v1961
          %v2397 = vpack.c.bf16 %v2317, %v2317
          %v2398 = vpack.c.bf16 %v2141, %v1963
          %v2399 = vpack.c.bf16 %v2319, %v2319
          %v2400 = vpack.c.bf16 %v2144, %v1966
          %v2401 = vpack.c.bf16 %v2322, %v2322
          %v2402 = vpack.c.bf16 %v2146, %v1968
          %v2403 = vpack.c.bf16 %v2324, %v2324
          %v2404 = vpack.c.bf16 %v2149, %v1971
          %v2405 = vpack.c.bf16 %v2327, %v2327
          %v2406 = vpack.c.bf16 %v2151, %v1973
          %v2407 = vpack.c.bf16 %v2329, %v2329
          %v2408 = vpack.c.bf16 %v2154, %v1976
          %v2409 = vpack.c.bf16 %v2332, %v2332
          %v2410 = vpack.c.bf16 %v2156, %v1978
          %v2411 = vpack.c.bf16 %v2334, %v2334
          %v2412 = vpack.c.bf16 %v2159, %v1981
          %v2413 = vpack.c.bf16 %v2337, %v2337
          %v2414 = vpack.c.bf16 %v2161, %v1983
          %v2415 = vpack.c.bf16 %v2339, %v2339
          %v2416 = vpack.c.bf16 %v2164, %v1986
          %v2417 = vpack.c.bf16 %v2342, %v2342
          %v2418 = vpack.c.bf16 %v2166, %v1988
          %v2419 = vpack.c.bf16 %v2344, %v2344
          %v2420 = vpack.c.bf16 %v2169, %v1991
          %v2421 = vpack.c.bf16 %v2347, %v2347
          %v2422 = vpack.c.bf16 %v2171, %v1993
          %v2423 = vpack.c.bf16 %v2349, %v2349
          %v2424 = vpack.c.bf16 %v2174, %v1996
          %v2425 = vpack.c.bf16 %v2352, %v2352
          %v2426 = vpack.c.bf16 %v2176, %v1998
          %v2427 = vpack.c.bf16 %v2354, %v2354
          %v2428 = vpack.c.bf16 %v2179, %v2001
          %v2429 = vpack.c.bf16 %v2357, %v2357
          %v2430 = vpack.c.bf16 %v2181, %v2003
          %v2431 = vpack.c.bf16 %v2359, %v2359
          %v2432 = vpack.c.bf16 %v2184, %v2006
          %v2433 = vpack.c.bf16 %v2362, %v2362
          %v2434 = vpack.c.bf16 %v2186, %v2008
          %v2435 = vpack.c.bf16 %v2364, %v2364
          %v2436 = vpack.c.bf16 %v2189, %v2011
          %v2437 = vpack.c.bf16 %v2367, %v2367
          %v2438 = vpack.c.bf16 %v2191, %v2013
          %v2439 = vpack.c.bf16 %v2369, %v2369
          %v2440 = vpack.c.bf16 %v2194, %v2016
          %v2441 = vpack.c.bf16 %v2372, %v2372
          %v2442 = vpack.c.bf16 %v2196, %v2018
          %v2443 = vpack.c.bf16 %v2374, %v2374
          %v2444 = vpack.c.bf16 %v2199, %v2021
          %v2445 = vpack.c.bf16 %v2377, %v2377
          %v2446 = vpack.c.bf16 %v2201, %v2023
          %v2447 = vpack.c.bf16 %v2379, %v2379
          %v2448 = vpack.c.bf16 %v2204, %v2026
          %v2449 = vpack.c.bf16 %v2382, %v2382
          %v2450 = vpack.c.bf16 %v2206, %v2028
          %v2451 = vpack.c.bf16 %v2384, %v2384
          %v2452 = vpack.c.bf16 %v2209, %v2031
          %v2453 = vpack.c.bf16 %v2387, %v2387
          %v2454 = vpack.c.bf16 %v2211, %v2033
          %v2455 = vpack.c.bf16 %v2389, %v2389
          %v2456 = vpack.c.bf16 %v2214, %v2036
          %v2457 = vpack.c.bf16 %v2392, %v2392
          %v2458 = vpack.c.bf16 %v2216, %v2038
          %v2459 = vpack.c.bf16 %v2394, %v2394
          %2460 = vst [vmem:[%s376] sm:$0xff] %v2396
          %2461 = vst [vmem:[%s376 + $0x8] sm:$0xf] %v2397
          %2462 = vst [vmem:[%s376 + $0xc] sm:$0xff] %v2398
          %2463 = vst [vmem:[%s376 + $0x14] sm:$0xf] %v2399
          %2464 = vst [vmem:[%s376 + $0x18] sm:$0xff] %v2400
          %2465 = vst [vmem:[%s376 + $0x20] sm:$0xf] %v2401
          %2466 = vst [vmem:[%s376 + $0x24] sm:$0xff] %v2402
          %2467 = vst [vmem:[%s376 + $0x2c] sm:$0xf] %v2403
          %2468 = vst [vmem:[%s376 + $0x30] sm:$0xff] %v2404
          %2469 = vst [vmem:[%s376 + $0x38] sm:$0xf] %v2405
          %2470 = vst [vmem:[%s376 + $0x3c] sm:$0xff] %v2406
          %2471 = vst [vmem:[%s376 + $0x44] sm:$0xf] %v2407
          %2472 = vst [vmem:[%s376 + $0x48] sm:$0xff] %v2408
          %2473 = vst [vmem:[%s376 + $0x50] sm:$0xf] %v2409
          %2474 = vst [vmem:[%s376 + $0x54] sm:$0xff] %v2410
          %2475 = vst [vmem:[%s376 + $0x5c] sm:$0xf] %v2411
          %2476 = vst [vmem:[%s376 + $0x60] sm:$0xff] %v2412
          %2477 = vst [vmem:[%s376 + $0x68] sm:$0xf] %v2413
          %2478 = vst [vmem:[%s376 + $0x6c] sm:$0xff] %v2414
          %2479 = vst [vmem:[%s376 + $0x74] sm:$0xf] %v2415
          %2480 = vst [vmem:[%s376 + $0x78] sm:$0xff] %v2416
          %2481 = vst [vmem:[%s376 + $0x80] sm:$0xf] %v2417
          %2482 = vst [vmem:[%s376 + $0x84] sm:$0xff] %v2418
          %2483 = vst [vmem:[%s376 + $0x8c] sm:$0xf] %v2419
          %2484 = vst [vmem:[%s376 + $0x90] sm:$0xff] %v2420
          %2485 = vst [vmem:[%s376 + $0x98] sm:$0xf] %v2421
          %2486 = vst [vmem:[%s376 + $0x9c] sm:$0xff] %v2422
          %2487 = vst [vmem:[%s376 + $0xa4] sm:$0xf] %v2423
          %2488 = vst [vmem:[%s376 + $0xa8] sm:$0xff] %v2424
          %2489 = vst [vmem:[%s376 + $0xb0] sm:$0xf] %v2425
          %2490 = vst [vmem:[%s376 + $0xb4] sm:$0xff] %v2426
          %2491 = vst [vmem:[%s376 + $0xbc] sm:$0xf] %v2427
          %2492 = vst [vmem:[%s376 + $0xc0] sm:$0xff] %v2428
          %2493 = vst [vmem:[%s376 + $0xc8] sm:$0xf] %v2429
          %2494 = vst [vmem:[%s376 + $0xcc] sm:$0xff] %v2430
          %2495 = vst [vmem:[%s376 + $0xd4] sm:$0xf] %v2431
          %2496 = vst [vmem:[%s376 + $0xd8] sm:$0xff] %v2432
          %2497 = vst [vmem:[%s376 + $0xe0] sm:$0xf] %v2433
          %2498 = vst [vmem:[%s376 + $0xe4] sm:$0xff] %v2434
          %2499 = vst [vmem:[%s376 + $0xec] sm:$0xf] %v2435
          %2500 = vst [vmem:[%s376 + $0xf0] sm:$0xff] %v2436
          %2501 = vst [vmem:[%s376 + $0xf8] sm:$0xf] %v2437
          %2502 = vst [vmem:[%s376 + $0xfc] sm:$0xff] %v2438
          %2503 = vst [vmem:[%s376 + $0x104] sm:$0xf] %v2439
          %2504 = vst [vmem:[%s376 + $0x108] sm:$0xff] %v2440
          %2505 = vst [vmem:[%s376 + $0x110] sm:$0xf] %v2441
          %2506 = vst [vmem:[%s376 + $0x114] sm:$0xff] %v2442
          %2507 = vst [vmem:[%s376 + $0x11c] sm:$0xf] %v2443
          %2508 = vst [vmem:[%s376 + $0x120] sm:$0xff] %v2444
          %2509 = vst [vmem:[%s376 + $0x128] sm:$0xf] %v2445
          %2510 = vst [vmem:[%s376 + $0x12c] sm:$0xff] %v2446
          %2511 = vst [vmem:[%s376 + $0x134] sm:$0xf] %v2447
          %2512 = vst [vmem:[%s376 + $0x138] sm:$0xff] %v2448
          %2513 = vst [vmem:[%s376 + $0x140] sm:$0xf] %v2449
          %2514 = vst [vmem:[%s376 + $0x144] sm:$0xff] %v2450
          %2515 = vst [vmem:[%s376 + $0x14c] sm:$0xf] %v2451
          %2516 = vst [vmem:[%s376 + $0x150] sm:$0xff] %v2452
          %2517 = vst [vmem:[%s376 + $0x158] sm:$0xf] %v2453
          %2518 = vst [vmem:[%s376 + $0x15c] sm:$0xff] %v2454
          %2519 = vst [vmem:[%s376 + $0x164] sm:$0xf] %v2455
          %2520 = vst [vmem:[%s376 + $0x168] sm:$0xff] %v2456
          %2521 = vst [vmem:[%s376 + $0x170] sm:$0xf] %v2457
          %2522 = vst [vmem:[%s376 + $0x174] sm:$0xff] %v2458
          %2523 = vst [vmem:[%s376 + $0x17c] sm:$0xf] %v2459
        $region78: #{_lambda_.5} parent=65 // pred_fallthru
          _
        %s2524 = smul.u32 32, %s18
        %p2525 = scmp.lt.s32.totalorder %s2524, 63
        %s2526 = scalar_select %p2525, %s2524, 63
        %s2527 = smul.addr %s2526, 3
        %s2528 = smul.addr %s2527, 4
        %s2529 = scalar_lea.vmem %s3, %s2528
        // Predicated region
        $region79: #{_lambda_.5} parent=65 // pred_check
          %p2530 = pneg %p119
        $region80: #{_lambda_.5} parent=65 // pred_check_branch
          %2532 = sbr.rel (%p2530) target = $region82
        $region81: #{_lambda_.5} parent=65 // pred_region
          %s2533 = smul.u32 32, %s18
        $region82: #{_lambda_.5} parent=65 // pred_fallthru
          _
      $region66: #{_lambda_.5} parent=5 // pred_fallthru
        _
      %p2534 = scmp.le.s32.totalorder 2, %s9
      // Predicated region
      $region83: #{_lambda_.5} parent=5 // pred_check
        %p2535 = pneg %p2534
      $region84: #{_lambda_.5} parent=5 // pred_check_branch
        %2537 = sbr.rel (%p2535) target = $region86
      $region85: #{_lambda_.5} parent=5 // pred_region
        %s2538 = ssub.s32 %s9, 2
        // Predicated region
        $region87: #{_lambda_.5} parent=85 // pred_check
          %p2539 = pneg %p125
        $region88: #{_lambda_.5} parent=85 // pred_check_branch
          %2541 = sbr.rel (%p2539) target = $region90
        $region89: #{_lambda_.5} parent=85 // pred_region
          %s2542 = smul.u32 32, %s20
          %p2543 = scmp.lt.s32.totalorder %s2542, 63
          %s2544 = scalar_select %p2543, %s2542, 63
          %s2545 = smul.addr %s2544, 3
          %s2546 = smul.addr %s2545, 4
          %s2547 = scalar_lea.vmem %s3, %s2546
        $region90: #{_lambda_.5} parent=85 // pred_fallthru
          _
      $region86: #{_lambda_.5} parent=5 // pred_fallthru
        _
    $region6: #{_lambda_.5} parent=1 // loop_footer
      %s13 = sadd.s32 1, %s9
    $region7: #{_lambda_.5} parent=1 // loop_footer_branch
      %8 = sbr.rel target = $region3
    $region8: #{_lambda_.5} parent=1 // loop_exit
      _

// kernel: _lambda_.7
$region0: #{_lambda_.7}
  #allocation0 [shape = 'u32[]', space=smem, size = 0x4, offset = 0x4, fixed_abs, tag = 'smem constant byte address 0x4 - core index']
  #allocation1 [shape = 'u32[72,128]{1,0:T(1,128)}', space=vmem, size = 0x9000, scoped, tag = 'internal scratch']
  #allocation2 [shape = 'f32[256,256]{1,0:T(8,128)}', space=vmem, size = 0x40000, scoped, tag = 'scratch operand']
  #allocation3 [shape = 'f32[1,1]{1,0:T(1,128)S(6)}', space=smem, size = 0x200, scoped, tag = 'scoped memory for _lambda_.7']
  %s0 = inlined_call_operand.vmem [shape: bf16[512,512], index: 0, kind: input, shape index: {}]
  %s1 = inlined_call_operand.vmem [shape: bf16[512,256], index: 1, kind: input, shape index: {}]
  %s2 = inlined_call_operand.vmem [shape: bf16[256,128], index: 2, kind: input, shape index: {}]
  %s3 = inlined_call_operand.vmem [shape: f32[1,128], index: 3, kind: input, shape index: {}]
  %s4 = inlined_call_operand.vmem [shape: f32[1,128], index: 4, kind: input, shape index: {}]
  %s5 = inlined_call_operand.<no memory space> [shape: f32[1,1], index: 5, kind: input, shape index: {}]
  %s6 = inlined_call_operand.vmem [shape: f32[512,128], index: 6, kind: output, shape index: {}]
  %s7 = sld [smem:[#allocation0]]
  $region103: #{_lambda_.7} parent=0
    _
  %s9 = ssub.s32 1, %s7
  %s10 = scalar_select 0, %s9, %s7
  %11 = sst [smem:[#allocation3]] %s5
  $region1: #{_lambda_.7} parent=0
    #allocation4 [shape = 'u8[262144]{0}', space=vmem, size = 0x40000, scoped, tag = 'input window, operand 0']
    loop: start=0, step=1, limit=6
    $region2: #{_lambda_.7} parent=1 // loop_pre_header
      _
    $region3: #{_lambda_.7} parent=1 // loop_header
      %s13 = sphi 0, %s17
      %p14 = scmp.ge.s32.totalorder %s13, 6
      %s20 = sphi 0, %s32
      %s21 = sphi 0, %s28
      %s22 = sphi 0, %s20
      %s23 = sphi 0, %s21
      %s24 = sphi 0, %s22
      %s25 = sphi 0, %s23
      %s37 = sphi 0, %s39
      %s40 = sphi 0, %s37
      %s41 = sphi 0, %s40
      %s57 = sphi 0, %s41
      %s63 = sphi 0, %s65
      %s66 = sphi 0, %s63
      %s67 = sphi 0, %s66
      %s83 = sphi 0, %s67
      %s87 = sphi 0, %s87
      %s89 = sphi 0, %s87
      %s90 = sphi 0, %s89
      %s104 = sphi 0, %s90
      %s108 = sphi 0, %s108
      %s110 = sphi 0, %s108
      %s111 = sphi 0, %s110
      %s125 = sphi 0, %s111
      %s129 = sphi 0, %s129
      %s131 = sphi 0, %s129
      %s132 = sphi 0, %s131
      %s146 = sphi 0, %s132
      %s150 = sphi 0, %s150
      %s152 = sphi 0, %s150
      %s153 = sphi 0, %s152
      %s167 = sphi 0, %s153
      %s173 = sphi 0, %s175
      %s176 = sphi 0, %s173
      %s177 = sphi 0, %s176
      %s193 = sphi 0, %s177
    $region4: #{_lambda_.7} parent=1 // loop_header_branch
      %16 = sbr.rel (%p14) target = $region8
    $region5: #{_lambda_.7} parent=1 // loop_body
      %s18 = ssub.s32 %s13, 1
      %s19 = ssub.s32 %s13, 2
      %s26 = sadd.s32 1, %s21
      %p27 = scmp.ge.s32.totalorder %s26, 2
      %s28 = scalar_select %p27, 0, %s26
      %s29 = sadd.s32 1, %s20
      %s30 = scalar_select %p27, %s29, %s20
      %p31 = scmp.ge.s32.totalorder %s30, 2
      %s32 = scalar_select %p31, 0, %s30
      %s33 = ssub.s32 %s20, %s32
      %s34 = ssub.s32 %s21, %s28
      %s35 = sor.u32 %s33, %s34
      %p36 = scmp.eq.s32.totalorder %s35, 0
      %s38 = sadd.s32 %s37, 1
      %s39 = scalar_select %p36, %s37, %s38
      %p42 = pneg %p36
      %p43 = scmp.eq.s32.totalorder %s13, 3
      %p44 = por %p42, %p43
      %p45 = scmp.ne.s32.totalorder %s37, %s40
      %p46 = scmp.eq.s32.totalorder %s13, 0
      %p47 = por %p45, %p46
      %p48 = scmp.ne.s32.totalorder %s37, %s40
      %p49 = scmp.eq.s32.totalorder %s18, 3
      %p50 = por %p48, %p49
      %p51 = scmp.ne.s32.totalorder %s40, %s41
      %p52 = scmp.eq.s32.totalorder %s18, 0
      %p53 = por %p51, %p52
      %p54 = scmp.ne.s32.totalorder %s40, %s41
      %p55 = scmp.eq.s32.totalorder %s19, 3
      %p56 = por %p54, %p55
      %p58 = scmp.ne.s32.totalorder %s41, %s57
      %p59 = scmp.eq.s32.totalorder %s19, 0
      %p60 = por %p58, %p59
      %s61 = ssub.s32 %s21, %s28
      %p62 = scmp.eq.s32.totalorder %s61, 0
      %s64 = sadd.s32 %s63, 1
      %s65 = scalar_select %p62, %s63, %s64
      %p68 = pneg %p62
      %p69 = scmp.eq.s32.totalorder %s13, 3
      %p70 = por %p68, %p69
      %p71 = scmp.ne.s32.totalorder %s63, %s66
      %p72 = scmp.eq.s32.totalorder %s13, 0
      %p73 = por %p71, %p72
      %p74 = scmp.ne.s32.totalorder %s63, %s66
      %p75 = scmp.eq.s32.totalorder %s18, 3
      %p76 = por %p74, %p75
      %p77 = scmp.ne.s32.totalorder %s66, %s67
      %p78 = scmp.eq.s32.totalorder %s18, 0
      %p79 = por %p77, %p78
      %p80 = scmp.ne.s32.totalorder %s66, %s67
      %p81 = scmp.eq.s32.totalorder %s19, 3
      %p82 = por %p80, %p81
      %p84 = scmp.ne.s32.totalorder %s67, %s83
      %p85 = scmp.eq.s32.totalorder %s19, 0
      %p86 = por %p84, %p85
      %s88 = sadd.s32 %s87, 1
      %p91 = scmp.eq.s32.totalorder %s13, 3
      %p92 = scmp.ne.s32.totalorder %s87, %s89
      %p93 = scmp.eq.s32.totalorder %s13, 0
      %p94 = por %p92, %p93
      %p95 = scmp.ne.s32.totalorder %s87, %s89
      %p96 = scmp.eq.s32.totalorder %s18, 3
      %p97 = por %p95, %p96
      %p98 = scmp.ne.s32.totalorder %s89, %s90
      %p99 = scmp.eq.s32.totalorder %s18, 0
      %p100 = por %p98, %p99
      %p101 = scmp.ne.s32.totalorder %s89, %s90
      %p102 = scmp.eq.s32.totalorder %s19, 3
      %p103 = por %p101, %p102
      %p105 = scmp.ne.s32.totalorder %s90, %s104
      %p106 = scmp.eq.s32.totalorder %s19, 0
      %p107 = por %p105, %p106
      %s109 = sadd.s32 %s108, 1
      %p112 = scmp.eq.s32.totalorder %s13, 3
      %p113 = scmp.ne.s32.totalorder %s108, %s110
      %p114 = scmp.eq.s32.totalorder %s13, 0
      %p115 = por %p113, %p114
      %p116 = scmp.ne.s32.totalorder %s108, %s110
      %p117 = scmp.eq.s32.totalorder %s18, 3
      %p118 = por %p116, %p117
      %p119 = scmp.ne.s32.totalorder %s110, %s111
      %p120 = scmp.eq.s32.totalorder %s18, 0
      %p121 = por %p119, %p120
      %p122 = scmp.ne.s32.totalorder %s110, %s111
      %p123 = scmp.eq.s32.totalorder %s19, 3
      %p124 = por %p122, %p123
      %p126 = scmp.ne.s32.totalorder %s111, %s125
      %p127 = scmp.eq.s32.totalorder %s19, 0
      %p128 = por %p126, %p127
      %s130 = sadd.s32 %s129, 1
      %p133 = scmp.eq.s32.totalorder %s13, 3
      %p134 = scmp.ne.s32.totalorder %s129, %s131
      %p135 = scmp.eq.s32.totalorder %s13, 0
      %p136 = por %p134, %p135
      %p137 = scmp.ne.s32.totalorder %s129, %s131
      %p138 = scmp.eq.s32.totalorder %s18, 3
      %p139 = por %p137, %p138
      %p140 = scmp.ne.s32.totalorder %s131, %s132
      %p141 = scmp.eq.s32.totalorder %s18, 0
      %p142 = por %p140, %p141
      %p143 = scmp.ne.s32.totalorder %s131, %s132
      %p144 = scmp.eq.s32.totalorder %s19, 3
      %p145 = por %p143, %p144
      %p147 = scmp.ne.s32.totalorder %s132, %s146
      %p148 = scmp.eq.s32.totalorder %s19, 0
      %p149 = por %p147, %p148
      %s151 = sadd.s32 %s150, 1
      %p154 = scmp.eq.s32.totalorder %s13, 3
      %p155 = scmp.ne.s32.totalorder %s150, %s152
      %p156 = scmp.eq.s32.totalorder %s13, 0
      %p157 = por %p155, %p156
      %p158 = scmp.ne.s32.totalorder %s150, %s152
      %p159 = scmp.eq.s32.totalorder %s18, 3
      %p160 = por %p158, %p159
      %p161 = scmp.ne.s32.totalorder %s152, %s153
      %p162 = scmp.eq.s32.totalorder %s18, 0
      %p163 = por %p161, %p162
      %p164 = scmp.ne.s32.totalorder %s152, %s153
      %p165 = scmp.eq.s32.totalorder %s19, 3
      %p166 = por %p164, %p165
      %p168 = scmp.ne.s32.totalorder %s153, %s167
      %p169 = scmp.eq.s32.totalorder %s19, 0
      %p170 = por %p168, %p169
      %s171 = ssub.s32 %s20, %s32
      %p172 = scmp.eq.s32.totalorder %s171, 0
      %s174 = sadd.s32 %s173, 1
      %s175 = scalar_select %p172, %s173, %s174
      %p178 = pneg %p172
      %p179 = scmp.eq.s32.totalorder %s13, 3
      %p180 = por %p178, %p179
      %p181 = scmp.ne.s32.totalorder %s173, %s176
      %p182 = scmp.eq.s32.totalorder %s13, 0
      %p183 = por %p181, %p182
      %p184 = scmp.ne.s32.totalorder %s173, %s176
      %p185 = scmp.eq.s32.totalorder %s18, 3
      %p186 = por %p184, %p185
      %p187 = scmp.ne.s32.totalorder %s176, %s177
      %p188 = scmp.eq.s32.totalorder %s18, 0
      %p189 = por %p187, %p188
      %p190 = scmp.ne.s32.totalorder %s176, %s177
      %p191 = scmp.eq.s32.totalorder %s19, 3
      %p192 = por %p190, %p191
      %p194 = scmp.ne.s32.totalorder %s177, %s193
      %p195 = scmp.eq.s32.totalorder %s19, 0
      %p196 = por %p194, %p195
      %p197 = scmp.le.s32.totalorder 1, %s13
      %p198 = scmp.lt.s32.totalorder %s13, 5
      %p199 = pnand %p197, %p198
      %p200 = pneg %p199
      // Predicated region
      $region9: #{_lambda_.7} parent=5 // pred_check
        _
      $region10: #{_lambda_.7} parent=5 // pred_check_branch
        %202 = sbr.rel (%p199) target = $region12
      $region11: #{_lambda_.7} parent=5 // pred_region
        %s203 = ssub.s32 %s13, 1
        // Predicated region
        $region13: #{_lambda_.7} parent=11 // pred_check
          %p204 = pneg %p100
        $region14: #{_lambda_.7} parent=11 // pred_check_branch
          %206 = sbr.rel (%p204) target = $region16
        $region15: #{_lambda_.7} parent=11 // pred_region
          _
        $region16: #{_lambda_.7} parent=11 // pred_fallthru
          _
        // Predicated region
        $region17: #{_lambda_.7} parent=11 // pred_check
          %p207 = pneg %p121
        $region18: #{_lambda_.7} parent=11 // pred_check_branch
          %209 = sbr.rel (%p207) target = $region20
        $region19: #{_lambda_.7} parent=11 // pred_region
          _
        $region20: #{_lambda_.7} parent=11 // pred_fallthru
          _
        // Predicated region
        $region21: #{_lambda_.7} parent=11 // pred_check
          %p210 = pneg %p142
        $region22: #{_lambda_.7} parent=11 // pred_check_branch
          %212 = sbr.rel (%p210) target = $region24
        $region23: #{_lambda_.7} parent=11 // pred_region
          _
        $region24: #{_lambda_.7} parent=11 // pred_fallthru
          _
        // Predicated region
        $region25: #{_lambda_.7} parent=11 // pred_check
          %p213 = pneg %p163
        $region26: #{_lambda_.7} parent=11 // pred_check_branch
          %215 = sbr.rel (%p213) target = $region28
        $region27: #{_lambda_.7} parent=11 // pred_region
          _
        $region28: #{_lambda_.7} parent=11 // pred_fallthru
          _
      $region12: #{_lambda_.7} parent=5 // pred_fallthru
        _
      %p216 = scmp.lt.s32.totalorder %s13, 4
      // Predicated region
      $region29: #{_lambda_.7} parent=5 // pred_check
        %p217 = pneg %p216
      $region30: #{_lambda_.7} parent=5 // pred_check_branch
        %219 = sbr.rel (%p217) target = $region32
      $region31: #{_lambda_.7} parent=5 // pred_region
        // Predicated region
        $region33: #{_lambda_.7} parent=31 // pred_check
          %p220 = pneg %p47
        $region34: #{_lambda_.7} parent=31 // pred_check_branch
          %222 = sbr.rel (%p220) target = $region36
        $region35: #{_lambda_.7} parent=31 // pred_region
          %s223 = sand.u32 %s37, 1
          %s224 = sand.u32 %s37, 1
          %s225 = smul.addr %s224, 256
          %s226 = scalar_lea.vmem [#allocation4], %s225
          %s227 = smul.u32 32, %s20
          %s228 = smul.u32 2, %s21
          %s229 = smul.addr %s227, 4
          %s230 = sadd.s32 %s228, %s229
          %s231 = smul.addr %s230, 4
          %s232 = scalar_lea.vmem %s0, %s231
          // Predicated region
          $region37: #{_lambda_.7} parent=35 // pred_check
            _
          $region38: #{_lambda_.7} parent=35 // pred_check_branch
            %234 = sbr.rel (0) target = $region40
          $region39: #{_lambda_.7} parent=35 // pred_region
            // Predicated region
            $region41: #{_lambda_.7} parent=39 // pred_check
              _
            $region42: #{_lambda_.7} parent=39 // pred_check_branch
              %236 = sbr.rel (0) target = $region44
            $region43: #{_lambda_.7} parent=39 // pred_region
              // Predicated region
              $region56: #{_lambda_.7} parent=43 // pred_check
                _
              $region57: #{_lambda_.7} parent=43 // pred_check_branch
                %314 = sbr.rel (0) target = $region59
              $region58: #{_lambda_.7} parent=43 // pred_region
                loop: start=0, step=1, limit=1
                $region60: #{_lambda_.7} parent=58 // loop_pre_header
                  _
                $region61: #{_lambda_.7} parent=58 // loop_header
                  %s316 = sphi 0, %s320
                  %p317 = scmp.ge.s32.totalorder %s316, 1
                  %s321 = sphi %s232, %s232
                  %s322 = sphi %s226, %s226
                $region62: #{_lambda_.7} parent=58 // loop_header_branch
                  %319 = sbr.rel (%p317) target = $region66
                $region63: #{_lambda_.7} parent=58 // loop_body
                  %v323 = vld [vmem:[%s321] sm:$0xff]
                  %324 = vst [vmem:[%s322] sm:$0xff] %v323
                  %v325 = vld [vmem:[%s321 + $0x10] sm:$0xff]
                  %326 = vst [vmem:[%s322 + $0x8] sm:$0xff] %v325
                  %v327 = vld [vmem:[%s321 + $0x20] sm:$0xff]
                  %328 = vst [vmem:[%s322 + $0x10] sm:$0xff] %v327
                  %v329 = vld [vmem:[%s321 + $0x30] sm:$0xff]
                  %330 = vst [vmem:[%s322 + $0x18] sm:$0xff] %v329
                  %v331 = vld [vmem:[%s321 + $0x40] sm:$0xff]
                  %332 = vst [vmem:[%s322 + $0x20] sm:$0xff] %v331
                  %v333 = vld [vmem:[%s321 + $0x50] sm:$0xff]
                  %334 = vst [vmem:[%s322 + $0x28] sm:$0xff] %v333
                  %v335 = vld [vmem:[%s321 + $0x60] sm:$0xff]
                  %336 = vst [vmem:[%s322 + $0x30] sm:$0xff] %v335
                  %v337 = vld [vmem:[%s321 + $0x70] sm:$0xff]
                  %338 = vst [vmem:[%s322 + $0x38] sm:$0xff] %v337
                  %v339 = vld [vmem:[%s321 + $0x80] sm:$0xff]
                  %340 = vst [vmem:[%s322 + $0x40] sm:$0xff] %v339
                  %v341 = vld [vmem:[%s321 + $0x90] sm:$0xff]
                  %342 = vst [vmem:[%s322 + $0x48] sm:$0xff] %v341
                  %v343 = vld [vmem:[%s321 + $0xa0] sm:$0xff]
                  %344 = vst [vmem:[%s322 + $0x50] sm:$0xff] %v343
                  %v345 = vld [vmem:[%s321 + $0xb0] sm:$0xff]
                  %346 = vst [vmem:[%s322 + $0x58] sm:$0xff] %v345
                  %v347 = vld [vmem:[%s321 + $0xc0] sm:$0xff]
                  %348 = vst [vmem:[%s322 + $0x60] sm:$0xff] %v347
                  %v349 = vld [vmem:[%s321 + $0xd0] sm:$0xff]
                  %350 = vst [vmem:[%s322 + $0x68] sm:$0xff] %v349
                  %v351 = vld [vmem:[%s321 + $0xe0] sm:$0xff]
                  %352 = vst [vmem:[%s322 + $0x70] sm:$0xff] %v351
                  %v353 = vld [vmem:[%s321 + $0xf0] sm:$0xff]
                  %354 = vst [vmem:[%s322 + $0x78] sm:$0xff] %v353
                  %v355 = vld [vmem:[%s321 + $0x100] sm:$0xff]
                  %356 = vst [vmem:[%s322 + $0x80] sm:$0xff] %v355
                  %v357 = vld [vmem:[%s321 + $0x110] sm:$0xff]
                  %358 = vst [vmem:[%s322 + $0x88] sm:$0xff] %v357
                  %v359 = vld [vmem:[%s321 + $0x120] sm:$0xff]
                  %360 = vst [vmem:[%s322 + $0x90] sm:$0xff] %v359
                  %v361 = vld [vmem:[%s321 + $0x130] sm:$0xff]
                  %362 = vst [vmem:[%s322 + $0x98] sm:$0xff] %v361
                  %v363 = vld [vmem:[%s321 + $0x140] sm:$0xff]
                  %364 = vst [vmem:[%s322 + $0xa0] sm:$0xff] %v363
                  %v365 = vld [vmem:[%s321 + $0x150] sm:$0xff]
                  %366 = vst [vmem:[%s322 + $0xa8] sm:$0xff] %v365
                  %v367 = vld [vmem:[%s321 + $0x160] sm:$0xff]
                  %368 = vst [vmem:[%s322 + $0xb0] sm:$0xff] %v367
                  %v369 = vld [vmem:[%s321 + $0x170] sm:$0xff]
                  %370 = vst [vmem:[%s322 + $0xb8] sm:$0xff] %v369
                  %v371 = vld [vmem:[%s321 + $0x180] sm:$0xff]
                  %372 = vst [vmem:[%s322 + $0xc0] sm:$0xff] %v371
                  %v373 = vld [vmem:[%s321 + $0x190] sm:$0xff]
                  %374 = vst [vmem:[%s322 + $0xc8] sm:$0xff] %v373
                  %v375 = vld [vmem:[%s321 + $0x1a0] sm:$0xff]
                  %376 = vst [vmem:[%s322 + $0xd0] sm:$0xff] %v375
                  %v377 = vld [vmem:[%s321 + $0x1b0] sm:$0xff]
                  %378 = vst [vmem:[%s322 + $0xd8] sm:$0xff] %v377
                  %v379 = vld [vmem:[%s321 + $0x1c0] sm:$0xff]
                  %380 = vst [vmem:[%s322 + $0xe0] sm:$0xff] %v379
                  %v381 = vld [vmem:[%s321 + $0x1d0] sm:$0xff]
                  %382 = vst [vmem:[%s322 + $0xe8] sm:$0xff] %v381
                  %v383 = vld [vmem:[%s321 + $0x1e0] sm:$0xff]
                  %384 = vst [vmem:[%s322 + $0xf0] sm:$0xff] %v383
                  %v385 = vld [vmem:[%s321 + $0x1f0] sm:$0xff]
                  %386 = vst [vmem:[%s322 + $0xf8] sm:$0xff] %v385
                $region64: #{_lambda_.7} parent=58 // loop_footer
                  %s320 = sadd.s32 1, %s316
                $region65: #{_lambda_.7} parent=58 // loop_footer_branch
                  %315 = sbr.rel target = $region61
                $region66: #{_lambda_.7} parent=58 // loop_exit
                  _
              $region59: #{_lambda_.7} parent=43 // pred_fallthru
                _
              // Predicated region
              $region67: #{_lambda_.7} parent=43 // pred_check
                _
              $region68: #{_lambda_.7} parent=43 // pred_check_branch
                %388 = sbr.rel target = $region70
              $region69: #{_lambda_.7} parent=43 // pred_region
                _
              $region70: #{_lambda_.7} parent=43 // pred_fallthru
                _
            $region44: #{_lambda_.7} parent=39 // pred_fallthru
              _
            // Predicated region
            $region45: #{_lambda_.7} parent=39 // pred_check
              _
            $region46: #{_lambda_.7} parent=39 // pred_check_branch
              %238 = sbr.rel target = $region48
            $region47: #{_lambda_.7} parent=39 // pred_region
              %s240 = ssub.s32 256, 1
              loop: start=0, step=1, limit=1
              $region49: #{_lambda_.7} parent=47 // loop_pre_header
                _
              $region50: #{_lambda_.7} parent=47 // loop_header
                %s242 = sphi 0, %s246
                %p243 = scmp.ge.s32.totalorder %s242, 1
                %s247 = sphi %s232, %s232
                %s248 = sphi %s226, %s226
              $region51: #{_lambda_.7} parent=47 // loop_header_branch
                %245 = sbr.rel (%p243) target = $region55
              $region52: #{_lambda_.7} parent=47 // loop_body
                %v249 = vld [vmem:[%s247] sm:%s240]
                %250 = vst [vmem:[%s248] sm:%s240] %v249
                %v251 = vld [vmem:[%s247 + $0x10] sm:%s240]
                %252 = vst [vmem:[%s248 + $0x8] sm:%s240] %v251
                %v253 = vld [vmem:[%s247 + $0x20] sm:%s240]
                %254 = vst [vmem:[%s248 + $0x10] sm:%s240] %v253
                %v255 = vld [vmem:[%s247 + $0x30] sm:%s240]
                %256 = vst [vmem:[%s248 + $0x18] sm:%s240] %v255
                %v257 = vld [vmem:[%s247 + $0x40] sm:%s240]
                %258 = vst [vmem:[%s248 + $0x20] sm:%s240] %v257
                %v259 = vld [vmem:[%s247 + $0x50] sm:%s240]
                %260 = vst [vmem:[%s248 + $0x28] sm:%s240] %v259
                %v261 = vld [vmem:[%s247 + $0x60] sm:%s240]
                %262 = vst [vmem:[%s248 + $0x30] sm:%s240] %v261
                %v263 = vld [vmem:[%s247 + $0x70] sm:%s240]
                %264 = vst [vmem:[%s248 + $0x38] sm:%s240] %v263
                %v265 = vld [vmem:[%s247 + $0x80] sm:%s240]
                %266 = vst [vmem:[%s248 + $0x40] sm:%s240] %v265
                %v267 = vld [vmem:[%s247 + $0x90] sm:%s240]
                %268 = vst [vmem:[%s248 + $0x48] sm:%s240] %v267
                %v269 = vld [vmem:[%s247 + $0xa0] sm:%s240]
                %270 = vst [vmem:[%s248 + $0x50] sm:%s240] %v269
                %v271 = vld [vmem:[%s247 + $0xb0] sm:%s240]
                %272 = vst [vmem:[%s248 + $0x58] sm:%s240] %v271
                %v273 = vld [vmem:[%s247 + $0xc0] sm:%s240]
                %274 = vst [vmem:[%s248 + $0x60] sm:%s240] %v273
                %v275 = vld [vmem:[%s247 + $0xd0] sm:%s240]
                %276 = vst [vmem:[%s248 + $0x68] sm:%s240] %v275
                %v277 = vld [vmem:[%s247 + $0xe0] sm:%s240]
                %278 = vst [vmem:[%s248 + $0x70] sm:%s240] %v277
                %v279 = vld [vmem:[%s247 + $0xf0] sm:%s240]
                %280 = vst [vmem:[%s248 + $0x78] sm:%s240] %v279
                %v281 = vld [vmem:[%s247 + $0x100] sm:%s240]
                %282 = vst [vmem:[%s248 + $0x80] sm:%s240] %v281
                %v283 = vld [vmem:[%s247 + $0x110] sm:%s240]
                %284 = vst [vmem:[%s248 + $0x88] sm:%s240] %v283
                %v285 = vld [vmem:[%s247 + $0x120] sm:%s240]
                %286 = vst [vmem:[%s248 + $0x90] sm:%s240] %v285
                %v287 = vld [vmem:[%s247 + $0x130] sm:%s240]
                %288 = vst [vmem:[%s248 + $0x98] sm:%s240] %v287
                %v289 = vld [vmem:[%s247 + $0x140] sm:%s240]
                %290 = vst [vmem:[%s248 + $0xa0] sm:%s240] %v289
                %v291 = vld [vmem:[%s247 + $0x150] sm:%s240]
                %292 = vst [vmem:[%s248 + $0xa8] sm:%s240] %v291
                %v293 = vld [vmem:[%s247 + $0x160] sm:%s240]
                %294 = vst [vmem:[%s248 + $0xb0] sm:%s240] %v293
                %v295 = vld [vmem:[%s247 + $0x170] sm:%s240]
                %296 = vst [vmem:[%s248 + $0xb8] sm:%s240] %v295
                %v297 = vld [vmem:[%s247 + $0x180] sm:%s240]
                %298 = vst [vmem:[%s248 + $0xc0] sm:%s240] %v297
                %v299 = vld [vmem:[%s247 + $0x190] sm:%s240]
                %300 = vst [vmem:[%s248 + $0xc8] sm:%s240] %v299
                %v301 = vld [vmem:[%s247 + $0x1a0] sm:%s240]
                %302 = vst [vmem:[%s248 + $0xd0] sm:%s240] %v301
                %v303 = vld [vmem:[%s247 + $0x1b0] sm:%s240]
                %304 = vst [vmem:[%s248 + $0xd8] sm:%s240] %v303
                %v305 = vld [vmem:[%s247 + $0x1c0] sm:%s240]
                %306 = vst [vmem:[%s248 + $0xe0] sm:%s240] %v305
                %v307 = vld [vmem:[%s247 + $0x1d0] sm:%s240]
                %308 = vst [vmem:[%s248 + $0xe8] sm:%s240] %v307
                %v309 = vld [vmem:[%s247 + $0x1e0] sm:%s240]
                %310 = vst [vmem:[%s248 + $0xf0] sm:%s240] %v309
                %v311 = vld [vmem:[%s247 + $0x1f0] sm:%s240]
                %312 = vst [vmem:[%s248 + $0xf8] sm:%s240] %v311
              $region53: #{_lambda_.7} parent=47 // loop_footer
                %s246 = sadd.s32 1, %s242
              $region54: #{_lambda_.7} parent=47 // loop_footer_branch
                %241 = sbr.rel target = $region50
              $region55: #{_lambda_.7} parent=47 // loop_exit
                _
            $region48: #{_lambda_.7} parent=39 // pred_fallthru
              _
          $region40: #{_lambda_.7} parent=35 // pred_fallthru
            _
          %389 = vnop
        $region36: #{_lambda_.7} parent=31 // pred_fallthru
          _
        // Predicated region
        $region71: #{_lambda_.7} parent=31 // pred_check
          %p390 = pneg %p73
        $region72: #{_lambda_.7} parent=31 // pred_check_branch
          %392 = sbr.rel (%p390) target = $region74
        $region73: #{_lambda_.7} parent=31 // pred_region
          %s393 = smul.u32 32, %s21
          %p394 = scmp.lt.s32.totalorder %s393, 63
          %s395 = scalar_select %p394, %s393, 63
          %s396 = smul.addr %s395, 2
          %s397 = smul.addr %s396, 4
          %s398 = scalar_lea.vmem %s1, %s397
          %s399 = smul.u32 32, %s21
        $region74: #{_lambda_.7} parent=31 // pred_fallthru
          _
      $region32: #{_lambda_.7} parent=5 // pred_fallthru
        _
      %p400 = scmp.le.s32.totalorder 1, %s13
      %p401 = scmp.lt.s32.totalorder %s13, 5
      %p402 = pnand %p400, %p401
      %p403 = pneg %p402
      // Predicated region
      $region75: #{_lambda_.7} parent=5 // pred_check
        _
      $region76: #{_lambda_.7} parent=5 // pred_check_branch
        %405 = sbr.rel (%p402) target = $region78
      $region77: #{_lambda_.7} parent=5 // pred_region
        %s406 = ssub.s32 %s13, 1
        %s407 = sand.u32 %s40, 1
        %s408 = sand.u32 %s40, 1
        %s409 = smul.addr %s408, 256
        %s410 = scalar_lea.vmem [#allocation4], %s409
        // Predicated region
        $region79: #{_lambda_.7} parent=77 // pred_check
          %p411 = pneg %p53
        $region80: #{_lambda_.7} parent=77 // pred_check_branch
          %413 = sbr.rel (%p411) target = $region82
        $region81: #{_lambda_.7} parent=77 // pred_region
          _
        $region82: #{_lambda_.7} parent=77 // pred_fallthru
          _
        %s414 = sand.u32 %s40, 1
        %s415 = sand.u32 %s40, 1
        %s416 = smul.addr %s415, 256
        %s417 = scalar_lea.vmem [#allocation4], %s416
        %p418 = pneg %p53
        %p419 = pneg %p50
        %s420 = smul.u32 32, %s23
        %p421 = scmp.lt.s32.totalorder %s420, 63
        %s422 = scalar_select %p421, %s420, 63
        %s423 = smul.addr %s422, 2
        %s424 = smul.addr %s423, 4
        %s425 = scalar_lea.vmem %s1, %s424
        %p426 = pneg %p79
        %p427 = pneg %p76
        %p428 = pneg %p100
        %p429 = pneg %p97
        %p430 = pneg %p121
        %p431 = pneg %p118
        %p432 = pneg %p142
        %p433 = pneg %p139
        %p434 = pneg %p163
        %p435 = pneg %p160
        %p436 = pneg %p189
        %p437 = pneg %p186
        %s438 = smul.u32 32, %s22
        %p439 = scmp.lt.s32.totalorder %s438, 63
        %s440 = scalar_select %p439, %s438, 63
        %s441 = smul.addr %s440, 8
        %s442 = scalar_lea.vmem %s6, %s441
        %s443 = smul.u32 32, %s22
        %s444 = smul.u32 2, %s23
        %s445 = smul.u32 32, %s23
        %p446 = scmp.lt.s32.totalorder %s445, 63
        %s447 = scalar_select %p446, %s445, 63
        %s448 = smul.addr %s447, 2
        %s449 = smul.addr %s448, 4
        %s450 = scalar_lea.vmem %s1, %s449
        %s451 = smul.u32 32, %s23
        %s452 = smul.u32 32, %s22
        %p453 = scmp.lt.s32.totalorder %s452, 63
        %s454 = scalar_select %p453, %s452, 63
        %s455 = smul.addr %s454, 8
        %s456 = scalar_lea.vmem %s6, %s455
        %s457 = smul.u32 32, %s22
        %p458 = scmp.eq.s32.totalorder %s23, 0
        // Predicated region
        $region83: #{_lambda_.7} parent=77 // pred_check
          %p459 = pneg %p458
        $region84: #{_lambda_.7} parent=77 // pred_check_branch
          %461 = sbr.rel (%p459) target = $region86
        $region85: #{_lambda_.7} parent=77 // pred_region
          %462 = vst [vmem:[#allocation2] sm:$0xff] 0.0
          %463 = vst [vmem:[#allocation2 + $0x8] sm:$0xff] 0.0
          %464 = vst [vmem:[#allocation2 + $0x10] sm:$0xff] 0.0
          %465 = vst [vmem:[#allocation2 + $0x18] sm:$0xff] 0.0
          %466 = vst [vmem:[#allocation2 + $0x20] sm:$0xff] 0.0
          %467 = vst [vmem:[#allocation2 + $0x28] sm:$0xff] 0.0
          %468 = vst [vmem:[#allocation2 + $0x30] sm:$0xff] 0.0
          %469 = vst [vmem:[#allocation2 + $0x38] sm:$0xff] 0.0
          %470 = vst [vmem:[#allocation2 + $0x40] sm:$0xff] 0.0
          %471 = vst [vmem:[#allocation2 + $0x48] sm:$0xff] 0.0
          %472 = vst [vmem:[#allocation2 + $0x50] sm:$0xff] 0.0
          %473 = vst [vmem:[#allocation2 + $0x58] sm:$0xff] 0.0
          %474 = vst [vmem:[#allocation2 + $0x60] sm:$0xff] 0.0
          %475 = vst [vmem:[#allocation2 + $0x68] sm:$0xff] 0.0
          %476 = vst [vmem:[#allocation2 + $0x70] sm:$0xff] 0.0
          %477 = vst [vmem:[#allocation2 + $0x78] sm:$0xff] 0.0
          %478 = vst [vmem:[#allocation2 + $0x80] sm:$0xff] 0.0
          %479 = vst [vmem:[#allocation2 + $0x88] sm:$0xff] 0.0
          %480 = vst [vmem:[#allocation2 + $0x90] sm:$0xff] 0.0
          %481 = vst [vmem:[#allocation2 + $0x98] sm:$0xff] 0.0
          %482 = vst [vmem:[#allocation2 + $0xa0] sm:$0xff] 0.0
          %483 = vst [vmem:[#allocation2 + $0xa8] sm:$0xff] 0.0
          %484 = vst [vmem:[#allocation2 + $0xb0] sm:$0xff] 0.0
          %485 = vst [vmem:[#allocation2 + $0xb8] sm:$0xff] 0.0
          %486 = vst [vmem:[#allocation2 + $0xc0] sm:$0xff] 0.0
          %487 = vst [vmem:[#allocation2 + $0xc8] sm:$0xff] 0.0
          %488 = vst [vmem:[#allocation2 + $0xd0] sm:$0xff] 0.0
          %489 = vst [vmem:[#allocation2 + $0xd8] sm:$0xff] 0.0
          %490 = vst [vmem:[#allocation2 + $0xe0] sm:$0xff] 0.0
          %491 = vst [vmem:[#allocation2 + $0xe8] sm:$0xff] 0.0
          %492 = vst [vmem:[#allocation2 + $0xf0] sm:$0xff] 0.0
          %493 = vst [vmem:[#allocation2 + $0xf8] sm:$0xff] 0.0
          %494 = vst [vmem:[#allocation2 + $0x100] sm:$0xff] 0.0
          %495 = vst [vmem:[#allocation2 + $0x108] sm:$0xff] 0.0
          %496 = vst [vmem:[#allocation2 + $0x110] sm:$0xff] 0.0
          %497 = vst [vmem:[#allocation2 + $0x118] sm:$0xff] 0.0
          %498 = vst [vmem:[#allocation2 + $0x120] sm:$0xff] 0.0
          %499 = vst [vmem:[#allocation2 + $0x128] sm:$0xff] 0.0
          %500 = vst [vmem:[#allocation2 + $0x130] sm:$0xff] 0.0
          %501 = vst [vmem:[#allocation2 + $0x138] sm:$0xff] 0.0
          %502 = vst [vmem:[#allocation2 + $0x140] sm:$0xff] 0.0
          %503 = vst [vmem:[#allocation2 + $0x148] sm:$0xff] 0.0
          %504 = vst [vmem:[#allocation2 + $0x150] sm:$0xff] 0.0
          %505 = vst [vmem:[#allocation2 + $0x158] sm:$0xff] 0.0
          %506 = vst [vmem:[#allocation2 + $0x160] sm:$0xff] 0.0
          %507 = vst [vmem:[#allocation2 + $0x168] sm:$0xff] 0.0
          %508 = vst [vmem:[#allocation2 + $0x170] sm:$0xff] 0.0
          %509 = vst [vmem:[#allocation2 + $0x178] sm:$0xff] 0.0
          %510 = vst [vmem:[#allocation2 + $0x180] sm:$0xff] 0.0
          %511 = vst [vmem:[#allocation2 + $0x188] sm:$0xff] 0.0
          %512 = vst [vmem:[#allocation2 + $0x190] sm:$0xff] 0.0
          %513 = vst [vmem:[#allocation2 + $0x198] sm:$0xff] 0.0
          %514 = vst [vmem:[#allocation2 + $0x1a0] sm:$0xff] 0.0
          %515 = vst [vmem:[#allocation2 + $0x1a8] sm:$0xff] 0.0
          %516 = vst [vmem:[#allocation2 + $0x1b0] sm:$0xff] 0.0
          %517 = vst [vmem:[#allocation2 + $0x1b8] sm:$0xff] 0.0
          %518 = vst [vmem:[#allocation2 + $0x1c0] sm:$0xff] 0.0
          %519 = vst [vmem:[#allocation2 + $0x1c8] sm:$0xff] 0.0
          %520 = vst [vmem:[#allocation2 + $0x1d0] sm:$0xff] 0.0
          %521 = vst [vmem:[#allocation2 + $0x1d8] sm:$0xff] 0.0
          %522 = vst [vmem:[#allocation2 + $0x1e0] sm:$0xff] 0.0
          %523 = vst [vmem:[#allocation2 + $0x1e8] sm:$0xff] 0.0
          %524 = vst [vmem:[#allocation2 + $0x1f0] sm:$0xff] 0.0
          %525 = vst [vmem:[#allocation2 + $0x1f8] sm:$0xff] 0.0
        $region86: #{_lambda_.7} parent=77 // pred_fallthru
          _
        %v526 = vld [vmem:[#allocation2] sm:$0xff]
        %v527 = vld [vmem:[#allocation2 + $0x8] sm:$0xff]
        %v528 = vld [vmem:[#allocation2 + $0x10] sm:$0xff]
        %v529 = vld [vmem:[#allocation2 + $0x18] sm:$0xff]
        %v530 = vld [vmem:[#allocation2 + $0x20] sm:$0xff]
        %v531 = vld [vmem:[#allocation2 + $0x28] sm:$0xff]
        %v532 = vld [vmem:[#allocation2 + $0x30] sm:$0xff]
        %v533 = vld [vmem:[#allocation2 + $0x38] sm:$0xff]
        %v534 = vld [vmem:[#allocation2 + $0x40] sm:$0xff]
        %v535 = vld [vmem:[#allocation2 + $0x48] sm:$0xff]
        %v536 = vld [vmem:[#allocation2 + $0x50] sm:$0xff]
        %v537 = vld [vmem:[#allocation2 + $0x58] sm:$0xff]
        %v538 = vld [vmem:[#allocation2 + $0x60] sm:$0xff]
        %v539 = vld [vmem:[#allocation2 + $0x68] sm:$0xff]
        %v540 = vld [vmem:[#allocation2 + $0x70] sm:$0xff]
        %v541 = vld [vmem:[#allocation2 + $0x78] sm:$0xff]
        %v542 = vld [vmem:[#allocation2 + $0x80] sm:$0xff]
        %v543 = vld [vmem:[#allocation2 + $0x88] sm:$0xff]
        %v544 = vld [vmem:[#allocation2 + $0x90] sm:$0xff]
        %v545 = vld [vmem:[#allocation2 + $0x98] sm:$0xff]
        %v546 = vld [vmem:[#allocation2 + $0xa0] sm:$0xff]
        %v547 = vld [vmem:[#allocation2 + $0xa8] sm:$0xff]
        %v548 = vld [vmem:[#allocation2 + $0xb0] sm:$0xff]
        %v549 = vld [vmem:[#allocation2 + $0xb8] sm:$0xff]
        %v550 = vld [vmem:[#allocation2 + $0xc0] sm:$0xff]
        %v551 = vld [vmem:[#allocation2 + $0xc8] sm:$0xff]
        %v552 = vld [vmem:[#allocation2 + $0xd0] sm:$0xff]
        %v553 = vld [vmem:[#allocation2 + $0xd8] sm:$0xff]
        %v554 = vld [vmem:[#allocation2 + $0xe0] sm:$0xff]
        %v555 = vld [vmem:[#allocation2 + $0xe8] sm:$0xff]
        %v556 = vld [vmem:[#allocation2 + $0xf0] sm:$0xff]
        %v557 = vld [vmem:[#allocation2 + $0xf8] sm:$0xff]
        %v558 = vld [vmem:[#allocation2 + $0x100] sm:$0xff]
        %v559 = vld [vmem:[#allocation2 + $0x108] sm:$0xff]
        %v560 = vld [vmem:[#allocation2 + $0x110] sm:$0xff]
        %v561 = vld [vmem:[#allocation2 + $0x118] sm:$0xff]
        %v562 = vld [vmem:[#allocation2 + $0x120] sm:$0xff]
        %v563 = vld [vmem:[#allocation2 + $0x128] sm:$0xff]
        %v564 = vld [vmem:[#allocation2 + $0x130] sm:$0xff]
        %v565 = vld [vmem:[#allocation2 + $0x138] sm:$0xff]
        %v566 = vld [vmem:[#allocation2 + $0x140] sm:$0xff]
        %v567 = vld [vmem:[#allocation2 + $0x148] sm:$0xff]
        %v568 = vld [vmem:[#allocation2 + $0x150] sm:$0xff]
        %v569 = vld [vmem:[#allocation2 + $0x158] sm:$0xff]
        %v570 = vld [vmem:[#allocation2 + $0x160] sm:$0xff]
        %v571 = vld [vmem:[#allocation2 + $0x168] sm:$0xff]
        %v572 = vld [vmem:[#allocation2 + $0x170] sm:$0xff]
        %v573 = vld [vmem:[#allocation2 + $0x178] sm:$0xff]
        %v574 = vld [vmem:[#allocation2 + $0x180] sm:$0xff]
        %v575 = vld [vmem:[#allocation2 + $0x188] sm:$0xff]
        %v576 = vld [vmem:[#allocation2 + $0x190] sm:$0xff]
        %v577 = vld [vmem:[#allocation2 + $0x198] sm:$0xff]
        %v578 = vld [vmem:[#allocation2 + $0x1a0] sm:$0xff]
        %v579 = vld [vmem:[#allocation2 + $0x1a8] sm:$0xff]
        %v580 = vld [vmem:[#allocation2 + $0x1b0] sm:$0xff]
        %v581 = vld [vmem:[#allocation2 + $0x1b8] sm:$0xff]
        %v582 = vld [vmem:[#allocation2 + $0x1c0] sm:$0xff]
        %v583 = vld [vmem:[#allocation2 + $0x1c8] sm:$0xff]
        %v584 = vld [vmem:[#allocation2 + $0x1d0] sm:$0xff]
        %v585 = vld [vmem:[#allocation2 + $0x1d8] sm:$0xff]
        %v586 = vld [vmem:[#allocation2 + $0x1e0] sm:$0xff]
        %v587 = vld [vmem:[#allocation2 + $0x1e8] sm:$0xff]
        %v588 = vld [vmem:[#allocation2 + $0x1f0] sm:$0xff]
        %v589 = vld [vmem:[#allocation2 + $0x1f8] sm:$0xff]
        %v590 = vld [vmem:[%s410] sm:$0xff]
        %v591 = vld [vmem:[%s410 + $0x8] sm:$0xff]
        %v592 = vld [vmem:[%s410 + $0x10] sm:$0xff]
        %v593 = vld [vmem:[%s410 + $0x18] sm:$0xff]
        %v594 = vld [vmem:[%s410 + $0x20] sm:$0xff]
        %v595 = vld [vmem:[%s410 + $0x28] sm:$0xff]
        %v596 = vld [vmem:[%s410 + $0x30] sm:$0xff]
        %v597 = vld [vmem:[%s410 + $0x38] sm:$0xff]
        %v598 = vld [vmem:[%s410 + $0x40] sm:$0xff]
        %v599 = vld [vmem:[%s410 + $0x48] sm:$0xff]
        %v600 = vld [vmem:[%s410 + $0x50] sm:$0xff]
        %v601 = vld [vmem:[%s410 + $0x58] sm:$0xff]
        %v602 = vld [vmem:[%s410 + $0x60] sm:$0xff]
        %v603 = vld [vmem:[%s410 + $0x68] sm:$0xff]
        %v604 = vld [vmem:[%s410 + $0x70] sm:$0xff]
        %v605 = vld [vmem:[%s410 + $0x78] sm:$0xff]
        %v606 = vld [vmem:[%s410 + $0x80] sm:$0xff]
        %v607 = vld [vmem:[%s410 + $0x88] sm:$0xff]
        %v608 = vld [vmem:[%s410 + $0x90] sm:$0xff]
        %v609 = vld [vmem:[%s410 + $0x98] sm:$0xff]
        %v610 = vld [vmem:[%s410 + $0xa0] sm:$0xff]
        %v611 = vld [vmem:[%s410 + $0xa8] sm:$0xff]
        %v612 = vld [vmem:[%s410 + $0xb0] sm:$0xff]
        %v613 = vld [vmem:[%s410 + $0xb8] sm:$0xff]
        %v614 = vld [vmem:[%s410 + $0xc0] sm:$0xff]
        %v615 = vld [vmem:[%s410 + $0xc8] sm:$0xff]
        %v616 = vld [vmem:[%s410 + $0xd0] sm:$0xff]
        %v617 = vld [vmem:[%s410 + $0xd8] sm:$0xff]
        %v618 = vld [vmem:[%s410 + $0xe0] sm:$0xff]
        %v619 = vld [vmem:[%s410 + $0xe8] sm:$0xff]
        %v620 = vld [vmem:[%s410 + $0xf0] sm:$0xff]
        %v621 = vld [vmem:[%s410 + $0xf8] sm:$0xff]
        %v622 = vld [vmem:[%s450] sm:$0xff]
        %v623 = vld [vmem:[%s450 + $0x8] sm:$0xff]
        %v624 = vld [vmem:[%s450 + $0x10] sm:$0xff]
        %v625 = vld [vmem:[%s450 + $0x18] sm:$0xff]
        %v626 = vld [vmem:[%s450 + $0x20] sm:$0xff]
        %v627 = vld [vmem:[%s450 + $0x28] sm:$0xff]
        %v628 = vld [vmem:[%s450 + $0x30] sm:$0xff]
        %v629 = vld [vmem:[%s450 + $0x38] sm:$0xff]
        %v630 = vld [vmem:[%s450 + $0x40] sm:$0xff]
        %v631 = vld [vmem:[%s450 + $0x48] sm:$0xff]
        %v632 = vld [vmem:[%s450 + $0x50] sm:$0xff]
        %v633 = vld [vmem:[%s450 + $0x58] sm:$0xff]
        %v634 = vld [vmem:[%s450 + $0x60] sm:$0xff]
        %v635 = vld [vmem:[%s450 + $0x68] sm:$0xff]
        %v636 = vld [vmem:[%s450 + $0x70] sm:$0xff]
        %v637 = vld [vmem:[%s450 + $0x78] sm:$0xff]
        %v638 = vld [vmem:[%s450 + $0x80] sm:$0xff]
        %v639 = vld [vmem:[%s450 + $0x88] sm:$0xff]
        %v640 = vld [vmem:[%s450 + $0x90] sm:$0xff]
        %v641 = vld [vmem:[%s450 + $0x98] sm:$0xff]
        %v642 = vld [vmem:[%s450 + $0xa0] sm:$0xff]
        %v643 = vld [vmem:[%s450 + $0xa8] sm:$0xff]
        %v644 = vld [vmem:[%s450 + $0xb0] sm:$0xff]
        %v645 = vld [vmem:[%s450 + $0xb8] sm:$0xff]
        %v646 = vld [vmem:[%s450 + $0xc0] sm:$0xff]
        %v647 = vld [vmem:[%s450 + $0xc8] sm:$0xff]
        %v648 = vld [vmem:[%s450 + $0xd0] sm:$0xff]
        %v649 = vld [vmem:[%s450 + $0xd8] sm:$0xff]
        %v650 = vld [vmem:[%s450 + $0xe0] sm:$0xff]
        %v651 = vld [vmem:[%s450 + $0xe8] sm:$0xff]
        %v652 = vld [vmem:[%s450 + $0xf0] sm:$0xff]
        %v653 = vld [vmem:[%s450 + $0xf8] sm:$0xff]
        %v686 = vunpack.c.l.b16 %v590
        %v687 = vunpack.c.h.b16 %v590
        %v688 = vunpack.c.l.b16 %v591
        %v689 = vunpack.c.h.b16 %v591
        %v690 = vunpack.c.l.b16 %v592
        %v691 = vunpack.c.h.b16 %v592
        %v692 = vunpack.c.l.b16 %v593
        %v693 = vunpack.c.h.b16 %v593
        %v694 = vunpack.c.l.b16 %v594
        %v695 = vunpack.c.h.b16 %v594
        %v696 = vunpack.c.l.b16 %v595
        %v697 = vunpack.c.h.b16 %v595
        %v698 = vunpack.c.l.b16 %v596
        %v699 = vunpack.c.h.b16 %v596
        %v700 = vunpack.c.l.b16 %v597
        %v701 = vunpack.c.h.b16 %v597
        %v702 = vunpack.c.l.b16 %v598
        %v703 = vunpack.c.h.b16 %v598
        %v704 = vunpack.c.l.b16 %v599
        %v705 = vunpack.c.h.b16 %v599
        %v706 = vunpack.c.l.b16 %v600
        %v707 = vunpack.c.h.b16 %v600
        %v708 = vunpack.c.l.b16 %v601
        %v709 = vunpack.c.h.b16 %v601
        %v710 = vunpack.c.l.b16 %v602
        %v711 = vunpack.c.h.b16 %v602
        %v712 = vunpack.c.l.b16 %v603
        %v713 = vunpack.c.h.b16 %v603
        %v714 = vunpack.c.l.b16 %v604
        %v715 = vunpack.c.h.b16 %v604
        %v716 = vunpack.c.l.b16 %v605
        %v717 = vunpack.c.h.b16 %v605
        %v718 = vunpack.c.l.b16 %v606
        %v719 = vunpack.c.h.b16 %v606
        %v720 = vunpack.c.l.b16 %v607
        %v721 = vunpack.c.h.b16 %v607
        %v722 = vunpack.c.l.b16 %v608
        %v723 = vunpack.c.h.b16 %v608
        %v724 = vunpack.c.l.b16 %v609
        %v725 = vunpack.c.h.b16 %v609
        %v726 = vunpack.c.l.b16 %v610
        %v727 = vunpack.c.h.b16 %v610
        %v728 = vunpack.c.l.b16 %v611
        %v729 = vunpack.c.h.b16 %v611
        %v730 = vunpack.c.l.b16 %v612
        %v731 = vunpack.c.h.b16 %v612
        %v732 = vunpack.c.l.b16 %v613
        %v733 = vunpack.c.h.b16 %v613
        %v734 = vunpack.c.l.b16 %v614
        %v735 = vunpack.c.h.b16 %v614
        %v736 = vunpack.c.l.b16 %v615
        %v737 = vunpack.c.h.b16 %v615
        %v738 = vunpack.c.l.b16 %v616
        %v739 = vunpack.c.h.b16 %v616
        %v740 = vunpack.c.l.b16 %v617
        %v741 = vunpack.c.h.b16 %v617
        %v742 = vunpack.c.l.b16 %v618
        %v743 = vunpack.c.h.b16 %v618
        %v744 = vunpack.c.l.b16 %v619
        %v745 = vunpack.c.h.b16 %v619
        %v746 = vunpack.c.l.b16 %v620
        %v747 = vunpack.c.h.b16 %v620
        %v748 = vunpack.c.l.b16 %v621
        %v749 = vunpack.c.h.b16 %v621
        %v750 = vpack.c.b16 %v688, %v686
        %v751 = vpack.c.b16 %v689, %v687
        %v752 = vpack.c.b16 %v692, %v690
        %v753 = vpack.c.b16 %v693, %v691
        %v754 = vpack.c.b16 %v696, %v694
        %v755 = vpack.c.b16 %v697, %v695
        %v756 = vpack.c.b16 %v700, %v698
        %v757 = vpack.c.b16 %v701, %v699
        %v758 = vpack.c.b16 %v704, %v702
        %v759 = vpack.c.b16 %v705, %v703
        %v760 = vpack.c.b16 %v708, %v706
        %v761 = vpack.c.b16 %v709, %v707
        %v762 = vpack.c.b16 %v712, %v710
        %v763 = vpack.c.b16 %v713, %v711
        %v764 = vpack.c.b16 %v716, %v714
        %v765 = vpack.c.b16 %v717, %v715
        %v766 = vpack.c.b16 %v720, %v718
        %v767 = vpack.c.b16 %v721, %v719
        %v768 = vpack.c.b16 %v724, %v722
        %v769 = vpack.c.b16 %v725, %v723
        %v770 = vpack.c.b16 %v728, %v726
        %v771 = vpack.c.b16 %v729, %v727
        %v772 = vpack.c.b16 %v732, %v730
        %v773 = vpack.c.b16 %v733, %v731
        %v774 = vpack.c.b16 %v736, %v734
        %v775 = vpack.c.b16 %v737, %v735
        %v776 = vpack.c.b16 %v740, %v738
        %v777 = vpack.c.b16 %v741, %v739
        %v778 = vpack.c.b16 %v744, %v742
        %v779 = vpack.c.b16 %v745, %v743
        %v780 = vpack.c.b16 %v748, %v746
        %v781 = vpack.c.b16 %v749, %v747
        %v846 = vunpack.c.l.b16 %v622
        %v847 = vunpack.c.h.b16 %v622
        %v848 = vunpack.c.l.b16 %v623
        %v849 = vunpack.c.h.b16 %v623
        %v850 = vunpack.c.l.b16 %v624
        %v851 = vunpack.c.h.b16 %v624
        %v852 = vunpack.c.l.b16 %v625
        %v853 = vunpack.c.h.b16 %v625
        %v854 = vunpack.c.l.b16 %v626
        %v855 = vunpack.c.h.b16 %v626
        %v856 = vunpack.c.l.b16 %v627
        %v857 = vunpack.c.h.b16 %v627
        %v858 = vunpack.c.l.b16 %v628
        %v859 = vunpack.c.h.b16 %v628
        %v860 = vunpack.c.l.b16 %v629
        %v861 = vunpack.c.h.b16 %v629
        %v862 = vunpack.c.l.b16 %v630
        %v863 = vunpack.c.h.b16 %v630
        %v864 = vunpack.c.l.b16 %v631
        %v865 = vunpack.c.h.b16 %v631
        %v866 = vunpack.c.l.b16 %v632
        %v867 = vunpack.c.h.b16 %v632
        %v868 = vunpack.c.l.b16 %v633
        %v869 = vunpack.c.h.b16 %v633
        %v870 = vunpack.c.l.b16 %v634
        %v871 = vunpack.c.h.b16 %v634
        %v872 = vunpack.c.l.b16 %v635
        %v873 = vunpack.c.h.b16 %v635
        %v874 = vunpack.c.l.b16 %v636
        %v875 = vunpack.c.h.b16 %v636
        %v876 = vunpack.c.l.b16 %v637
        %v877 = vunpack.c.h.b16 %v637
        %v878 = vunpack.c.l.b16 %v638
        %v879 = vunpack.c.h.b16 %v638
        %v880 = vunpack.c.l.b16 %v639
        %v881 = vunpack.c.h.b16 %v639
        %v882 = vunpack.c.l.b16 %v640
        %v883 = vunpack.c.h.b16 %v640
        %v884 = vunpack.c.l.b16 %v641
        %v885 = vunpack.c.h.b16 %v641
        %v886 = vunpack.c.l.b16 %v642
        %v887 = vunpack.c.h.b16 %v642
        %v888 = vunpack.c.l.b16 %v643
        %v889 = vunpack.c.h.b16 %v643
        %v890 = vunpack.c.l.b16 %v644
        %v891 = vunpack.c.h.b16 %v644
        %v892 = vunpack.c.l.b16 %v645
        %v893 = vunpack.c.h.b16 %v645
        %v894 = vunpack.c.l.b16 %v646
        %v895 = vunpack.c.h.b16 %v646
        %v896 = vunpack.c.l.b16 %v647
        %v897 = vunpack.c.h.b16 %v647
        %v898 = vunpack.c.l.b16 %v648
        %v899 = vunpack.c.h.b16 %v648
        %v900 = vunpack.c.l.b16 %v649
        %v901 = vunpack.c.h.b16 %v649
        %v902 = vunpack.c.l.b16 %v650
        %v903 = vunpack.c.h.b16 %v650
        %v904 = vunpack.c.l.b16 %v651
        %v905 = vunpack.c.h.b16 %v651
        %v906 = vunpack.c.l.b16 %v652
        %v907 = vunpack.c.h.b16 %v652
        %v908 = vunpack.c.l.b16 %v653
        %v909 = vunpack.c.h.b16 %v653
        %v910 = vpack.c.b16 %v848, %v846
        %v911 = vpack.c.b16 %v849, %v847
        %v912 = vpack.c.b16 %v852, %v850
        %v913 = vpack.c.b16 %v853, %v851
        %v914 = vpack.c.b16 %v856, %v854
        %v915 = vpack.c.b16 %v857, %v855
        %v916 = vpack.c.b16 %v860, %v858
        %v917 = vpack.c.b16 %v861, %v859
        %v918 = vpack.c.b16 %v864, %v862
        %v919 = vpack.c.b16 %v865, %v863
        %v920 = vpack.c.b16 %v868, %v866
        %v921 = vpack.c.b16 %v869, %v867
        %v922 = vpack.c.b16 %v872, %v870
        %v923 = vpack.c.b16 %v873, %v871
        %v924 = vpack.c.b16 %v876, %v874
        %v925 = vpack.c.b16 %v877, %v875
        %v926 = vpack.c.b16 %v880, %v878
        %v927 = vpack.c.b16 %v881, %v879
        %v928 = vpack.c.b16 %v884, %v882
        %v929 = vpack.c.b16 %v885, %v883
        %v930 = vpack.c.b16 %v888, %v886
        %v931 = vpack.c.b16 %v889, %v887
        %v932 = vpack.c.b16 %v892, %v890
        %v933 = vpack.c.b16 %v893, %v891
        %v934 = vpack.c.b16 %v896, %v894
        %v935 = vpack.c.b16 %v897, %v895
        %v936 = vpack.c.b16 %v900, %v898
        %v937 = vpack.c.b16 %v901, %v899
        %v938 = vpack.c.b16 %v904, %v902
        %v939 = vpack.c.b16 %v905, %v903
        %v940 = vpack.c.b16 %v908, %v906
        %v941 = vpack.c.b16 %v909, %v907
        %974 = vmatpush.bf16.msra.mxu0 %v924
        %975 = vmatpush.bf16.msra.mxu0 %v922
        %976 = vmatpush.bf16.msra.mxu0 %v920
        %977 = vmatpush.bf16.msra.mxu0 %v918
        %978 = vmatpush.bf16.msra.mxu0 %v916
        %979 = vmatpush.bf16.msra.mxu0 %v914
        %980 = vmatpush.bf16.msra.mxu0 %v912
        %981 = vmatpush.bf16.msra.mxu0 %v910
        %982 = vmatmul.bf16.gmra.mxu0 %v750
        %v983 = vpop.f32.mrf.mxu0
        %v984 = vadd.f32 0.0, %v983
        %v985 = vpop.f32.mrf.mxu0
        %v986 = vadd.f32 0.0, %v985
        %987 = vmatmul.bf16.gmra.mxu0 %v752
        %v988 = vpop.f32.mrf.mxu0
        %v989 = vadd.f32 0.0, %v988
        %v990 = vpop.f32.mrf.mxu0
        %v991 = vadd.f32 0.0, %v990
        %992 = vmatmul.bf16.gmra.mxu0 %v754
        %v993 = vpop.f32.mrf.mxu0
        %v994 = vadd.f32 0.0, %v993
        %v995 = vpop.f32.mrf.mxu0
        %v996 = vadd.f32 0.0, %v995
        %997 = vmatmul.bf16.gmra.mxu0 %v756
        %v998 = vpop.f32.mrf.mxu0
        %v999 = vadd.f32 0.0, %v998
        %v1000 = vpop.f32.mrf.mxu0
        %v1001 = vadd.f32 0.0, %v1000
        %1002 = vmatmul.bf16.gmra.mxu0 %v758
        %v1003 = vpop.f32.mrf.mxu0
        %v1004 = vadd.f32 0.0, %v1003
        %v1005 = vpop.f32.mrf.mxu0
        %v1006 = vadd.f32 0.0, %v1005
        %1007 = vmatmul.bf16.gmra.mxu0 %v760
        %v1008 = vpop.f32.mrf.mxu0
        %v1009 = vadd.f32 0.0, %v1008
        %v1010 = vpop.f32.mrf.mxu0
        %v1011 = vadd.f32 0.0, %v1010
        %1012 = vmatmul.bf16.gmra.mxu0 %v762
        %v1013 = vpop.f32.mrf.mxu0
        %v1014 = vadd.f32 0.0, %v1013
        %v1015 = vpop.f32.mrf.mxu0
        %v1016 = vadd.f32 0.0, %v1015
        %1017 = vmatmul.bf16.gmra.mxu0 %v764
        %v1018 = vpop.f32.mrf.mxu0
        %v1019 = vadd.f32 0.0, %v1018
        %v1020 = vpop.f32.mrf.mxu0
        %v1021 = vadd.f32 0.0, %v1020
        %1022 = vmatmul.bf16.gmra.mxu0 %v766
        %v1023 = vpop.f32.mrf.mxu0
        %v1024 = vadd.f32 0.0, %v1023
        %v1025 = vpop.f32.mrf.mxu0
        %v1026 = vadd.f32 0.0, %v1025
        %1027 = vmatmul.bf16.gmra.mxu0 %v768
        %v1028 = vpop.f32.mrf.mxu0
        %v1029 = vadd.f32 0.0, %v1028
        %v1030 = vpop.f32.mrf.mxu0
        %v1031 = vadd.f32 0.0, %v1030
        %1032 = vmatmul.bf16.gmra.mxu0 %v770
        %v1033 = vpop.f32.mrf.mxu0
        %v1034 = vadd.f32 0.0, %v1033
        %v1035 = vpop.f32.mrf.mxu0
        %v1036 = vadd.f32 0.0, %v1035
        %1037 = vmatmul.bf16.gmra.mxu0 %v772
        %v1038 = vpop.f32.mrf.mxu0
        %v1039 = vadd.f32 0.0, %v1038
        %v1040 = vpop.f32.mrf.mxu0
        %v1041 = vadd.f32 0.0, %v1040
        %1042 = vmatmul.bf16.gmra.mxu0 %v774
        %v1043 = vpop.f32.mrf.mxu0
        %v1044 = vadd.f32 0.0, %v1043
        %v1045 = vpop.f32.mrf.mxu0
        %v1046 = vadd.f32 0.0, %v1045
        %1047 = vmatmul.bf16.gmra.mxu0 %v776
        %v1048 = vpop.f32.mrf.mxu0
        %v1049 = vadd.f32 0.0, %v1048
        %v1050 = vpop.f32.mrf.mxu0
        %v1051 = vadd.f32 0.0, %v1050
        %1052 = vmatmul.bf16.gmra.mxu0 %v778
        %v1053 = vpop.f32.mrf.mxu0
        %v1054 = vadd.f32 0.0, %v1053
        %v1055 = vpop.f32.mrf.mxu0
        %v1056 = vadd.f32 0.0, %v1055
        %1057 = vmatmul.bf16.gmra.mxu0 %v780
        %v1058 = vpop.f32.mrf.mxu0
        %v1059 = vadd.f32 0.0, %v1058
        %v1060 = vpop.f32.mrf.mxu0
        %v1061 = vadd.f32 0.0, %v1060
        %1062 = vdwg.mxu0
        %1063 = vmatpush.bf16.msra.mxu0 %v940
        %1064 = vmatpush.bf16.msra.mxu0 %v938
        %1065 = vmatpush.bf16.msra.mxu0 %v936
        %1066 = vmatpush.bf16.msra.mxu0 %v934
        %1067 = vmatpush.bf16.msra.mxu0 %v932
        %1068 = vmatpush.bf16.msra.mxu0 %v930
        %1069 = vmatpush.bf16.msra.mxu0 %v928
        %1070 = vmatpush.bf16.msra.mxu0 %v926
        %1071 = vmatmul.bf16.gmra.mxu0 %v751
        %v1072 = vpop.f32.mrf.mxu0
        %v1073 = vadd.f32 %v984, %v1072
        %v1074 = vpop.f32.mrf.mxu0
        %v1075 = vadd.f32 %v986, %v1074
        %1076 = vmatmul.bf16.gmra.mxu0 %v753
        %v1077 = vpop.f32.mrf.mxu0
        %v1078 = vadd.f32 %v989, %v1077
        %v1079 = vpop.f32.mrf.mxu0
        %v1080 = vadd.f32 %v991, %v1079
        %1081 = vmatmul.bf16.gmra.mxu0 %v755
        %v1082 = vpop.f32.mrf.mxu0
        %v1083 = vadd.f32 %v994, %v1082
        %v1084 = vpop.f32.mrf.mxu0
        %v1085 = vadd.f32 %v996, %v1084
        %1086 = vmatmul.bf16.gmra.mxu0 %v757
        %v1087 = vpop.f32.mrf.mxu0
        %v1088 = vadd.f32 %v999, %v1087
        %v1089 = vpop.f32.mrf.mxu0
        %v1090 = vadd.f32 %v1001, %v1089
        %1091 = vmatmul.bf16.gmra.mxu0 %v759
        %v1092 = vpop.f32.mrf.mxu0
        %v1093 = vadd.f32 %v1004, %v1092
        %v1094 = vpop.f32.mrf.mxu0
        %v1095 = vadd.f32 %v1006, %v1094
        %1096 = vmatmul.bf16.gmra.mxu0 %v761
        %v1097 = vpop.f32.mrf.mxu0
        %v1098 = vadd.f32 %v1009, %v1097
        %v1099 = vpop.f32.mrf.mxu0
        %v1100 = vadd.f32 %v1011, %v1099
        %1101 = vmatmul.bf16.gmra.mxu0 %v763
        %v1102 = vpop.f32.mrf.mxu0
        %v1103 = vadd.f32 %v1014, %v1102
        %v1104 = vpop.f32.mrf.mxu0
        %v1105 = vadd.f32 %v1016, %v1104
        %1106 = vmatmul.bf16.gmra.mxu0 %v765
        %v1107 = vpop.f32.mrf.mxu0
        %v1108 = vadd.f32 %v1019, %v1107
        %v1109 = vpop.f32.mrf.mxu0
        %v1110 = vadd.f32 %v1021, %v1109
        %1111 = vmatmul.bf16.gmra.mxu0 %v767
        %v1112 = vpop.f32.mrf.mxu0
        %v1113 = vadd.f32 %v1024, %v1112
        %v1114 = vpop.f32.mrf.mxu0
        %v1115 = vadd.f32 %v1026, %v1114
        %1116 = vmatmul.bf16.gmra.mxu0 %v769
        %v1117 = vpop.f32.mrf.mxu0
        %v1118 = vadd.f32 %v1029, %v1117
        %v1119 = vpop.f32.mrf.mxu0
        %v1120 = vadd.f32 %v1031, %v1119
        %1121 = vmatmul.bf16.gmra.mxu0 %v771
        %v1122 = vpop.f32.mrf.mxu0
        %v1123 = vadd.f32 %v1034, %v1122
        %v1124 = vpop.f32.mrf.mxu0
        %v1125 = vadd.f32 %v1036, %v1124
        %1126 = vmatmul.bf16.gmra.mxu0 %v773
        %v1127 = vpop.f32.mrf.mxu0
        %v1128 = vadd.f32 %v1039, %v1127
        %v1129 = vpop.f32.mrf.mxu0
        %v1130 = vadd.f32 %v1041, %v1129
        %1131 = vmatmul.bf16.gmra.mxu0 %v775
        %v1132 = vpop.f32.mrf.mxu0
        %v1133 = vadd.f32 %v1044, %v1132
        %v1134 = vpop.f32.mrf.mxu0
        %v1135 = vadd.f32 %v1046, %v1134
        %1136 = vmatmul.bf16.gmra.mxu0 %v777
        %v1137 = vpop.f32.mrf.mxu0
        %v1138 = vadd.f32 %v1049, %v1137
        %v1139 = vpop.f32.mrf.mxu0
        %v1140 = vadd.f32 %v1051, %v1139
        %1141 = vmatmul.bf16.gmra.mxu0 %v779
        %v1142 = vpop.f32.mrf.mxu0
        %v1143 = vadd.f32 %v1054, %v1142
        %v1144 = vpop.f32.mrf.mxu0
        %v1145 = vadd.f32 %v1056, %v1144
        %1146 = vmatmul.bf16.gmra.mxu0 %v781
        %v1147 = vpop.f32.mrf.mxu0
        %v1148 = vadd.f32 %v1059, %v1147
        %v1149 = vpop.f32.mrf.mxu0
        %v1150 = vadd.f32 %v1061, %v1149
        %1151 = vdwg.mxu0
        %1152 = vmatpush.bf16.msra.mxu0 %v925
        %1153 = vmatpush.bf16.msra.mxu0 %v923
        %1154 = vmatpush.bf16.msra.mxu0 %v921
        %1155 = vmatpush.bf16.msra.mxu0 %v919
        %1156 = vmatpush.bf16.msra.mxu0 %v917
        %1157 = vmatpush.bf16.msra.mxu0 %v915
        %1158 = vmatpush.bf16.msra.mxu0 %v913
        %1159 = vmatpush.bf16.msra.mxu0 %v911
        %1160 = vmatmul.bf16.gmra.mxu0 %v750
        %v1161 = vpop.f32.mrf.mxu0
        %v1162 = vadd.f32 0.0, %v1161
        %v1163 = vpop.f32.mrf.mxu0
        %v1164 = vadd.f32 0.0, %v1163
        %1165 = vmatmul.bf16.gmra.mxu0 %v752
        %v1166 = vpop.f32.mrf.mxu0
        %v1167 = vadd.f32 0.0, %v1166
        %v1168 = vpop.f32.mrf.mxu0
        %v1169 = vadd.f32 0.0, %v1168
        %1170 = vmatmul.bf16.gmra.mxu0 %v754
        %v1171 = vpop.f32.mrf.mxu0
        %v1172 = vadd.f32 0.0, %v1171
        %v1173 = vpop.f32.mrf.mxu0
        %v1174 = vadd.f32 0.0, %v1173
        %1175 = vmatmul.bf16.gmra.mxu0 %v756
        %v1176 = vpop.f32.mrf.mxu0
        %v1177 = vadd.f32 0.0, %v1176
        %v1178 = vpop.f32.mrf.mxu0
        %v1179 = vadd.f32 0.0, %v1178
        %1180 = vmatmul.bf16.gmra.mxu0 %v758
        %v1181 = vpop.f32.mrf.mxu0
        %v1182 = vadd.f32 0.0, %v1181
        %v1183 = vpop.f32.mrf.mxu0
        %v1184 = vadd.f32 0.0, %v1183
        %1185 = vmatmul.bf16.gmra.mxu0 %v760
        %v1186 = vpop.f32.mrf.mxu0
        %v1187 = vadd.f32 0.0, %v1186
        %v1188 = vpop.f32.mrf.mxu0
        %v1189 = vadd.f32 0.0, %v1188
        %1190 = vmatmul.bf16.gmra.mxu0 %v762
        %v1191 = vpop.f32.mrf.mxu0
        %v1192 = vadd.f32 0.0, %v1191
        %v1193 = vpop.f32.mrf.mxu0
        %v1194 = vadd.f32 0.0, %v1193
        %1195 = vmatmul.bf16.gmra.mxu0 %v764
        %v1196 = vpop.f32.mrf.mxu0
        %v1197 = vadd.f32 0.0, %v1196
        %v1198 = vpop.f32.mrf.mxu0
        %v1199 = vadd.f32 0.0, %v1198
        %1200 = vmatmul.bf16.gmra.mxu0 %v766
        %v1201 = vpop.f32.mrf.mxu0
        %v1202 = vadd.f32 0.0, %v1201
        %v1203 = vpop.f32.mrf.mxu0
        %v1204 = vadd.f32 0.0, %v1203
        %1205 = vmatmul.bf16.gmra.mxu0 %v768
        %v1206 = vpop.f32.mrf.mxu0
        %v1207 = vadd.f32 0.0, %v1206
        %v1208 = vpop.f32.mrf.mxu0
        %v1209 = vadd.f32 0.0, %v1208
        %1210 = vmatmul.bf16.gmra.mxu0 %v770
        %v1211 = vpop.f32.mrf.mxu0
        %v1212 = vadd.f32 0.0, %v1211
        %v1213 = vpop.f32.mrf.mxu0
        %v1214 = vadd.f32 0.0, %v1213
        %1215 = vmatmul.bf16.gmra.mxu0 %v772
        %v1216 = vpop.f32.mrf.mxu0
        %v1217 = vadd.f32 0.0, %v1216
        %v1218 = vpop.f32.mrf.mxu0
        %v1219 = vadd.f32 0.0, %v1218
        %1220 = vmatmul.bf16.gmra.mxu0 %v774
        %v1221 = vpop.f32.mrf.mxu0
        %v1222 = vadd.f32 0.0, %v1221
        %v1223 = vpop.f32.mrf.mxu0
        %v1224 = vadd.f32 0.0, %v1223
        %1225 = vmatmul.bf16.gmra.mxu0 %v776
        %v1226 = vpop.f32.mrf.mxu0
        %v1227 = vadd.f32 0.0, %v1226
        %v1228 = vpop.f32.mrf.mxu0
        %v1229 = vadd.f32 0.0, %v1228
        %1230 = vmatmul.bf16.gmra.mxu0 %v778
        %v1231 = vpop.f32.mrf.mxu0
        %v1232 = vadd.f32 0.0, %v1231
        %v1233 = vpop.f32.mrf.mxu0
        %v1234 = vadd.f32 0.0, %v1233
        %1235 = vmatmul.bf16.gmra.mxu0 %v780
        %v1236 = vpop.f32.mrf.mxu0
        %v1237 = vadd.f32 0.0, %v1236
        %v1238 = vpop.f32.mrf.mxu0
        %v1239 = vadd.f32 0.0, %v1238
        %1240 = vdwg.mxu0
        %1241 = vmatpush.bf16.msra.mxu0 %v941
        %1242 = vmatpush.bf16.msra.mxu0 %v939
        %1243 = vmatpush.bf16.msra.mxu0 %v937
        %1244 = vmatpush.bf16.msra.mxu0 %v935
        %1245 = vmatpush.bf16.msra.mxu0 %v933
        %1246 = vmatpush.bf16.msra.mxu0 %v931
        %1247 = vmatpush.bf16.msra.mxu0 %v929
        %1248 = vmatpush.bf16.msra.mxu0 %v927
        %1249 = vmatmul.bf16.gmra.mxu0 %v751
        %v1250 = vpop.f32.mrf.mxu0
        %v1251 = vadd.f32 %v1162, %v1250
        %v1252 = vpop.f32.mrf.mxu0
        %v1253 = vadd.f32 %v1164, %v1252
        %1254 = vmatmul.bf16.gmra.mxu0 %v753
        %v1255 = vpop.f32.mrf.mxu0
        %v1256 = vadd.f32 %v1167, %v1255
        %v1257 = vpop.f32.mrf.mxu0
        %v1258 = vadd.f32 %v1169, %v1257
        %1259 = vmatmul.bf16.gmra.mxu0 %v755
        %v1260 = vpop.f32.mrf.mxu0
        %v1261 = vadd.f32 %v1172, %v1260
        %v1262 = vpop.f32.mrf.mxu0
        %v1263 = vadd.f32 %v1174, %v1262
        %1264 = vmatmul.bf16.gmra.mxu0 %v757
        %v1265 = vpop.f32.mrf.mxu0
        %v1266 = vadd.f32 %v1177, %v1265
        %v1267 = vpop.f32.mrf.mxu0
        %v1268 = vadd.f32 %v1179, %v1267
        %1269 = vmatmul.bf16.gmra.mxu0 %v759
        %v1270 = vpop.f32.mrf.mxu0
        %v1271 = vadd.f32 %v1182, %v1270
        %v1272 = vpop.f32.mrf.mxu0
        %v1273 = vadd.f32 %v1184, %v1272
        %1274 = vmatmul.bf16.gmra.mxu0 %v761
        %v1275 = vpop.f32.mrf.mxu0
        %v1276 = vadd.f32 %v1187, %v1275
        %v1277 = vpop.f32.mrf.mxu0
        %v1278 = vadd.f32 %v1189, %v1277
        %1279 = vmatmul.bf16.gmra.mxu0 %v763
        %v1280 = vpop.f32.mrf.mxu0
        %v1281 = vadd.f32 %v1192, %v1280
        %v1282 = vpop.f32.mrf.mxu0
        %v1283 = vadd.f32 %v1194, %v1282
        %1284 = vmatmul.bf16.gmra.mxu0 %v765
        %v1285 = vpop.f32.mrf.mxu0
        %v1286 = vadd.f32 %v1197, %v1285
        %v1287 = vpop.f32.mrf.mxu0
        %v1288 = vadd.f32 %v1199, %v1287
        %1289 = vmatmul.bf16.gmra.mxu0 %v767
        %v1290 = vpop.f32.mrf.mxu0
        %v1291 = vadd.f32 %v1202, %v1290
        %v1292 = vpop.f32.mrf.mxu0
        %v1293 = vadd.f32 %v1204, %v1292
        %1294 = vmatmul.bf16.gmra.mxu0 %v769
        %v1295 = vpop.f32.mrf.mxu0
        %v1296 = vadd.f32 %v1207, %v1295
        %v1297 = vpop.f32.mrf.mxu0
        %v1298 = vadd.f32 %v1209, %v1297
        %1299 = vmatmul.bf16.gmra.mxu0 %v771
        %v1300 = vpop.f32.mrf.mxu0
        %v1301 = vadd.f32 %v1212, %v1300
        %v1302 = vpop.f32.mrf.mxu0
        %v1303 = vadd.f32 %v1214, %v1302
        %1304 = vmatmul.bf16.gmra.mxu0 %v773
        %v1305 = vpop.f32.mrf.mxu0
        %v1306 = vadd.f32 %v1217, %v1305
        %v1307 = vpop.f32.mrf.mxu0
        %v1308 = vadd.f32 %v1219, %v1307
        %1309 = vmatmul.bf16.gmra.mxu0 %v775
        %v1310 = vpop.f32.mrf.mxu0
        %v1311 = vadd.f32 %v1222, %v1310
        %v1312 = vpop.f32.mrf.mxu0
        %v1313 = vadd.f32 %v1224, %v1312
        %1314 = vmatmul.bf16.gmra.mxu0 %v777
        %v1315 = vpop.f32.mrf.mxu0
        %v1316 = vadd.f32 %v1227, %v1315
        %v1317 = vpop.f32.mrf.mxu0
        %v1318 = vadd.f32 %v1229, %v1317
        %1319 = vmatmul.bf16.gmra.mxu0 %v779
        %v1320 = vpop.f32.mrf.mxu0
        %v1321 = vadd.f32 %v1232, %v1320
        %v1322 = vpop.f32.mrf.mxu0
        %v1323 = vadd.f32 %v1234, %v1322
        %1324 = vmatmul.bf16.gmra.mxu0 %v781
        %v1325 = vpop.f32.mrf.mxu0
        %v1326 = vadd.f32 %v1237, %v1325
        %v1327 = vpop.f32.mrf.mxu0
        %v1328 = vadd.f32 %v1239, %v1327
        %1329 = vdwg.mxu0
        %v1330 = vadd.f32 %v526, %v1073
        %v1331 = vadd.f32 %v527, %v1251
        %v1332 = vadd.f32 %v528, %v1075
        %v1333 = vadd.f32 %v529, %v1253
        %v1334 = vadd.f32 %v530, %v1078
        %v1335 = vadd.f32 %v531, %v1256
        %v1336 = vadd.f32 %v532, %v1080
        %v1337 = vadd.f32 %v533, %v1258
        %v1338 = vadd.f32 %v534, %v1083
        %v1339 = vadd.f32 %v535, %v1261
        %v1340 = vadd.f32 %v536, %v1085
        %v1341 = vadd.f32 %v537, %v1263
        %v1342 = vadd.f32 %v538, %v1088
        %v1343 = vadd.f32 %v539, %v1266
        %v1344 = vadd.f32 %v540, %v1090
        %v1345 = vadd.f32 %v541, %v1268
        %v1346 = vadd.f32 %v542, %v1093
        %v1347 = vadd.f32 %v543, %v1271
        %v1348 = vadd.f32 %v544, %v1095
        %v1349 = vadd.f32 %v545, %v1273
        %v1350 = vadd.f32 %v546, %v1098
        %v1351 = vadd.f32 %v547, %v1276
        %v1352 = vadd.f32 %v548, %v1100
        %v1353 = vadd.f32 %v549, %v1278
        %v1354 = vadd.f32 %v550, %v1103
        %v1355 = vadd.f32 %v551, %v1281
        %v1356 = vadd.f32 %v552, %v1105
        %v1357 = vadd.f32 %v553, %v1283
        %v1358 = vadd.f32 %v554, %v1108
        %v1359 = vadd.f32 %v555, %v1286
        %v1360 = vadd.f32 %v556, %v1110
        %v1361 = vadd.f32 %v557, %v1288
        %v1362 = vadd.f32 %v558, %v1113
        %v1363 = vadd.f32 %v559, %v1291
        %v1364 = vadd.f32 %v560, %v1115
        %v1365 = vadd.f32 %v561, %v1293
        %v1366 = vadd.f32 %v562, %v1118
        %v1367 = vadd.f32 %v563, %v1296
        %v1368 = vadd.f32 %v564, %v1120
        %v1369 = vadd.f32 %v565, %v1298
        %v1370 = vadd.f32 %v566, %v1123
        %v1371 = vadd.f32 %v567, %v1301
        %v1372 = vadd.f32 %v568, %v1125
        %v1373 = vadd.f32 %v569, %v1303
        %v1374 = vadd.f32 %v570, %v1128
        %v1375 = vadd.f32 %v571, %v1306
        %v1376 = vadd.f32 %v572, %v1130
        %v1377 = vadd.f32 %v573, %v1308
        %v1378 = vadd.f32 %v574, %v1133
        %v1379 = vadd.f32 %v575, %v1311
        %v1380 = vadd.f32 %v576, %v1135
        %v1381 = vadd.f32 %v577, %v1313
        %v1382 = vadd.f32 %v578, %v1138
        %v1383 = vadd.f32 %v579, %v1316
        %v1384 = vadd.f32 %v580, %v1140
        %v1385 = vadd.f32 %v581, %v1318
        %v1386 = vadd.f32 %v582, %v1143
        %v1387 = vadd.f32 %v583, %v1321
        %v1388 = vadd.f32 %v584, %v1145
        %v1389 = vadd.f32 %v585, %v1323
        %v1390 = vadd.f32 %v586, %v1148
        %v1391 = vadd.f32 %v587, %v1326
        %v1392 = vadd.f32 %v588, %v1150
        %v1393 = vadd.f32 %v589, %v1328
        %1394 = vst [vmem:[#allocation2] sm:$0xff] %v1330
        %1395 = vst [vmem:[#allocation2 + $0x8] sm:$0xff] %v1331
        %1396 = vst [vmem:[#allocation2 + $0x10] sm:$0xff] %v1332
        %1397 = vst [vmem:[#allocation2 + $0x18] sm:$0xff] %v1333
        %1398 = vst [vmem:[#allocation2 + $0x20] sm:$0xff] %v1334
        %1399 = vst [vmem:[#allocation2 + $0x28] sm:$0xff] %v1335
        %1400 = vst [vmem:[#allocation2 + $0x30] sm:$0xff] %v1336
        %1401 = vst [vmem:[#allocation2 + $0x38] sm:$0xff] %v1337
        %1402 = vst [vmem:[#allocation2 + $0x40] sm:$0xff] %v1338
        %1403 = vst [vmem:[#allocation2 + $0x48] sm:$0xff] %v1339
        %1404 = vst [vmem:[#allocation2 + $0x50] sm:$0xff] %v1340
        %1405 = vst [vmem:[#allocation2 + $0x58] sm:$0xff] %v1341
        %1406 = vst [vmem:[#allocation2 + $0x60] sm:$0xff] %v1342
        %1407 = vst [vmem:[#allocation2 + $0x68] sm:$0xff] %v1343
        %1408 = vst [vmem:[#allocation2 + $0x70] sm:$0xff] %v1344
        %1409 = vst [vmem:[#allocation2 + $0x78] sm:$0xff] %v1345
        %1410 = vst [vmem:[#allocation2 + $0x80] sm:$0xff] %v1346
        %1411 = vst [vmem:[#allocation2 + $0x88] sm:$0xff] %v1347
        %1412 = vst [vmem:[#allocation2 + $0x90] sm:$0xff] %v1348
        %1413 = vst [vmem:[#allocation2 + $0x98] sm:$0xff] %v1349
        %1414 = vst [vmem:[#allocation2 + $0xa0] sm:$0xff] %v1350
        %1415 = vst [vmem:[#allocation2 + $0xa8] sm:$0xff] %v1351
        %1416 = vst [vmem:[#allocation2 + $0xb0] sm:$0xff] %v1352
        %1417 = vst [vmem:[#allocation2 + $0xb8] sm:$0xff] %v1353
        %1418 = vst [vmem:[#allocation2 + $0xc0] sm:$0xff] %v1354
        %1419 = vst [vmem:[#allocation2 + $0xc8] sm:$0xff] %v1355
        %1420 = vst [vmem:[#allocation2 + $0xd0] sm:$0xff] %v1356
        %1421 = vst [vmem:[#allocation2 + $0xd8] sm:$0xff] %v1357
        %1422 = vst [vmem:[#allocation2 + $0xe0] sm:$0xff] %v1358
        %1423 = vst [vmem:[#allocation2 + $0xe8] sm:$0xff] %v1359
        %1424 = vst [vmem:[#allocation2 + $0xf0] sm:$0xff] %v1360
        %1425 = vst [vmem:[#allocation2 + $0xf8] sm:$0xff] %v1361
        %1426 = vst [vmem:[#allocation2 + $0x100] sm:$0xff] %v1362
        %1427 = vst [vmem:[#allocation2 + $0x108] sm:$0xff] %v1363
        %1428 = vst [vmem:[#allocation2 + $0x110] sm:$0xff] %v1364
        %1429 = vst [vmem:[#allocation2 + $0x118] sm:$0xff] %v1365
        %1430 = vst [vmem:[#allocation2 + $0x120] sm:$0xff] %v1366
        %1431 = vst [vmem:[#allocation2 + $0x128] sm:$0xff] %v1367
        %1432 = vst [vmem:[#allocation2 + $0x130] sm:$0xff] %v1368
        %1433 = vst [vmem:[#allocation2 + $0x138] sm:$0xff] %v1369
        %1434 = vst [vmem:[#allocation2 + $0x140] sm:$0xff] %v1370
        %1435 = vst [vmem:[#allocation2 + $0x148] sm:$0xff] %v1371
        %1436 = vst [vmem:[#allocation2 + $0x150] sm:$0xff] %v1372
        %1437 = vst [vmem:[#allocation2 + $0x158] sm:$0xff] %v1373
        %1438 = vst [vmem:[#allocation2 + $0x160] sm:$0xff] %v1374
        %1439 = vst [vmem:[#allocation2 + $0x168] sm:$0xff] %v1375
        %1440 = vst [vmem:[#allocation2 + $0x170] sm:$0xff] %v1376
        %1441 = vst [vmem:[#allocation2 + $0x178] sm:$0xff] %v1377
        %1442 = vst [vmem:[#allocation2 + $0x180] sm:$0xff] %v1378
        %1443 = vst [vmem:[#allocation2 + $0x188] sm:$0xff] %v1379
        %1444 = vst [vmem:[#allocation2 + $0x190] sm:$0xff] %v1380
        %1445 = vst [vmem:[#allocation2 + $0x198] sm:$0xff] %v1381
        %1446 = vst [vmem:[#allocation2 + $0x1a0] sm:$0xff] %v1382
        %1447 = vst [vmem:[#allocation2 + $0x1a8] sm:$0xff] %v1383
        %1448 = vst [vmem:[#allocation2 + $0x1b0] sm:$0xff] %v1384
        %1449 = vst [vmem:[#allocation2 + $0x1b8] sm:$0xff] %v1385
        %1450 = vst [vmem:[#allocation2 + $0x1c0] sm:$0xff] %v1386
        %1451 = vst [vmem:[#allocation2 + $0x1c8] sm:$0xff] %v1387
        %1452 = vst [vmem:[#allocation2 + $0x1d0] sm:$0xff] %v1388
        %1453 = vst [vmem:[#allocation2 + $0x1d8] sm:$0xff] %v1389
        %1454 = vst [vmem:[#allocation2 + $0x1e0] sm:$0xff] %v1390
        %1455 = vst [vmem:[#allocation2 + $0x1e8] sm:$0xff] %v1391
        %1456 = vst [vmem:[#allocation2 + $0x1f0] sm:$0xff] %v1392
        %1457 = vst [vmem:[#allocation2 + $0x1f8] sm:$0xff] %v1393
        %p1458 = scmp.eq.s32.totalorder %s23, 1
        // Predicated region
        $region87: #{_lambda_.7} parent=77 // pred_check
          %p1459 = pneg %p1458
        $region88: #{_lambda_.7} parent=77 // pred_check_branch
          %1461 = sbr.rel (%p1459) target = $region90
        $region89: #{_lambda_.7} parent=77 // pred_region
          %v1462 = vld [vmem:[#allocation2] sm:$0xff]
          %v1463 = vld [vmem:[#allocation2 + $0x8] sm:$0xff]
          %v1464 = vld [vmem:[#allocation2 + $0x10] sm:$0xff]
          %v1465 = vld [vmem:[#allocation2 + $0x18] sm:$0xff]
          %v1466 = vld [vmem:[#allocation2 + $0x20] sm:$0xff]
          %v1467 = vld [vmem:[#allocation2 + $0x28] sm:$0xff]
          %v1468 = vld [vmem:[#allocation2 + $0x30] sm:$0xff]
          %v1469 = vld [vmem:[#allocation2 + $0x38] sm:$0xff]
          %v1470 = vld [vmem:[#allocation2 + $0x40] sm:$0xff]
          %v1471 = vld [vmem:[#allocation2 + $0x48] sm:$0xff]
          %v1472 = vld [vmem:[#allocation2 + $0x50] sm:$0xff]
          %v1473 = vld [vmem:[#allocation2 + $0x58] sm:$0xff]
          %v1474 = vld [vmem:[#allocation2 + $0x60] sm:$0xff]
          %v1475 = vld [vmem:[#allocation2 + $0x68] sm:$0xff]
          %v1476 = vld [vmem:[#allocation2 + $0x70] sm:$0xff]
          %v1477 = vld [vmem:[#allocation2 + $0x78] sm:$0xff]
          %v1478 = vld [vmem:[#allocation2 + $0x80] sm:$0xff]
          %v1479 = vld [vmem:[#allocation2 + $0x88] sm:$0xff]
          %v1480 = vld [vmem:[#allocation2 + $0x90] sm:$0xff]
          %v1481 = vld [vmem:[#allocation2 + $0x98] sm:$0xff]
          %v1482 = vld [vmem:[#allocation2 + $0xa0] sm:$0xff]
          %v1483 = vld [vmem:[#allocation2 + $0xa8] sm:$0xff]
          %v1484 = vld [vmem:[#allocation2 + $0xb0] sm:$0xff]
          %v1485 = vld [vmem:[#allocation2 + $0xb8] sm:$0xff]
          %v1486 = vld [vmem:[#allocation2 + $0xc0] sm:$0xff]
          %v1487 = vld [vmem:[#allocation2 + $0xc8] sm:$0xff]
          %v1488 = vld [vmem:[#allocation2 + $0xd0] sm:$0xff]
          %v1489 = vld [vmem:[#allocation2 + $0xd8] sm:$0xff]
          %v1490 = vld [vmem:[#allocation2 + $0xe0] sm:$0xff]
          %v1491 = vld [vmem:[#allocation2 + $0xe8] sm:$0xff]
          %v1492 = vld [vmem:[#allocation2 + $0xf0] sm:$0xff]
          %v1493 = vld [vmem:[#allocation2 + $0xf8] sm:$0xff]
          %v1494 = vld [vmem:[#allocation2 + $0x100] sm:$0xff]
          %v1495 = vld [vmem:[#allocation2 + $0x108] sm:$0xff]
          %v1496 = vld [vmem:[#allocation2 + $0x110] sm:$0xff]
          %v1497 = vld [vmem:[#allocation2 + $0x118] sm:$0xff]
          %v1498 = vld [vmem:[#allocation2 + $0x120] sm:$0xff]
          %v1499 = vld [vmem:[#allocation2 + $0x128] sm:$0xff]
          %v1500 = vld [vmem:[#allocation2 + $0x130] sm:$0xff]
          %v1501 = vld [vmem:[#allocation2 + $0x138] sm:$0xff]
          %v1502 = vld [vmem:[#allocation2 + $0x140] sm:$0xff]
          %v1503 = vld [vmem:[#allocation2 + $0x148] sm:$0xff]
          %v1504 = vld [vmem:[#allocation2 + $0x150] sm:$0xff]
          %v1505 = vld [vmem:[#allocation2 + $0x158] sm:$0xff]
          %v1506 = vld [vmem:[#allocation2 + $0x160] sm:$0xff]
          %v1507 = vld [vmem:[#allocation2 + $0x168] sm:$0xff]
          %v1508 = vld [vmem:[#allocation2 + $0x170] sm:$0xff]
          %v1509 = vld [vmem:[#allocation2 + $0x178] sm:$0xff]
          %v1510 = vld [vmem:[#allocation2 + $0x180] sm:$0xff]
          %v1511 = vld [vmem:[#allocation2 + $0x188] sm:$0xff]
          %v1512 = vld [vmem:[#allocation2 + $0x190] sm:$0xff]
          %v1513 = vld [vmem:[#allocation2 + $0x198] sm:$0xff]
          %v1514 = vld [vmem:[#allocation2 + $0x1a0] sm:$0xff]
          %v1515 = vld [vmem:[#allocation2 + $0x1a8] sm:$0xff]
          %v1516 = vld [vmem:[#allocation2 + $0x1b0] sm:$0xff]
          %v1517 = vld [vmem:[#allocation2 + $0x1b8] sm:$0xff]
          %v1518 = vld [vmem:[#allocation2 + $0x1c0] sm:$0xff]
          %v1519 = vld [vmem:[#allocation2 + $0x1c8] sm:$0xff]
          %v1520 = vld [vmem:[#allocation2 + $0x1d0] sm:$0xff]
          %v1521 = vld [vmem:[#allocation2 + $0x1d8] sm:$0xff]
          %v1522 = vld [vmem:[#allocation2 + $0x1e0] sm:$0xff]
          %v1523 = vld [vmem:[#allocation2 + $0x1e8] sm:$0xff]
          %v1524 = vld [vmem:[#allocation2 + $0x1f0] sm:$0xff]
          %v1525 = vld [vmem:[#allocation2 + $0x1f8] sm:$0xff]
          %v1526 = vmax.f32 %v1462, 0.0
          %v1527 = vmax.f32 %v1463, 0.0
          %v1528 = vmax.f32 %v1464, 0.0
          %v1529 = vmax.f32 %v1465, 0.0
          %v1530 = vmax.f32 %v1466, 0.0
          %v1531 = vmax.f32 %v1467, 0.0
          %v1532 = vmax.f32 %v1468, 0.0
          %v1533 = vmax.f32 %v1469, 0.0
          %v1534 = vmax.f32 %v1470, 0.0
          %v1535 = vmax.f32 %v1471, 0.0
          %v1536 = vmax.f32 %v1472, 0.0
          %v1537 = vmax.f32 %v1473, 0.0
          %v1538 = vmax.f32 %v1474, 0.0
          %v1539 = vmax.f32 %v1475, 0.0
          %v1540 = vmax.f32 %v1476, 0.0
          %v1541 = vmax.f32 %v1477, 0.0
          %v1542 = vmax.f32 %v1478, 0.0
          %v1543 = vmax.f32 %v1479, 0.0
          %v1544 = vmax.f32 %v1480, 0.0
          %v1545 = vmax.f32 %v1481, 0.0
          %v1546 = vmax.f32 %v1482, 0.0
          %v1547 = vmax.f32 %v1483, 0.0
          %v1548 = vmax.f32 %v1484, 0.0
          %v1549 = vmax.f32 %v1485, 0.0
          %v1550 = vmax.f32 %v1486, 0.0
          %v1551 = vmax.f32 %v1487, 0.0
          %v1552 = vmax.f32 %v1488, 0.0
          %v1553 = vmax.f32 %v1489, 0.0
          %v1554 = vmax.f32 %v1490, 0.0
          %v1555 = vmax.f32 %v1491, 0.0
          %v1556 = vmax.f32 %v1492, 0.0
          %v1557 = vmax.f32 %v1493, 0.0
          %v1558 = vmax.f32 %v1494, 0.0
          %v1559 = vmax.f32 %v1495, 0.0
          %v1560 = vmax.f32 %v1496, 0.0
          %v1561 = vmax.f32 %v1497, 0.0
          %v1562 = vmax.f32 %v1498, 0.0
          %v1563 = vmax.f32 %v1499, 0.0
          %v1564 = vmax.f32 %v1500, 0.0
          %v1565 = vmax.f32 %v1501, 0.0
          %v1566 = vmax.f32 %v1502, 0.0
          %v1567 = vmax.f32 %v1503, 0.0
          %v1568 = vmax.f32 %v1504, 0.0
          %v1569 = vmax.f32 %v1505, 0.0
          %v1570 = vmax.f32 %v1506, 0.0
          %v1571 = vmax.f32 %v1507, 0.0
          %v1572 = vmax.f32 %v1508, 0.0
          %v1573 = vmax.f32 %v1509, 0.0
          %v1574 = vmax.f32 %v1510, 0.0
          %v1575 = vmax.f32 %v1511, 0.0
          %v1576 = vmax.f32 %v1512, 0.0
          %v1577 = vmax.f32 %v1513, 0.0
          %v1578 = vmax.f32 %v1514, 0.0
          %v1579 = vmax.f32 %v1515, 0.0
          %v1580 = vmax.f32 %v1516, 0.0
          %v1581 = vmax.f32 %v1517, 0.0
          %v1582 = vmax.f32 %v1518, 0.0
          %v1583 = vmax.f32 %v1519, 0.0
          %v1584 = vmax.f32 %v1520, 0.0
          %v1585 = vmax.f32 %v1521, 0.0
          %v1586 = vmax.f32 %v1522, 0.0
          %v1587 = vmax.f32 %v1523, 0.0
          %v1588 = vmax.f32 %v1524, 0.0
          %v1589 = vmax.f32 %v1525, 0.0
          %v1590 = vpack.c.bf16 %v1528, %v1526
          %v1591 = vpack.c.bf16 %v1529, %v1527
          %v1592 = vpack.c.bf16 %v1532, %v1530
          %v1593 = vpack.c.bf16 %v1533, %v1531
          %v1594 = vpack.c.bf16 %v1536, %v1534
          %v1595 = vpack.c.bf16 %v1537, %v1535
          %v1596 = vpack.c.bf16 %v1540, %v1538
          %v1597 = vpack.c.bf16 %v1541, %v1539
          %v1598 = vpack.c.bf16 %v1544, %v1542
          %v1599 = vpack.c.bf16 %v1545, %v1543
          %v1600 = vpack.c.bf16 %v1548, %v1546
          %v1601 = vpack.c.bf16 %v1549, %v1547
          %v1602 = vpack.c.bf16 %v1552, %v1550
          %v1603 = vpack.c.bf16 %v1553, %v1551
          %v1604 = vpack.c.bf16 %v1556, %v1554
          %v1605 = vpack.c.bf16 %v1557, %v1555
          %v1606 = vpack.c.bf16 %v1560, %v1558
          %v1607 = vpack.c.bf16 %v1561, %v1559
          %v1608 = vpack.c.bf16 %v1564, %v1562
          %v1609 = vpack.c.bf16 %v1565, %v1563
          %v1610 = vpack.c.bf16 %v1568, %v1566
          %v1611 = vpack.c.bf16 %v1569, %v1567
          %v1612 = vpack.c.bf16 %v1572, %v1570
          %v1613 = vpack.c.bf16 %v1573, %v1571
          %v1614 = vpack.c.bf16 %v1576, %v1574
          %v1615 = vpack.c.bf16 %v1577, %v1575
          %v1616 = vpack.c.bf16 %v1580, %v1578
          %v1617 = vpack.c.bf16 %v1581, %v1579
          %v1618 = vpack.c.bf16 %v1584, %v1582
          %v1619 = vpack.c.bf16 %v1585, %v1583
          %v1620 = vpack.c.bf16 %v1588, %v1586
          %v1621 = vpack.c.bf16 %v1589, %v1587
          %v1622 = vld [vmem:[%s2] sm:$0xf]
          %v1623 = vld [vmem:[%s2 + $0x4] sm:$0xf]
          %v1624 = vld [vmem:[%s2 + $0x8] sm:$0xf]
          %v1625 = vld [vmem:[%s2 + $0xc] sm:$0xf]
          %v1626 = vld [vmem:[%s2 + $0x10] sm:$0xf]
          %v1627 = vld [vmem:[%s2 + $0x14] sm:$0xf]
          %v1628 = vld [vmem:[%s2 + $0x18] sm:$0xf]
          %v1629 = vld [vmem:[%s2 + $0x1c] sm:$0xf]
          %v1630 = vld [vmem:[%s2 + $0x20] sm:$0xf]
          %v1631 = vld [vmem:[%s2 + $0x24] sm:$0xf]
          %v1632 = vld [vmem:[%s2 + $0x28] sm:$0xf]
          %v1633 = vld [vmem:[%s2 + $0x2c] sm:$0xf]
          %v1634 = vld [vmem:[%s2 + $0x30] sm:$0xf]
          %v1635 = vld [vmem:[%s2 + $0x34] sm:$0xf]
          %v1636 = vld [vmem:[%s2 + $0x38] sm:$0xf]
          %v1637 = vld [vmem:[%s2 + $0x3c] sm:$0xf]
          %v1638 = vld [vmem:[%s2 + $0x40] sm:$0xf]
          %v1639 = vld [vmem:[%s2 + $0x44] sm:$0xf]
          %v1640 = vld [vmem:[%s2 + $0x48] sm:$0xf]
          %v1641 = vld [vmem:[%s2 + $0x4c] sm:$0xf]
          %v1642 = vld [vmem:[%s2 + $0x50] sm:$0xf]
          %v1643 = vld [vmem:[%s2 + $0x54] sm:$0xf]
          %v1644 = vld [vmem:[%s2 + $0x58] sm:$0xf]
          %v1645 = vld [vmem:[%s2 + $0x5c] sm:$0xf]
          %v1646 = vld [vmem:[%s2 + $0x60] sm:$0xf]
          %v1647 = vld [vmem:[%s2 + $0x64] sm:$0xf]
          %v1648 = vld [vmem:[%s2 + $0x68] sm:$0xf]
          %v1649 = vld [vmem:[%s2 + $0x6c] sm:$0xf]
          %v1650 = vld [vmem:[%s2 + $0x70] sm:$0xf]
          %v1651 = vld [vmem:[%s2 + $0x74] sm:$0xf]
          %v1652 = vld [vmem:[%s2 + $0x78] sm:$0xf]
          %v1653 = vld [vmem:[%s2 + $0x7c] sm:$0xf]
          %v1654 = vld [vmem:[%s3] sm:$0x1]
          %v1656 = vperm.slane %v1654, 0
          %v1690 = vunpack.c.l.b16 %v1622
          %v1691 = vunpack.c.l.b16 %v1623
          %v1692 = vunpack.c.l.b16 %v1624
          %v1693 = vunpack.c.l.b16 %v1625
          %v1694 = vunpack.c.l.b16 %v1626
          %v1695 = vunpack.c.l.b16 %v1627
          %v1696 = vunpack.c.l.b16 %v1628
          %v1697 = vunpack.c.l.b16 %v1629
          %v1698 = vunpack.c.l.b16 %v1630
          %v1699 = vunpack.c.l.b16 %v1631
          %v1700 = vunpack.c.l.b16 %v1632
          %v1701 = vunpack.c.l.b16 %v1633
          %v1702 = vunpack.c.l.b16 %v1634
          %v1703 = vunpack.c.l.b16 %v1635
          %v1704 = vunpack.c.l.b16 %v1636
          %v1705 = vunpack.c.l.b16 %v1637
          %v1706 = vunpack.c.l.b16 %v1638
          %v1707 = vunpack.c.l.b16 %v1639
          %v1708 = vunpack.c.l.b16 %v1640
          %v1709 = vunpack.c.l.b16 %v1641
          %v1710 = vunpack.c.l.b16 %v1642
          %v1711 = vunpack.c.l.b16 %v1643
          %v1712 = vunpack.c.l.b16 %v1644
          %v1713 = vunpack.c.l.b16 %v1645
          %v1714 = vunpack.c.l.b16 %v1646
          %v1715 = vunpack.c.l.b16 %v1647
          %v1716 = vunpack.c.l.b16 %v1648
          %v1717 = vunpack.c.l.b16 %v1649
          %v1718 = vunpack.c.l.b16 %v1650
          %v1719 = vunpack.c.l.b16 %v1651
          %v1720 = vunpack.c.l.b16 %v1652
          %v1721 = vunpack.c.l.b16 %v1653
          %v1722 = vpack.c.b16 %v1691, %v1690
          %v1723 = vpack.c.b16 %v1693, %v1692
          %v1724 = vpack.c.b16 %v1695, %v1694
          %v1725 = vpack.c.b16 %v1697, %v1696
          %v1726 = vpack.c.b16 %v1699, %v1698
          %v1727 = vpack.c.b16 %v1701, %v1700
          %v1728 = vpack.c.b16 %v1703, %v1702
          %v1729 = vpack.c.b16 %v1705, %v1704
          %v1730 = vpack.c.b16 %v1707, %v1706
          %v1731 = vpack.c.b16 %v1709, %v1708
          %v1732 = vpack.c.b16 %v1711, %v1710
          %v1733 = vpack.c.b16 %v1713, %v1712
          %v1734 = vpack.c.b16 %v1715, %v1714
          %v1735 = vpack.c.b16 %v1717, %v1716
          %v1736 = vpack.c.b16 %v1719, %v1718
          %v1737 = vpack.c.b16 %v1721, %v1720
          %1754 = vmatpush.bf16.msra.mxu0 %v1729
          %1755 = vmatpush.bf16.msra.mxu0 %v1728
          %1756 = vmatpush.bf16.msra.mxu0 %v1727
          %1757 = vmatpush.bf16.msra.mxu0 %v1726
          %1758 = vmatpush.bf16.msra.mxu0 %v1725
          %1759 = vmatpush.bf16.msra.mxu0 %v1724
          %1760 = vmatpush.bf16.msra.mxu0 %v1723
          %1761 = vmatpush.bf16.msra.mxu0 %v1722
          %1762 = vmatmul.bf16.gmra.mxu0 %v1590
          %v1763 = vpop.f32.mrf.mxu0
          %v1764 = vadd.f32 %v1656, %v1763
          %v1765 = vpop.f32.mrf.mxu0
          %v1766 = vadd.f32 %v1656, %v1765
          %1767 = vmatmul.bf16.gmra.mxu0 %v1592
          %v1768 = vpop.f32.mrf.mxu0
          %v1769 = vadd.f32 %v1656, %v1768
          %v1770 = vpop.f32.mrf.mxu0
          %v1771 = vadd.f32 %v1656, %v1770
          %1772 = vmatmul.bf16.gmra.mxu0 %v1594
          %v1773 = vpop.f32.mrf.mxu0
          %v1774 = vadd.f32 %v1656, %v1773
          %v1775 = vpop.f32.mrf.mxu0
          %v1776 = vadd.f32 %v1656, %v1775
          %1777 = vmatmul.bf16.gmra.mxu0 %v1596
          %v1778 = vpop.f32.mrf.mxu0
          %v1779 = vadd.f32 %v1656, %v1778
          %v1780 = vpop.f32.mrf.mxu0
          %v1781 = vadd.f32 %v1656, %v1780
          %1782 = vmatmul.bf16.gmra.mxu0 %v1598
          %v1783 = vpop.f32.mrf.mxu0
          %v1784 = vadd.f32 %v1656, %v1783
          %v1785 = vpop.f32.mrf.mxu0
          %v1786 = vadd.f32 %v1656, %v1785
          %1787 = vmatmul.bf16.gmra.mxu0 %v1600
          %v1788 = vpop.f32.mrf.mxu0
          %v1789 = vadd.f32 %v1656, %v1788
          %v1790 = vpop.f32.mrf.mxu0
          %v1791 = vadd.f32 %v1656, %v1790
          %1792 = vmatmul.bf16.gmra.mxu0 %v1602
          %v1793 = vpop.f32.mrf.mxu0
          %v1794 = vadd.f32 %v1656, %v1793
          %v1795 = vpop.f32.mrf.mxu0
          %v1796 = vadd.f32 %v1656, %v1795
          %1797 = vmatmul.bf16.gmra.mxu0 %v1604
          %v1798 = vpop.f32.mrf.mxu0
          %v1799 = vadd.f32 %v1656, %v1798
          %v1800 = vpop.f32.mrf.mxu0
          %v1801 = vadd.f32 %v1656, %v1800
          %1802 = vmatmul.bf16.gmra.mxu0 %v1606
          %v1803 = vpop.f32.mrf.mxu0
          %v1804 = vadd.f32 %v1656, %v1803
          %v1805 = vpop.f32.mrf.mxu0
          %v1806 = vadd.f32 %v1656, %v1805
          %1807 = vmatmul.bf16.gmra.mxu0 %v1608
          %v1808 = vpop.f32.mrf.mxu0
          %v1809 = vadd.f32 %v1656, %v1808
          %v1810 = vpop.f32.mrf.mxu0
          %v1811 = vadd.f32 %v1656, %v1810
          %1812 = vmatmul.bf16.gmra.mxu0 %v1610
          %v1813 = vpop.f32.mrf.mxu0
          %v1814 = vadd.f32 %v1656, %v1813
          %v1815 = vpop.f32.mrf.mxu0
          %v1816 = vadd.f32 %v1656, %v1815
          %1817 = vmatmul.bf16.gmra.mxu0 %v1612
          %v1818 = vpop.f32.mrf.mxu0
          %v1819 = vadd.f32 %v1656, %v1818
          %v1820 = vpop.f32.mrf.mxu0
          %v1821 = vadd.f32 %v1656, %v1820
          %1822 = vmatmul.bf16.gmra.mxu0 %v1614
          %v1823 = vpop.f32.mrf.mxu0
          %v1824 = vadd.f32 %v1656, %v1823
          %v1825 = vpop.f32.mrf.mxu0
          %v1826 = vadd.f32 %v1656, %v1825
          %1827 = vmatmul.bf16.gmra.mxu0 %v1616
          %v1828 = vpop.f32.mrf.mxu0
          %v1829 = vadd.f32 %v1656, %v1828
          %v1830 = vpop.f32.mrf.mxu0
          %v1831 = vadd.f32 %v1656, %v1830
          %1832 = vmatmul.bf16.gmra.mxu0 %v1618
          %v1833 = vpop.f32.mrf.mxu0
          %v1834 = vadd.f32 %v1656, %v1833
          %v1835 = vpop.f32.mrf.mxu0
          %v1836 = vadd.f32 %v1656, %v1835
          %1837 = vmatmul.bf16.gmra.mxu0 %v1620
          %v1838 = vpop.f32.mrf.mxu0
          %v1839 = vadd.f32 %v1656, %v1838
          %v1840 = vpop.f32.mrf.mxu0
          %v1841 = vadd.f32 %v1656, %v1840
          %1842 = vdwg.mxu0
          %1843 = vmatpush.bf16.msra.mxu0 %v1737
          %1844 = vmatpush.bf16.msra.mxu0 %v1736
          %1845 = vmatpush.bf16.msra.mxu0 %v1735
          %1846 = vmatpush.bf16.msra.mxu0 %v1734
          %1847 = vmatpush.bf16.msra.mxu0 %v1733
          %1848 = vmatpush.bf16.msra.mxu0 %v1732
          %1849 = vmatpush.bf16.msra.mxu0 %v1731
          %1850 = vmatpush.bf16.msra.mxu0 %v1730
          %1851 = vmatmul.bf16.gmra.mxu0 %v1591
          %v1852 = vpop.f32.mrf.mxu0
          %v1853 = vadd.f32 %v1764, %v1852
          %v1854 = vpop.f32.mrf.mxu0
          %v1855 = vadd.f32 %v1766, %v1854
          %1856 = vmatmul.bf16.gmra.mxu0 %v1593
          %v1857 = vpop.f32.mrf.mxu0
          %v1858 = vadd.f32 %v1769, %v1857
          %v1859 = vpop.f32.mrf.mxu0
          %v1860 = vadd.f32 %v1771, %v1859
          %1861 = vmatmul.bf16.gmra.mxu0 %v1595
          %v1862 = vpop.f32.mrf.mxu0
          %v1863 = vadd.f32 %v1774, %v1862
          %v1864 = vpop.f32.mrf.mxu0
          %v1865 = vadd.f32 %v1776, %v1864
          %1866 = vmatmul.bf16.gmra.mxu0 %v1597
          %v1867 = vpop.f32.mrf.mxu0
          %v1868 = vadd.f32 %v1779, %v1867
          %v1869 = vpop.f32.mrf.mxu0
          %v1870 = vadd.f32 %v1781, %v1869
          %1871 = vmatmul.bf16.gmra.mxu0 %v1599
          %v1872 = vpop.f32.mrf.mxu0
          %v1873 = vadd.f32 %v1784, %v1872
          %v1874 = vpop.f32.mrf.mxu0
          %v1875 = vadd.f32 %v1786, %v1874
          %1876 = vmatmul.bf16.gmra.mxu0 %v1601
          %v1877 = vpop.f32.mrf.mxu0
          %v1878 = vadd.f32 %v1789, %v1877
          %v1879 = vpop.f32.mrf.mxu0
          %v1880 = vadd.f32 %v1791, %v1879
          %1881 = vmatmul.bf16.gmra.mxu0 %v1603
          %v1882 = vpop.f32.mrf.mxu0
          %v1883 = vadd.f32 %v1794, %v1882
          %v1884 = vpop.f32.mrf.mxu0
          %v1885 = vadd.f32 %v1796, %v1884
          %1886 = vmatmul.bf16.gmra.mxu0 %v1605
          %v1887 = vpop.f32.mrf.mxu0
          %v1888 = vadd.f32 %v1799, %v1887
          %v1889 = vpop.f32.mrf.mxu0
          %v1890 = vadd.f32 %v1801, %v1889
          %1891 = vmatmul.bf16.gmra.mxu0 %v1607
          %v1892 = vpop.f32.mrf.mxu0
          %v1893 = vadd.f32 %v1804, %v1892
          %v1894 = vpop.f32.mrf.mxu0
          %v1895 = vadd.f32 %v1806, %v1894
          %1896 = vmatmul.bf16.gmra.mxu0 %v1609
          %v1897 = vpop.f32.mrf.mxu0
          %v1898 = vadd.f32 %v1809, %v1897
          %v1899 = vpop.f32.mrf.mxu0
          %v1900 = vadd.f32 %v1811, %v1899
          %1901 = vmatmul.bf16.gmra.mxu0 %v1611
          %v1902 = vpop.f32.mrf.mxu0
          %v1903 = vadd.f32 %v1814, %v1902
          %v1904 = vpop.f32.mrf.mxu0
          %v1905 = vadd.f32 %v1816, %v1904
          %1906 = vmatmul.bf16.gmra.mxu0 %v1613
          %v1907 = vpop.f32.mrf.mxu0
          %v1908 = vadd.f32 %v1819, %v1907
          %v1909 = vpop.f32.mrf.mxu0
          %v1910 = vadd.f32 %v1821, %v1909
          %1911 = vmatmul.bf16.gmra.mxu0 %v1615
          %v1912 = vpop.f32.mrf.mxu0
          %v1913 = vadd.f32 %v1824, %v1912
          %v1914 = vpop.f32.mrf.mxu0
          %v1915 = vadd.f32 %v1826, %v1914
          %1916 = vmatmul.bf16.gmra.mxu0 %v1617
          %v1917 = vpop.f32.mrf.mxu0
          %v1918 = vadd.f32 %v1829, %v1917
          %v1919 = vpop.f32.mrf.mxu0
          %v1920 = vadd.f32 %v1831, %v1919
          %1921 = vmatmul.bf16.gmra.mxu0 %v1619
          %v1922 = vpop.f32.mrf.mxu0
          %v1923 = vadd.f32 %v1834, %v1922
          %v1924 = vpop.f32.mrf.mxu0
          %v1925 = vadd.f32 %v1836, %v1924
          %1926 = vmatmul.bf16.gmra.mxu0 %v1621
          %v1927 = vpop.f32.mrf.mxu0
          %v1928 = vadd.f32 %v1839, %v1927
          %v1929 = vpop.f32.mrf.mxu0
          %v1930 = vadd.f32 %v1841, %v1929
          %1931 = vdwg.mxu0
          %v1932 = vmax.f32 %v1853, 0.0
          %v1933 = vmax.f32 %v1855, 0.0
          %v1934 = vmax.f32 %v1858, 0.0
          %v1935 = vmax.f32 %v1860, 0.0
          %v1936 = vmax.f32 %v1863, 0.0
          %v1937 = vmax.f32 %v1865, 0.0
          %v1938 = vmax.f32 %v1868, 0.0
          %v1939 = vmax.f32 %v1870, 0.0
          %v1940 = vmax.f32 %v1873, 0.0
          %v1941 = vmax.f32 %v1875, 0.0
          %v1942 = vmax.f32 %v1878, 0.0
          %v1943 = vmax.f32 %v1880, 0.0
          %v1944 = vmax.f32 %v1883, 0.0
          %v1945 = vmax.f32 %v1885, 0.0
          %v1946 = vmax.f32 %v1888, 0.0
          %v1947 = vmax.f32 %v1890, 0.0
          %v1948 = vmax.f32 %v1893, 0.0
          %v1949 = vmax.f32 %v1895, 0.0
          %v1950 = vmax.f32 %v1898, 0.0
          %v1951 = vmax.f32 %v1900, 0.0
          %v1952 = vmax.f32 %v1903, 0.0
          %v1953 = vmax.f32 %v1905, 0.0
          %v1954 = vmax.f32 %v1908, 0.0
          %v1955 = vmax.f32 %v1910, 0.0
          %v1956 = vmax.f32 %v1913, 0.0
          %v1957 = vmax.f32 %v1915, 0.0
          %v1958 = vmax.f32 %v1918, 0.0
          %v1959 = vmax.f32 %v1920, 0.0
          %v1960 = vmax.f32 %v1923, 0.0
          %v1961 = vmax.f32 %v1925, 0.0
          %v1962 = vmax.f32 %v1928, 0.0
          %v1963 = vmax.f32 %v1930, 0.0
          %v1964 = vld [vmem:[%s4] sm:$0x1]
          %v1966 = vperm.slane %v1964, 0
          %v1968 = vmul.f32 %v1932, %v1966
          %v1969 = vmul.f32 %v1933, %v1966
          %v1970 = vmul.f32 %v1934, %v1966
          %v1971 = vmul.f32 %v1935, %v1966
          %v1972 = vmul.f32 %v1936, %v1966
          %v1973 = vmul.f32 %v1937, %v1966
          %v1974 = vmul.f32 %v1938, %v1966
          %v1975 = vmul.f32 %v1939, %v1966
          %v1976 = vmul.f32 %v1940, %v1966
          %v1977 = vmul.f32 %v1941, %v1966
          %v1978 = vmul.f32 %v1942, %v1966
          %v1979 = vmul.f32 %v1943, %v1966
          %v1980 = vmul.f32 %v1944, %v1966
          %v1981 = vmul.f32 %v1945, %v1966
          %v1982 = vmul.f32 %v1946, %v1966
          %v1983 = vmul.f32 %v1947, %v1966
          %v1984 = vmul.f32 %v1948, %v1966
          %v1985 = vmul.f32 %v1949, %v1966
          %v1986 = vmul.f32 %v1950, %v1966
          %v1987 = vmul.f32 %v1951, %v1966
          %v1988 = vmul.f32 %v1952, %v1966
          %v1989 = vmul.f32 %v1953, %v1966
          %v1990 = vmul.f32 %v1954, %v1966
          %v1991 = vmul.f32 %v1955, %v1966
          %v1992 = vmul.f32 %v1956, %v1966
          %v1993 = vmul.f32 %v1957, %v1966
          %v1994 = vmul.f32 %v1958, %v1966
          %v1995 = vmul.f32 %v1959, %v1966
          %v1996 = vmul.f32 %v1960, %v1966
          %v1997 = vmul.f32 %v1961, %v1966
          %v1998 = vmul.f32 %v1962, %v1966
          %v1999 = vmul.f32 %v1963, %v1966
          %2000 = vadd.xlane.f32.xlu0 %v1968
          %v2001 = vpop.xlane.xlu0 %2000
          %2002 = vadd.xlane.f32.xlu0 %v1969
          %v2003 = vpop.xlane.xlu0 %2002
          %2004 = vadd.xlane.f32.xlu0 %v1970
          %v2005 = vpop.xlane.xlu0 %2004
          %2006 = vadd.xlane.f32.xlu0 %v1971
          %v2007 = vpop.xlane.xlu0 %2006
          %2008 = vadd.xlane.f32.xlu0 %v1972
          %v2009 = vpop.xlane.xlu0 %2008
          %2010 = vadd.xlane.f32.xlu0 %v1973
          %v2011 = vpop.xlane.xlu0 %2010
          %2012 = vadd.xlane.f32.xlu0 %v1974
          %v2013 = vpop.xlane.xlu0 %2012
          %2014 = vadd.xlane.f32.xlu0 %v1975
          %v2015 = vpop.xlane.xlu0 %2014
          %2016 = vadd.xlane.f32.xlu0 %v1976
          %v2017 = vpop.xlane.xlu0 %2016
          %2018 = vadd.xlane.f32.xlu0 %v1977
          %v2019 = vpop.xlane.xlu0 %2018
          %2020 = vadd.xlane.f32.xlu0 %v1978
          %v2021 = vpop.xlane.xlu0 %2020
          %2022 = vadd.xlane.f32.xlu0 %v1979
          %v2023 = vpop.xlane.xlu0 %2022
          %2024 = vadd.xlane.f32.xlu0 %v1980
          %v2025 = vpop.xlane.xlu0 %2024
          %2026 = vadd.xlane.f32.xlu0 %v1981
          %v2027 = vpop.xlane.xlu0 %2026
          %2028 = vadd.xlane.f32.xlu0 %v1982
          %v2029 = vpop.xlane.xlu0 %2028
          %2030 = vadd.xlane.f32.xlu0 %v1983
          %v2031 = vpop.xlane.xlu0 %2030
          %2032 = vadd.xlane.f32.xlu0 %v1984
          %v2033 = vpop.xlane.xlu0 %2032
          %2034 = vadd.xlane.f32.xlu0 %v1985
          %v2035 = vpop.xlane.xlu0 %2034
          %2036 = vadd.xlane.f32.xlu0 %v1986
          %v2037 = vpop.xlane.xlu0 %2036
          %2038 = vadd.xlane.f32.xlu0 %v1987
          %v2039 = vpop.xlane.xlu0 %2038
          %2040 = vadd.xlane.f32.xlu0 %v1988
          %v2041 = vpop.xlane.xlu0 %2040
          %2042 = vadd.xlane.f32.xlu0 %v1989
          %v2043 = vpop.xlane.xlu0 %2042
          %2044 = vadd.xlane.f32.xlu0 %v1990
          %v2045 = vpop.xlane.xlu0 %2044
          %2046 = vadd.xlane.f32.xlu0 %v1991
          %v2047 = vpop.xlane.xlu0 %2046
          %2048 = vadd.xlane.f32.xlu0 %v1992
          %v2049 = vpop.xlane.xlu0 %2048
          %2050 = vadd.xlane.f32.xlu0 %v1993
          %v2051 = vpop.xlane.xlu0 %2050
          %2052 = vadd.xlane.f32.xlu0 %v1994
          %v2053 = vpop.xlane.xlu0 %2052
          %2054 = vadd.xlane.f32.xlu0 %v1995
          %v2055 = vpop.xlane.xlu0 %2054
          %2056 = vadd.xlane.f32.xlu0 %v1996
          %v2057 = vpop.xlane.xlu0 %2056
          %2058 = vadd.xlane.f32.xlu0 %v1997
          %v2059 = vpop.xlane.xlu0 %2058
          %2060 = vadd.xlane.f32.xlu0 %v1998
          %v2061 = vpop.xlane.xlu0 %2060
          %2062 = vadd.xlane.f32.xlu0 %v1999
          %v2063 = vpop.xlane.xlu0 %2062
          %s2064 = sld [smem:[#allocation3]]
          %v2065 = vstv %s2064
          %v2066 = vadd.f32 %v2001, %v2065
          %v2067 = vadd.f32 %v2003, %v2065
          %v2068 = vadd.f32 %v2005, %v2065
          %v2069 = vadd.f32 %v2007, %v2065
          %v2070 = vadd.f32 %v2009, %v2065
          %v2071 = vadd.f32 %v2011, %v2065
          %v2072 = vadd.f32 %v2013, %v2065
          %v2073 = vadd.f32 %v2015, %v2065
          %v2074 = vadd.f32 %v2017, %v2065
          %v2075 = vadd.f32 %v2019, %v2065
          %v2076 = vadd.f32 %v2021, %v2065
          %v2077 = vadd.f32 %v2023, %v2065
          %v2078 = vadd.f32 %v2025, %v2065
          %v2079 = vadd.f32 %v2027, %v2065
          %v2080 = vadd.f32 %v2029, %v2065
          %v2081 = vadd.f32 %v2031, %v2065
          %v2082 = vadd.f32 %v2033, %v2065
          %v2083 = vadd.f32 %v2035, %v2065
          %v2084 = vadd.f32 %v2037, %v2065
          %v2085 = vadd.f32 %v2039, %v2065
          %v2086 = vadd.f32 %v2041, %v2065
          %v2087 = vadd.f32 %v2043, %v2065
          %v2088 = vadd.f32 %v2045, %v2065
          %v2089 = vadd.f32 %v2047, %v2065
          %v2090 = vadd.f32 %v2049, %v2065
          %v2091 = vadd.f32 %v2051, %v2065
          %v2092 = vadd.f32 %v2053, %v2065
          %v2093 = vadd.f32 %v2055, %v2065
          %v2094 = vadd.f32 %v2057, %v2065
          %v2095 = vadd.f32 %v2059, %v2065
          %v2096 = vadd.f32 %v2061, %v2065
          %v2097 = vadd.f32 %v2063, %v2065
          %v2098 = vmax.f32 %v2066, 0.0
          %v2099 = vmax.f32 %v2067, 0.0
          %v2100 = vmax.f32 %v2068, 0.0
          %v2101 = vmax.f32 %v2069, 0.0
          %v2102 = vmax.f32 %v2070, 0.0
          %v2103 = vmax.f32 %v2071, 0.0
          %v2104 = vmax.f32 %v2072, 0.0
          %v2105 = vmax.f32 %v2073, 0.0
          %v2106 = vmax.f32 %v2074, 0.0
          %v2107 = vmax.f32 %v2075, 0.0
          %v2108 = vmax.f32 %v2076, 0.0
          %v2109 = vmax.f32 %v2077, 0.0
          %v2110 = vmax.f32 %v2078, 0.0
          %v2111 = vmax.f32 %v2079, 0.0
          %v2112 = vmax.f32 %v2080, 0.0
          %v2113 = vmax.f32 %v2081, 0.0
          %v2114 = vmax.f32 %v2082, 0.0
          %v2115 = vmax.f32 %v2083, 0.0
          %v2116 = vmax.f32 %v2084, 0.0
          %v2117 = vmax.f32 %v2085, 0.0
          %v2118 = vmax.f32 %v2086, 0.0
          %v2119 = vmax.f32 %v2087, 0.0
          %v2120 = vmax.f32 %v2088, 0.0
          %v2121 = vmax.f32 %v2089, 0.0
          %v2122 = vmax.f32 %v2090, 0.0
          %v2123 = vmax.f32 %v2091, 0.0
          %v2124 = vmax.f32 %v2092, 0.0
          %v2125 = vmax.f32 %v2093, 0.0
          %v2126 = vmax.f32 %v2094, 0.0
          %v2127 = vmax.f32 %v2095, 0.0
          %v2128 = vmax.f32 %v2096, 0.0
          %v2129 = vmax.f32 %v2097, 0.0
          %2130 = vst [vmem:[%s456] sm:$0xff] %v2098
          %2131 = vst [vmem:[%s456 + $0x8] sm:$0xff] %v2099
          %2132 = vst [vmem:[%s456 + $0x10] sm:$0xff] %v2100
          %2133 = vst [vmem:[%s456 + $0x18] sm:$0xff] %v2101
          %2134 = vst [vmem:[%s456 + $0x20] sm:$0xff] %v2102
          %2135 = vst [vmem:[%s456 + $0x28] sm:$0xff] %v2103
          %2136 = vst [vmem:[%s456 + $0x30] sm:$0xff] %v2104
          %2137 = vst [vmem:[%s456 + $0x38] sm:$0xff] %v2105
          %2138 = vst [vmem:[%s456 + $0x40] sm:$0xff] %v2106
          %2139 = vst [vmem:[%s456 + $0x48] sm:$0xff] %v2107
          %2140 = vst [vmem:[%s456 + $0x50] sm:$0xff] %v2108
          %2141 = vst [vmem:[%s456 + $0x58] sm:$0xff] %v2109
          %2142 = vst [vmem:[%s456 + $0x60] sm:$0xff] %v2110
          %2143 = vst [vmem:[%s456 + $0x68] sm:$0xff] %v2111
          %2144 = vst [vmem:[%s456 + $0x70] sm:$0xff] %v2112
          %2145 = vst [vmem:[%s456 + $0x78] sm:$0xff] %v2113
          %2146 = vst [vmem:[%s456 + $0x80] sm:$0xff] %v2114
          %2147 = vst [vmem:[%s456 + $0x88] sm:$0xff] %v2115
          %2148 = vst [vmem:[%s456 + $0x90] sm:$0xff] %v2116
          %2149 = vst [vmem:[%s456 + $0x98] sm:$0xff] %v2117
          %2150 = vst [vmem:[%s456 + $0xa0] sm:$0xff] %v2118
          %2151 = vst [vmem:[%s456 + $0xa8] sm:$0xff] %v2119
          %2152 = vst [vmem:[%s456 + $0xb0] sm:$0xff] %v2120
          %2153 = vst [vmem:[%s456 + $0xb8] sm:$0xff] %v2121
          %2154 = vst [vmem:[%s456 + $0xc0] sm:$0xff] %v2122
          %2155 = vst [vmem:[%s456 + $0xc8] sm:$0xff] %v2123
          %2156 = vst [vmem:[%s456 + $0xd0] sm:$0xff] %v2124
          %2157 = vst [vmem:[%s456 + $0xd8] sm:$0xff] %v2125
          %2158 = vst [vmem:[%s456 + $0xe0] sm:$0xff] %v2126
          %2159 = vst [vmem:[%s456 + $0xe8] sm:$0xff] %v2127
          %2160 = vst [vmem:[%s456 + $0xf0] sm:$0xff] %v2128
          %2161 = vst [vmem:[%s456 + $0xf8] sm:$0xff] %v2129
        $region90: #{_lambda_.7} parent=77 // pred_fallthru
          _
        %s2162 = smul.u32 32, %s22
        %p2163 = scmp.lt.s32.totalorder %s2162, 63
        %s2164 = scalar_select %p2163, %s2162, 63
        %s2165 = smul.addr %s2164, 8
        %s2166 = scalar_lea.vmem %s6, %s2165
        // Predicated region
        $region91: #{_lambda_.7} parent=77 // pred_check
          %p2167 = pneg %p186
        $region92: #{_lambda_.7} parent=77 // pred_check_branch
          %2169 = sbr.rel (%p2167) target = $region94
        $region93: #{_lambda_.7} parent=77 // pred_region
          %s2170 = smul.u32 32, %s22
        $region94: #{_lambda_.7} parent=77 // pred_fallthru
          _
      $region78: #{_lambda_.7} parent=5 // pred_fallthru
        _
      %p2171 = scmp.le.s32.totalorder 2, %s13
      // Predicated region
      $region95: #{_lambda_.7} parent=5 // pred_check
        %p2172 = pneg %p2171
      $region96: #{_lambda_.7} parent=5 // pred_check_branch
        %2174 = sbr.rel (%p2172) target = $region98
      $region97: #{_lambda_.7} parent=5 // pred_region
        %s2175 = ssub.s32 %s13, 2
        // Predicated region
        $region99: #{_lambda_.7} parent=97 // pred_check
          %p2176 = pneg %p192
        $region100: #{_lambda_.7} parent=97 // pred_check_branch
          %2178 = sbr.rel (%p2176) target = $region102
        $region101: #{_lambda_.7} parent=97 // pred_region
          %s2179 = smul.u32 32, %s24
          %p2180 = scmp.lt.s32.totalorder %s2179, 63
          %s2181 = scalar_select %p2180, %s2179, 63
          %s2182 = smul.addr %s2181, 8
          %s2183 = scalar_lea.vmem %s6, %s2182
        $region102: #{_lambda_.7} parent=97 // pred_fallthru
          _
      $region98: #{_lambda_.7} parent=5 // pred_fallthru
        _
    $region6: #{_lambda_.7} parent=1 // loop_footer
      %s17 = sadd.s32 1, %s13
    $region7: #{_lambda_.7} parent=1 // loop_footer_branch
      %12 = sbr.rel target = $region3
    $region8: #{_lambda_.7} parent=1 // loop_exit
      _

// kernel: _lambda_.6
$region0: #{_lambda_.6}
  #allocation0 [shape = 'u32[]', space=smem, size = 0x4, offset = 0x4, fixed_abs, tag = 'smem constant byte address 0x4 - core index']
  #allocation1 [shape = 'u32[72,128]{1,0:T(1,128)}', space=vmem, size = 0x9000, scoped, tag = 'internal scratch']
  #allocation2 [shape = 'f32[256,384]{1,0:T(8,128)}', space=vmem, size = 0x60000, scoped, tag = 'scratch operand']
  %s0 = inlined_call_operand.vmem [shape: bf16[512,512], index: 0, kind: input, shape index: {}]
  %s1 = inlined_call_operand.vmem [shape: bf16[512,384], index: 1, kind: input, shape index: {}]
  %s2 = inlined_call_operand.vmem [shape: bf16[384,256], index: 2, kind: input, shape index: {}]
  %s3 = inlined_call_operand.vmem [shape: bf16[512,256], index: 3, kind: output, shape index: {}]
  %s4 = sld [smem:[#allocation0]]
  $region91: #{_lambda_.6} parent=0
    _
  %s6 = ssub.s32 1, %s4
  %s7 = scalar_select 0, %s6, %s4
  $region1: #{_lambda_.6} parent=0
    #allocation3 [shape = 'u8[262144]{0}', space=vmem, size = 0x40000, scoped, tag = 'input window, operand 0']
    loop: start=0, step=1, limit=6
    $region2: #{_lambda_.6} parent=1 // loop_pre_header
      _
    $region3: #{_lambda_.6} parent=1 // loop_header
      %s9 = sphi 0, %s13
      %p10 = scmp.ge.s32.totalorder %s9, 6
      %s16 = sphi 0, %s28
      %s17 = sphi 0, %s24
      %s18 = sphi 0, %s16
      %s19 = sphi 0, %s17
      %s20 = sphi 0, %s18
      %s21 = sphi 0, %s19
      %s33 = sphi 0, %s35
      %s36 = sphi 0, %s33
      %s37 = sphi 0, %s36
      %s53 = sphi 0, %s37
      %s59 = sphi 0, %s61
      %s62 = sphi 0, %s59
      %s63 = sphi 0, %s62
      %s79 = sphi 0, %s63
      %s83 = sphi 0, %s83
      %s85 = sphi 0, %s83
      %s86 = sphi 0, %s85
      %s100 = sphi 0, %s86
      %s106 = sphi 0, %s108
      %s109 = sphi 0, %s106
      %s110 = sphi 0, %s109
      %s126 = sphi 0, %s110
    $region4: #{_lambda_.6} parent=1 // loop_header_branch
      %12 = sbr.rel (%p10) target = $region8
    $region5: #{_lambda_.6} parent=1 // loop_body
      %s14 = ssub.s32 %s9, 1
      %s15 = ssub.s32 %s9, 2
      %s22 = sadd.s32 1, %s17
      %p23 = scmp.ge.s32.totalorder %s22, 2
      %s24 = scalar_select %p23, 0, %s22
      %s25 = sadd.s32 1, %s16
      %s26 = scalar_select %p23, %s25, %s16
      %p27 = scmp.ge.s32.totalorder %s26, 2
      %s28 = scalar_select %p27, 0, %s26
      %s29 = ssub.s32 %s16, %s28
      %s30 = ssub.s32 %s17, %s24
      %s31 = sor.u32 %s29, %s30
      %p32 = scmp.eq.s32.totalorder %s31, 0
      %s34 = sadd.s32 %s33, 1
      %s35 = scalar_select %p32, %s33, %s34
      %p38 = pneg %p32
      %p39 = scmp.eq.s32.totalorder %s9, 3
      %p40 = por %p38, %p39
      %p41 = scmp.ne.s32.totalorder %s33, %s36
      %p42 = scmp.eq.s32.totalorder %s9, 0
      %p43 = por %p41, %p42
      %p44 = scmp.ne.s32.totalorder %s33, %s36
      %p45 = scmp.eq.s32.totalorder %s14, 3
      %p46 = por %p44, %p45
      %p47 = scmp.ne.s32.totalorder %s36, %s37
      %p48 = scmp.eq.s32.totalorder %s14, 0
      %p49 = por %p47, %p48
      %p50 = scmp.ne.s32.totalorder %s36, %s37
      %p51 = scmp.eq.s32.totalorder %s15, 3
      %p52 = por %p50, %p51
      %p54 = scmp.ne.s32.totalorder %s37, %s53
      %p55 = scmp.eq.s32.totalorder %s15, 0
      %p56 = por %p54, %p55
      %s57 = ssub.s32 %s17, %s24
      %p58 = scmp.eq.s32.totalorder %s57, 0
      %s60 = sadd.s32 %s59, 1
      %s61 = scalar_select %p58, %s59, %s60
      %p64 = pneg %p58
      %p65 = scmp.eq.s32.totalorder %s9, 3
      %p66 = por %p64, %p65
      %p67 = scmp.ne.s32.totalorder %s59, %s62
      %p68 = scmp.eq.s32.totalorder %s9, 0
      %p69 = por %p67, %p68
      %p70 = scmp.ne.s32.totalorder %s59, %s62
      %p71 = scmp.eq.s32.totalorder %s14, 3
      %p72 = por %p70, %p71
      %p73 = scmp.ne.s32.totalorder %s62, %s63
      %p74 = scmp.eq.s32.totalorder %s14, 0
      %p75 = por %p73, %p74
      %p76 = scmp.ne.s32.totalorder %s62, %s63
      %p77 = scmp.eq.s32.totalorder %s15, 3
      %p78 = por %p76, %p77
      %p80 = scmp.ne.s32.totalorder %s63, %s79
      %p81 = scmp.eq.s32.totalorder %s15, 0
      %p82 = por %p80, %p81
      %s84 = sadd.s32 %s83, 1
      %p87 = scmp.eq.s32.totalorder %s9, 3
      %p88 = scmp.ne.s32.totalorder %s83, %s85
      %p89 = scmp.eq.s32.totalorder %s9, 0
      %p90 = por %p88, %p89
      %p91 = scmp.ne.s32.totalorder %s83, %s85
      %p92 = scmp.eq.s32.totalorder %s14, 3
      %p93 = por %p91, %p92
      %p94 = scmp.ne.s32.totalorder %s85, %s86
      %p95 = scmp.eq.s32.totalorder %s14, 0
      %p96 = por %p94, %p95
      %p97 = scmp.ne.s32.totalorder %s85, %s86
      %p98 = scmp.eq.s32.totalorder %s15, 3
      %p99 = por %p97, %p98
      %p101 = scmp.ne.s32.totalorder %s86, %s100
      %p102 = scmp.eq.s32.totalorder %s15, 0
      %p103 = por %p101, %p102
      %s104 = ssub.s32 %s16, %s28
      %p105 = scmp.eq.s32.totalorder %s104, 0
      %s107 = sadd.s32 %s106, 1
      %s108 = scalar_select %p105, %s106, %s107
      %p111 = pneg %p105
      %p112 = scmp.eq.s32.totalorder %s9, 3
      %p113 = por %p111, %p112
      %p114 = scmp.ne.s32.totalorder %s106, %s109
      %p115 = scmp.eq.s32.totalorder %s9, 0
      %p116 = por %p114, %p115
      %p117 = scmp.ne.s32.totalorder %s106, %s109
      %p118 = scmp.eq.s32.totalorder %s14, 3
      %p119 = por %p117, %p118
      %p120 = scmp.ne.s32.totalorder %s109, %s110
      %p121 = scmp.eq.s32.totalorder %s14, 0
      %p122 = por %p120, %p121
      %p123 = scmp.ne.s32.totalorder %s109, %s110
      %p124 = scmp.eq.s32.totalorder %s15, 3
      %p125 = por %p123, %p124
      %p127 = scmp.ne.s32.totalorder %s110, %s126
      %p128 = scmp.eq.s32.totalorder %s15, 0
      %p129 = por %p127, %p128
      %p130 = scmp.le.s32.totalorder 1, %s9
      %p131 = scmp.lt.s32.totalorder %s9, 5
      %p132 = pnand %p130, %p131
      %p133 = pneg %p132
      // Predicated region
      $region9: #{_lambda_.6} parent=5 // pred_check
        _
      $region10: #{_lambda_.6} parent=5 // pred_check_branch
        %135 = sbr.rel (%p132) target = $region12
      $region11: #{_lambda_.6} parent=5 // pred_region
        %s136 = ssub.s32 %s9, 1
        // Predicated region
        $region13: #{_lambda_.6} parent=11 // pred_check
          %p137 = pneg %p96
        $region14: #{_lambda_.6} parent=11 // pred_check_branch
          %139 = sbr.rel (%p137) target = $region16
        $region15: #{_lambda_.6} parent=11 // pred_region
          _
        $region16: #{_lambda_.6} parent=11 // pred_fallthru
          _
      $region12: #{_lambda_.6} parent=5 // pred_fallthru
        _
      %p140 = scmp.lt.s32.totalorder %s9, 4
      // Predicated region
      $region17: #{_lambda_.6} parent=5 // pred_check
        %p141 = pneg %p140
      $region18: #{_lambda_.6} parent=5 // pred_check_branch
        %143 = sbr.rel (%p141) target = $region20
      $region19: #{_lambda_.6} parent=5 // pred_region
        // Predicated region
        $region21: #{_lambda_.6} parent=19 // pred_check
          %p144 = pneg %p43
        $region22: #{_lambda_.6} parent=19 // pred_check_branch
          %146 = sbr.rel (%p144) target = $region24
        $region23: #{_lambda_.6} parent=19 // pred_region
          %s147 = sand.u32 %s33, 1
          %s148 = sand.u32 %s33, 1
          %s149 = smul.addr %s148, 256
          %s150 = scalar_lea.vmem [#allocation3], %s149
          %s151 = smul.u32 32, %s16
          %s152 = smul.u32 2, %s17
          %s153 = smul.addr %s151, 4
          %s154 = sadd.s32 %s152, %s153
          %s155 = smul.addr %s154, 4
          %s156 = scalar_lea.vmem %s0, %s155
          // Predicated region
          $region25: #{_lambda_.6} parent=23 // pred_check
            _
          $region26: #{_lambda_.6} parent=23 // pred_check_branch
            %158 = sbr.rel (0) target = $region28
          $region27: #{_lambda_.6} parent=23 // pred_region
            // Predicated region
            $region29: #{_lambda_.6} parent=27 // pred_check
              _
            $region30: #{_lambda_.6} parent=27 // pred_check_branch
              %160 = sbr.rel (0) target = $region32
            $region31: #{_lambda_.6} parent=27 // pred_region
              // Predicated region
              $region44: #{_lambda_.6} parent=31 // pred_check
                _
              $region45: #{_lambda_.6} parent=31 // pred_check_branch
                %238 = sbr.rel (0) target = $region47
              $region46: #{_lambda_.6} parent=31 // pred_region
                loop: start=0, step=1, limit=1
                $region48: #{_lambda_.6} parent=46 // loop_pre_header
                  _
                $region49: #{_lambda_.6} parent=46 // loop_header
                  %s240 = sphi 0, %s244
                  %p241 = scmp.ge.s32.totalorder %s240, 1
                  %s245 = sphi %s156, %s156
                  %s246 = sphi %s150, %s150
                $region50: #{_lambda_.6} parent=46 // loop_header_branch
                  %243 = sbr.rel (%p241) target = $region54
                $region51: #{_lambda_.6} parent=46 // loop_body
                  %v247 = vld [vmem:[%s245] sm:$0xff]
                  %248 = vst [vmem:[%s246] sm:$0xff] %v247
                  %v249 = vld [vmem:[%s245 + $0x10] sm:$0xff]
                  %250 = vst [vmem:[%s246 + $0x8] sm:$0xff] %v249
                  %v251 = vld [vmem:[%s245 + $0x20] sm:$0xff]
                  %252 = vst [vmem:[%s246 + $0x10] sm:$0xff] %v251
                  %v253 = vld [vmem:[%s245 + $0x30] sm:$0xff]
                  %254 = vst [vmem:[%s246 + $0x18] sm:$0xff] %v253
                  %v255 = vld [vmem:[%s245 + $0x40] sm:$0xff]
                  %256 = vst [vmem:[%s246 + $0x20] sm:$0xff] %v255
                  %v257 = vld [vmem:[%s245 + $0x50] sm:$0xff]
                  %258 = vst [vmem:[%s246 + $0x28] sm:$0xff] %v257
                  %v259 = vld [vmem:[%s245 + $0x60] sm:$0xff]
                  %260 = vst [vmem:[%s246 + $0x30] sm:$0xff] %v259
                  %v261 = vld [vmem:[%s245 + $0x70] sm:$0xff]
                  %262 = vst [vmem:[%s246 + $0x38] sm:$0xff] %v261
                  %v263 = vld [vmem:[%s245 + $0x80] sm:$0xff]
                  %264 = vst [vmem:[%s246 + $0x40] sm:$0xff] %v263
                  %v265 = vld [vmem:[%s245 + $0x90] sm:$0xff]
                  %266 = vst [vmem:[%s246 + $0x48] sm:$0xff] %v265
                  %v267 = vld [vmem:[%s245 + $0xa0] sm:$0xff]
                  %268 = vst [vmem:[%s246 + $0x50] sm:$0xff] %v267
                  %v269 = vld [vmem:[%s245 + $0xb0] sm:$0xff]
                  %270 = vst [vmem:[%s246 + $0x58] sm:$0xff] %v269
                  %v271 = vld [vmem:[%s245 + $0xc0] sm:$0xff]
                  %272 = vst [vmem:[%s246 + $0x60] sm:$0xff] %v271
                  %v273 = vld [vmem:[%s245 + $0xd0] sm:$0xff]
                  %274 = vst [vmem:[%s246 + $0x68] sm:$0xff] %v273
                  %v275 = vld [vmem:[%s245 + $0xe0] sm:$0xff]
                  %276 = vst [vmem:[%s246 + $0x70] sm:$0xff] %v275
                  %v277 = vld [vmem:[%s245 + $0xf0] sm:$0xff]
                  %278 = vst [vmem:[%s246 + $0x78] sm:$0xff] %v277
                  %v279 = vld [vmem:[%s245 + $0x100] sm:$0xff]
                  %280 = vst [vmem:[%s246 + $0x80] sm:$0xff] %v279
                  %v281 = vld [vmem:[%s245 + $0x110] sm:$0xff]
                  %282 = vst [vmem:[%s246 + $0x88] sm:$0xff] %v281
                  %v283 = vld [vmem:[%s245 + $0x120] sm:$0xff]
                  %284 = vst [vmem:[%s246 + $0x90] sm:$0xff] %v283
                  %v285 = vld [vmem:[%s245 + $0x130] sm:$0xff]
                  %286 = vst [vmem:[%s246 + $0x98] sm:$0xff] %v285
                  %v287 = vld [vmem:[%s245 + $0x140] sm:$0xff]
                  %288 = vst [vmem:[%s246 + $0xa0] sm:$0xff] %v287
                  %v289 = vld [vmem:[%s245 + $0x150] sm:$0xff]
                  %290 = vst [vmem:[%s246 + $0xa8] sm:$0xff] %v289
                  %v291 = vld [vmem:[%s245 + $0x160] sm:$0xff]
                  %292 = vst [vmem:[%s246 + $0xb0] sm:$0xff] %v291
                  %v293 = vld [vmem:[%s245 + $0x170] sm:$0xff]
                  %294 = vst [vmem:[%s246 + $0xb8] sm:$0xff] %v293
                  %v295 = vld [vmem:[%s245 + $0x180] sm:$0xff]
                  %296 = vst [vmem:[%s246 + $0xc0] sm:$0xff] %v295
                  %v297 = vld [vmem:[%s245 + $0x190] sm:$0xff]
                  %298 = vst [vmem:[%s246 + $0xc8] sm:$0xff] %v297
                  %v299 = vld [vmem:[%s245 + $0x1a0] sm:$0xff]
                  %300 = vst [vmem:[%s246 + $0xd0] sm:$0xff] %v299
                  %v301 = vld [vmem:[%s245 + $0x1b0] sm:$0xff]
                  %302 = vst [vmem:[%s246 + $0xd8] sm:$0xff] %v301
                  %v303 = vld [vmem:[%s245 + $0x1c0] sm:$0xff]
                  %304 = vst [vmem:[%s246 + $0xe0] sm:$0xff] %v303
                  %v305 = vld [vmem:[%s245 + $0x1d0] sm:$0xff]
                  %306 = vst [vmem:[%s246 + $0xe8] sm:$0xff] %v305
                  %v307 = vld [vmem:[%s245 + $0x1e0] sm:$0xff]
                  %308 = vst [vmem:[%s246 + $0xf0] sm:$0xff] %v307
                  %v309 = vld [vmem:[%s245 + $0x1f0] sm:$0xff]
                  %310 = vst [vmem:[%s246 + $0xf8] sm:$0xff] %v309
                $region52: #{_lambda_.6} parent=46 // loop_footer
                  %s244 = sadd.s32 1, %s240
                $region53: #{_lambda_.6} parent=46 // loop_footer_branch
                  %239 = sbr.rel target = $region49
                $region54: #{_lambda_.6} parent=46 // loop_exit
                  _
              $region47: #{_lambda_.6} parent=31 // pred_fallthru
                _
              // Predicated region
              $region55: #{_lambda_.6} parent=31 // pred_check
                _
              $region56: #{_lambda_.6} parent=31 // pred_check_branch
                %312 = sbr.rel target = $region58
              $region57: #{_lambda_.6} parent=31 // pred_region
                _
              $region58: #{_lambda_.6} parent=31 // pred_fallthru
                _
            $region32: #{_lambda_.6} parent=27 // pred_fallthru
              _
            // Predicated region
            $region33: #{_lambda_.6} parent=27 // pred_check
              _
            $region34: #{_lambda_.6} parent=27 // pred_check_branch
              %162 = sbr.rel target = $region36
            $region35: #{_lambda_.6} parent=27 // pred_region
              %s164 = ssub.s32 256, 1
              loop: start=0, step=1, limit=1
              $region37: #{_lambda_.6} parent=35 // loop_pre_header
                _
              $region38: #{_lambda_.6} parent=35 // loop_header
                %s166 = sphi 0, %s170
                %p167 = scmp.ge.s32.totalorder %s166, 1
                %s171 = sphi %s156, %s156
                %s172 = sphi %s150, %s150
              $region39: #{_lambda_.6} parent=35 // loop_header_branch
                %169 = sbr.rel (%p167) target = $region43
              $region40: #{_lambda_.6} parent=35 // loop_body
                %v173 = vld [vmem:[%s171] sm:%s164]
                %174 = vst [vmem:[%s172] sm:%s164] %v173
                %v175 = vld [vmem:[%s171 + $0x10] sm:%s164]
                %176 = vst [vmem:[%s172 + $0x8] sm:%s164] %v175
                %v177 = vld [vmem:[%s171 + $0x20] sm:%s164]
                %178 = vst [vmem:[%s172 + $0x10] sm:%s164] %v177
                %v179 = vld [vmem:[%s171 + $0x30] sm:%s164]
                %180 = vst [vmem:[%s172 + $0x18] sm:%s164] %v179
                %v181 = vld [vmem:[%s171 + $0x40] sm:%s164]
                %182 = vst [vmem:[%s172 + $0x20] sm:%s164] %v181
                %v183 = vld [vmem:[%s171 + $0x50] sm:%s164]
                %184 = vst [vmem:[%s172 + $0x28] sm:%s164] %v183
                %v185 = vld [vmem:[%s171 + $0x60] sm:%s164]
                %186 = vst [vmem:[%s172 + $0x30] sm:%s164] %v185
                %v187 = vld [vmem:[%s171 + $0x70] sm:%s164]
                %188 = vst [vmem:[%s172 + $0x38] sm:%s164] %v187
                %v189 = vld [vmem:[%s171 + $0x80] sm:%s164]
                %190 = vst [vmem:[%s172 + $0x40] sm:%s164] %v189
                %v191 = vld [vmem:[%s171 + $0x90] sm:%s164]
                %192 = vst [vmem:[%s172 + $0x48] sm:%s164] %v191
                %v193 = vld [vmem:[%s171 + $0xa0] sm:%s164]
                %194 = vst [vmem:[%s172 + $0x50] sm:%s164] %v193
                %v195 = vld [vmem:[%s171 + $0xb0] sm:%s164]
                %196 = vst [vmem:[%s172 + $0x58] sm:%s164] %v195
                %v197 = vld [vmem:[%s171 + $0xc0] sm:%s164]
                %198 = vst [vmem:[%s172 + $0x60] sm:%s164] %v197
                %v199 = vld [vmem:[%s171 + $0xd0] sm:%s164]
                %200 = vst [vmem:[%s172 + $0x68] sm:%s164] %v199
                %v201 = vld [vmem:[%s171 + $0xe0] sm:%s164]
                %202 = vst [vmem:[%s172 + $0x70] sm:%s164] %v201
                %v203 = vld [vmem:[%s171 + $0xf0] sm:%s164]
                %204 = vst [vmem:[%s172 + $0x78] sm:%s164] %v203
                %v205 = vld [vmem:[%s171 + $0x100] sm:%s164]
                %206 = vst [vmem:[%s172 + $0x80] sm:%s164] %v205
                %v207 = vld [vmem:[%s171 + $0x110] sm:%s164]
                %208 = vst [vmem:[%s172 + $0x88] sm:%s164] %v207
                %v209 = vld [vmem:[%s171 + $0x120] sm:%s164]
                %210 = vst [vmem:[%s172 + $0x90] sm:%s164] %v209
                %v211 = vld [vmem:[%s171 + $0x130] sm:%s164]
                %212 = vst [vmem:[%s172 + $0x98] sm:%s164] %v211
                %v213 = vld [vmem:[%s171 + $0x140] sm:%s164]
                %214 = vst [vmem:[%s172 + $0xa0] sm:%s164] %v213
                %v215 = vld [vmem:[%s171 + $0x150] sm:%s164]
                %216 = vst [vmem:[%s172 + $0xa8] sm:%s164] %v215
                %v217 = vld [vmem:[%s171 + $0x160] sm:%s164]
                %218 = vst [vmem:[%s172 + $0xb0] sm:%s164] %v217
                %v219 = vld [vmem:[%s171 + $0x170] sm:%s164]
                %220 = vst [vmem:[%s172 + $0xb8] sm:%s164] %v219
                %v221 = vld [vmem:[%s171 + $0x180] sm:%s164]
                %222 = vst [vmem:[%s172 + $0xc0] sm:%s164] %v221
                %v223 = vld [vmem:[%s171 + $0x190] sm:%s164]
                %224 = vst [vmem:[%s172 + $0xc8] sm:%s164] %v223
                %v225 = vld [vmem:[%s171 + $0x1a0] sm:%s164]
                %226 = vst [vmem:[%s172 + $0xd0] sm:%s164] %v225
                %v227 = vld [vmem:[%s171 + $0x1b0] sm:%s164]
                %228 = vst [vmem:[%s172 + $0xd8] sm:%s164] %v227
                %v229 = vld [vmem:[%s171 + $0x1c0] sm:%s164]
                %230 = vst [vmem:[%s172 + $0xe0] sm:%s164] %v229
                %v231 = vld [vmem:[%s171 + $0x1d0] sm:%s164]
                %232 = vst [vmem:[%s172 + $0xe8] sm:%s164] %v231
                %v233 = vld [vmem:[%s171 + $0x1e0] sm:%s164]
                %234 = vst [vmem:[%s172 + $0xf0] sm:%s164] %v233
                %v235 = vld [vmem:[%s171 + $0x1f0] sm:%s164]
                %236 = vst [vmem:[%s172 + $0xf8] sm:%s164] %v235
              $region41: #{_lambda_.6} parent=35 // loop_footer
                %s170 = sadd.s32 1, %s166
              $region42: #{_lambda_.6} parent=35 // loop_footer_branch
                %165 = sbr.rel target = $region38
              $region43: #{_lambda_.6} parent=35 // loop_exit
                _
            $region36: #{_lambda_.6} parent=27 // pred_fallthru
              _
          $region28: #{_lambda_.6} parent=23 // pred_fallthru
            _
          %313 = vnop
        $region24: #{_lambda_.6} parent=19 // pred_fallthru
          _
        // Predicated region
        $region59: #{_lambda_.6} parent=19 // pred_check
          %p314 = pneg %p69
        $region60: #{_lambda_.6} parent=19 // pred_check_branch
          %316 = sbr.rel (%p314) target = $region62
        $region61: #{_lambda_.6} parent=19 // pred_region
          %s317 = smul.u32 32, %s17
          %p318 = scmp.lt.s32.totalorder %s317, 63
          %s319 = scalar_select %p318, %s317, 63
          %s320 = smul.addr %s319, 3
          %s321 = smul.addr %s320, 4
          %s322 = scalar_lea.vmem %s1, %s321
          %s323 = smul.u32 32, %s17
        $region62: #{_lambda_.6} parent=19 // pred_fallthru
          _
      $region20: #{_lambda_.6} parent=5 // pred_fallthru
        _
      %p324 = scmp.le.s32.totalorder 1, %s9
      %p325 = scmp.lt.s32.totalorder %s9, 5
      %p326 = pnand %p324, %p325
      %p327 = pneg %p326
      // Predicated region
      $region63: #{_lambda_.6} parent=5 // pred_check
        _
      $region64: #{_lambda_.6} parent=5 // pred_check_branch
        %329 = sbr.rel (%p326) target = $region66
      $region65: #{_lambda_.6} parent=5 // pred_region
        %s330 = ssub.s32 %s9, 1
        %s331 = sand.u32 %s36, 1
        %s332 = sand.u32 %s36, 1
        %s333 = smul.addr %s332, 256
        %s334 = scalar_lea.vmem [#allocation3], %s333
        // Predicated region
        $region67: #{_lambda_.6} parent=65 // pred_check
          %p335 = pneg %p49
        $region68: #{_lambda_.6} parent=65 // pred_check_branch
          %337 = sbr.rel (%p335) target = $region70
        $region69: #{_lambda_.6} parent=65 // pred_region
          _
        $region70: #{_lambda_.6} parent=65 // pred_fallthru
          _
        %s338 = sand.u32 %s36, 1
        %s339 = sand.u32 %s36, 1
        %s340 = smul.addr %s339, 256
        %s341 = scalar_lea.vmem [#allocation3], %s340
        %p342 = pneg %p49
        %p343 = pneg %p46
        %s344 = smul.u32 32, %s19
        %p345 = scmp.lt.s32.totalorder %s344, 63
        %s346 = scalar_select %p345, %s344, 63
        %s347 = smul.addr %s346, 3
        %s348 = smul.addr %s347, 4
        %s349 = scalar_lea.vmem %s1, %s348
        %p350 = pneg %p75
        %p351 = pneg %p72
        %p352 = pneg %p96
        %p353 = pneg %p93
        %p354 = pneg %p122
        %p355 = pneg %p119
        %s356 = smul.u32 32, %s18
        %p357 = scmp.lt.s32.totalorder %s356, 63
        %s358 = scalar_select %p357, %s356, 63
        %s359 = smul.addr %s358, 2
        %s360 = smul.addr %s359, 4
        %s361 = scalar_lea.vmem %s3, %s360
        %s362 = smul.u32 32, %s18
        %s363 = smul.u32 2, %s19
        %s364 = smul.u32 32, %s19
        %p365 = scmp.lt.s32.totalorder %s364, 63
        %s366 = scalar_select %p365, %s364, 63
        %s367 = smul.addr %s366, 3
        %s368 = smul.addr %s367, 4
        %s369 = scalar_lea.vmem %s1, %s368
        %s370 = smul.u32 32, %s19
        %s371 = smul.u32 32, %s18
        %p372 = scmp.lt.s32.totalorder %s371, 63
        %s373 = scalar_select %p372, %s371, 63
        %s374 = smul.addr %s373, 2
        %s375 = smul.addr %s374, 4
        %s376 = scalar_lea.vmem %s3, %s375
        %s377 = smul.u32 32, %s18
        %p378 = scmp.eq.s32.totalorder %s19, 0
        // Predicated region
        $region71: #{_lambda_.6} parent=65 // pred_check
          %p379 = pneg %p378
        $region72: #{_lambda_.6} parent=65 // pred_check_branch
          %381 = sbr.rel (%p379) target = $region74
        $region73: #{_lambda_.6} parent=65 // pred_region
          %382 = vst [vmem:[#allocation2] sm:$0xff] 0.0
          %383 = vst [vmem:[#allocation2 + $0x8] sm:$0xff] 0.0
          %384 = vst [vmem:[#allocation2 + $0x10] sm:$0xff] 0.0
          %385 = vst [vmem:[#allocation2 + $0x18] sm:$0xff] 0.0
          %386 = vst [vmem:[#allocation2 + $0x20] sm:$0xff] 0.0
          %387 = vst [vmem:[#allocation2 + $0x28] sm:$0xff] 0.0
          %388 = vst [vmem:[#allocation2 + $0x30] sm:$0xff] 0.0
          %389 = vst [vmem:[#allocation2 + $0x38] sm:$0xff] 0.0
          %390 = vst [vmem:[#allocation2 + $0x40] sm:$0xff] 0.0
          %391 = vst [vmem:[#allocation2 + $0x48] sm:$0xff] 0.0
          %392 = vst [vmem:[#allocation2 + $0x50] sm:$0xff] 0.0
          %393 = vst [vmem:[#allocation2 + $0x58] sm:$0xff] 0.0
          %394 = vst [vmem:[#allocation2 + $0x60] sm:$0xff] 0.0
          %395 = vst [vmem:[#allocation2 + $0x68] sm:$0xff] 0.0
          %396 = vst [vmem:[#allocation2 + $0x70] sm:$0xff] 0.0
          %397 = vst [vmem:[#allocation2 + $0x78] sm:$0xff] 0.0
          %398 = vst [vmem:[#allocation2 + $0x80] sm:$0xff] 0.0
          %399 = vst [vmem:[#allocation2 + $0x88] sm:$0xff] 0.0
          %400 = vst [vmem:[#allocation2 + $0x90] sm:$0xff] 0.0
          %401 = vst [vmem:[#allocation2 + $0x98] sm:$0xff] 0.0
          %402 = vst [vmem:[#allocation2 + $0xa0] sm:$0xff] 0.0
          %403 = vst [vmem:[#allocation2 + $0xa8] sm:$0xff] 0.0
          %404 = vst [vmem:[#allocation2 + $0xb0] sm:$0xff] 0.0
          %405 = vst [vmem:[#allocation2 + $0xb8] sm:$0xff] 0.0
          %406 = vst [vmem:[#allocation2 + $0xc0] sm:$0xff] 0.0
          %407 = vst [vmem:[#allocation2 + $0xc8] sm:$0xff] 0.0
          %408 = vst [vmem:[#allocation2 + $0xd0] sm:$0xff] 0.0
          %409 = vst [vmem:[#allocation2 + $0xd8] sm:$0xff] 0.0
          %410 = vst [vmem:[#allocation2 + $0xe0] sm:$0xff] 0.0
          %411 = vst [vmem:[#allocation2 + $0xe8] sm:$0xff] 0.0
          %412 = vst [vmem:[#allocation2 + $0xf0] sm:$0xff] 0.0
          %413 = vst [vmem:[#allocation2 + $0xf8] sm:$0xff] 0.0
          %414 = vst [vmem:[#allocation2 + $0x100] sm:$0xff] 0.0
          %415 = vst [vmem:[#allocation2 + $0x108] sm:$0xff] 0.0
          %416 = vst [vmem:[#allocation2 + $0x110] sm:$0xff] 0.0
          %417 = vst [vmem:[#allocation2 + $0x118] sm:$0xff] 0.0
          %418 = vst [vmem:[#allocation2 + $0x120] sm:$0xff] 0.0
          %419 = vst [vmem:[#allocation2 + $0x128] sm:$0xff] 0.0
          %420 = vst [vmem:[#allocation2 + $0x130] sm:$0xff] 0.0
          %421 = vst [vmem:[#allocation2 + $0x138] sm:$0xff] 0.0
          %422 = vst [vmem:[#allocation2 + $0x140] sm:$0xff] 0.0
          %423 = vst [vmem:[#allocation2 + $0x148] sm:$0xff] 0.0
          %424 = vst [vmem:[#allocation2 + $0x150] sm:$0xff] 0.0
          %425 = vst [vmem:[#allocation2 + $0x158] sm:$0xff] 0.0
          %426 = vst [vmem:[#allocation2 + $0x160] sm:$0xff] 0.0
          %427 = vst [vmem:[#allocation2 + $0x168] sm:$0xff] 0.0
          %428 = vst [vmem:[#allocation2 + $0x170] sm:$0xff] 0.0
          %429 = vst [vmem:[#allocation2 + $0x178] sm:$0xff] 0.0
          %430 = vst [vmem:[#allocation2 + $0x180] sm:$0xff] 0.0
          %431 = vst [vmem:[#allocation2 + $0x188] sm:$0xff] 0.0
          %432 = vst [vmem:[#allocation2 + $0x190] sm:$0xff] 0.0
          %433 = vst [vmem:[#allocation2 + $0x198] sm:$0xff] 0.0
          %434 = vst [vmem:[#allocation2 + $0x1a0] sm:$0xff] 0.0
          %435 = vst [vmem:[#allocation2 + $0x1a8] sm:$0xff] 0.0
          %436 = vst [vmem:[#allocation2 + $0x1b0] sm:$0xff] 0.0
          %437 = vst [vmem:[#allocation2 + $0x1b8] sm:$0xff] 0.0
          %438 = vst [vmem:[#allocation2 + $0x1c0] sm:$0xff] 0.0
          %439 = vst [vmem:[#allocation2 + $0x1c8] sm:$0xff] 0.0
          %440 = vst [vmem:[#allocation2 + $0x1d0] sm:$0xff] 0.0
          %441 = vst [vmem:[#allocation2 + $0x1d8] sm:$0xff] 0.0
          %442 = vst [vmem:[#allocation2 + $0x1e0] sm:$0xff] 0.0
          %443 = vst [vmem:[#allocation2 + $0x1e8] sm:$0xff] 0.0
          %444 = vst [vmem:[#allocation2 + $0x1f0] sm:$0xff] 0.0
          %445 = vst [vmem:[#allocation2 + $0x1f8] sm:$0xff] 0.0
          %446 = vst [vmem:[#allocation2 + $0x200] sm:$0xff] 0.0
          %447 = vst [vmem:[#allocation2 + $0x208] sm:$0xff] 0.0
          %448 = vst [vmem:[#allocation2 + $0x210] sm:$0xff] 0.0
          %449 = vst [vmem:[#allocation2 + $0x218] sm:$0xff] 0.0
          %450 = vst [vmem:[#allocation2 + $0x220] sm:$0xff] 0.0
          %451 = vst [vmem:[#allocation2 + $0x228] sm:$0xff] 0.0
          %452 = vst [vmem:[#allocation2 + $0x230] sm:$0xff] 0.0
          %453 = vst [vmem:[#allocation2 + $0x238] sm:$0xff] 0.0
          %454 = vst [vmem:[#allocation2 + $0x240] sm:$0xff] 0.0
          %455 = vst [vmem:[#allocation2 + $0x248] sm:$0xff] 0.0
          %456 = vst [vmem:[#allocation2 + $0x250] sm:$0xff] 0.0
          %457 = vst [vmem:[#allocation2 + $0x258] sm:$0xff] 0.0
          %458 = vst [vmem:[#allocation2 + $0x260] sm:$0xff] 0.0
          %459 = vst [vmem:[#allocation2 + $0x268] sm:$0xff] 0.0
          %460 = vst [vmem:[#allocation2 + $0x270] sm:$0xff] 0.0
          %461 = vst [vmem:[#allocation2 + $0x278] sm:$0xff] 0.0
          %462 = vst [vmem:[#allocation2 + $0x280] sm:$0xff] 0.0
          %463 = vst [vmem:[#allocation2 + $0x288] sm:$0xff] 0.0
          %464 = vst [vmem:[#allocation2 + $0x290] sm:$0xff] 0.0
          %465 = vst [vmem:[#allocation2 + $0x298] sm:$0xff] 0.0
          %466 = vst [vmem:[#allocation2 + $0x2a0] sm:$0xff] 0.0
          %467 = vst [vmem:[#allocation2 + $0x2a8] sm:$0xff] 0.0
          %468 = vst [vmem:[#allocation2 + $0x2b0] sm:$0xff] 0.0
          %469 = vst [vmem:[#allocation2 + $0x2b8] sm:$0xff] 0.0
          %470 = vst [vmem:[#allocation2 + $0x2c0] sm:$0xff] 0.0
          %471 = vst [vmem:[#allocation2 + $0x2c8] sm:$0xff] 0.0
          %472 = vst [vmem:[#allocation2 + $0x2d0] sm:$0xff] 0.0
          %473 = vst [vmem:[#allocation2 + $0x2d8] sm:$0xff] 0.0
          %474 = vst [vmem:[#allocation2 + $0x2e0] sm:$0xff] 0.0
          %475 = vst [vmem:[#allocation2 + $0x2e8] sm:$0xff] 0.0
          %476 = vst [vmem:[#allocation2 + $0x2f0] sm:$0xff] 0.0
          %477 = vst [vmem:[#allocation2 + $0x2f8] sm:$0xff] 0.0
        $region74: #{_lambda_.6} parent=65 // pred_fallthru
          _
        %v478 = vld [vmem:[#allocation2] sm:$0xff]
        %v479 = vld [vmem:[#allocation2 + $0x8] sm:$0xff]
        %v480 = vld [vmem:[#allocation2 + $0x10] sm:$0xff]
        %v481 = vld [vmem:[#allocation2 + $0x18] sm:$0xff]
        %v482 = vld [vmem:[#allocation2 + $0x20] sm:$0xff]
        %v483 = vld [vmem:[#allocation2 + $0x28] sm:$0xff]
        %v484 = vld [vmem:[#allocation2 + $0x30] sm:$0xff]
        %v485 = vld [vmem:[#allocation2 + $0x38] sm:$0xff]
        %v486 = vld [vmem:[#allocation2 + $0x40] sm:$0xff]
        %v487 = vld [vmem:[#allocation2 + $0x48] sm:$0xff]
        %v488 = vld [vmem:[#allocation2 + $0x50] sm:$0xff]
        %v489 = vld [vmem:[#allocation2 + $0x58] sm:$0xff]
        %v490 = vld [vmem:[#allocation2 + $0x60] sm:$0xff]
        %v491 = vld [vmem:[#allocation2 + $0x68] sm:$0xff]
        %v492 = vld [vmem:[#allocation2 + $0x70] sm:$0xff]
        %v493 = vld [vmem:[#allocation2 + $0x78] sm:$0xff]
        %v494 = vld [vmem:[#allocation2 + $0x80] sm:$0xff]
        %v495 = vld [vmem:[#allocation2 + $0x88] sm:$0xff]
        %v496 = vld [vmem:[#allocation2 + $0x90] sm:$0xff]
        %v497 = vld [vmem:[#allocation2 + $0x98] sm:$0xff]
        %v498 = vld [vmem:[#allocation2 + $0xa0] sm:$0xff]
        %v499 = vld [vmem:[#allocation2 + $0xa8] sm:$0xff]
        %v500 = vld [vmem:[#allocation2 + $0xb0] sm:$0xff]
        %v501 = vld [vmem:[#allocation2 + $0xb8] sm:$0xff]
        %v502 = vld [vmem:[#allocation2 + $0xc0] sm:$0xff]
        %v503 = vld [vmem:[#allocation2 + $0xc8] sm:$0xff]
        %v504 = vld [vmem:[#allocation2 + $0xd0] sm:$0xff]
        %v505 = vld [vmem:[#allocation2 + $0xd8] sm:$0xff]
        %v506 = vld [vmem:[#allocation2 + $0xe0] sm:$0xff]
        %v507 = vld [vmem:[#allocation2 + $0xe8] sm:$0xff]
        %v508 = vld [vmem:[#allocation2 + $0xf0] sm:$0xff]
        %v509 = vld [vmem:[#allocation2 + $0xf8] sm:$0xff]
        %v510 = vld [vmem:[#allocation2 + $0x100] sm:$0xff]
        %v511 = vld [vmem:[#allocation2 + $0x108] sm:$0xff]
        %v512 = vld [vmem:[#allocation2 + $0x110] sm:$0xff]
        %v513 = vld [vmem:[#allocation2 + $0x118] sm:$0xff]
        %v514 = vld [vmem:[#allocation2 + $0x120] sm:$0xff]
        %v515 = vld [vmem:[#allocation2 + $0x128] sm:$0xff]
        %v516 = vld [vmem:[#allocation2 + $0x130] sm:$0xff]
        %v517 = vld [vmem:[#allocation2 + $0x138] sm:$0xff]
        %v518 = vld [vmem:[#allocation2 + $0x140] sm:$0xff]
        %v519 = vld [vmem:[#allocation2 + $0x148] sm:$0xff]
        %v520 = vld [vmem:[#allocation2 + $0x150] sm:$0xff]
        %v521 = vld [vmem:[#allocation2 + $0x158] sm:$0xff]
        %v522 = vld [vmem:[#allocation2 + $0x160] sm:$0xff]
        %v523 = vld [vmem:[#allocation2 + $0x168] sm:$0xff]
        %v524 = vld [vmem:[#allocation2 + $0x170] sm:$0xff]
        %v525 = vld [vmem:[#allocation2 + $0x178] sm:$0xff]
        %v526 = vld [vmem:[#allocation2 + $0x180] sm:$0xff]
        %v527 = vld [vmem:[#allocation2 + $0x188] sm:$0xff]
        %v528 = vld [vmem:[#allocation2 + $0x190] sm:$0xff]
        %v529 = vld [vmem:[#allocation2 + $0x198] sm:$0xff]
        %v530 = vld [vmem:[#allocation2 + $0x1a0] sm:$0xff]
        %v531 = vld [vmem:[#allocation2 + $0x1a8] sm:$0xff]
        %v532 = vld [vmem:[#allocation2 + $0x1b0] sm:$0xff]
        %v533 = vld [vmem:[#allocation2 + $0x1b8] sm:$0xff]
        %v534 = vld [vmem:[#allocation2 + $0x1c0] sm:$0xff]
        %v535 = vld [vmem:[#allocation2 + $0x1c8] sm:$0xff]
        %v536 = vld [vmem:[#allocation2 + $0x1d0] sm:$0xff]
        %v537 = vld [vmem:[#allocation2 + $0x1d8] sm:$0xff]
        %v538 = vld [vmem:[#allocation2 + $0x1e0] sm:$0xff]
        %v539 = vld [vmem:[#allocation2 + $0x1e8] sm:$0xff]
        %v540 = vld [vmem:[#allocation2 + $0x1f0] sm:$0xff]
        %v541 = vld [vmem:[#allocation2 + $0x1f8] sm:$0xff]
        %v542 = vld [vmem:[#allocation2 + $0x200] sm:$0xff]
        %v543 = vld [vmem:[#allocation2 + $0x208] sm:$0xff]
        %v544 = vld [vmem:[#allocation2 + $0x210] sm:$0xff]
        %v545 = vld [vmem:[#allocation2 + $0x218] sm:$0xff]
        %v546 = vld [vmem:[#allocation2 + $0x220] sm:$0xff]
        %v547 = vld [vmem:[#allocation2 + $0x228] sm:$0xff]
        %v548 = vld [vmem:[#allocation2 + $0x230] sm:$0xff]
        %v549 = vld [vmem:[#allocation2 + $0x238] sm:$0xff]
        %v550 = vld [vmem:[#allocation2 + $0x240] sm:$0xff]
        %v551 = vld [vmem:[#allocation2 + $0x248] sm:$0xff]
        %v552 = vld [vmem:[#allocation2 + $0x250] sm:$0xff]
        %v553 = vld [vmem:[#allocation2 + $0x258] sm:$0xff]
        %v554 = vld [vmem:[#allocation2 + $0x260] sm:$0xff]
        %v555 = vld [vmem:[#allocation2 + $0x268] sm:$0xff]
        %v556 = vld [vmem:[#allocation2 + $0x270] sm:$0xff]
        %v557 = vld [vmem:[#allocation2 + $0x278] sm:$0xff]
        %v558 = vld [vmem:[#allocation2 + $0x280] sm:$0xff]
        %v559 = vld [vmem:[#allocation2 + $0x288] sm:$0xff]
        %v560 = vld [vmem:[#allocation2 + $0x290] sm:$0xff]
        %v561 = vld [vmem:[#allocation2 + $0x298] sm:$0xff]
        %v562 = vld [vmem:[#allocation2 + $0x2a0] sm:$0xff]
        %v563 = vld [vmem:[#allocation2 + $0x2a8] sm:$0xff]
        %v564 = vld [vmem:[#allocation2 + $0x2b0] sm:$0xff]
        %v565 = vld [vmem:[#allocation2 + $0x2b8] sm:$0xff]
        %v566 = vld [vmem:[#allocation2 + $0x2c0] sm:$0xff]
        %v567 = vld [vmem:[#allocation2 + $0x2c8] sm:$0xff]
        %v568 = vld [vmem:[#allocation2 + $0x2d0] sm:$0xff]
        %v569 = vld [vmem:[#allocation2 + $0x2d8] sm:$0xff]
        %v570 = vld [vmem:[#allocation2 + $0x2e0] sm:$0xff]
        %v571 = vld [vmem:[#allocation2 + $0x2e8] sm:$0xff]
        %v572 = vld [vmem:[#allocation2 + $0x2f0] sm:$0xff]
        %v573 = vld [vmem:[#allocation2 + $0x2f8] sm:$0xff]
        %v574 = vld [vmem:[%s334] sm:$0xff]
        %v575 = vld [vmem:[%s334 + $0x8] sm:$0xff]
        %v576 = vld [vmem:[%s334 + $0x10] sm:$0xff]
        %v577 = vld [vmem:[%s334 + $0x18] sm:$0xff]
        %v578 = vld [vmem:[%s334 + $0x20] sm:$0xff]
        %v579 = vld [vmem:[%s334 + $0x28] sm:$0xff]
        %v580 = vld [vmem:[%s334 + $0x30] sm:$0xff]
        %v581 = vld [vmem:[%s334 + $0x38] sm:$0xff]
        %v582 = vld [vmem:[%s334 + $0x40] sm:$0xff]
        %v583 = vld [vmem:[%s334 + $0x48] sm:$0xff]
        %v584 = vld [vmem:[%s334 + $0x50] sm:$0xff]
        %v585 = vld [vmem:[%s334 + $0x58] sm:$0xff]
        %v586 = vld [vmem:[%s334 + $0x60] sm:$0xff]
        %v587 = vld [vmem:[%s334 + $0x68] sm:$0xff]
        %v588 = vld [vmem:[%s334 + $0x70] sm:$0xff]
        %v589 = vld [vmem:[%s334 + $0x78] sm:$0xff]
        %v590 = vld [vmem:[%s334 + $0x80] sm:$0xff]
        %v591 = vld [vmem:[%s334 + $0x88] sm:$0xff]
        %v592 = vld [vmem:[%s334 + $0x90] sm:$0xff]
        %v593 = vld [vmem:[%s334 + $0x98] sm:$0xff]
        %v594 = vld [vmem:[%s334 + $0xa0] sm:$0xff]
        %v595 = vld [vmem:[%s334 + $0xa8] sm:$0xff]
        %v596 = vld [vmem:[%s334 + $0xb0] sm:$0xff]
        %v597 = vld [vmem:[%s334 + $0xb8] sm:$0xff]
        %v598 = vld [vmem:[%s334 + $0xc0] sm:$0xff]
        %v599 = vld [vmem:[%s334 + $0xc8] sm:$0xff]
        %v600 = vld [vmem:[%s334 + $0xd0] sm:$0xff]
        %v601 = vld [vmem:[%s334 + $0xd8] sm:$0xff]
        %v602 = vld [vmem:[%s334 + $0xe0] sm:$0xff]
        %v603 = vld [vmem:[%s334 + $0xe8] sm:$0xff]
        %v604 = vld [vmem:[%s334 + $0xf0] sm:$0xff]
        %v605 = vld [vmem:[%s334 + $0xf8] sm:$0xff]
        %v606 = vld [vmem:[%s369] sm:$0xff]
        %v607 = vld [vmem:[%s369 + $0x8] sm:$0xf]
        %v608 = vld [vmem:[%s369 + $0xc] sm:$0xff]
        %v609 = vld [vmem:[%s369 + $0x14] sm:$0xf]
        %v610 = vld [vmem:[%s369 + $0x18] sm:$0xff]
        %v611 = vld [vmem:[%s369 + $0x20] sm:$0xf]
        %v612 = vld [vmem:[%s369 + $0x24] sm:$0xff]
        %v613 = vld [vmem:[%s369 + $0x2c] sm:$0xf]
        %v614 = vld [vmem:[%s369 + $0x30] sm:$0xff]
        %v615 = vld [vmem:[%s369 + $0x38] sm:$0xf]
        %v616 = vld [vmem:[%s369 + $0x3c] sm:$0xff]
        %v617 = vld [vmem:[%s369 + $0x44] sm:$0xf]
        %v618 = vld [vmem:[%s369 + $0x48] sm:$0xff]
        %v619 = vld [vmem:[%s369 + $0x50] sm:$0xf]
        %v620 = vld [vmem:[%s369 + $0x54] sm:$0xff]
        %v621 = vld [vmem:[%s369 + $0x5c] sm:$0xf]
        %v622 = vld [vmem:[%s369 + $0x60] sm:$0xff]
        %v623 = vld [vmem:[%s369 + $0x68] sm:$0xf]
        %v624 = vld [vmem:[%s369 + $0x6c] sm:$0xff]
        %v625 = vld [vmem:[%s369 + $0x74] sm:$0xf]
        %v626 = vld [vmem:[%s369 + $0x78] sm:$0xff]
        %v627 = vld [vmem:[%s369 + $0x80] sm:$0xf]
        %v628 = vld [vmem:[%s369 + $0x84] sm:$0xff]
        %v629 = vld [vmem:[%s369 + $0x8c] sm:$0xf]
        %v630 = vld [vmem:[%s369 + $0x90] sm:$0xff]
        %v631 = vld [vmem:[%s369 + $0x98] sm:$0xf]
        %v632 = vld [vmem:[%s369 + $0x9c] sm:$0xff]
        %v633 = vld [vmem:[%s369 + $0xa4] sm:$0xf]
        %v634 = vld [vmem:[%s369 + $0xa8] sm:$0xff]
        %v635 = vld [vmem:[%s369 + $0xb0] sm:$0xf]
        %v636 = vld [vmem:[%s369 + $0xb4] sm:$0xff]
        %v637 = vld [vmem:[%s369 + $0xbc] sm:$0xf]
        %v638 = vld [vmem:[%s369 + $0xc0] sm:$0xff]
        %v639 = vld [vmem:[%s369 + $0xc8] sm:$0xf]
        %v640 = vld [vmem:[%s369 + $0xcc] sm:$0xff]
        %v641 = vld [vmem:[%s369 + $0xd4] sm:$0xf]
        %v642 = vld [vmem:[%s369 + $0xd8] sm:$0xff]
        %v643 = vld [vmem:[%s369 + $0xe0] sm:$0xf]
        %v644 = vld [vmem:[%s369 + $0xe4] sm:$0xff]
        %v645 = vld [vmem:[%s369 + $0xec] sm:$0xf]
        %v646 = vld [vmem:[%s369 + $0xf0] sm:$0xff]
        %v647 = vld [vmem:[%s369 + $0xf8] sm:$0xf]
        %v648 = vld [vmem:[%s369 + $0xfc] sm:$0xff]
        %v649 = vld [vmem:[%s369 + $0x104] sm:$0xf]
        %v650 = vld [vmem:[%s369 + $0x108] sm:$0xff]
        %v651 = vld [vmem:[%s369 + $0x110] sm:$0xf]
        %v652 = vld [vmem:[%s369 + $0x114] sm:$0xff]
        %v653 = vld [vmem:[%s369 + $0x11c] sm:$0xf]
        %v654 = vld [vmem:[%s369 + $0x120] sm:$0xff]
        %v655 = vld [vmem:[%s369 + $0x128] sm:$0xf]
        %v656 = vld [vmem:[%s369 + $0x12c] sm:$0xff]
        %v657 = vld [vmem:[%s369 + $0x134] sm:$0xf]
        %v658 = vld [vmem:[%s369 + $0x138] sm:$0xff]
        %v659 = vld [vmem:[%s369 + $0x140] sm:$0xf]
        %v660 = vld [vmem:[%s369 + $0x144] sm:$0xff]
        %v661 = vld [vmem:[%s369 + $0x14c] sm:$0xf]
        %v662 = vld [vmem:[%s369 + $0x150] sm:$0xff]
        %v663 = vld [vmem:[%s369 + $0x158] sm:$0xf]
        %v664 = vld [vmem:[%s369 + $0x15c] sm:$0xff]
        %v665 = vld [vmem:[%s369 + $0x164] sm:$0xf]
        %v666 = vld [vmem:[%s369 + $0x168] sm:$0xff]
        %v667 = vld [vmem:[%s369 + $0x170] sm:$0xf]
        %v668 = vld [vmem:[%s369 + $0x174] sm:$0xff]
        %v669 = vld [vmem:[%s369 + $0x17c] sm:$0xf]
        %v702 = vunpack.c.l.b16 %v574
        %v703 = vunpack.c.h.b16 %v574
        %v704 = vunpack.c.l.b16 %v575
        %v705 = vunpack.c.h.b16 %v575
        %v706 = vunpack.c.l.b16 %v576
        %v707 = vunpack.c.h.b16 %v576
        %v708 = vunpack.c.l.b16 %v577
        %v709 = vunpack.c.h.b16 %v577
        %v710 = vunpack.c.l.b16 %v578
        %v711 = vunpack.c.h.b16 %v578
        %v712 = vunpack.c.l.b16 %v579
        %v713 = vunpack.c.h.b16 %v579
        %v714 = vunpack.c.l.b16 %v580
        %v715 = vunpack.c.h.b16 %v580
        %v716 = vunpack.c.l.b16 %v581
        %v717 = vunpack.c.h.b16 %v581
        %v718 = vunpack.c.l.b16 %v582
        %v719 = vunpack.c.h.b16 %v582
        %v720 = vunpack.c.l.b16 %v583
        %v721 = vunpack.c.h.b16 %v583
        %v722 = vunpack.c.l.b16 %v584
        %v723 = vunpack.c.h.b16 %v584
        %v724 = vunpack.c.l.b16 %v585
        %v725 = vunpack.c.h.b16 %v585
        %v726 = vunpack.c.l.b16 %v586
        %v727 = vunpack.c.h.b16 %v586
        %v728 = vunpack.c.l.b16 %v587
        %v729 = vunpack.c.h.b16 %v587
        %v730 = vunpack.c.l.b16 %v588
        %v731 = vunpack.c.h.b16 %v588
        %v732 = vunpack.c.l.b16 %v589
        %v733 = vunpack.c.h.b16 %v589
        %v734 = vunpack.c.l.b16 %v590
        %v735 = vunpack.c.h.b16 %v590
        %v736 = vunpack.c.l.b16 %v591
        %v737 = vunpack.c.h.b16 %v591
        %v738 = vunpack.c.l.b16 %v592
        %v739 = vunpack.c.h.b16 %v592
        %v740 = vunpack.c.l.b16 %v593
        %v741 = vunpack.c.h.b16 %v593
        %v742 = vunpack.c.l.b16 %v594
        %v743 = vunpack.c.h.b16 %v594
        %v744 = vunpack.c.l.b16 %v595
        %v745 = vunpack.c.h.b16 %v595
        %v746 = vunpack.c.l.b16 %v596
        %v747 = vunpack.c.h.b16 %v596
        %v748 = vunpack.c.l.b16 %v597
        %v749 = vunpack.c.h.b16 %v597
        %v750 = vunpack.c.l.b16 %v598
        %v751 = vunpack.c.h.b16 %v598
        %v752 = vunpack.c.l.b16 %v599
        %v753 = vunpack.c.h.b16 %v599
        %v754 = vunpack.c.l.b16 %v600
        %v755 = vunpack.c.h.b16 %v600
        %v756 = vunpack.c.l.b16 %v601
        %v757 = vunpack.c.h.b16 %v601
        %v758 = vunpack.c.l.b16 %v602
        %v759 = vunpack.c.h.b16 %v602
        %v760 = vunpack.c.l.b16 %v603
        %v761 = vunpack.c.h.b16 %v603
        %v762 = vunpack.c.l.b16 %v604
        %v763 = vunpack.c.h.b16 %v604
        %v764 = vunpack.c.l.b16 %v605
        %v765 = vunpack.c.h.b16 %v605
        %v766 = vpack.c.b16 %v704, %v702
        %v767 = vpack.c.b16 %v705, %v703
        %v768 = vpack.c.b16 %v708, %v706
        %v769 = vpack.c.b16 %v709, %v707
        %v770 = vpack.c.b16 %v712, %v710
        %v771 = vpack.c.b16 %v713, %v711
        %v772 = vpack.c.b16 %v716, %v714
        %v773 = vpack.c.b16 %v717, %v715
        %v774 = vpack.c.b16 %v720, %v718
        %v775 = vpack.c.b16 %v721, %v719
        %v776 = vpack.c.b16 %v724, %v722
        %v777 = vpack.c.b16 %v725, %v723
        %v778 = vpack.c.b16 %v728, %v726
        %v779 = vpack.c.b16 %v729, %v727
        %v780 = vpack.c.b16 %v732, %v730
        %v781 = vpack.c.b16 %v733, %v731
        %v782 = vpack.c.b16 %v736, %v734
        %v783 = vpack.c.b16 %v737, %v735
        %v784 = vpack.c.b16 %v740, %v738
        %v785 = vpack.c.b16 %v741, %v739
        %v786 = vpack.c.b16 %v744, %v742
        %v787 = vpack.c.b16 %v745, %v743
        %v788 = vpack.c.b16 %v748, %v746
        %v789 = vpack.c.b16 %v749, %v747
        %v790 = vpack.c.b16 %v752, %v750
        %v791 = vpack.c.b16 %v753, %v751
        %v792 = vpack.c.b16 %v756, %v754
        %v793 = vpack.c.b16 %v757, %v755
        %v794 = vpack.c.b16 %v760, %v758
        %v795 = vpack.c.b16 %v761, %v759
        %v796 = vpack.c.b16 %v764, %v762
        %v797 = vpack.c.b16 %v765, %v763
        %v894 = vunpack.c.l.b16 %v606
        %v895 = vunpack.c.h.b16 %v606
        %v896 = vunpack.c.l.b16 %v607
        %v897 = vunpack.c.l.b16 %v608
        %v898 = vunpack.c.h.b16 %v608
        %v899 = vunpack.c.l.b16 %v609
        %v900 = vunpack.c.l.b16 %v610
        %v901 = vunpack.c.h.b16 %v610
        %v902 = vunpack.c.l.b16 %v611
        %v903 = vunpack.c.l.b16 %v612
        %v904 = vunpack.c.h.b16 %v612
        %v905 = vunpack.c.l.b16 %v613
        %v906 = vunpack.c.l.b16 %v614
        %v907 = vunpack.c.h.b16 %v614
        %v908 = vunpack.c.l.b16 %v615
        %v909 = vunpack.c.l.b16 %v616
        %v910 = vunpack.c.h.b16 %v616
        %v911 = vunpack.c.l.b16 %v617
        %v912 = vunpack.c.l.b16 %v618
        %v913 = vunpack.c.h.b16 %v618
        %v914 = vunpack.c.l.b16 %v619
        %v915 = vunpack.c.l.b16 %v620
        %v916 = vunpack.c.h.b16 %v620
        %v917 = vunpack.c.l.b16 %v621
        %v918 = vunpack.c.l.b16 %v622
        %v919 = vunpack.c.h.b16 %v622
        %v920 = vunpack.c.l.b16 %v623
        %v921 = vunpack.c.l.b16 %v624
        %v922 = vunpack.c.h.b16 %v624
        %v923 = vunpack.c.l.b16 %v625
        %v924 = vunpack.c.l.b16 %v626
        %v925 = vunpack.c.h.b16 %v626
        %v926 = vunpack.c.l.b16 %v627
        %v927 = vunpack.c.l.b16 %v628
        %v928 = vunpack.c.h.b16 %v628
        %v929 = vunpack.c.l.b16 %v629
        %v930 = vunpack.c.l.b16 %v630
        %v931 = vunpack.c.h.b16 %v630
        %v932 = vunpack.c.l.b16 %v631
        %v933 = vunpack.c.l.b16 %v632
        %v934 = vunpack.c.h.b16 %v632
        %v935 = vunpack.c.l.b16 %v633
        %v936 = vunpack.c.l.b16 %v634
        %v937 = vunpack.c.h.b16 %v634
        %v938 = vunpack.c.l.b16 %v635
        %v939 = vunpack.c.l.b16 %v636
        %v940 = vunpack.c.h.b16 %v636
        %v941 = vunpack.c.l.b16 %v637
        %v942 = vunpack.c.l.b16 %v638
        %v943 = vunpack.c.h.b16 %v638
        %v944 = vunpack.c.l.b16 %v639
        %v945 = vunpack.c.l.b16 %v640
        %v946 = vunpack.c.h.b16 %v640
        %v947 = vunpack.c.l.b16 %v641
        %v948 = vunpack.c.l.b16 %v642
        %v949 = vunpack.c.h.b16 %v642
        %v950 = vunpack.c.l.b16 %v643
        %v951 = vunpack.c.l.b16 %v644
        %v952 = vunpack.c.h.b16 %v644
        %v953 = vunpack.c.l.b16 %v645
        %v954 = vunpack.c.l.b16 %v646
        %v955 = vunpack.c.h.b16 %v646
        %v956 = vunpack.c.l.b16 %v647
        %v957 = vunpack.c.l.b16 %v648
        %v958 = vunpack.c.h.b16 %v648
        %v959 = vunpack.c.l.b16 %v649
        %v960 = vunpack.c.l.b16 %v650
        %v961 = vunpack.c.h.b16 %v650
        %v962 = vunpack.c.l.b16 %v651
        %v963 = vunpack.c.l.b16 %v652
        %v964 = vunpack.c.h.b16 %v652
        %v965 = vunpack.c.l.b16 %v653
        %v966 = vunpack.c.l.b16 %v654
        %v967 = vunpack.c.h.b16 %v654
        %v968 = vunpack.c.l.b16 %v655
        %v969 = vunpack.c.l.b16 %v656
        %v970 = vunpack.c.h.b16 %v656
        %v971 = vunpack.c.l.b16 %v657
        %v972 = vunpack.c.l.b16 %v658
        %v973 = vunpack.c.h.b16 %v658
        %v974 = vunpack.c.l.b16 %v659
        %v975 = vunpack.c.l.b16 %v660
        %v976 = vunpack.c.h.b16 %v660
        %v977 = vunpack.c.l.b16 %v661
        %v978 = vunpack.c.l.b16 %v662
        %v979 = vunpack.c.h.b16 %v662
        %v980 = vunpack.c.l.b16 %v663
        %v981 = vunpack.c.l.b16 %v664
        %v982 = vunpack.c.h.b16 %v664
        %v983 = vunpack.c.l.b16 %v665
        %v984 = vunpack.c.l.b16 %v666
        %v985 = vunpack.c.h.b16 %v666
        %v986 = vunpack.c.l.b16 %v667
        %v987 = vunpack.c.l.b16 %v668
        %v988 = vunpack.c.h.b16 %v668
        %v989 = vunpack.c.l.b16 %v669
        %v990 = vpack.c.b16 %v897, %v894
        %v991 = vpack.c.b16 %v898, %v895
        %v992 = vpack.c.b16 %v899, %v896
        %v993 = vpack.c.b16 %v903, %v900
        %v994 = vpack.c.b16 %v904, %v901
        %v995 = vpack.c.b16 %v905, %v902
        %v996 = vpack.c.b16 %v909, %v906
        %v997 = vpack.c.b16 %v910, %v907
        %v998 = vpack.c.b16 %v911, %v908
        %v999 = vpack.c.b16 %v915, %v912
        %v1000 = vpack.c.b16 %v916, %v913
        %v1001 = vpack.c.b16 %v917, %v914
        %v1002 = vpack.c.b16 %v921, %v918
        %v1003 = vpack.c.b16 %v922, %v919
        %v1004 = vpack.c.b16 %v923, %v920
        %v1005 = vpack.c.b16 %v927, %v924
        %v1006 = vpack.c.b16 %v928, %v925
        %v1007 = vpack.c.b16 %v929, %v926
        %v1008 = vpack.c.b16 %v933, %v930
        %v1009 = vpack.c.b16 %v934, %v931
        %v1010 = vpack.c.b16 %v935, %v932
        %v1011 = vpack.c.b16 %v939, %v936
        %v1012 = vpack.c.b16 %v940, %v937
        %v1013 = vpack.c.b16 %v941, %v938
        %v1014 = vpack.c.b16 %v945, %v942
        %v1015 = vpack.c.b16 %v946, %v943
        %v1016 = vpack.c.b16 %v947, %v944
        %v1017 = vpack.c.b16 %v951, %v948
        %v1018 = vpack.c.b16 %v952, %v949
        %v1019 = vpack.c.b16 %v953, %v950
        %v1020 = vpack.c.b16 %v957, %v954
        %v1021 = vpack.c.b16 %v958, %v955
        %v1022 = vpack.c.b16 %v959, %v956
        %v1023 = vpack.c.b16 %v963, %v960
        %v1024 = vpack.c.b16 %v964, %v961
        %v1025 = vpack.c.b16 %v965, %v962
        %v1026 = vpack.c.b16 %v969, %v966
        %v1027 = vpack.c.b16 %v970, %v967
        %v1028 = vpack.c.b16 %v971, %v968
        %v1029 = vpack.c.b16 %v975, %v972
        %v1030 = vpack.c.b16 %v976, %v973
        %v1031 = vpack.c.b16 %v977, %v974
        %v1032 = vpack.c.b16 %v981, %v978
        %v1033 = vpack.c.b16 %v982, %v979
        %v1034 = vpack.c.b16 %v983, %v980
        %v1035 = vpack.c.b16 %v987, %v984
        %v1036 = vpack.c.b16 %v988, %v985
        %v1037 = vpack.c.b16 %v989, %v986
        %1086 = vmatpush.bf16.msra.mxu0 %v1011
        %1087 = vmatpush.bf16.msra.mxu0 %v1008
        %1088 = vmatpush.bf16.msra.mxu0 %v1005
        %1089 = vmatpush.bf16.msra.mxu0 %v1002
        %1090 = vmatpush.bf16.msra.mxu0 %v999
        %1091 = vmatpush.bf16.msra.mxu0 %v996
        %1092 = vmatpush.bf16.msra.mxu0 %v993
        %1093 = vmatpush.bf16.msra.mxu0 %v990
        %1094 = vmatmul.bf16.gmra.mxu0 %v766
        %v1095 = vpop.f32.mrf.mxu0
        %v1096 = vadd.f32 0.0, %v1095
        %v1097 = vpop.f32.mrf.mxu0
        %v1098 = vadd.f32 0.0, %v1097
        %1099 = vmatmul.bf16.gmra.mxu0 %v768
        %v1100 = vpop.f32.mrf.mxu0
        %v1101 = vadd.f32 0.0, %v1100
        %v1102 = vpop.f32.mrf.mxu0
        %v1103 = vadd.f32 0.0, %v1102
        %1104 = vmatmul.bf16.gmra.mxu0 %v770
        %v1105 = vpop.f32.mrf.mxu0
        %v1106 = vadd.f32 0.0, %v1105
        %v1107 = vpop.f32.mrf.mxu0
        %v1108 = vadd.f32 0.0, %v1107
        %1109 = vmatmul.bf16.gmra.mxu0 %v772
        %v1110 = vpop.f32.mrf.mxu0
        %v1111 = vadd.f32 0.0, %v1110
        %v1112 = vpop.f32.mrf.mxu0
        %v1113 = vadd.f32 0.0, %v1112
        %1114 = vmatmul.bf16.gmra.mxu0 %v774
        %v1115 = vpop.f32.mrf.mxu0
        %v1116 = vadd.f32 0.0, %v1115
        %v1117 = vpop.f32.mrf.mxu0
        %v1118 = vadd.f32 0.0, %v1117
        %1119 = vmatmul.bf16.gmra.mxu0 %v776
        %v1120 = vpop.f32.mrf.mxu0
        %v1121 = vadd.f32 0.0, %v1120
        %v1122 = vpop.f32.mrf.mxu0
        %v1123 = vadd.f32 0.0, %v1122
        %1124 = vmatmul.bf16.gmra.mxu0 %v778
        %v1125 = vpop.f32.mrf.mxu0
        %v1126 = vadd.f32 0.0, %v1125
        %v1127 = vpop.f32.mrf.mxu0
        %v1128 = vadd.f32 0.0, %v1127
        %1129 = vmatmul.bf16.gmra.mxu0 %v780
        %v1130 = vpop.f32.mrf.mxu0
        %v1131 = vadd.f32 0.0, %v1130
        %v1132 = vpop.f32.mrf.mxu0
        %v1133 = vadd.f32 0.0, %v1132
        %1134 = vmatmul.bf16.gmra.mxu0 %v782
        %v1135 = vpop.f32.mrf.mxu0
        %v1136 = vadd.f32 0.0, %v1135
        %v1137 = vpop.f32.mrf.mxu0
        %v1138 = vadd.f32 0.0, %v1137
        %1139 = vmatmul.bf16.gmra.mxu0 %v784
        %v1140 = vpop.f32.mrf.mxu0
        %v1141 = vadd.f32 0.0, %v1140
        %v1142 = vpop.f32.mrf.mxu0
        %v1143 = vadd.f32 0.0, %v1142
        %1144 = vmatmul.bf16.gmra.mxu0 %v786
        %v1145 = vpop.f32.mrf.mxu0
        %v1146 = vadd.f32 0.0, %v1145
        %v1147 = vpop.f32.mrf.mxu0
        %v1148 = vadd.f32 0.0, %v1147
        %1149 = vmatmul.bf16.gmra.mxu0 %v788
        %v1150 = vpop.f32.mrf.mxu0
        %v1151 = vadd.f32 0.0, %v1150
        %v1152 = vpop.f32.mrf.mxu0
        %v1153 = vadd.f32 0.0, %v1152
        %1154 = vmatmul.bf16.gmra.mxu0 %v790
        %v1155 = vpop.f32.mrf.mxu0
        %v1156 = vadd.f32 0.0, %v1155
        %v1157 = vpop.f32.mrf.mxu0
        %v1158 = vadd.f32 0.0, %v1157
        %1159 = vmatmul.bf16.gmra.mxu0 %v792
        %v1160 = vpop.f32.mrf.mxu0
        %v1161 = vadd.f32 0.0, %v1160
        %v1162 = vpop.f32.mrf.mxu0
        %v1163 = vadd.f32 0.0, %v1162
        %1164 = vmatmul.bf16.gmra.mxu0 %v794
        %v1165 = vpop.f32.mrf.mxu0
        %v1166 = vadd.f32 0.0, %v1165
        %v1167 = vpop.f32.mrf.mxu0
        %v1168 = vadd.f32 0.0, %v1167
        %1169 = vmatmul.bf16.gmra.mxu0 %v796
        %v1170 = vpop.f32.mrf.mxu0
        %v1171 = vadd.f32 0.0, %v1170
        %v1172 = vpop.f32.mrf.mxu0
        %v1173 = vadd.f32 0.0, %v1172
        %1174 = vdwg.mxu0
        %1175 = vmatpush.bf16.msra.mxu0 %v1035
        %1176 = vmatpush.bf16.msra.mxu0 %v1032
        %1177 = vmatpush.bf16.msra.mxu0 %v1029
        %1178 = vmatpush.bf16.msra.mxu0 %v1026
        %1179 = vmatpush.bf16.msra.mxu0 %v1023
        %1180 = vmatpush.bf16.msra.mxu0 %v1020
        %1181 = vmatpush.bf16.msra.mxu0 %v1017
        %1182 = vmatpush.bf16.msra.mxu0 %v1014
        %1183 = vmatmul.bf16.gmra.mxu0 %v767
        %v1184 = vpop.f32.mrf.mxu0
        %v1185 = vadd.f32 %v1096, %v1184
        %v1186 = vpop.f32.mrf.mxu0
        %v1187 = vadd.f32 %v1098, %v1186
        %1188 = vmatmul.bf16.gmra.mxu0 %v769
        %v1189 = vpop.f32.mrf.mxu0
        %v1190 = vadd.f32 %v1101, %v1189
        %v1191 = vpop.f32.mrf.mxu0
        %v1192 = vadd.f32 %v1103, %v1191
        %1193 = vmatmul.bf16.gmra.mxu0 %v771
        %v1194 = vpop.f32.mrf.mxu0
        %v1195 = vadd.f32 %v1106, %v1194
        %v1196 = vpop.f32.mrf.mxu0
        %v1197 = vadd.f32 %v1108, %v1196
        %1198 = vmatmul.bf16.gmra.mxu0 %v773
        %v1199 = vpop.f32.mrf.mxu0
        %v1200 = vadd.f32 %v1111, %v1199
        %v1201 = vpop.f32.mrf.mxu0
        %v1202 = vadd.f32 %v1113, %v1201
        %1203 = vmatmul.bf16.gmra.mxu0 %v775
        %v1204 = vpop.f32.mrf.mxu0
        %v1205 = vadd.f32 %v1116, %v1204
        %v1206 = vpop.f32.mrf.mxu0
        %v1207 = vadd.f32 %v1118, %v1206
        %1208 = vmatmul.bf16.gmra.mxu0 %v777
        %v1209 = vpop.f32.mrf.mxu0
        %v1210 = vadd.f32 %v1121, %v1209
        %v1211 = vpop.f32.mrf.mxu0
        %v1212 = vadd.f32 %v1123, %v1211
        %1213 = vmatmul.bf16.gmra.mxu0 %v779
        %v1214 = vpop.f32.mrf.mxu0
        %v1215 = vadd.f32 %v1126, %v1214
        %v1216 = vpop.f32.mrf.mxu0
        %v1217 = vadd.f32 %v1128, %v1216
        %1218 = vmatmul.bf16.gmra.mxu0 %v781
        %v1219 = vpop.f32.mrf.mxu0
        %v1220 = vadd.f32 %v1131, %v1219
        %v1221 = vpop.f32.mrf.mxu0
        %v1222 = vadd.f32 %v1133, %v1221
        %1223 = vmatmul.bf16.gmra.mxu0 %v783
        %v1224 = vpop.f32.mrf.mxu0
        %v1225 = vadd.f32 %v1136, %v1224
        %v1226 = vpop.f32.mrf.mxu0
        %v1227 = vadd.f32 %v1138, %v1226
        %1228 = vmatmul.bf16.gmra.mxu0 %v785
        %v1229 = vpop.f32.mrf.mxu0
        %v1230 = vadd.f32 %v1141, %v1229
        %v1231 = vpop.f32.mrf.mxu0
        %v1232 = vadd.f32 %v1143, %v1231
        %1233 = vmatmul.bf16.gmra.mxu0 %v787
        %v1234 = vpop.f32.mrf.mxu0
        %v1235 = vadd.f32 %v1146, %v1234
        %v1236 = vpop.f32.mrf.mxu0
        %v1237 = vadd.f32 %v1148, %v1236
        %1238 = vmatmul.bf16.gmra.mxu0 %v789
        %v1239 = vpop.f32.mrf.mxu0
        %v1240 = vadd.f32 %v1151, %v1239
        %v1241 = vpop.f32.mrf.mxu0
        %v1242 = vadd.f32 %v1153, %v1241
        %1243 = vmatmul.bf16.gmra.mxu0 %v791
        %v1244 = vpop.f32.mrf.mxu0
        %v1245 = vadd.f32 %v1156, %v1244
        %v1246 = vpop.f32.mrf.mxu0
        %v1247 = vadd.f32 %v1158, %v1246
        %1248 = vmatmul.bf16.gmra.mxu0 %v793
        %v1249 = vpop.f32.mrf.mxu0
        %v1250 = vadd.f32 %v1161, %v1249
        %v1251 = vpop.f32.mrf.mxu0
        %v1252 = vadd.f32 %v1163, %v1251
        %1253 = vmatmul.bf16.gmra.mxu0 %v795
        %v1254 = vpop.f32.mrf.mxu0
        %v1255 = vadd.f32 %v1166, %v1254
        %v1256 = vpop.f32.mrf.mxu0
        %v1257 = vadd.f32 %v1168, %v1256
        %1258 = vmatmul.bf16.gmra.mxu0 %v797
        %v1259 = vpop.f32.mrf.mxu0
        %v1260 = vadd.f32 %v1171, %v1259
        %v1261 = vpop.f32.mrf.mxu0
        %v1262 = vadd.f32 %v1173, %v1261
        %1263 = vdwg.mxu0
        %1264 = vmatpush.bf16.msra.mxu0 %v1012
        %1265 = vmatpush.bf16.msra.mxu0 %v1009
        %1266 = vmatpush.bf16.msra.mxu0 %v1006
        %1267 = vmatpush.bf16.msra.mxu0 %v1003
        %1268 = vmatpush.bf16.msra.mxu0 %v1000
        %1269 = vmatpush.bf16.msra.mxu0 %v997
        %1270 = vmatpush.bf16.msra.mxu0 %v994
        %1271 = vmatpush.bf16.msra.mxu0 %v991
        %1272 = vmatmul.bf16.gmra.mxu0 %v766
        %v1273 = vpop.f32.mrf.mxu0
        %v1274 = vadd.f32 0.0, %v1273
        %v1275 = vpop.f32.mrf.mxu0
        %v1276 = vadd.f32 0.0, %v1275
        %1277 = vmatmul.bf16.gmra.mxu0 %v768
        %v1278 = vpop.f32.mrf.mxu0
        %v1279 = vadd.f32 0.0, %v1278
        %v1280 = vpop.f32.mrf.mxu0
        %v1281 = vadd.f32 0.0, %v1280
        %1282 = vmatmul.bf16.gmra.mxu0 %v770
        %v1283 = vpop.f32.mrf.mxu0
        %v1284 = vadd.f32 0.0, %v1283
        %v1285 = vpop.f32.mrf.mxu0
        %v1286 = vadd.f32 0.0, %v1285
        %1287 = vmatmul.bf16.gmra.mxu0 %v772
        %v1288 = vpop.f32.mrf.mxu0
        %v1289 = vadd.f32 0.0, %v1288
        %v1290 = vpop.f32.mrf.mxu0
        %v1291 = vadd.f32 0.0, %v1290
        %1292 = vmatmul.bf16.gmra.mxu0 %v774
        %v1293 = vpop.f32.mrf.mxu0
        %v1294 = vadd.f32 0.0, %v1293
        %v1295 = vpop.f32.mrf.mxu0
        %v1296 = vadd.f32 0.0, %v1295
        %1297 = vmatmul.bf16.gmra.mxu0 %v776
        %v1298 = vpop.f32.mrf.mxu0
        %v1299 = vadd.f32 0.0, %v1298
        %v1300 = vpop.f32.mrf.mxu0
        %v1301 = vadd.f32 0.0, %v1300
        %1302 = vmatmul.bf16.gmra.mxu0 %v778
        %v1303 = vpop.f32.mrf.mxu0
        %v1304 = vadd.f32 0.0, %v1303
        %v1305 = vpop.f32.mrf.mxu0
        %v1306 = vadd.f32 0.0, %v1305
        %1307 = vmatmul.bf16.gmra.mxu0 %v780
        %v1308 = vpop.f32.mrf.mxu0
        %v1309 = vadd.f32 0.0, %v1308
        %v1310 = vpop.f32.mrf.mxu0
        %v1311 = vadd.f32 0.0, %v1310
        %1312 = vmatmul.bf16.gmra.mxu0 %v782
        %v1313 = vpop.f32.mrf.mxu0
        %v1314 = vadd.f32 0.0, %v1313
        %v1315 = vpop.f32.mrf.mxu0
        %v1316 = vadd.f32 0.0, %v1315
        %1317 = vmatmul.bf16.gmra.mxu0 %v784
        %v1318 = vpop.f32.mrf.mxu0
        %v1319 = vadd.f32 0.0, %v1318
        %v1320 = vpop.f32.mrf.mxu0
        %v1321 = vadd.f32 0.0, %v1320
        %1322 = vmatmul.bf16.gmra.mxu0 %v786
        %v1323 = vpop.f32.mrf.mxu0
        %v1324 = vadd.f32 0.0, %v1323
        %v1325 = vpop.f32.mrf.mxu0
        %v1326 = vadd.f32 0.0, %v1325
        %1327 = vmatmul.bf16.gmra.mxu0 %v788
        %v1328 = vpop.f32.mrf.mxu0
        %v1329 = vadd.f32 0.0, %v1328
        %v1330 = vpop.f32.mrf.mxu0
        %v1331 = vadd.f32 0.0, %v1330
        %1332 = vmatmul.bf16.gmra.mxu0 %v790
        %v1333 = vpop.f32.mrf.mxu0
        %v1334 = vadd.f32 0.0, %v1333
        %v1335 = vpop.f32.mrf.mxu0
        %v1336 = vadd.f32 0.0, %v1335
        %1337 = vmatmul.bf16.gmra.mxu0 %v792
        %v1338 = vpop.f32.mrf.mxu0
        %v1339 = vadd.f32 0.0, %v1338
        %v1340 = vpop.f32.mrf.mxu0
        %v1341 = vadd.f32 0.0, %v1340
        %1342 = vmatmul.bf16.gmra.mxu0 %v794
        %v1343 = vpop.f32.mrf.mxu0
        %v1344 = vadd.f32 0.0, %v1343
        %v1345 = vpop.f32.mrf.mxu0
        %v1346 = vadd.f32 0.0, %v1345
        %1347 = vmatmul.bf16.gmra.mxu0 %v796
        %v1348 = vpop.f32.mrf.mxu0
        %v1349 = vadd.f32 0.0, %v1348
        %v1350 = vpop.f32.mrf.mxu0
        %v1351 = vadd.f32 0.0, %v1350
        %1352 = vdwg.mxu0
        %1353 = vmatpush.bf16.msra.mxu0 %v1036
        %1354 = vmatpush.bf16.msra.mxu0 %v1033
        %1355 = vmatpush.bf16.msra.mxu0 %v1030
        %1356 = vmatpush.bf16.msra.mxu0 %v1027
        %1357 = vmatpush.bf16.msra.mxu0 %v1024
        %1358 = vmatpush.bf16.msra.mxu0 %v1021
        %1359 = vmatpush.bf16.msra.mxu0 %v1018
        %1360 = vmatpush.bf16.msra.mxu0 %v1015
        %1361 = vmatmul.bf16.gmra.mxu0 %v767
        %v1362 = vpop.f32.mrf.mxu0
        %v1363 = vadd.f32 %v1274, %v1362
        %v1364 = vpop.f32.mrf.mxu0
        %v1365 = vadd.f32 %v1276, %v1364
        %1366 = vmatmul.bf16.gmra.mxu0 %v769
        %v1367 = vpop.f32.mrf.mxu0
        %v1368 = vadd.f32 %v1279, %v1367
        %v1369 = vpop.f32.mrf.mxu0
        %v1370 = vadd.f32 %v1281, %v1369
        %1371 = vmatmul.bf16.gmra.mxu0 %v771
        %v1372 = vpop.f32.mrf.mxu0
        %v1373 = vadd.f32 %v1284, %v1372
        %v1374 = vpop.f32.mrf.mxu0
        %v1375 = vadd.f32 %v1286, %v1374
        %1376 = vmatmul.bf16.gmra.mxu0 %v773
        %v1377 = vpop.f32.mrf.mxu0
        %v1378 = vadd.f32 %v1289, %v1377
        %v1379 = vpop.f32.mrf.mxu0
        %v1380 = vadd.f32 %v1291, %v1379
        %1381 = vmatmul.bf16.gmra.mxu0 %v775
        %v1382 = vpop.f32.mrf.mxu0
        %v1383 = vadd.f32 %v1294, %v1382
        %v1384 = vpop.f32.mrf.mxu0
        %v1385 = vadd.f32 %v1296, %v1384
        %1386 = vmatmul.bf16.gmra.mxu0 %v777
        %v1387 = vpop.f32.mrf.mxu0
        %v1388 = vadd.f32 %v1299, %v1387
        %v1389 = vpop.f32.mrf.mxu0
        %v1390 = vadd.f32 %v1301, %v1389
        %1391 = vmatmul.bf16.gmra.mxu0 %v779
        %v1392 = vpop.f32.mrf.mxu0
        %v1393 = vadd.f32 %v1304, %v1392
        %v1394 = vpop.f32.mrf.mxu0
        %v1395 = vadd.f32 %v1306, %v1394
        %1396 = vmatmul.bf16.gmra.mxu0 %v781
        %v1397 = vpop.f32.mrf.mxu0
        %v1398 = vadd.f32 %v1309, %v1397
        %v1399 = vpop.f32.mrf.mxu0
        %v1400 = vadd.f32 %v1311, %v1399
        %1401 = vmatmul.bf16.gmra.mxu0 %v783
        %v1402 = vpop.f32.mrf.mxu0
        %v1403 = vadd.f32 %v1314, %v1402
        %v1404 = vpop.f32.mrf.mxu0
        %v1405 = vadd.f32 %v1316, %v1404
        %1406 = vmatmul.bf16.gmra.mxu0 %v785
        %v1407 = vpop.f32.mrf.mxu0
        %v1408 = vadd.f32 %v1319, %v1407
        %v1409 = vpop.f32.mrf.mxu0
        %v1410 = vadd.f32 %v1321, %v1409
        %1411 = vmatmul.bf16.gmra.mxu0 %v787
        %v1412 = vpop.f32.mrf.mxu0
        %v1413 = vadd.f32 %v1324, %v1412
        %v1414 = vpop.f32.mrf.mxu0
        %v1415 = vadd.f32 %v1326, %v1414
        %1416 = vmatmul.bf16.gmra.mxu0 %v789
        %v1417 = vpop.f32.mrf.mxu0
        %v1418 = vadd.f32 %v1329, %v1417
        %v1419 = vpop.f32.mrf.mxu0
        %v1420 = vadd.f32 %v1331, %v1419
        %1421 = vmatmul.bf16.gmra.mxu0 %v791
        %v1422 = vpop.f32.mrf.mxu0
        %v1423 = vadd.f32 %v1334, %v1422
        %v1424 = vpop.f32.mrf.mxu0
        %v1425 = vadd.f32 %v1336, %v1424
        %1426 = vmatmul.bf16.gmra.mxu0 %v793
        %v1427 = vpop.f32.mrf.mxu0
        %v1428 = vadd.f32 %v1339, %v1427
        %v1429 = vpop.f32.mrf.mxu0
        %v1430 = vadd.f32 %v1341, %v1429
        %1431 = vmatmul.bf16.gmra.mxu0 %v795
        %v1432 = vpop.f32.mrf.mxu0
        %v1433 = vadd.f32 %v1344, %v1432
        %v1434 = vpop.f32.mrf.mxu0
        %v1435 = vadd.f32 %v1346, %v1434
        %1436 = vmatmul.bf16.gmra.mxu0 %v797
        %v1437 = vpop.f32.mrf.mxu0
        %v1438 = vadd.f32 %v1349, %v1437
        %v1439 = vpop.f32.mrf.mxu0
        %v1440 = vadd.f32 %v1351, %v1439
        %1441 = vdwg.mxu0
        %1442 = vmatpush.bf16.msra.mxu0 %v1013
        %1443 = vmatpush.bf16.msra.mxu0 %v1010
        %1444 = vmatpush.bf16.msra.mxu0 %v1007
        %1445 = vmatpush.bf16.msra.mxu0 %v1004
        %1446 = vmatpush.bf16.msra.mxu0 %v1001
        %1447 = vmatpush.bf16.msra.mxu0 %v998
        %1448 = vmatpush.bf16.msra.mxu0 %v995
        %1449 = vmatpush.bf16.msra.mxu0 %v992
        %1450 = vmatmul.bf16.gmra.mxu0 %v766
        %v1451 = vpop.f32.mrf.mxu0
        %v1452 = vadd.f32 0.0, %v1451
        %v1453 = vpop.f32.mrf.mxu0
        %v1454 = vadd.f32 0.0, %v1453
        %1455 = vmatmul.bf16.gmra.mxu0 %v768
        %v1456 = vpop.f32.mrf.mxu0
        %v1457 = vadd.f32 0.0, %v1456
        %v1458 = vpop.f32.mrf.mxu0
        %v1459 = vadd.f32 0.0, %v1458
        %1460 = vmatmul.bf16.gmra.mxu0 %v770
        %v1461 = vpop.f32.mrf.mxu0
        %v1462 = vadd.f32 0.0, %v1461
        %v1463 = vpop.f32.mrf.mxu0
        %v1464 = vadd.f32 0.0, %v1463
        %1465 = vmatmul.bf16.gmra.mxu0 %v772
        %v1466 = vpop.f32.mrf.mxu0
        %v1467 = vadd.f32 0.0, %v1466
        %v1468 = vpop.f32.mrf.mxu0
        %v1469 = vadd.f32 0.0, %v1468
        %1470 = vmatmul.bf16.gmra.mxu0 %v774
        %v1471 = vpop.f32.mrf.mxu0
        %v1472 = vadd.f32 0.0, %v1471
        %v1473 = vpop.f32.mrf.mxu0
        %v1474 = vadd.f32 0.0, %v1473
        %1475 = vmatmul.bf16.gmra.mxu0 %v776
        %v1476 = vpop.f32.mrf.mxu0
        %v1477 = vadd.f32 0.0, %v1476
        %v1478 = vpop.f32.mrf.mxu0
        %v1479 = vadd.f32 0.0, %v1478
        %1480 = vmatmul.bf16.gmra.mxu0 %v778
        %v1481 = vpop.f32.mrf.mxu0
        %v1482 = vadd.f32 0.0, %v1481
        %v1483 = vpop.f32.mrf.mxu0
        %v1484 = vadd.f32 0.0, %v1483
        %1485 = vmatmul.bf16.gmra.mxu0 %v780
        %v1486 = vpop.f32.mrf.mxu0
        %v1487 = vadd.f32 0.0, %v1486
        %v1488 = vpop.f32.mrf.mxu0
        %v1489 = vadd.f32 0.0, %v1488
        %1490 = vmatmul.bf16.gmra.mxu0 %v782
        %v1491 = vpop.f32.mrf.mxu0
        %v1492 = vadd.f32 0.0, %v1491
        %v1493 = vpop.f32.mrf.mxu0
        %v1494 = vadd.f32 0.0, %v1493
        %1495 = vmatmul.bf16.gmra.mxu0 %v784
        %v1496 = vpop.f32.mrf.mxu0
        %v1497 = vadd.f32 0.0, %v1496
        %v1498 = vpop.f32.mrf.mxu0
        %v1499 = vadd.f32 0.0, %v1498
        %1500 = vmatmul.bf16.gmra.mxu0 %v786
        %v1501 = vpop.f32.mrf.mxu0
        %v1502 = vadd.f32 0.0, %v1501
        %v1503 = vpop.f32.mrf.mxu0
        %v1504 = vadd.f32 0.0, %v1503
        %1505 = vmatmul.bf16.gmra.mxu0 %v788
        %v1506 = vpop.f32.mrf.mxu0
        %v1507 = vadd.f32 0.0, %v1506
        %v1508 = vpop.f32.mrf.mxu0
        %v1509 = vadd.f32 0.0, %v1508
        %1510 = vmatmul.bf16.gmra.mxu0 %v790
        %v1511 = vpop.f32.mrf.mxu0
        %v1512 = vadd.f32 0.0, %v1511
        %v1513 = vpop.f32.mrf.mxu0
        %v1514 = vadd.f32 0.0, %v1513
        %1515 = vmatmul.bf16.gmra.mxu0 %v792
        %v1516 = vpop.f32.mrf.mxu0
        %v1517 = vadd.f32 0.0, %v1516
        %v1518 = vpop.f32.mrf.mxu0
        %v1519 = vadd.f32 0.0, %v1518
        %1520 = vmatmul.bf16.gmra.mxu0 %v794
        %v1521 = vpop.f32.mrf.mxu0
        %v1522 = vadd.f32 0.0, %v1521
        %v1523 = vpop.f32.mrf.mxu0
        %v1524 = vadd.f32 0.0, %v1523
        %1525 = vmatmul.bf16.gmra.mxu0 %v796
        %v1526 = vpop.f32.mrf.mxu0
        %v1527 = vadd.f32 0.0, %v1526
        %v1528 = vpop.f32.mrf.mxu0
        %v1529 = vadd.f32 0.0, %v1528
        %1530 = vdwg.mxu0
        %1531 = vmatpush.bf16.msra.mxu0 %v1037
        %1532 = vmatpush.bf16.msra.mxu0 %v1034
        %1533 = vmatpush.bf16.msra.mxu0 %v1031
        %1534 = vmatpush.bf16.msra.mxu0 %v1028
        %1535 = vmatpush.bf16.msra.mxu0 %v1025
        %1536 = vmatpush.bf16.msra.mxu0 %v1022
        %1537 = vmatpush.bf16.msra.mxu0 %v1019
        %1538 = vmatpush.bf16.msra.mxu0 %v1016
        %1539 = vmatmul.bf16.gmra.mxu0 %v767
        %v1540 = vpop.f32.mrf.mxu0
        %v1541 = vadd.f32 %v1452, %v1540
        %v1542 = vpop.f32.mrf.mxu0
        %v1543 = vadd.f32 %v1454, %v1542
        %1544 = vmatmul.bf16.gmra.mxu0 %v769
        %v1545 = vpop.f32.mrf.mxu0
        %v1546 = vadd.f32 %v1457, %v1545
        %v1547 = vpop.f32.mrf.mxu0
        %v1548 = vadd.f32 %v1459, %v1547
        %1549 = vmatmul.bf16.gmra.mxu0 %v771
        %v1550 = vpop.f32.mrf.mxu0
        %v1551 = vadd.f32 %v1462, %v1550
        %v1552 = vpop.f32.mrf.mxu0
        %v1553 = vadd.f32 %v1464, %v1552
        %1554 = vmatmul.bf16.gmra.mxu0 %v773
        %v1555 = vpop.f32.mrf.mxu0
        %v1556 = vadd.f32 %v1467, %v1555
        %v1557 = vpop.f32.mrf.mxu0
        %v1558 = vadd.f32 %v1469, %v1557
        %1559 = vmatmul.bf16.gmra.mxu0 %v775
        %v1560 = vpop.f32.mrf.mxu0
        %v1561 = vadd.f32 %v1472, %v1560
        %v1562 = vpop.f32.mrf.mxu0
        %v1563 = vadd.f32 %v1474, %v1562
        %1564 = vmatmul.bf16.gmra.mxu0 %v777
        %v1565 = vpop.f32.mrf.mxu0
        %v1566 = vadd.f32 %v1477, %v1565
        %v1567 = vpop.f32.mrf.mxu0
        %v1568 = vadd.f32 %v1479, %v1567
        %1569 = vmatmul.bf16.gmra.mxu0 %v779
        %v1570 = vpop.f32.mrf.mxu0
        %v1571 = vadd.f32 %v1482, %v1570
        %v1572 = vpop.f32.mrf.mxu0
        %v1573 = vadd.f32 %v1484, %v1572
        %1574 = vmatmul.bf16.gmra.mxu0 %v781
        %v1575 = vpop.f32.mrf.mxu0
        %v1576 = vadd.f32 %v1487, %v1575
        %v1577 = vpop.f32.mrf.mxu0
        %v1578 = vadd.f32 %v1489, %v1577
        %1579 = vmatmul.bf16.gmra.mxu0 %v783
        %v1580 = vpop.f32.mrf.mxu0
        %v1581 = vadd.f32 %v1492, %v1580
        %v1582 = vpop.f32.mrf.mxu0
        %v1583 = vadd.f32 %v1494, %v1582
        %1584 = vmatmul.bf16.gmra.mxu0 %v785
        %v1585 = vpop.f32.mrf.mxu0
        %v1586 = vadd.f32 %v1497, %v1585
        %v1587 = vpop.f32.mrf.mxu0
        %v1588 = vadd.f32 %v1499, %v1587
        %1589 = vmatmul.bf16.gmra.mxu0 %v787
        %v1590 = vpop.f32.mrf.mxu0
        %v1591 = vadd.f32 %v1502, %v1590
        %v1592 = vpop.f32.mrf.mxu0
        %v1593 = vadd.f32 %v1504, %v1592
        %1594 = vmatmul.bf16.gmra.mxu0 %v789
        %v1595 = vpop.f32.mrf.mxu0
        %v1596 = vadd.f32 %v1507, %v1595
        %v1597 = vpop.f32.mrf.mxu0
        %v1598 = vadd.f32 %v1509, %v1597
        %1599 = vmatmul.bf16.gmra.mxu0 %v791
        %v1600 = vpop.f32.mrf.mxu0
        %v1601 = vadd.f32 %v1512, %v1600
        %v1602 = vpop.f32.mrf.mxu0
        %v1603 = vadd.f32 %v1514, %v1602
        %1604 = vmatmul.bf16.gmra.mxu0 %v793
        %v1605 = vpop.f32.mrf.mxu0
        %v1606 = vadd.f32 %v1517, %v1605
        %v1607 = vpop.f32.mrf.mxu0
        %v1608 = vadd.f32 %v1519, %v1607
        %1609 = vmatmul.bf16.gmra.mxu0 %v795
        %v1610 = vpop.f32.mrf.mxu0
        %v1611 = vadd.f32 %v1522, %v1610
        %v1612 = vpop.f32.mrf.mxu0
        %v1613 = vadd.f32 %v1524, %v1612
        %1614 = vmatmul.bf16.gmra.mxu0 %v797
        %v1615 = vpop.f32.mrf.mxu0
        %v1616 = vadd.f32 %v1527, %v1615
        %v1617 = vpop.f32.mrf.mxu0
        %v1618 = vadd.f32 %v1529, %v1617
        %1619 = vdwg.mxu0
        %v1620 = vadd.f32 %v478, %v1185
        %v1621 = vadd.f32 %v479, %v1363
        %v1622 = vadd.f32 %v480, %v1541
        %v1623 = vadd.f32 %v481, %v1187
        %v1624 = vadd.f32 %v482, %v1365
        %v1625 = vadd.f32 %v483, %v1543
        %v1626 = vadd.f32 %v484, %v1190
        %v1627 = vadd.f32 %v485, %v1368
        %v1628 = vadd.f32 %v486, %v1546
        %v1629 = vadd.f32 %v487, %v1192
        %v1630 = vadd.f32 %v488, %v1370
        %v1631 = vadd.f32 %v489, %v1548
        %v1632 = vadd.f32 %v490, %v1195
        %v1633 = vadd.f32 %v491, %v1373
        %v1634 = vadd.f32 %v492, %v1551
        %v1635 = vadd.f32 %v493, %v1197
        %v1636 = vadd.f32 %v494, %v1375
        %v1637 = vadd.f32 %v495, %v1553
        %v1638 = vadd.f32 %v496, %v1200
        %v1639 = vadd.f32 %v497, %v1378
        %v1640 = vadd.f32 %v498, %v1556
        %v1641 = vadd.f32 %v499, %v1202
        %v1642 = vadd.f32 %v500, %v1380
        %v1643 = vadd.f32 %v501, %v1558
        %v1644 = vadd.f32 %v502, %v1205
        %v1645 = vadd.f32 %v503, %v1383
        %v1646 = vadd.f32 %v504, %v1561
        %v1647 = vadd.f32 %v505, %v1207
        %v1648 = vadd.f32 %v506, %v1385
        %v1649 = vadd.f32 %v507, %v1563
        %v1650 = vadd.f32 %v508, %v1210
        %v1651 = vadd.f32 %v509, %v1388
        %v1652 = vadd.f32 %v510, %v1566
        %v1653 = vadd.f32 %v511, %v1212
        %v1654 = vadd.f32 %v512, %v1390
        %v1655 = vadd.f32 %v513, %v1568
        %v1656 = vadd.f32 %v514, %v1215
        %v1657 = vadd.f32 %v515, %v1393
        %v1658 = vadd.f32 %v516, %v1571
        %v1659 = vadd.f32 %v517, %v1217
        %v1660 = vadd.f32 %v518, %v1395
        %v1661 = vadd.f32 %v519, %v1573
        %v1662 = vadd.f32 %v520, %v1220
        %v1663 = vadd.f32 %v521, %v1398
        %v1664 = vadd.f32 %v522, %v1576
        %v1665 = vadd.f32 %v523, %v1222
        %v1666 = vadd.f32 %v524, %v1400
        %v1667 = vadd.f32 %v525, %v1578
        %v1668 = vadd.f32 %v526, %v1225
        %v1669 = vadd.f32 %v527, %v1403
        %v1670 = vadd.f32 %v528, %v1581
        %v1671 = vadd.f32 %v529, %v1227
        %v1672 = vadd.f32 %v530, %v1405
        %v1673 = vadd.f32 %v531, %v1583
        %v1674 = vadd.f32 %v532, %v1230
        %v1675 = vadd.f32 %v533, %v1408
        %v1676 = vadd.f32 %v534, %v1586
        %v1677 = vadd.f32 %v535, %v1232
        %v1678 = vadd.f32 %v536, %v1410
        %v1679 = vadd.f32 %v537, %v1588
        %v1680 = vadd.f32 %v538, %v1235
        %v1681 = vadd.f32 %v539, %v1413
        %v1682 = vadd.f32 %v540, %v1591
        %v1683 = vadd.f32 %v541, %v1237
        %v1684 = vadd.f32 %v542, %v1415
        %v1685 = vadd.f32 %v543, %v1593
        %v1686 = vadd.f32 %v544, %v1240
        %v1687 = vadd.f32 %v545, %v1418
        %v1688 = vadd.f32 %v546, %v1596
        %v1689 = vadd.f32 %v547, %v1242
        %v1690 = vadd.f32 %v548, %v1420
        %v1691 = vadd.f32 %v549, %v1598
        %v1692 = vadd.f32 %v550, %v1245
        %v1693 = vadd.f32 %v551, %v1423
        %v1694 = vadd.f32 %v552, %v1601
        %v1695 = vadd.f32 %v553, %v1247
        %v1696 = vadd.f32 %v554, %v1425
        %v1697 = vadd.f32 %v555, %v1603
        %v1698 = vadd.f32 %v556, %v1250
        %v1699 = vadd.f32 %v557, %v1428
        %v1700 = vadd.f32 %v558, %v1606
        %v1701 = vadd.f32 %v559, %v1252
        %v1702 = vadd.f32 %v560, %v1430
        %v1703 = vadd.f32 %v561, %v1608
        %v1704 = vadd.f32 %v562, %v1255
        %v1705 = vadd.f32 %v563, %v1433
        %v1706 = vadd.f32 %v564, %v1611
        %v1707 = vadd.f32 %v565, %v1257
        %v1708 = vadd.f32 %v566, %v1435
        %v1709 = vadd.f32 %v567, %v1613
        %v1710 = vadd.f32 %v568, %v1260
        %v1711 = vadd.f32 %v569, %v1438
        %v1712 = vadd.f32 %v570, %v1616
        %v1713 = vadd.f32 %v571, %v1262
        %v1714 = vadd.f32 %v572, %v1440
        %v1715 = vadd.f32 %v573, %v1618
        %1716 = vst [vmem:[#allocation2] sm:$0xff] %v1620
        %1717 = vst [vmem:[#allocation2 + $0x8] sm:$0xff] %v1621
        %1718 = vst [vmem:[#allocation2 + $0x10] sm:$0xff] %v1622
        %1719 = vst [vmem:[#allocation2 + $0x18] sm:$0xff] %v1623
        %1720 = vst [vmem:[#allocation2 + $0x20] sm:$0xff] %v1624
        %1721 = vst [vmem:[#allocation2 + $0x28] sm:$0xff] %v1625
        %1722 = vst [vmem:[#allocation2 + $0x30] sm:$0xff] %v1626
        %1723 = vst [vmem:[#allocation2 + $0x38] sm:$0xff] %v1627
        %1724 = vst [vmem:[#allocation2 + $0x40] sm:$0xff] %v1628
        %1725 = vst [vmem:[#allocation2 + $0x48] sm:$0xff] %v1629
        %1726 = vst [vmem:[#allocation2 + $0x50] sm:$0xff] %v1630
        %1727 = vst [vmem:[#allocation2 + $0x58] sm:$0xff] %v1631
        %1728 = vst [vmem:[#allocation2 + $0x60] sm:$0xff] %v1632
        %1729 = vst [vmem:[#allocation2 + $0x68] sm:$0xff] %v1633
        %1730 = vst [vmem:[#allocation2 + $0x70] sm:$0xff] %v1634
        %1731 = vst [vmem:[#allocation2 + $0x78] sm:$0xff] %v1635
        %1732 = vst [vmem:[#allocation2 + $0x80] sm:$0xff] %v1636
        %1733 = vst [vmem:[#allocation2 + $0x88] sm:$0xff] %v1637
        %1734 = vst [vmem:[#allocation2 + $0x90] sm:$0xff] %v1638
        %1735 = vst [vmem:[#allocation2 + $0x98] sm:$0xff] %v1639
        %1736 = vst [vmem:[#allocation2 + $0xa0] sm:$0xff] %v1640
        %1737 = vst [vmem:[#allocation2 + $0xa8] sm:$0xff] %v1641
        %1738 = vst [vmem:[#allocation2 + $0xb0] sm:$0xff] %v1642
        %1739 = vst [vmem:[#allocation2 + $0xb8] sm:$0xff] %v1643
        %1740 = vst [vmem:[#allocation2 + $0xc0] sm:$0xff] %v1644
        %1741 = vst [vmem:[#allocation2 + $0xc8] sm:$0xff] %v1645
        %1742 = vst [vmem:[#allocation2 + $0xd0] sm:$0xff] %v1646
        %1743 = vst [vmem:[#allocation2 + $0xd8] sm:$0xff] %v1647
        %1744 = vst [vmem:[#allocation2 + $0xe0] sm:$0xff] %v1648
        %1745 = vst [vmem:[#allocation2 + $0xe8] sm:$0xff] %v1649
        %1746 = vst [vmem:[#allocation2 + $0xf0] sm:$0xff] %v1650
        %1747 = vst [vmem:[#allocation2 + $0xf8] sm:$0xff] %v1651
        %1748 = vst [vmem:[#allocation2 + $0x100] sm:$0xff] %v1652
        %1749 = vst [vmem:[#allocation2 + $0x108] sm:$0xff] %v1653
        %1750 = vst [vmem:[#allocation2 + $0x110] sm:$0xff] %v1654
        %1751 = vst [vmem:[#allocation2 + $0x118] sm:$0xff] %v1655
        %1752 = vst [vmem:[#allocation2 + $0x120] sm:$0xff] %v1656
        %1753 = vst [vmem:[#allocation2 + $0x128] sm:$0xff] %v1657
        %1754 = vst [vmem:[#allocation2 + $0x130] sm:$0xff] %v1658
        %1755 = vst [vmem:[#allocation2 + $0x138] sm:$0xff] %v1659
        %1756 = vst [vmem:[#allocation2 + $0x140] sm:$0xff] %v1660
        %1757 = vst [vmem:[#allocation2 + $0x148] sm:$0xff] %v1661
        %1758 = vst [vmem:[#allocation2 + $0x150] sm:$0xff] %v1662
        %1759 = vst [vmem:[#allocation2 + $0x158] sm:$0xff] %v1663
        %1760 = vst [vmem:[#allocation2 + $0x160] sm:$0xff] %v1664
        %1761 = vst [vmem:[#allocation2 + $0x168] sm:$0xff] %v1665
        %1762 = vst [vmem:[#allocation2 + $0x170] sm:$0xff] %v1666
        %1763 = vst [vmem:[#allocation2 + $0x178] sm:$0xff] %v1667
        %1764 = vst [vmem:[#allocation2 + $0x180] sm:$0xff] %v1668
        %1765 = vst [vmem:[#allocation2 + $0x188] sm:$0xff] %v1669
        %1766 = vst [vmem:[#allocation2 + $0x190] sm:$0xff] %v1670
        %1767 = vst [vmem:[#allocation2 + $0x198] sm:$0xff] %v1671
        %1768 = vst [vmem:[#allocation2 + $0x1a0] sm:$0xff] %v1672
        %1769 = vst [vmem:[#allocation2 + $0x1a8] sm:$0xff] %v1673
        %1770 = vst [vmem:[#allocation2 + $0x1b0] sm:$0xff] %v1674
        %1771 = vst [vmem:[#allocation2 + $0x1b8] sm:$0xff] %v1675
        %1772 = vst [vmem:[#allocation2 + $0x1c0] sm:$0xff] %v1676
        %1773 = vst [vmem:[#allocation2 + $0x1c8] sm:$0xff] %v1677
        %1774 = vst [vmem:[#allocation2 + $0x1d0] sm:$0xff] %v1678
        %1775 = vst [vmem:[#allocation2 + $0x1d8] sm:$0xff] %v1679
        %1776 = vst [vmem:[#allocation2 + $0x1e0] sm:$0xff] %v1680
        %1777 = vst [vmem:[#allocation2 + $0x1e8] sm:$0xff] %v1681
        %1778 = vst [vmem:[#allocation2 + $0x1f0] sm:$0xff] %v1682
        %1779 = vst [vmem:[#allocation2 + $0x1f8] sm:$0xff] %v1683
        %1780 = vst [vmem:[#allocation2 + $0x200] sm:$0xff] %v1684
        %1781 = vst [vmem:[#allocation2 + $0x208] sm:$0xff] %v1685
        %1782 = vst [vmem:[#allocation2 + $0x210] sm:$0xff] %v1686
        %1783 = vst [vmem:[#allocation2 + $0x218] sm:$0xff] %v1687
        %1784 = vst [vmem:[#allocation2 + $0x220] sm:$0xff] %v1688
        %1785 = vst [vmem:[#allocation2 + $0x228] sm:$0xff] %v1689
        %1786 = vst [vmem:[#allocation2 + $0x230] sm:$0xff] %v1690
        %1787 = vst [vmem:[#allocation2 + $0x238] sm:$0xff] %v1691
        %1788 = vst [vmem:[#allocation2 + $0x240] sm:$0xff] %v1692
        %1789 = vst [vmem:[#allocation2 + $0x248] sm:$0xff] %v1693
        %1790 = vst [vmem:[#allocation2 + $0x250] sm:$0xff] %v1694
        %1791 = vst [vmem:[#allocation2 + $0x258] sm:$0xff] %v1695
        %1792 = vst [vmem:[#allocation2 + $0x260] sm:$0xff] %v1696
        %1793 = vst [vmem:[#allocation2 + $0x268] sm:$0xff] %v1697
        %1794 = vst [vmem:[#allocation2 + $0x270] sm:$0xff] %v1698
        %1795 = vst [vmem:[#allocation2 + $0x278] sm:$0xff] %v1699
        %1796 = vst [vmem:[#allocation2 + $0x280] sm:$0xff] %v1700
        %1797 = vst [vmem:[#allocation2 + $0x288] sm:$0xff] %v1701
        %1798 = vst [vmem:[#allocation2 + $0x290] sm:$0xff] %v1702
        %1799 = vst [vmem:[#allocation2 + $0x298] sm:$0xff] %v1703
        %1800 = vst [vmem:[#allocation2 + $0x2a0] sm:$0xff] %v1704
        %1801 = vst [vmem:[#allocation2 + $0x2a8] sm:$0xff] %v1705
        %1802 = vst [vmem:[#allocation2 + $0x2b0] sm:$0xff] %v1706
        %1803 = vst [vmem:[#allocation2 + $0x2b8] sm:$0xff] %v1707
        %1804 = vst [vmem:[#allocation2 + $0x2c0] sm:$0xff] %v1708
        %1805 = vst [vmem:[#allocation2 + $0x2c8] sm:$0xff] %v1709
        %1806 = vst [vmem:[#allocation2 + $0x2d0] sm:$0xff] %v1710
        %1807 = vst [vmem:[#allocation2 + $0x2d8] sm:$0xff] %v1711
        %1808 = vst [vmem:[#allocation2 + $0x2e0] sm:$0xff] %v1712
        %1809 = vst [vmem:[#allocation2 + $0x2e8] sm:$0xff] %v1713
        %1810 = vst [vmem:[#allocation2 + $0x2f0] sm:$0xff] %v1714
        %1811 = vst [vmem:[#allocation2 + $0x2f8] sm:$0xff] %v1715
        %p1812 = scmp.eq.s32.totalorder %s19, 1
        // Predicated region
        $region75: #{_lambda_.6} parent=65 // pred_check
          %p1813 = pneg %p1812
        $region76: #{_lambda_.6} parent=65 // pred_check_branch
          %1815 = sbr.rel (%p1813) target = $region78
        $region77: #{_lambda_.6} parent=65 // pred_region
          %v1816 = vld [vmem:[#allocation2] sm:$0xff]
          %v1817 = vld [vmem:[#allocation2 + $0x8] sm:$0xff]
          %v1818 = vld [vmem:[#allocation2 + $0x10] sm:$0xff]
          %v1819 = vld [vmem:[#allocation2 + $0x18] sm:$0xff]
          %v1820 = vld [vmem:[#allocation2 + $0x20] sm:$0xff]
          %v1821 = vld [vmem:[#allocation2 + $0x28] sm:$0xff]
          %v1822 = vld [vmem:[#allocation2 + $0x30] sm:$0xff]
          %v1823 = vld [vmem:[#allocation2 + $0x38] sm:$0xff]
          %v1824 = vld [vmem:[#allocation2 + $0x40] sm:$0xff]
          %v1825 = vld [vmem:[#allocation2 + $0x48] sm:$0xff]
          %v1826 = vld [vmem:[#allocation2 + $0x50] sm:$0xff]
          %v1827 = vld [vmem:[#allocation2 + $0x58] sm:$0xff]
          %v1828 = vld [vmem:[#allocation2 + $0x60] sm:$0xff]
          %v1829 = vld [vmem:[#allocation2 + $0x68] sm:$0xff]
          %v1830 = vld [vmem:[#allocation2 + $0x70] sm:$0xff]
          %v1831 = vld [vmem:[#allocation2 + $0x78] sm:$0xff]
          %v1832 = vld [vmem:[#allocation2 + $0x80] sm:$0xff]
          %v1833 = vld [vmem:[#allocation2 + $0x88] sm:$0xff]
          %v1834 = vld [vmem:[#allocation2 + $0x90] sm:$0xff]
          %v1835 = vld [vmem:[#allocation2 + $0x98] sm:$0xff]
          %v1836 = vld [vmem:[#allocation2 + $0xa0] sm:$0xff]
          %v1837 = vld [vmem:[#allocation2 + $0xa8] sm:$0xff]
          %v1838 = vld [vmem:[#allocation2 + $0xb0] sm:$0xff]
          %v1839 = vld [vmem:[#allocation2 + $0xb8] sm:$0xff]
          %v1840 = vld [vmem:[#allocation2 + $0xc0] sm:$0xff]
          %v1841 = vld [vmem:[#allocation2 + $0xc8] sm:$0xff]
          %v1842 = vld [vmem:[#allocation2 + $0xd0] sm:$0xff]
          %v1843 = vld [vmem:[#allocation2 + $0xd8] sm:$0xff]
          %v1844 = vld [vmem:[#allocation2 + $0xe0] sm:$0xff]
          %v1845 = vld [vmem:[#allocation2 + $0xe8] sm:$0xff]
          %v1846 = vld [vmem:[#allocation2 + $0xf0] sm:$0xff]
          %v1847 = vld [vmem:[#allocation2 + $0xf8] sm:$0xff]
          %v1848 = vld [vmem:[#allocation2 + $0x100] sm:$0xff]
          %v1849 = vld [vmem:[#allocation2 + $0x108] sm:$0xff]
          %v1850 = vld [vmem:[#allocation2 + $0x110] sm:$0xff]
          %v1851 = vld [vmem:[#allocation2 + $0x118] sm:$0xff]
          %v1852 = vld [vmem:[#allocation2 + $0x120] sm:$0xff]
          %v1853 = vld [vmem:[#allocation2 + $0x128] sm:$0xff]
          %v1854 = vld [vmem:[#allocation2 + $0x130] sm:$0xff]
          %v1855 = vld [vmem:[#allocation2 + $0x138] sm:$0xff]
          %v1856 = vld [vmem:[#allocation2 + $0x140] sm:$0xff]
          %v1857 = vld [vmem:[#allocation2 + $0x148] sm:$0xff]
          %v1858 = vld [vmem:[#allocation2 + $0x150] sm:$0xff]
          %v1859 = vld [vmem:[#allocation2 + $0x158] sm:$0xff]
          %v1860 = vld [vmem:[#allocation2 + $0x160] sm:$0xff]
          %v1861 = vld [vmem:[#allocation2 + $0x168] sm:$0xff]
          %v1862 = vld [vmem:[#allocation2 + $0x170] sm:$0xff]
          %v1863 = vld [vmem:[#allocation2 + $0x178] sm:$0xff]
          %v1864 = vld [vmem:[#allocation2 + $0x180] sm:$0xff]
          %v1865 = vld [vmem:[#allocation2 + $0x188] sm:$0xff]
          %v1866 = vld [vmem:[#allocation2 + $0x190] sm:$0xff]
          %v1867 = vld [vmem:[#allocation2 + $0x198] sm:$0xff]
          %v1868 = vld [vmem:[#allocation2 + $0x1a0] sm:$0xff]
          %v1869 = vld [vmem:[#allocation2 + $0x1a8] sm:$0xff]
          %v1870 = vld [vmem:[#allocation2 + $0x1b0] sm:$0xff]
          %v1871 = vld [vmem:[#allocation2 + $0x1b8] sm:$0xff]
          %v1872 = vld [vmem:[#allocation2 + $0x1c0] sm:$0xff]
          %v1873 = vld [vmem:[#allocation2 + $0x1c8] sm:$0xff]
          %v1874 = vld [vmem:[#allocation2 + $0x1d0] sm:$0xff]
          %v1875 = vld [vmem:[#allocation2 + $0x1d8] sm:$0xff]
          %v1876 = vld [vmem:[#allocation2 + $0x1e0] sm:$0xff]
          %v1877 = vld [vmem:[#allocation2 + $0x1e8] sm:$0xff]
          %v1878 = vld [vmem:[#allocation2 + $0x1f0] sm:$0xff]
          %v1879 = vld [vmem:[#allocation2 + $0x1f8] sm:$0xff]
          %v1880 = vld [vmem:[#allocation2 + $0x200] sm:$0xff]
          %v1881 = vld [vmem:[#allocation2 + $0x208] sm:$0xff]
          %v1882 = vld [vmem:[#allocation2 + $0x210] sm:$0xff]
          %v1883 = vld [vmem:[#allocation2 + $0x218] sm:$0xff]
          %v1884 = vld [vmem:[#allocation2 + $0x220] sm:$0xff]
          %v1885 = vld [vmem:[#allocation2 + $0x228] sm:$0xff]
          %v1886 = vld [vmem:[#allocation2 + $0x230] sm:$0xff]
          %v1887 = vld [vmem:[#allocation2 + $0x238] sm:$0xff]
          %v1888 = vld [vmem:[#allocation2 + $0x240] sm:$0xff]
          %v1889 = vld [vmem:[#allocation2 + $0x248] sm:$0xff]
          %v1890 = vld [vmem:[#allocation2 + $0x250] sm:$0xff]
          %v1891 = vld [vmem:[#allocation2 + $0x258] sm:$0xff]
          %v1892 = vld [vmem:[#allocation2 + $0x260] sm:$0xff]
          %v1893 = vld [vmem:[#allocation2 + $0x268] sm:$0xff]
          %v1894 = vld [vmem:[#allocation2 + $0x270] sm:$0xff]
          %v1895 = vld [vmem:[#allocation2 + $0x278] sm:$0xff]
          %v1896 = vld [vmem:[#allocation2 + $0x280] sm:$0xff]
          %v1897 = vld [vmem:[#allocation2 + $0x288] sm:$0xff]
          %v1898 = vld [vmem:[#allocation2 + $0x290] sm:$0xff]
          %v1899 = vld [vmem:[#allocation2 + $0x298] sm:$0xff]
          %v1900 = vld [vmem:[#allocation2 + $0x2a0] sm:$0xff]
          %v1901 = vld [vmem:[#allocation2 + $0x2a8] sm:$0xff]
          %v1902 = vld [vmem:[#allocation2 + $0x2b0] sm:$0xff]
          %v1903 = vld [vmem:[#allocation2 + $0x2b8] sm:$0xff]
          %v1904 = vld [vmem:[#allocation2 + $0x2c0] sm:$0xff]
          %v1905 = vld [vmem:[#allocation2 + $0x2c8] sm:$0xff]
          %v1906 = vld [vmem:[#allocation2 + $0x2d0] sm:$0xff]
          %v1907 = vld [vmem:[#allocation2 + $0x2d8] sm:$0xff]
          %v1908 = vld [vmem:[#allocation2 + $0x2e0] sm:$0xff]
          %v1909 = vld [vmem:[#allocation2 + $0x2e8] sm:$0xff]
          %v1910 = vld [vmem:[#allocation2 + $0x2f0] sm:$0xff]
          %v1911 = vld [vmem:[#allocation2 + $0x2f8] sm:$0xff]
          %v1912 = vmax.f32 %v1816, 0.0
          %v1913 = vmax.f32 %v1817, 0.0
          %v1914 = vmax.f32 %v1818, 0.0
          %v1915 = vmax.f32 %v1819, 0.0
          %v1916 = vmax.f32 %v1820, 0.0
          %v1917 = vmax.f32 %v1821, 0.0
          %v1918 = vmax.f32 %v1822, 0.0
          %v1919 = vmax.f32 %v1823, 0.0
          %v1920 = vmax.f32 %v1824, 0.0
          %v1921 = vmax.f32 %v1825, 0.0
          %v1922 = vmax.f32 %v1826, 0.0
          %v1923 = vmax.f32 %v1827, 0.0
          %v1924 = vmax.f32 %v1828, 0.0
          %v1925 = vmax.f32 %v1829, 0.0
          %v1926 = vmax.f32 %v1830, 0.0
          %v1927 = vmax.f32 %v1831, 0.0
          %v1928 = vmax.f32 %v1832, 0.0
          %v1929 = vmax.f32 %v1833, 0.0
          %v1930 = vmax.f32 %v1834, 0.0
          %v1931 = vmax.f32 %v1835, 0.0
          %v1932 = vmax.f32 %v1836, 0.0
          %v1933 = vmax.f32 %v1837, 0.0
          %v1934 = vmax.f32 %v1838, 0.0
          %v1935 = vmax.f32 %v1839, 0.0
          %v1936 = vmax.f32 %v1840, 0.0
          %v1937 = vmax.f32 %v1841, 0.0
          %v1938 = vmax.f32 %v1842, 0.0
          %v1939 = vmax.f32 %v1843, 0.0
          %v1940 = vmax.f32 %v1844, 0.0
          %v1941 = vmax.f32 %v1845, 0.0
          %v1942 = vmax.f32 %v1846, 0.0
          %v1943 = vmax.f32 %v1847, 0.0
          %v1944 = vmax.f32 %v1848, 0.0
          %v1945 = vmax.f32 %v1849, 0.0
          %v1946 = vmax.f32 %v1850, 0.0
          %v1947 = vmax.f32 %v1851, 0.0
          %v1948 = vmax.f32 %v1852, 0.0
          %v1949 = vmax.f32 %v1853, 0.0
          %v1950 = vmax.f32 %v1854, 0.0
          %v1951 = vmax.f32 %v1855, 0.0
          %v1952 = vmax.f32 %v1856, 0.0
          %v1953 = vmax.f32 %v1857, 0.0
          %v1954 = vmax.f32 %v1858, 0.0
          %v1955 = vmax.f32 %v1859, 0.0
          %v1956 = vmax.f32 %v1860, 0.0
          %v1957 = vmax.f32 %v1861, 0.0
          %v1958 = vmax.f32 %v1862, 0.0
          %v1959 = vmax.f32 %v1863, 0.0
          %v1960 = vmax.f32 %v1864, 0.0
          %v1961 = vmax.f32 %v1865, 0.0
          %v1962 = vmax.f32 %v1866, 0.0
          %v1963 = vmax.f32 %v1867, 0.0
          %v1964 = vmax.f32 %v1868, 0.0
          %v1965 = vmax.f32 %v1869, 0.0
          %v1966 = vmax.f32 %v1870, 0.0
          %v1967 = vmax.f32 %v1871, 0.0
          %v1968 = vmax.f32 %v1872, 0.0
          %v1969 = vmax.f32 %v1873, 0.0
          %v1970 = vmax.f32 %v1874, 0.0
          %v1971 = vmax.f32 %v1875, 0.0
          %v1972 = vmax.f32 %v1876, 0.0
          %v1973 = vmax.f32 %v1877, 0.0
          %v1974 = vmax.f32 %v1878, 0.0
          %v1975 = vmax.f32 %v1879, 0.0
          %v1976 = vmax.f32 %v1880, 0.0
          %v1977 = vmax.f32 %v1881, 0.0
          %v1978 = vmax.f32 %v1882, 0.0
          %v1979 = vmax.f32 %v1883, 0.0
          %v1980 = vmax.f32 %v1884, 0.0
          %v1981 = vmax.f32 %v1885, 0.0
          %v1982 = vmax.f32 %v1886, 0.0
          %v1983 = vmax.f32 %v1887, 0.0
          %v1984 = vmax.f32 %v1888, 0.0
          %v1985 = vmax.f32 %v1889, 0.0
          %v1986 = vmax.f32 %v1890, 0.0
          %v1987 = vmax.f32 %v1891, 0.0
          %v1988 = vmax.f32 %v1892, 0.0
          %v1989 = vmax.f32 %v1893, 0.0
          %v1990 = vmax.f32 %v1894, 0.0
          %v1991 = vmax.f32 %v1895, 0.0
          %v1992 = vmax.f32 %v1896, 0.0
          %v1993 = vmax.f32 %v1897, 0.0
          %v1994 = vmax.f32 %v1898, 0.0
          %v1995 = vmax.f32 %v1899, 0.0
          %v1996 = vmax.f32 %v1900, 0.0
          %v1997 = vmax.f32 %v1901, 0.0
          %v1998 = vmax.f32 %v1902, 0.0
          %v1999 = vmax.f32 %v1903, 0.0
          %v2000 = vmax.f32 %v1904, 0.0
          %v2001 = vmax.f32 %v1905, 0.0
          %v2002 = vmax.f32 %v1906, 0.0
          %v2003 = vmax.f32 %v1907, 0.0
          %v2004 = vmax.f32 %v1908, 0.0
          %v2005 = vmax.f32 %v1909, 0.0
          %v2006 = vmax.f32 %v1910, 0.0
          %v2007 = vmax.f32 %v1911, 0.0
          %v2008 = vpack.c.bf16 %v1915, %v1912
          %v2009 = vpack.c.bf16 %v1916, %v1913
          %v2010 = vpack.c.bf16 %v1917, %v1914
          %v2011 = vpack.c.bf16 %v1921, %v1918
          %v2012 = vpack.c.bf16 %v1922, %v1919
          %v2013 = vpack.c.bf16 %v1923, %v1920
          %v2014 = vpack.c.bf16 %v1927, %v1924
          %v2015 = vpack.c.bf16 %v1928, %v1925
          %v2016 = vpack.c.bf16 %v1929, %v1926
          %v2017 = vpack.c.bf16 %v1933, %v1930
          %v2018 = vpack.c.bf16 %v1934, %v1931
          %v2019 = vpack.c.bf16 %v1935, %v1932
          %v2020 = vpack.c.bf16 %v1939, %v1936
          %v2021 = vpack.c.bf16 %v1940, %v1937
          %v2022 = vpack.c.bf16 %v1941, %v1938
          %v2023 = vpack.c.bf16 %v1945, %v1942
          %v2024 = vpack.c.bf16 %v1946, %v1943
          %v2025 = vpack.c.bf16 %v1947, %v1944
          %v2026 = vpack.c.bf16 %v1951, %v1948
          %v2027 = vpack.c.bf16 %v1952, %v1949
          %v2028 = vpack.c.bf16 %v1953, %v1950
          %v2029 = vpack.c.bf16 %v1957, %v1954
          %v2030 = vpack.c.bf16 %v1958, %v1955
          %v2031 = vpack.c.bf16 %v1959, %v1956
          %v2032 = vpack.c.bf16 %v1963, %v1960
          %v2033 = vpack.c.bf16 %v1964, %v1961
          %v2034 = vpack.c.bf16 %v1965, %v1962
          %v2035 = vpack.c.bf16 %v1969, %v1966
          %v2036 = vpack.c.bf16 %v1970, %v1967
          %v2037 = vpack.c.bf16 %v1971, %v1968
          %v2038 = vpack.c.bf16 %v1975, %v1972
          %v2039 = vpack.c.bf16 %v1976, %v1973
          %v2040 = vpack.c.bf16 %v1977, %v1974
          %v2041 = vpack.c.bf16 %v1981, %v1978
          %v2042 = vpack.c.bf16 %v1982, %v1979
          %v2043 = vpack.c.bf16 %v1983, %v1980
          %v2044 = vpack.c.bf16 %v1987, %v1984
          %v2045 = vpack.c.bf16 %v1988, %v1985
          %v2046 = vpack.c.bf16 %v1989, %v1986
          %v2047 = vpack.c.bf16 %v1993, %v1990
          %v2048 = vpack.c.bf16 %v1994, %v1991
          %v2049 = vpack.c.bf16 %v1995, %v1992
          %v2050 = vpack.c.bf16 %v1999, %v1996
          %v2051 = vpack.c.bf16 %v2000, %v1997
          %v2052 = vpack.c.bf16 %v2001, %v1998
          %v2053 = vpack.c.bf16 %v2005, %v2002
          %v2054 = vpack.c.bf16 %v2006, %v2003
          %v2055 = vpack.c.bf16 %v2007, %v2004
          %v2056 = vld [vmem:[%s2] sm:$0xff]
          %v2057 = vld [vmem:[%s2 + $0x8] sm:$0xff]
          %v2058 = vld [vmem:[%s2 + $0x10] sm:$0xff]
          %v2059 = vld [vmem:[%s2 + $0x18] sm:$0xff]
          %v2060 = vld [vmem:[%s2 + $0x20] sm:$0xff]
          %v2061 = vld [vmem:[%s2 + $0x28] sm:$0xff]
          %v2062 = vld [vmem:[%s2 + $0x30] sm:$0xff]
          %v2063 = vld [vmem:[%s2 + $0x38] sm:$0xff]
          %v2064 = vld [vmem:[%s2 + $0x40] sm:$0xff]
          %v2065 = vld [vmem:[%s2 + $0x48] sm:$0xff]
          %v2066 = vld [vmem:[%s2 + $0x50] sm:$0xff]
          %v2067 = vld [vmem:[%s2 + $0x58] sm:$0xff]
          %v2068 = vld [vmem:[%s2 + $0x60] sm:$0xff]
          %v2069 = vld [vmem:[%s2 + $0x68] sm:$0xff]
          %v2070 = vld [vmem:[%s2 + $0x70] sm:$0xff]
          %v2071 = vld [vmem:[%s2 + $0x78] sm:$0xff]
          %v2072 = vld [vmem:[%s2 + $0x80] sm:$0xff]
          %v2073 = vld [vmem:[%s2 + $0x88] sm:$0xff]
          %v2074 = vld [vmem:[%s2 + $0x90] sm:$0xff]
          %v2075 = vld [vmem:[%s2 + $0x98] sm:$0xff]
          %v2076 = vld [vmem:[%s2 + $0xa0] sm:$0xff]
          %v2077 = vld [vmem:[%s2 + $0xa8] sm:$0xff]
          %v2078 = vld [vmem:[%s2 + $0xb0] sm:$0xff]
          %v2079 = vld [vmem:[%s2 + $0xb8] sm:$0xff]
          %v2080 = vld [vmem:[%s2 + $0xc0] sm:$0xff]
          %v2081 = vld [vmem:[%s2 + $0xc8] sm:$0xff]
          %v2082 = vld [vmem:[%s2 + $0xd0] sm:$0xff]
          %v2083 = vld [vmem:[%s2 + $0xd8] sm:$0xff]
          %v2084 = vld [vmem:[%s2 + $0xe0] sm:$0xff]
          %v2085 = vld [vmem:[%s2 + $0xe8] sm:$0xff]
          %v2086 = vld [vmem:[%s2 + $0xf0] sm:$0xff]
          %v2087 = vld [vmem:[%s2 + $0xf8] sm:$0xff]
          %v2088 = vld [vmem:[%s2 + $0x100] sm:$0xff]
          %v2089 = vld [vmem:[%s2 + $0x108] sm:$0xff]
          %v2090 = vld [vmem:[%s2 + $0x110] sm:$0xff]
          %v2091 = vld [vmem:[%s2 + $0x118] sm:$0xff]
          %v2092 = vld [vmem:[%s2 + $0x120] sm:$0xff]
          %v2093 = vld [vmem:[%s2 + $0x128] sm:$0xff]
          %v2094 = vld [vmem:[%s2 + $0x130] sm:$0xff]
          %v2095 = vld [vmem:[%s2 + $0x138] sm:$0xff]
          %v2096 = vld [vmem:[%s2 + $0x140] sm:$0xff]
          %v2097 = vld [vmem:[%s2 + $0x148] sm:$0xff]
          %v2098 = vld [vmem:[%s2 + $0x150] sm:$0xff]
          %v2099 = vld [vmem:[%s2 + $0x158] sm:$0xff]
          %v2100 = vld [vmem:[%s2 + $0x160] sm:$0xff]
          %v2101 = vld [vmem:[%s2 + $0x168] sm:$0xff]
          %v2102 = vld [vmem:[%s2 + $0x170] sm:$0xff]
          %v2103 = vld [vmem:[%s2 + $0x178] sm:$0xff]
          %v2152 = vunpack.c.l.b16 %v2056
          %v2153 = vunpack.c.h.b16 %v2056
          %v2154 = vunpack.c.l.b16 %v2057
          %v2155 = vunpack.c.h.b16 %v2057
          %v2156 = vunpack.c.l.b16 %v2058
          %v2157 = vunpack.c.h.b16 %v2058
          %v2158 = vunpack.c.l.b16 %v2059
          %v2159 = vunpack.c.h.b16 %v2059
          %v2160 = vunpack.c.l.b16 %v2060
          %v2161 = vunpack.c.h.b16 %v2060
          %v2162 = vunpack.c.l.b16 %v2061
          %v2163 = vunpack.c.h.b16 %v2061
          %v2164 = vunpack.c.l.b16 %v2062
          %v2165 = vunpack.c.h.b16 %v2062
          %v2166 = vunpack.c.l.b16 %v2063
          %v2167 = vunpack.c.h.b16 %v2063
          %v2168 = vunpack.c.l.b16 %v2064
          %v2169 = vunpack.c.h.b16 %v2064
          %v2170 = vunpack.c.l.b16 %v2065
          %v2171 = vunpack.c.h.b16 %v2065
          %v2172 = vunpack.c.l.b16 %v2066
          %v2173 = vunpack.c.h.b16 %v2066
          %v2174 = vunpack.c.l.b16 %v2067
          %v2175 = vunpack.c.h.b16 %v2067
          %v2176 = vunpack.c.l.b16 %v2068
          %v2177 = vunpack.c.h.b16 %v2068
          %v2178 = vunpack.c.l.b16 %v2069
          %v2179 = vunpack.c.h.b16 %v2069
          %v2180 = vunpack.c.l.b16 %v2070
          %v2181 = vunpack.c.h.b16 %v2070
          %v2182 = vunpack.c.l.b16 %v2071
          %v2183 = vunpack.c.h.b16 %v2071
          %v2184 = vunpack.c.l.b16 %v2072
          %v2185 = vunpack.c.h.b16 %v2072
          %v2186 = vunpack.c.l.b16 %v2073
          %v2187 = vunpack.c.h.b16 %v2073
          %v2188 = vunpack.c.l.b16 %v2074
          %v2189 = vunpack.c.h.b16 %v2074
          %v2190 = vunpack.c.l.b16 %v2075
          %v2191 = vunpack.c.h.b16 %v2075
          %v2192 = vunpack.c.l.b16 %v2076
          %v2193 = vunpack.c.h.b16 %v2076
          %v2194 = vunpack.c.l.b16 %v2077
          %v2195 = vunpack.c.h.b16 %v2077
          %v2196 = vunpack.c.l.b16 %v2078
          %v2197 = vunpack.c.h.b16 %v2078
          %v2198 = vunpack.c.l.b16 %v2079
          %v2199 = vunpack.c.h.b16 %v2079
          %v2200 = vunpack.c.l.b16 %v2080
          %v2201 = vunpack.c.h.b16 %v2080
          %v2202 = vunpack.c.l.b16 %v2081
          %v2203 = vunpack.c.h.b16 %v2081
          %v2204 = vunpack.c.l.b16 %v2082
          %v2205 = vunpack.c.h.b16 %v2082
          %v2206 = vunpack.c.l.b16 %v2083
          %v2207 = vunpack.c.h.b16 %v2083
          %v2208 = vunpack.c.l.b16 %v2084
          %v2209 = vunpack.c.h.b16 %v2084
          %v2210 = vunpack.c.l.b16 %v2085
          %v2211 = vunpack.c.h.b16 %v2085
          %v2212 = vunpack.c.l.b16 %v2086
          %v2213 = vunpack.c.h.b16 %v2086
          %v2214 = vunpack.c.l.b16 %v2087
          %v2215 = vunpack.c.h.b16 %v2087
          %v2216 = vunpack.c.l.b16 %v2088
          %v2217 = vunpack.c.h.b16 %v2088
          %v2218 = vunpack.c.l.b16 %v2089
          %v2219 = vunpack.c.h.b16 %v2089
          %v2220 = vunpack.c.l.b16 %v2090
          %v2221 = vunpack.c.h.b16 %v2090
          %v2222 = vunpack.c.l.b16 %v2091
          %v2223 = vunpack.c.h.b16 %v2091
          %v2224 = vunpack.c.l.b16 %v2092
          %v2225 = vunpack.c.h.b16 %v2092
          %v2226 = vunpack.c.l.b16 %v2093
          %v2227 = vunpack.c.h.b16 %v2093
          %v2228 = vunpack.c.l.b16 %v2094
          %v2229 = vunpack.c.h.b16 %v2094
          %v2230 = vunpack.c.l.b16 %v2095
          %v2231 = vunpack.c.h.b16 %v2095
          %v2232 = vunpack.c.l.b16 %v2096
          %v2233 = vunpack.c.h.b16 %v2096
          %v2234 = vunpack.c.l.b16 %v2097
          %v2235 = vunpack.c.h.b16 %v2097
          %v2236 = vunpack.c.l.b16 %v2098
          %v2237 = vunpack.c.h.b16 %v2098
          %v2238 = vunpack.c.l.b16 %v2099
          %v2239 = vunpack.c.h.b16 %v2099
          %v2240 = vunpack.c.l.b16 %v2100
          %v2241 = vunpack.c.h.b16 %v2100
          %v2242 = vunpack.c.l.b16 %v2101
          %v2243 = vunpack.c.h.b16 %v2101
          %v2244 = vunpack.c.l.b16 %v2102
          %v2245 = vunpack.c.h.b16 %v2102
          %v2246 = vunpack.c.l.b16 %v2103
          %v2247 = vunpack.c.h.b16 %v2103
          %v2248 = vpack.c.b16 %v2154, %v2152
          %v2249 = vpack.c.b16 %v2155, %v2153
          %v2250 = vpack.c.b16 %v2158, %v2156
          %v2251 = vpack.c.b16 %v2159, %v2157
          %v2252 = vpack.c.b16 %v2162, %v2160
          %v2253 = vpack.c.b16 %v2163, %v2161
          %v2254 = vpack.c.b16 %v2166, %v2164
          %v2255 = vpack.c.b16 %v2167, %v2165
          %v2256 = vpack.c.b16 %v2170, %v2168
          %v2257 = vpack.c.b16 %v2171, %v2169
          %v2258 = vpack.c.b16 %v2174, %v2172
          %v2259 = vpack.c.b16 %v2175, %v2173
          %v2260 = vpack.c.b16 %v2178, %v2176
          %v2261 = vpack.c.b16 %v2179, %v2177
          %v2262 = vpack.c.b16 %v2182, %v2180
          %v2263 = vpack.c.b16 %v2183, %v2181
          %v2264 = vpack.c.b16 %v2186, %v2184
          %v2265 = vpack.c.b16 %v2187, %v2185
          %v2266 = vpack.c.b16 %v2190, %v2188
          %v2267 = vpack.c.b16 %v2191, %v2189
          %v2268 = vpack.c.b16 %v2194, %v2192
          %v2269 = vpack.c.b16 %v2195, %v2193
          %v2270 = vpack.c.b16 %v2198, %v2196
          %v2271 = vpack.c.b16 %v2199, %v2197
          %v2272 = vpack.c.b16 %v2202, %v2200
          %v2273 = vpack.c.b16 %v2203, %v2201
          %v2274 = vpack.c.b16 %v2206, %v2204
          %v2275 = vpack.c.b16 %v2207, %v2205
          %v2276 = vpack.c.b16 %v2210, %v2208
          %v2277 = vpack.c.b16 %v2211, %v2209
          %v2278 = vpack.c.b16 %v2214, %v2212
          %v2279 = vpack.c.b16 %v2215, %v2213
          %v2280 = vpack.c.b16 %v2218, %v2216
          %v2281 = vpack.c.b16 %v2219, %v2217
          %v2282 = vpack.c.b16 %v2222, %v2220
          %v2283 = vpack.c.b16 %v2223, %v2221
          %v2284 = vpack.c.b16 %v2226, %v2224
          %v2285 = vpack.c.b16 %v2227, %v2225
          %v2286 = vpack.c.b16 %v2230, %v2228
          %v2287 = vpack.c.b16 %v2231, %v2229
          %v2288 = vpack.c.b16 %v2234, %v2232
          %v2289 = vpack.c.b16 %v2235, %v2233
          %v2290 = vpack.c.b16 %v2238, %v2236
          %v2291 = vpack.c.b16 %v2239, %v2237
          %v2292 = vpack.c.b16 %v2242, %v2240
          %v2293 = vpack.c.b16 %v2243, %v2241
          %v2294 = vpack.c.b16 %v2246, %v2244
          %v2295 = vpack.c.b16 %v2247, %v2245
          %2344 = vmatpush.bf16.msra.mxu0 %v2262
          %2345 = vmatpush.bf16.msra.mxu0 %v2260
          %2346 = vmatpush.bf16.msra.mxu0 %v2258
          %2347 = vmatpush.bf16.msra.mxu0 %v2256
          %2348 = vmatpush.bf16.msra.mxu0 %v2254
          %2349 = vmatpush.bf16.msra.mxu0 %v2252
          %2350 = vmatpush.bf16.msra.mxu0 %v2250
          %2351 = vmatpush.bf16.msra.mxu0 %v2248
          %2352 = vmatmul.bf16.gmra.mxu0 %v2008
          %v2353 = vpop.f32.mrf.mxu0
          %v2354 = vadd.f32 0.0, %v2353
          %v2355 = vpop.f32.mrf.mxu0
          %v2356 = vadd.f32 0.0, %v2355
          %2357 = vmatmul.bf16.gmra.mxu0 %v2011
          %v2358 = vpop.f32.mrf.mxu0
          %v2359 = vadd.f32 0.0, %v2358
          %v2360 = vpop.f32.mrf.mxu0
          %v2361 = vadd.f32 0.0, %v2360
          %2362 = vmatmul.bf16.gmra.mxu0 %v2014
          %v2363 = vpop.f32.mrf.mxu0
          %v2364 = vadd.f32 0.0, %v2363
          %v2365 = vpop.f32.mrf.mxu0
          %v2366 = vadd.f32 0.0, %v2365
          %2367 = vmatmul.bf16.gmra.mxu0 %v2017
          %v2368 = vpop.f32.mrf.mxu0
          %v2369 = vadd.f32 0.0, %v2368
          %v2370 = vpop.f32.mrf.mxu0
          %v2371 = vadd.f32 0.0, %v2370
          %2372 = vmatmul.bf16.gmra.mxu0 %v2020
          %v2373 = vpop.f32.mrf.mxu0
          %v2374 = vadd.f32 0.0, %v2373
          %v2375 = vpop.f32.mrf.mxu0
          %v2376 = vadd.f32 0.0, %v2375
          %2377 = vmatmul.bf16.gmra.mxu0 %v2023
          %v2378 = vpop.f32.mrf.mxu0
          %v2379 = vadd.f32 0.0, %v2378
          %v2380 = vpop.f32.mrf.mxu0
          %v2381 = vadd.f32 0.0, %v2380
          %2382 = vmatmul.bf16.gmra.mxu0 %v2026
          %v2383 = vpop.f32.mrf.mxu0
          %v2384 = vadd.f32 0.0, %v2383
          %v2385 = vpop.f32.mrf.mxu0
          %v2386 = vadd.f32 0.0, %v2385
          %2387 = vmatmul.bf16.gmra.mxu0 %v2029
          %v2388 = vpop.f32.mrf.mxu0
          %v2389 = vadd.f32 0.0, %v2388
          %v2390 = vpop.f32.mrf.mxu0
          %v2391 = vadd.f32 0.0, %v2390
          %2392 = vmatmul.bf16.gmra.mxu0 %v2032
          %v2393 = vpop.f32.mrf.mxu0
          %v2394 = vadd.f32 0.0, %v2393
          %v2395 = vpop.f32.mrf.mxu0
          %v2396 = vadd.f32 0.0, %v2395
          %2397 = vmatmul.bf16.gmra.mxu0 %v2035
          %v2398 = vpop.f32.mrf.mxu0
          %v2399 = vadd.f32 0.0, %v2398
          %v2400 = vpop.f32.mrf.mxu0
          %v2401 = vadd.f32 0.0, %v2400
          %2402 = vmatmul.bf16.gmra.mxu0 %v2038
          %v2403 = vpop.f32.mrf.mxu0
          %v2404 = vadd.f32 0.0, %v2403
          %v2405 = vpop.f32.mrf.mxu0
          %v2406 = vadd.f32 0.0, %v2405
          %2407 = vmatmul.bf16.gmra.mxu0 %v2041
          %v2408 = vpop.f32.mrf.mxu0
          %v2409 = vadd.f32 0.0, %v2408
          %v2410 = vpop.f32.mrf.mxu0
          %v2411 = vadd.f32 0.0, %v2410
          %2412 = vmatmul.bf16.gmra.mxu0 %v2044
          %v2413 = vpop.f32.mrf.mxu0
          %v2414 = vadd.f32 0.0, %v2413
          %v2415 = vpop.f32.mrf.mxu0
          %v2416 = vadd.f32 0.0, %v2415
          %2417 = vmatmul.bf16.gmra.mxu0 %v2047
          %v2418 = vpop.f32.mrf.mxu0
          %v2419 = vadd.f32 0.0, %v2418
          %v2420 = vpop.f32.mrf.mxu0
          %v2421 = vadd.f32 0.0, %v2420
          %2422 = vmatmul.bf16.gmra.mxu0 %v2050
          %v2423 = vpop.f32.mrf.mxu0
          %v2424 = vadd.f32 0.0, %v2423
          %v2425 = vpop.f32.mrf.mxu0
          %v2426 = vadd.f32 0.0, %v2425
          %2427 = vmatmul.bf16.gmra.mxu0 %v2053
          %v2428 = vpop.f32.mrf.mxu0
          %v2429 = vadd.f32 0.0, %v2428
          %v2430 = vpop.f32.mrf.mxu0
          %v2431 = vadd.f32 0.0, %v2430
          %2432 = vdwg.mxu0
          %2433 = vmatpush.bf16.msra.mxu0 %v2278
          %2434 = vmatpush.bf16.msra.mxu0 %v2276
          %2435 = vmatpush.bf16.msra.mxu0 %v2274
          %2436 = vmatpush.bf16.msra.mxu0 %v2272
          %2437 = vmatpush.bf16.msra.mxu0 %v2270
          %2438 = vmatpush.bf16.msra.mxu0 %v2268
          %2439 = vmatpush.bf16.msra.mxu0 %v2266
          %2440 = vmatpush.bf16.msra.mxu0 %v2264
          %2441 = vmatmul.bf16.gmra.mxu0 %v2009
          %v2442 = vpop.f32.mrf.mxu0
          %v2443 = vadd.f32 %v2354, %v2442
          %v2444 = vpop.f32.mrf.mxu0
          %v2445 = vadd.f32 %v2356, %v2444
          %2446 = vmatmul.bf16.gmra.mxu0 %v2012
          %v2447 = vpop.f32.mrf.mxu0
          %v2448 = vadd.f32 %v2359, %v2447
          %v2449 = vpop.f32.mrf.mxu0
          %v2450 = vadd.f32 %v2361, %v2449
          %2451 = vmatmul.bf16.gmra.mxu0 %v2015
          %v2452 = vpop.f32.mrf.mxu0
          %v2453 = vadd.f32 %v2364, %v2452
          %v2454 = vpop.f32.mrf.mxu0
          %v2455 = vadd.f32 %v2366, %v2454
          %2456 = vmatmul.bf16.gmra.mxu0 %v2018
          %v2457 = vpop.f32.mrf.mxu0
          %v2458 = vadd.f32 %v2369, %v2457
          %v2459 = vpop.f32.mrf.mxu0
          %v2460 = vadd.f32 %v2371, %v2459
          %2461 = vmatmul.bf16.gmra.mxu0 %v2021
          %v2462 = vpop.f32.mrf.mxu0
          %v2463 = vadd.f32 %v2374, %v2462
          %v2464 = vpop.f32.mrf.mxu0
          %v2465 = vadd.f32 %v2376, %v2464
          %2466 = vmatmul.bf16.gmra.mxu0 %v2024
          %v2467 = vpop.f32.mrf.mxu0
          %v2468 = vadd.f32 %v2379, %v2467
          %v2469 = vpop.f32.mrf.mxu0
          %v2470 = vadd.f32 %v2381, %v2469
          %2471 = vmatmul.bf16.gmra.mxu0 %v2027
          %v2472 = vpop.f32.mrf.mxu0
          %v2473 = vadd.f32 %v2384, %v2472
          %v2474 = vpop.f32.mrf.mxu0
          %v2475 = vadd.f32 %v2386, %v2474
          %2476 = vmatmul.bf16.gmra.mxu0 %v2030
          %v2477 = vpop.f32.mrf.mxu0
          %v2478 = vadd.f32 %v2389, %v2477
          %v2479 = vpop.f32.mrf.mxu0
          %v2480 = vadd.f32 %v2391, %v2479
          %2481 = vmatmul.bf16.gmra.mxu0 %v2033
          %v2482 = vpop.f32.mrf.mxu0
          %v2483 = vadd.f32 %v2394, %v2482
          %v2484 = vpop.f32.mrf.mxu0
          %v2485 = vadd.f32 %v2396, %v2484
          %2486 = vmatmul.bf16.gmra.mxu0 %v2036
          %v2487 = vpop.f32.mrf.mxu0
          %v2488 = vadd.f32 %v2399, %v2487
          %v2489 = vpop.f32.mrf.mxu0
          %v2490 = vadd.f32 %v2401, %v2489
          %2491 = vmatmul.bf16.gmra.mxu0 %v2039
          %v2492 = vpop.f32.mrf.mxu0
          %v2493 = vadd.f32 %v2404, %v2492
          %v2494 = vpop.f32.mrf.mxu0
          %v2495 = vadd.f32 %v2406, %v2494
          %2496 = vmatmul.bf16.gmra.mxu0 %v2042
          %v2497 = vpop.f32.mrf.mxu0
          %v2498 = vadd.f32 %v2409, %v2497
          %v2499 = vpop.f32.mrf.mxu0
          %v2500 = vadd.f32 %v2411, %v2499
          %2501 = vmatmul.bf16.gmra.mxu0 %v2045
          %v2502 = vpop.f32.mrf.mxu0
          %v2503 = vadd.f32 %v2414, %v2502
          %v2504 = vpop.f32.mrf.mxu0
          %v2505 = vadd.f32 %v2416, %v2504
          %2506 = vmatmul.bf16.gmra.mxu0 %v2048
          %v2507 = vpop.f32.mrf.mxu0
          %v2508 = vadd.f32 %v2419, %v2507
          %v2509 = vpop.f32.mrf.mxu0
          %v2510 = vadd.f32 %v2421, %v2509
          %2511 = vmatmul.bf16.gmra.mxu0 %v2051
          %v2512 = vpop.f32.mrf.mxu0
          %v2513 = vadd.f32 %v2424, %v2512
          %v2514 = vpop.f32.mrf.mxu0
          %v2515 = vadd.f32 %v2426, %v2514
          %2516 = vmatmul.bf16.gmra.mxu0 %v2054
          %v2517 = vpop.f32.mrf.mxu0
          %v2518 = vadd.f32 %v2429, %v2517
          %v2519 = vpop.f32.mrf.mxu0
          %v2520 = vadd.f32 %v2431, %v2519
          %2521 = vdwg.mxu0
          %2522 = vmatpush.bf16.msra.mxu0 %v2294
          %2523 = vmatpush.bf16.msra.mxu0 %v2292
          %2524 = vmatpush.bf16.msra.mxu0 %v2290
          %2525 = vmatpush.bf16.msra.mxu0 %v2288
          %2526 = vmatpush.bf16.msra.mxu0 %v2286
          %2527 = vmatpush.bf16.msra.mxu0 %v2284
          %2528 = vmatpush.bf16.msra.mxu0 %v2282
          %2529 = vmatpush.bf16.msra.mxu0 %v2280
          %2530 = vmatmul.bf16.gmra.mxu0 %v2010
          %v2531 = vpop.f32.mrf.mxu0
          %v2532 = vadd.f32 %v2443, %v2531
          %v2533 = vpop.f32.mrf.mxu0
          %v2534 = vadd.f32 %v2445, %v2533
          %2535 = vmatmul.bf16.gmra.mxu0 %v2013
          %v2536 = vpop.f32.mrf.mxu0
          %v2537 = vadd.f32 %v2448, %v2536
          %v2538 = vpop.f32.mrf.mxu0
          %v2539 = vadd.f32 %v2450, %v2538
          %2540 = vmatmul.bf16.gmra.mxu0 %v2016
          %v2541 = vpop.f32.mrf.mxu0
          %v2542 = vadd.f32 %v2453, %v2541
          %v2543 = vpop.f32.mrf.mxu0
          %v2544 = vadd.f32 %v2455, %v2543
          %2545 = vmatmul.bf16.gmra.mxu0 %v2019
          %v2546 = vpop.f32.mrf.mxu0
          %v2547 = vadd.f32 %v2458, %v2546
          %v2548 = vpop.f32.mrf.mxu0
          %v2549 = vadd.f32 %v2460, %v2548
          %2550 = vmatmul.bf16.gmra.mxu0 %v2022
          %v2551 = vpop.f32.mrf.mxu0
          %v2552 = vadd.f32 %v2463, %v2551
          %v2553 = vpop.f32.mrf.mxu0
          %v2554 = vadd.f32 %v2465, %v2553
          %2555 = vmatmul.bf16.gmra.mxu0 %v2025
          %v2556 = vpop.f32.mrf.mxu0
          %v2557 = vadd.f32 %v2468, %v2556
          %v2558 = vpop.f32.mrf.mxu0
          %v2559 = vadd.f32 %v2470, %v2558
          %2560 = vmatmul.bf16.gmra.mxu0 %v2028
          %v2561 = vpop.f32.mrf.mxu0
          %v2562 = vadd.f32 %v2473, %v2561
          %v2563 = vpop.f32.mrf.mxu0
          %v2564 = vadd.f32 %v2475, %v2563
          %2565 = vmatmul.bf16.gmra.mxu0 %v2031
          %v2566 = vpop.f32.mrf.mxu0
          %v2567 = vadd.f32 %v2478, %v2566
          %v2568 = vpop.f32.mrf.mxu0
          %v2569 = vadd.f32 %v2480, %v2568
          %2570 = vmatmul.bf16.gmra.mxu0 %v2034
          %v2571 = vpop.f32.mrf.mxu0
          %v2572 = vadd.f32 %v2483, %v2571
          %v2573 = vpop.f32.mrf.mxu0
          %v2574 = vadd.f32 %v2485, %v2573
          %2575 = vmatmul.bf16.gmra.mxu0 %v2037
          %v2576 = vpop.f32.mrf.mxu0
          %v2577 = vadd.f32 %v2488, %v2576
          %v2578 = vpop.f32.mrf.mxu0
          %v2579 = vadd.f32 %v2490, %v2578
          %2580 = vmatmul.bf16.gmra.mxu0 %v2040
          %v2581 = vpop.f32.mrf.mxu0
          %v2582 = vadd.f32 %v2493, %v2581
          %v2583 = vpop.f32.mrf.mxu0
          %v2584 = vadd.f32 %v2495, %v2583
          %2585 = vmatmul.bf16.gmra.mxu0 %v2043
          %v2586 = vpop.f32.mrf.mxu0
          %v2587 = vadd.f32 %v2498, %v2586
          %v2588 = vpop.f32.mrf.mxu0
          %v2589 = vadd.f32 %v2500, %v2588
          %2590 = vmatmul.bf16.gmra.mxu0 %v2046
          %v2591 = vpop.f32.mrf.mxu0
          %v2592 = vadd.f32 %v2503, %v2591
          %v2593 = vpop.f32.mrf.mxu0
          %v2594 = vadd.f32 %v2505, %v2593
          %2595 = vmatmul.bf16.gmra.mxu0 %v2049
          %v2596 = vpop.f32.mrf.mxu0
          %v2597 = vadd.f32 %v2508, %v2596
          %v2598 = vpop.f32.mrf.mxu0
          %v2599 = vadd.f32 %v2510, %v2598
          %2600 = vmatmul.bf16.gmra.mxu0 %v2052
          %v2601 = vpop.f32.mrf.mxu0
          %v2602 = vadd.f32 %v2513, %v2601
          %v2603 = vpop.f32.mrf.mxu0
          %v2604 = vadd.f32 %v2515, %v2603
          %2605 = vmatmul.bf16.gmra.mxu0 %v2055
          %v2606 = vpop.f32.mrf.mxu0
          %v2607 = vadd.f32 %v2518, %v2606
          %v2608 = vpop.f32.mrf.mxu0
          %v2609 = vadd.f32 %v2520, %v2608
          %2610 = vdwg.mxu0
          %2611 = vmatpush.bf16.msra.mxu0 %v2263
          %2612 = vmatpush.bf16.msra.mxu0 %v2261
          %2613 = vmatpush.bf16.msra.mxu0 %v2259
          %2614 = vmatpush.bf16.msra.mxu0 %v2257
          %2615 = vmatpush.bf16.msra.mxu0 %v2255
          %2616 = vmatpush.bf16.msra.mxu0 %v2253
          %2617 = vmatpush.bf16.msra.mxu0 %v2251
          %2618 = vmatpush.bf16.msra.mxu0 %v2249
          %2619 = vmatmul.bf16.gmra.mxu0 %v2008
          %v2620 = vpop.f32.mrf.mxu0
          %v2621 = vadd.f32 0.0, %v2620
          %v2622 = vpop.f32.mrf.mxu0
          %v2623 = vadd.f32 0.0, %v2622
          %2624 = vmatmul.bf16.gmra.mxu0 %v2011
          %v2625 = vpop.f32.mrf.mxu0
          %v2626 = vadd.f32 0.0, %v2625
          %v2627 = vpop.f32.mrf.mxu0
          %v2628 = vadd.f32 0.0, %v2627
          %2629 = vmatmul.bf16.gmra.mxu0 %v2014
          %v2630 = vpop.f32.mrf.mxu0
          %v2631 = vadd.f32 0.0, %v2630
          %v2632 = vpop.f32.mrf.mxu0
          %v2633 = vadd.f32 0.0, %v2632
          %2634 = vmatmul.bf16.gmra.mxu0 %v2017
          %v2635 = vpop.f32.mrf.mxu0
          %v2636 = vadd.f32 0.0, %v2635
          %v2637 = vpop.f32.mrf.mxu0
          %v2638 = vadd.f32 0.0, %v2637
          %2639 = vmatmul.bf16.gmra.mxu0 %v2020
          %v2640 = vpop.f32.mrf.mxu0
          %v2641 = vadd.f32 0.0, %v2640
          %v2642 = vpop.f32.mrf.mxu0
          %v2643 = vadd.f32 0.0, %v2642
          %2644 = vmatmul.bf16.gmra.mxu0 %v2023
          %v2645 = vpop.f32.mrf.mxu0
          %v2646 = vadd.f32 0.0, %v2645
          %v2647 = vpop.f32.mrf.mxu0
          %v2648 = vadd.f32 0.0, %v2647
          %2649 = vmatmul.bf16.gmra.mxu0 %v2026
          %v2650 = vpop.f32.mrf.mxu0
          %v2651 = vadd.f32 0.0, %v2650
          %v2652 = vpop.f32.mrf.mxu0
          %v2653 = vadd.f32 0.0, %v2652
          %2654 = vmatmul.bf16.gmra.mxu0 %v2029
          %v2655 = vpop.f32.mrf.mxu0
          %v2656 = vadd.f32 0.0, %v2655
          %v2657 = vpop.f32.mrf.mxu0
          %v2658 = vadd.f32 0.0, %v2657
          %2659 = vmatmul.bf16.gmra.mxu0 %v2032
          %v2660 = vpop.f32.mrf.mxu0
          %v2661 = vadd.f32 0.0, %v2660
          %v2662 = vpop.f32.mrf.mxu0
          %v2663 = vadd.f32 0.0, %v2662
          %2664 = vmatmul.bf16.gmra.mxu0 %v2035
          %v2665 = vpop.f32.mrf.mxu0
          %v2666 = vadd.f32 0.0, %v2665
          %v2667 = vpop.f32.mrf.mxu0
          %v2668 = vadd.f32 0.0, %v2667
          %2669 = vmatmul.bf16.gmra.mxu0 %v2038
          %v2670 = vpop.f32.mrf.mxu0
          %v2671 = vadd.f32 0.0, %v2670
          %v2672 = vpop.f32.mrf.mxu0
          %v2673 = vadd.f32 0.0, %v2672
          %2674 = vmatmul.bf16.gmra.mxu0 %v2041
          %v2675 = vpop.f32.mrf.mxu0
          %v2676 = vadd.f32 0.0, %v2675
          %v2677 = vpop.f32.mrf.mxu0
          %v2678 = vadd.f32 0.0, %v2677
          %2679 = vmatmul.bf16.gmra.mxu0 %v2044
          %v2680 = vpop.f32.mrf.mxu0
          %v2681 = vadd.f32 0.0, %v2680
          %v2682 = vpop.f32.mrf.mxu0
          %v2683 = vadd.f32 0.0, %v2682
          %2684 = vmatmul.bf16.gmra.mxu0 %v2047
          %v2685 = vpop.f32.mrf.mxu0
          %v2686 = vadd.f32 0.0, %v2685
          %v2687 = vpop.f32.mrf.mxu0
          %v2688 = vadd.f32 0.0, %v2687
          %2689 = vmatmul.bf16.gmra.mxu0 %v2050
          %v2690 = vpop.f32.mrf.mxu0
          %v2691 = vadd.f32 0.0, %v2690
          %v2692 = vpop.f32.mrf.mxu0
          %v2693 = vadd.f32 0.0, %v2692
          %2694 = vmatmul.bf16.gmra.mxu0 %v2053
          %v2695 = vpop.f32.mrf.mxu0
          %v2696 = vadd.f32 0.0, %v2695
          %v2697 = vpop.f32.mrf.mxu0
          %v2698 = vadd.f32 0.0, %v2697
          %2699 = vdwg.mxu0
          %2700 = vmatpush.bf16.msra.mxu0 %v2279
          %2701 = vmatpush.bf16.msra.mxu0 %v2277
          %2702 = vmatpush.bf16.msra.mxu0 %v2275
          %2703 = vmatpush.bf16.msra.mxu0 %v2273
          %2704 = vmatpush.bf16.msra.mxu0 %v2271
          %2705 = vmatpush.bf16.msra.mxu0 %v2269
          %2706 = vmatpush.bf16.msra.mxu0 %v2267
          %2707 = vmatpush.bf16.msra.mxu0 %v2265
          %2708 = vmatmul.bf16.gmra.mxu0 %v2009
          %v2709 = vpop.f32.mrf.mxu0
          %v2710 = vadd.f32 %v2621, %v2709
          %v2711 = vpop.f32.mrf.mxu0
          %v2712 = vadd.f32 %v2623, %v2711
          %2713 = vmatmul.bf16.gmra.mxu0 %v2012
          %v2714 = vpop.f32.mrf.mxu0
          %v2715 = vadd.f32 %v2626, %v2714
          %v2716 = vpop.f32.mrf.mxu0
          %v2717 = vadd.f32 %v2628, %v2716
          %2718 = vmatmul.bf16.gmra.mxu0 %v2015
          %v2719 = vpop.f32.mrf.mxu0
          %v2720 = vadd.f32 %v2631, %v2719
          %v2721 = vpop.f32.mrf.mxu0
          %v2722 = vadd.f32 %v2633, %v2721
          %2723 = vmatmul.bf16.gmra.mxu0 %v2018
          %v2724 = vpop.f32.mrf.mxu0
          %v2725 = vadd.f32 %v2636, %v2724
          %v2726 = vpop.f32.mrf.mxu0
          %v2727 = vadd.f32 %v2638, %v2726
          %2728 = vmatmul.bf16.gmra.mxu0 %v2021
          %v2729 = vpop.f32.mrf.mxu0
          %v2730 = vadd.f32 %v2641, %v2729
          %v2731 = vpop.f32.mrf.mxu0
          %v2732 = vadd.f32 %v2643, %v2731
          %2733 = vmatmul.bf16.gmra.mxu0 %v2024
          %v2734 = vpop.f32.mrf.mxu0
          %v2735 = vadd.f32 %v2646, %v2734
          %v2736 = vpop.f32.mrf.mxu0
          %v2737 = vadd.f32 %v2648, %v2736
          %2738 = vmatmul.bf16.gmra.mxu0 %v2027
          %v2739 = vpop.f32.mrf.mxu0
          %v2740 = vadd.f32 %v2651, %v2739
          %v2741 = vpop.f32.mrf.mxu0
          %v2742 = vadd.f32 %v2653, %v2741
          %2743 = vmatmul.bf16.gmra.mxu0 %v2030
          %v2744 = vpop.f32.mrf.mxu0
          %v2745 = vadd.f32 %v2656, %v2744
          %v2746 = vpop.f32.mrf.mxu0
          %v2747 = vadd.f32 %v2658, %v2746
          %2748 = vmatmul.bf16.gmra.mxu0 %v2033
          %v2749 = vpop.f32.mrf.mxu0
          %v2750 = vadd.f32 %v2661, %v2749
          %v2751 = vpop.f32.mrf.mxu0
          %v2752 = vadd.f32 %v2663, %v2751
          %2753 = vmatmul.bf16.gmra.mxu0 %v2036
          %v2754 = vpop.f32.mrf.mxu0
          %v2755 = vadd.f32 %v2666, %v2754
          %v2756 = vpop.f32.mrf.mxu0
          %v2757 = vadd.f32 %v2668, %v2756
          %2758 = vmatmul.bf16.gmra.mxu0 %v2039
          %v2759 = vpop.f32.mrf.mxu0
          %v2760 = vadd.f32 %v2671, %v2759
          %v2761 = vpop.f32.mrf.mxu0
          %v2762 = vadd.f32 %v2673, %v2761
          %2763 = vmatmul.bf16.gmra.mxu0 %v2042
          %v2764 = vpop.f32.mrf.mxu0
          %v2765 = vadd.f32 %v2676, %v2764
          %v2766 = vpop.f32.mrf.mxu0
          %v2767 = vadd.f32 %v2678, %v2766
          %2768 = vmatmul.bf16.gmra.mxu0 %v2045
          %v2769 = vpop.f32.mrf.mxu0
          %v2770 = vadd.f32 %v2681, %v2769
          %v2771 = vpop.f32.mrf.mxu0
          %v2772 = vadd.f32 %v2683, %v2771
          %2773 = vmatmul.bf16.gmra.mxu0 %v2048
          %v2774 = vpop.f32.mrf.mxu0
          %v2775 = vadd.f32 %v2686, %v2774
          %v2776 = vpop.f32.mrf.mxu0
          %v2777 = vadd.f32 %v2688, %v2776
          %2778 = vmatmul.bf16.gmra.mxu0 %v2051
          %v2779 = vpop.f32.mrf.mxu0
          %v2780 = vadd.f32 %v2691, %v2779
          %v2781 = vpop.f32.mrf.mxu0
          %v2782 = vadd.f32 %v2693, %v2781
          %2783 = vmatmul.bf16.gmra.mxu0 %v2054
          %v2784 = vpop.f32.mrf.mxu0
          %v2785 = vadd.f32 %v2696, %v2784
          %v2786 = vpop.f32.mrf.mxu0
          %v2787 = vadd.f32 %v2698, %v2786
          %2788 = vdwg.mxu0
          %2789 = vmatpush.bf16.msra.mxu0 %v2295
          %2790 = vmatpush.bf16.msra.mxu0 %v2293
          %2791 = vmatpush.bf16.msra.mxu0 %v2291
          %2792 = vmatpush.bf16.msra.mxu0 %v2289
          %2793 = vmatpush.bf16.msra.mxu0 %v2287
          %2794 = vmatpush.bf16.msra.mxu0 %v2285
          %2795 = vmatpush.bf16.msra.mxu0 %v2283
          %2796 = vmatpush.bf16.msra.mxu0 %v2281
          %2797 = vmatmul.bf16.gmra.mxu0 %v2010
          %v2798 = vpop.f32.mrf.mxu0
          %v2799 = vadd.f32 %v2710, %v2798
          %v2800 = vpop.f32.mrf.mxu0
          %v2801 = vadd.f32 %v2712, %v2800
          %2802 = vmatmul.bf16.gmra.mxu0 %v2013
          %v2803 = vpop.f32.mrf.mxu0
          %v2804 = vadd.f32 %v2715, %v2803
          %v2805 = vpop.f32.mrf.mxu0
          %v2806 = vadd.f32 %v2717, %v2805
          %2807 = vmatmul.bf16.gmra.mxu0 %v2016
          %v2808 = vpop.f32.mrf.mxu0
          %v2809 = vadd.f32 %v2720, %v2808
          %v2810 = vpop.f32.mrf.mxu0
          %v2811 = vadd.f32 %v2722, %v2810
          %2812 = vmatmul.bf16.gmra.mxu0 %v2019
          %v2813 = vpop.f32.mrf.mxu0
          %v2814 = vadd.f32 %v2725, %v2813
          %v2815 = vpop.f32.mrf.mxu0
          %v2816 = vadd.f32 %v2727, %v2815
          %2817 = vmatmul.bf16.gmra.mxu0 %v2022
          %v2818 = vpop.f32.mrf.mxu0
          %v2819 = vadd.f32 %v2730, %v2818
          %v2820 = vpop.f32.mrf.mxu0
          %v2821 = vadd.f32 %v2732, %v2820
          %2822 = vmatmul.bf16.gmra.mxu0 %v2025
          %v2823 = vpop.f32.mrf.mxu0
          %v2824 = vadd.f32 %v2735, %v2823
          %v2825 = vpop.f32.mrf.mxu0
          %v2826 = vadd.f32 %v2737, %v2825
          %2827 = vmatmul.bf16.gmra.mxu0 %v2028
          %v2828 = vpop.f32.mrf.mxu0
          %v2829 = vadd.f32 %v2740, %v2828
          %v2830 = vpop.f32.mrf.mxu0
          %v2831 = vadd.f32 %v2742, %v2830
          %2832 = vmatmul.bf16.gmra.mxu0 %v2031
          %v2833 = vpop.f32.mrf.mxu0
          %v2834 = vadd.f32 %v2745, %v2833
          %v2835 = vpop.f32.mrf.mxu0
          %v2836 = vadd.f32 %v2747, %v2835
          %2837 = vmatmul.bf16.gmra.mxu0 %v2034
          %v2838 = vpop.f32.mrf.mxu0
          %v2839 = vadd.f32 %v2750, %v2838
          %v2840 = vpop.f32.mrf.mxu0
          %v2841 = vadd.f32 %v2752, %v2840
          %2842 = vmatmul.bf16.gmra.mxu0 %v2037
          %v2843 = vpop.f32.mrf.mxu0
          %v2844 = vadd.f32 %v2755, %v2843
          %v2845 = vpop.f32.mrf.mxu0
          %v2846 = vadd.f32 %v2757, %v2845
          %2847 = vmatmul.bf16.gmra.mxu0 %v2040
          %v2848 = vpop.f32.mrf.mxu0
          %v2849 = vadd.f32 %v2760, %v2848
          %v2850 = vpop.f32.mrf.mxu0
          %v2851 = vadd.f32 %v2762, %v2850
          %2852 = vmatmul.bf16.gmra.mxu0 %v2043
          %v2853 = vpop.f32.mrf.mxu0
          %v2854 = vadd.f32 %v2765, %v2853
          %v2855 = vpop.f32.mrf.mxu0
          %v2856 = vadd.f32 %v2767, %v2855
          %2857 = vmatmul.bf16.gmra.mxu0 %v2046
          %v2858 = vpop.f32.mrf.mxu0
          %v2859 = vadd.f32 %v2770, %v2858
          %v2860 = vpop.f32.mrf.mxu0
          %v2861 = vadd.f32 %v2772, %v2860
          %2862 = vmatmul.bf16.gmra.mxu0 %v2049
          %v2863 = vpop.f32.mrf.mxu0
          %v2864 = vadd.f32 %v2775, %v2863
          %v2865 = vpop.f32.mrf.mxu0
          %v2866 = vadd.f32 %v2777, %v2865
          %2867 = vmatmul.bf16.gmra.mxu0 %v2052
          %v2868 = vpop.f32.mrf.mxu0
          %v2869 = vadd.f32 %v2780, %v2868
          %v2870 = vpop.f32.mrf.mxu0
          %v2871 = vadd.f32 %v2782, %v2870
          %2872 = vmatmul.bf16.gmra.mxu0 %v2055
          %v2873 = vpop.f32.mrf.mxu0
          %v2874 = vadd.f32 %v2785, %v2873
          %v2875 = vpop.f32.mrf.mxu0
          %v2876 = vadd.f32 %v2787, %v2875
          %2877 = vdwg.mxu0
          %v2878 = vpack.c.bf16 %v2799, %v2532
          %v2879 = vpack.c.bf16 %v2801, %v2534
          %v2880 = vpack.c.bf16 %v2804, %v2537
          %v2881 = vpack.c.bf16 %v2806, %v2539
          %v2882 = vpack.c.bf16 %v2809, %v2542
          %v2883 = vpack.c.bf16 %v2811, %v2544
          %v2884 = vpack.c.bf16 %v2814, %v2547
          %v2885 = vpack.c.bf16 %v2816, %v2549
          %v2886 = vpack.c.bf16 %v2819, %v2552
          %v2887 = vpack.c.bf16 %v2821, %v2554
          %v2888 = vpack.c.bf16 %v2824, %v2557
          %v2889 = vpack.c.bf16 %v2826, %v2559
          %v2890 = vpack.c.bf16 %v2829, %v2562
          %v2891 = vpack.c.bf16 %v2831, %v2564
          %v2892 = vpack.c.bf16 %v2834, %v2567
          %v2893 = vpack.c.bf16 %v2836, %v2569
          %v2894 = vpack.c.bf16 %v2839, %v2572
          %v2895 = vpack.c.bf16 %v2841, %v2574
          %v2896 = vpack.c.bf16 %v2844, %v2577
          %v2897 = vpack.c.bf16 %v2846, %v2579
          %v2898 = vpack.c.bf16 %v2849, %v2582
          %v2899 = vpack.c.bf16 %v2851, %v2584
          %v2900 = vpack.c.bf16 %v2854, %v2587
          %v2901 = vpack.c.bf16 %v2856, %v2589
          %v2902 = vpack.c.bf16 %v2859, %v2592
          %v2903 = vpack.c.bf16 %v2861, %v2594
          %v2904 = vpack.c.bf16 %v2864, %v2597
          %v2905 = vpack.c.bf16 %v2866, %v2599
          %v2906 = vpack.c.bf16 %v2869, %v2602
          %v2907 = vpack.c.bf16 %v2871, %v2604
          %v2908 = vpack.c.bf16 %v2874, %v2607
          %v2909 = vpack.c.bf16 %v2876, %v2609
          %2910 = vst [vmem:[%s376] sm:$0xff] %v2878
          %2911 = vst [vmem:[%s376 + $0x8] sm:$0xff] %v2879
          %2912 = vst [vmem:[%s376 + $0x10] sm:$0xff] %v2880
          %2913 = vst [vmem:[%s376 + $0x18] sm:$0xff] %v2881
          %2914 = vst [vmem:[%s376 + $0x20] sm:$0xff] %v2882
          %2915 = vst [vmem:[%s376 + $0x28] sm:$0xff] %v2883
          %2916 = vst [vmem:[%s376 + $0x30] sm:$0xff] %v2884
          %2917 = vst [vmem:[%s376 + $0x38] sm:$0xff] %v2885
          %2918 = vst [vmem:[%s376 + $0x40] sm:$0xff] %v2886
          %2919 = vst [vmem:[%s376 + $0x48] sm:$0xff] %v2887
          %2920 = vst [vmem:[%s376 + $0x50] sm:$0xff] %v2888
          %2921 = vst [vmem:[%s376 + $0x58] sm:$0xff] %v2889
          %2922 = vst [vmem:[%s376 + $0x60] sm:$0xff] %v2890
          %2923 = vst [vmem:[%s376 + $0x68] sm:$0xff] %v2891
          %2924 = vst [vmem:[%s376 + $0x70] sm:$0xff] %v2892
          %2925 = vst [vmem:[%s376 + $0x78] sm:$0xff] %v2893
          %2926 = vst [vmem:[%s376 + $0x80] sm:$0xff] %v2894
          %2927 = vst [vmem:[%s376 + $0x88] sm:$0xff] %v2895
          %2928 = vst [vmem:[%s376 + $0x90] sm:$0xff] %v2896
          %2929 = vst [vmem:[%s376 + $0x98] sm:$0xff] %v2897
          %2930 = vst [vmem:[%s376 + $0xa0] sm:$0xff] %v2898
          %2931 = vst [vmem:[%s376 + $0xa8] sm:$0xff] %v2899
          %2932 = vst [vmem:[%s376 + $0xb0] sm:$0xff] %v2900
          %2933 = vst [vmem:[%s376 + $0xb8] sm:$0xff] %v2901
          %2934 = vst [vmem:[%s376 + $0xc0] sm:$0xff] %v2902
          %2935 = vst [vmem:[%s376 + $0xc8] sm:$0xff] %v2903
          %2936 = vst [vmem:[%s376 + $0xd0] sm:$0xff] %v2904
          %2937 = vst [vmem:[%s376 + $0xd8] sm:$0xff] %v2905
          %2938 = vst [vmem:[%s376 + $0xe0] sm:$0xff] %v2906
          %2939 = vst [vmem:[%s376 + $0xe8] sm:$0xff] %v2907
          %2940 = vst [vmem:[%s376 + $0xf0] sm:$0xff] %v2908
          %2941 = vst [vmem:[%s376 + $0xf8] sm:$0xff] %v2909
        $region78: #{_lambda_.6} parent=65 // pred_fallthru
          _
        %s2942 = smul.u32 32, %s18
        %p2943 = scmp.lt.s32.totalorder %s2942, 63
        %s2944 = scalar_select %p2943, %s2942, 63
        %s2945 = smul.addr %s2944, 2
        %s2946 = smul.addr %s2945, 4
        %s2947 = scalar_lea.vmem %s3, %s2946
        // Predicated region
        $region79: #{_lambda_.6} parent=65 // pred_check
          %p2948 = pneg %p119
        $region80: #{_lambda_.6} parent=65 // pred_check_branch
          %2950 = sbr.rel (%p2948) target = $region82
        $region81: #{_lambda_.6} parent=65 // pred_region
          %s2951 = smul.u32 32, %s18
        $region82: #{_lambda_.6} parent=65 // pred_fallthru
          _
      $region66: #{_lambda_.6} parent=5 // pred_fallthru
        _
      %p2952 = scmp.le.s32.totalorder 2, %s9
      // Predicated region
      $region83: #{_lambda_.6} parent=5 // pred_check
        %p2953 = pneg %p2952
      $region84: #{_lambda_.6} parent=5 // pred_check_branch
        %2955 = sbr.rel (%p2953) target = $region86
      $region85: #{_lambda_.6} parent=5 // pred_region
        %s2956 = ssub.s32 %s9, 2
        // Predicated region
        $region87: #{_lambda_.6} parent=85 // pred_check
          %p2957 = pneg %p125
        $region88: #{_lambda_.6} parent=85 // pred_check_branch
          %2959 = sbr.rel (%p2957) target = $region90
        $region89: #{_lambda_.6} parent=85 // pred_region
          %s2960 = smul.u32 32, %s20
          %p2961 = scmp.lt.s32.totalorder %s2960, 63
          %s2962 = scalar_select %p2961, %s2960, 63
          %s2963 = smul.addr %s2962, 2
          %s2964 = smul.addr %s2963, 4
          %s2965 = scalar_lea.vmem %s3, %s2964
        $region90: #{_lambda_.6} parent=85 // pred_fallthru
          _
      $region86: #{_lambda_.6} parent=5 // pred_fallthru
        _
    $region6: #{_lambda_.6} parent=1 // loop_footer
      %s13 = sadd.s32 1, %s9
    $region7: #{_lambda_.6} parent=1 // loop_footer_branch
      %8 = sbr.rel target = $region3
    $region8: #{_lambda_.6} parent=1 // loop_exit
      _

</llo_original>
